<compile_context>
chip_gen: v7x
topology: tpu7x:2x2x1
jax: 0.10.0
libtpu: 0.0.40
codegen_flags: <defaults>
</compile_context>

<pallas_src>
import numpy as np
import jax
import jax.numpy as jnp
from jax.experimental import pallas as pl
from jax.experimental.pallas import tpu as pltpu

POOL_SIZES = (1, 2, 4)      # AdaptiveAvgPool2d output sizes in SPPM_T
N_SCALES = len(POOL_SIZES)
EPS = 1e-5
HIGHEST = jax.lax.Precision.HIGHEST


def _pad8(n):
    return ((n + 7) // 8) * 8


# ----------------------------------------------------------------------------
# Precomputed spatial matrices (numpy, built once).
# ----------------------------------------------------------------------------
def _bilinear_vec(n_out, n_in):
    """F.interpolate(mode='bilinear', align_corners=False) as a 1-D matrix."""
    M = np.zeros((n_out, n_in), np.float32)
    scale = n_in / n_out
    for i in range(n_out):
        src = max((i + 0.5) * scale - 0.5, 0.0)
        i0 = min(int(np.floor(src)), n_in - 1)
        i1 = min(i0 + 1, n_in - 1)
        w1 = src - i0
        M[i, i0] += 1.0 - w1
        M[i, i1] += w1
    return M


def _pool_matrix(k, H, W):
    """Adaptive average pooling (H,W)->(k,k) as a (k*k, H*W) matrix."""
    def pool1d(kk, n):
        P = np.zeros((kk, n), np.float32)
        for i in range(kk):
            s = (i * n) // kk
            e = -(-((i + 1) * n) // kk)
            P[i, s:e] = 1.0 / (e - s)
        return P
    Ph, Pw = pool1d(k, H), pool1d(k, W)
    return np.einsum("ih,jw->ijhw", Ph, Pw).reshape(k * k, H * W)


def _upsample_matrix(k, H, W):
    """Bilinear upsample (k,k)->(H,W) as a (H*W, k*k) matrix."""
    Rh, Rw = _bilinear_vec(H, k), _bilinear_vec(W, k)
    return np.einsum("hi,wj->hwij", Rh, Rw).reshape(H * W, k * k)


def _shift_masks(H, W):
    """(9, H*W) validity masks for the 9 taps of a 'same' 3x3 conv."""
    m = np.zeros((9, H, W), np.float32)
    idx = 0
    for dy in (-1, 0, 1):
        for dx in (-1, 0, 1):
            m[idx, max(0, -dy):min(H, H - dy), max(0, -dx):min(W, W - dx)] = 1.0
            idx += 1
    return m.reshape(9, H * W)


def _stage_offsets(pool_sizes, align=8):
    """8-aligned column offsets for the per-scale pooled blocks (1, 4, 16)."""
    offs, off = [], 0
    for k in pool_sizes:
        offs.append(off)
        off += ((k * k + align - 1) // align) * align
    return offs, off


def _block_diag(m, nb):
    r, c = m.shape
    out = np.zeros((nb * r, nb * c), m.dtype)
    for i in range(nb):
        out[i * r:(i + 1) * r, i * c:(i + 1) * c] = m
    return out


# ----------------------------------------------------------------------------
# Fold BN into weights and pack everything into kernel operand slabs.
# ----------------------------------------------------------------------------
def build_params(raw, H, W, N):
    HW = H * W
    NB = 1
    for nb in (8, 4, 2, 1):
        if N % nb == 0:
            NB = nb
            break
    L = NB * HW
    offs, nseg = _stage_offsets(POOL_SIZES)
    NS = NB * nseg

    Cr2, Cr = raw["w_rgb"][0].shape
    Ct2, Ct = raw["w_t"][0].shape
    Cmid = raw["w_o1"].shape[0]
    Cout = raw["w_o2"].shape[0]
    CrP, CtP = _pad8(Cr), _pad8(Ct)
    CR2P, CT2P = _pad8(Cr2), _pad8(Ct2)
    CIP = CR2P + CT2P
    CMP, COP = _pad8(Cmid), _pad8(Cout)

    # ---- spatial matrices (per image, then tiled / block-diag over NB) ----
    pool_full = np.zeros((nseg, HW), np.float32)
    u_full = np.zeros((nseg, HW), np.float32)
    cmask = np.zeros((N_SCALES, nseg), np.float32)
    for si, (k, off) in enumerate(zip(POOL_SIZES, offs)):
        pool_full[off:off + k * k] = _pool_matrix(k, H, W)
        u_full[off:off + k * k] = _upsample_matrix(k, H, W).T
        cmask[si, off:off + k * k] = 1.0

    poolT_blk = _block_diag(pool_full.T, NB)          # (L, NS)
    um_blk = _block_diag(u_full, NB)                  # (NS, L)
    cmask_t = np.tile(cmask, (1, NB))                 # (3, NS)
    masks_t = np.tile(_shift_masks(H, W), (1, NB))    # (9, L)

    # ---- BN folding ----
    def fold(w, bn):
        w = np.asarray(w, np.float32)
        g, b = np.asarray(bn["gamma"]), np.asarray(bn["beta"])
        m, v = np.asarray(bn["mean"]), np.asarray(bn["var"])
        s = g / np.sqrt(v + EPS)
        wf = w * s.reshape((-1,) + (1,) * (w.ndim - 1))
        return wf.astype(np.float32), (b - m * s).astype(np.float32)

    def pack_stage(ws, bns, cin, cinP, chalf, chP):
        Wcat = np.zeros((chP, N_SCALES * cinP), np.float32)
        Bsl = np.zeros((chP, nseg), np.float32)
        for si, (w, bn) in enumerate(zip(ws, bns)):
            wf, b = fold(w, bn)
            Wcat[:chalf, si * cinP:si * cinP + cin] = wf
            off, kk = offs[si], POOL_SIZES[si] ** 2
            Bsl[:chalf, off:off + kk] = b[:, None]
        return jnp.asarray(Wcat), jnp.asarray(np.tile(Bsl, (1, NB)))

    def pack_conv(w, bn, in_map, cinP, co, coP):
        wf, b = fold(w, bn)                                   # (co, cin, 3, 3)
        Wm = np.zeros((coP, 9 * cinP), np.float32)
        for idx in range(9):
            ky, kx = idx // 3, idx % 3
            for c, r in enumerate(in_map):
                Wm[:co, idx * cinP + r] = wf[:, c, ky, kx]
        Bsl = np.zeros((coP, L), np.float32)
        Bsl[:co, :] = b[:, None]
        return jnp.asarray(Wm), jnp.asarray(Bsl)

    wr, br = pack_stage(raw["w_rgb"], raw["bn_rgb"], Cr, CrP, Cr2, CR2P)
    wt, bt = pack_stage(raw["w_t"], raw["bn_t"], Ct, CtP, Ct2, CT2P)
    in_map1 = list(range(Cr2)) + [CR2P + i for i in range(Ct2)]
    in_map2 = list(range(Cmid))
    wo1, bo1 = pack_conv(raw["w_o1"], raw["bn_o1"], in_map1, CIP, Cmid, CMP)
    wo2, bo2 = pack_conv(raw["w_o2"], raw["bn_o2"], in_map2, CMP, Cout, COP)

    return dict(
        NB=NB, L=L, NS=NS, H=H, W=W,
        CrP=CrP, CtP=CtP, CIP=CIP, CMP=CMP, COP=COP, Cout=Cout,
        poolT_blk=jnp.asarray(poolT_blk), um_blk=jnp.asarray(um_blk),
        cmask=jnp.asarray(cmask_t), masks=jnp.asarray(masks_t),
        wr=wr, br=br, wt=wt, bt=bt, wo1=wo1, bo1=bo1, wo2=wo2, bo2=bo2,
    )


# ----------------------------------------------------------------------------
# Wrapper: layout plumbing + pallas_call.
# ----------------------------------------------------------------------------
def sppm_t_forward(rgb_nchw, t_nchw, P):
    N, Cr, H, W = rgb_nchw.shape
    HW = H * W
    NB, L, NS = P["NB"], P["L"], P["NS"]
    assert N % NB == 0 and H == P["H"] and W == P["W"]
    NG = N // NB
    CrP, CtP = P["CrP"], P["CtP"]
    CIP, CMP, COP, Cout = P["CIP"], P["CMP"], P["COP"], P["Cout"]

    def to_lanes(x, cpad):
        c = x.shape[1]
        y = x.reshape(NG, NB, c, HW).transpose(0, 2, 1, 3).reshape(NG, c, L)
        if cpad > c:
            y = jnp.pad(y, ((0, 0), (0, cpad - c), (0, 0)))
        return y.astype(jnp.float32)

    rgb = to_lanes(rgb_nchw, CrP)
    t = to_lanes(t_nchw, CtP)

    def kernel(rgb_ref, t_ref, pT_ref, um_ref, cm_ref, mk_ref,
               wr_ref, br_ref, wt_ref, bt_ref,
               wo1_ref, bo1_ref, wo2_ref, bo2_ref,
               out_ref, patch1_ref, patch2_ref):
        pT = pT_ref[...]        # (L, NS)   block-diag pool matrix (transposed)
        um = um_ref[...]        # (NS, L)   block-diag upsample matrix
        cm = cm_ref[...]        # (3, NS)   per-scale column masks
        mk = mk_ref[...]        # (9, L)    3x3 tap validity masks

        # One SPP branch = 3 matmuls (pool, stacked 1x1-conv+BN+ReLU, upsample).
        def branch(x, w_cat, b_slab):
            pooled = jnp.dot(x, pT, precision=HIGHEST,
                             preferred_element_type=jnp.float32)   # (cP, NS)
            stack = jnp.concatenate(
                [pooled * cm[s:s + 1, :] for s in range(N_SCALES)], axis=0)
            y = jnp.maximum(
                jnp.dot(w_cat, stack, precision=HIGHEST,
                        preferred_element_type=jnp.float32) + b_slab, 0.0)
            return jnp.dot(y, um, precision=HIGHEST,
                           preferred_element_type=jnp.float32)     # (chP, L)

        # 3x3 "same" conv: 9 lane rolls + masks written at static 8-aligned
        # offsets of a VMEM scratch, then a single K = 9*cinP matmul.
        def conv3x3(x, w, b_slab, cinP, pref):
            idx = 0
            for dy in (-1, 0, 1):
                for dx in (-1, 0, 1):
                    sh = (-(dy * W + dx)) % L
                    r = pltpu.roll(x, sh, 1) if sh else x
                    pref[idx * cinP:(idx + 1) * cinP, :] = r * mk[idx:idx + 1, :]
                    idx += 1
            return jnp.maximum(
                jnp.dot(w, pref[...], precision=HIGHEST,
                        preferred_element_type=jnp.float32) + b_slab, 0.0)

        rgb_out = branch(rgb_ref[0], wr_ref[...], br_ref[...])     # (8, L)
        t_out = branch(t_ref[0], wt_ref[...], bt_ref[...])         # (8, L)
        cat = jnp.concatenate([rgb_out, t_out], axis=0)            # (CIP, L)

        h1 = conv3x3(cat, wo1_ref[...], bo1_ref[...], CIP, patch1_ref)
        out_ref[0] = conv3x3(h1, wo2_ref[...], bo2_ref[...], CMP, patch2_ref)

    flops_step = 2 * (CrP * L * NS + CtP * L * NS
                      + 8 * 3 * CrP * NS + 8 * 3 * CtP * NS
                      + 2 * 8 * NS * L
                      + CMP * 9 * CIP * L + COP * 9 * CMP * L)
    bytes_step = 4 * ((CrP + CtP + COP + CMP + COP) * L + 2 * L * NS
                      + 9 * L + 3 * NS + 8 * 3 * (CrP + CtP) + 2 * 8 * NS
                      + CMP * 9 * CIP + COP * 9 * CMP)

    out = pl.pallas_call(
        kernel,
        out_shape=jax.ShapeDtypeStruct((NG, COP, L), jnp.float32),
        grid=(NG,),
        in_specs=[
            pl.BlockSpec((1, CrP, L), lambda g: (g, 0, 0)),
            pl.BlockSpec((1, CtP, L), lambda g: (g, 0, 0)),
            pl.BlockSpec((L, NS), lambda g: (0, 0)),
            pl.BlockSpec((NS, L), lambda g: (0, 0)),
            pl.BlockSpec((N_SCALES, NS), lambda g: (0, 0)),
            pl.BlockSpec((9, L), lambda g: (0, 0)),
            pl.BlockSpec(P["wr"].shape, lambda g: (0, 0)),
            pl.BlockSpec(P["br"].shape, lambda g: (0, 0)),
            pl.BlockSpec(P["wt"].shape, lambda g: (0, 0)),
            pl.BlockSpec(P["bt"].shape, lambda g: (0, 0)),
            pl.BlockSpec(P["wo1"].shape, lambda g: (0, 0)),
            pl.BlockSpec(P["bo1"].shape, lambda g: (0, 0)),
            pl.BlockSpec(P["wo2"].shape, lambda g: (0, 0)),
            pl.BlockSpec(P["bo2"].shape, lambda g: (0, 0)),
        ],
        out_specs=pl.BlockSpec((1, COP, L), lambda g: (g, 0, 0)),
        scratch_shapes=[pltpu.VMEM((9 * CIP, L), jnp.float32),
                        pltpu.VMEM((9 * CMP, L), jnp.float32)],
        compiler_params=pltpu.CompilerParams(
            dimension_semantics=("parallel",)),
        cost_estimate=pl.CostEstimate(flops=int(flops_step * NG),
                                      transcendentals=0,
                                      bytes_accessed=int(bytes_step * NG)),
    )(rgb, t, P["poolT_blk"], P["um_blk"], P["cmask"], P["masks"],
      P["wr"], P["br"], P["wt"], P["bt"],
      P["wo1"], P["bo1"], P["wo2"], P["bo2"])

    out = out.reshape(NG, COP, NB, HW).transpose(0, 2, 1, 3)
    return out.reshape(N, COP, H, W)[:, :Cout]


# ----------------------------------------------------------------------------
# Deterministic raw parameters (conv weights + BN stats, eval mode).
# ----------------------------------------------------------------------------
def init_params(key, Cr, Ct, Cout):
    Cr2, Ct2 = Cr // 2, Ct // 2
    Ci = Cr2 + Ct2
    ks = iter(jax.random.split(key, 64))

    def nrm(shape, s=0.4):
        return s * jax.random.normal(next(ks), shape, jnp.float32)

    def bn(c):
        return dict(
            gamma=1.0 + 0.1 * jax.random.normal(next(ks), (c,), jnp.float32),
            beta=0.1 * jax.random.normal(next(ks), (c,), jnp.float32),
            mean=0.1 * jax.random.normal(next(ks), (c,), jnp.float32),
            var=1.0 + 0.1 * jnp.abs(jax.random.normal(next(ks), (c,), jnp.float32)))

    return dict(
        w_rgb=[nrm((Cr2, Cr)) for _ in range(3)],
        bn_rgb=[bn(Cr2) for _ in range(3)],
        w_t=[nrm((Ct2, Ct)) for _ in range(3)],
        bn_t=[bn(Ct2) for _ in range(3)],
        w_o1=nrm((Cr, Ci, 3, 3)), bn_o1=bn(Cr),
        w_o2=nrm((Cout, Cr, 3, 3)), bn_o2=bn(Cout),
    )


# ----------------------------------------------------------------------------
# Numpy float64 reference (raw, unfolded params) for the numerical check.
# ----------------------------------------------------------------------------
def reference_forward_np(rgb, t, raw):
    rgb = np.asarray(rgb, np.float64)
    t = np.asarray(t, np.float64)

    def g(x):
        return np.asarray(x, np.float64)

    def bn_eval(y, bn):
        s = g(bn["gamma"]) / np.sqrt(g(bn["var"]) + EPS)
        b = g(bn["beta"]) - g(bn["mean"]) * s
        return y * s[None, :, None, None] + b[None, :, None, None]

    def branch(x, ws, bns):
        N, C, H, W = x.shape
        out = np.zeros((N, ws[0].shape[0], H, W))
        for w, bn, k in zip(ws, bns, POOL_SIZES):
            p = x.reshape(N, C, k, H // k, k, W // k).mean(axis=(3, 5))
            y = np.maximum(bn_eval(np.einsum("oc,ncij->noij", g(w), p), bn), 0.0)
            Rh = _bilinear_vec(H, k).astype(np.float64)
            Rw = _bilinear_vec(W, k).astype(np.float64)
            out += np.einsum("hi,noij,wj->nohw", Rh, y, Rw)
        return out

    def conv3x3(x, w):
        N, C, H, W = x.shape
        w = g(w)
        xp = np.pad(x, ((0, 0), (0, 0), (1, 1), (1, 1)))
        out = np.zeros((N, w.shape[0], H, W))
        for ky in range(3):
            for kx in range(3):
                out += np.einsum("oc,nchw->nohw", w[:, :, ky, kx],
                                 xp[:, :, ky:ky + H, kx:kx + W])
        return out

    r = branch(rgb, raw["w_rgb"], raw["bn_rgb"])
    tt = branch(t, raw["w_t"], raw["bn_t"])
    x = np.concatenate([r, tt], axis=1)
    x = np.maximum(bn_eval(conv3x3(x, raw["w_o1"]), raw["bn_o1"]), 0.0)
    x = np.maximum(bn_eval(conv3x3(x, raw["w_o2"]), raw["bn_o2"]), 0.0)
    return x


if __name__ == "__main__":
    N, Cr, Ct, Cout = 2, 4, 6, 8
    H = W = 16

    k0, k1 = jax.random.split(jax.random.PRNGKey(0))
    rgb = jax.random.normal(k0, (N, Cr, H, W), jnp.float32)
    t = jax.random.normal(k1, (N, Ct, H, W), jnp.float32)

    raw = init_params(jax.random.PRNGKey(1), Cr, Ct, Cout)
    P = build_params(raw, H, W, N)

    out = jax.block_until_ready(sppm_t_forward(rgb, t, P))
    ref = reference_forward_np(rgb, t, raw)

    assert out.shape == (N, Cout, H, W)
    err = float(np.max(np.abs(np.asarray(out, np.float64) - ref)))
    assert err < 2e-3, f"max abs err {err}"
    print("KERNEL_OK")
</pallas_src>

<mosaic_0001>
module attributes {stable_mosaic.version = 11 : i64} {
  func.func @kernel(%arg0: i32, %arg1: memref<1x8x512xf32, #tpu.memory_space<vmem>>, %arg2: memref<1x8x512xf32, #tpu.memory_space<vmem>>, %arg3: memref<512x64xf32, #tpu.memory_space<vmem>>, %arg4: memref<64x512xf32, #tpu.memory_space<vmem>>, %arg5: memref<3x64xf32, #tpu.memory_space<vmem>>, %arg6: memref<9x512xf32, #tpu.memory_space<vmem>>, %arg7: memref<8x24xf32, #tpu.memory_space<vmem>>, %arg8: memref<8x64xf32, #tpu.memory_space<vmem>>, %arg9: memref<8x24xf32, #tpu.memory_space<vmem>>, %arg10: memref<8x64xf32, #tpu.memory_space<vmem>>, %arg11: memref<8x144xf32, #tpu.memory_space<vmem>>, %arg12: memref<8x512xf32, #tpu.memory_space<vmem>>, %arg13: memref<8x72xf32, #tpu.memory_space<vmem>>, %arg14: memref<8x512xf32, #tpu.memory_space<vmem>>, %arg15: memref<1x8x512xf32, #tpu.memory_space<vmem>>, %arg16: memref<144x512xf32, #tpu.memory_space<vmem>>, %arg17: memref<72x512xf32, #tpu.memory_space<vmem>>) attributes {dimension_semantics = [#tpu.dimension_semantics<parallel>], iteration_bounds = array<i64: 1>, scalar_prefetch = 0 : i64, scratch_operands = 2 : i64, tpu.core_type = #tpu.core_type<tc>, window_params = [{transform_indices = @transform_0, window_bounds = array<i64: 1, 8, 512>}, {transform_indices = @transform_1, window_bounds = array<i64: 1, 8, 512>}, {pipeline_mode = #tpu.pipeline_mode<synchronous>, transform_indices = @transform_2, window_bounds = array<i64: 512, 64>}, {pipeline_mode = #tpu.pipeline_mode<synchronous>, transform_indices = @transform_3, window_bounds = array<i64: 64, 512>}, {pipeline_mode = #tpu.pipeline_mode<synchronous>, transform_indices = @transform_4, window_bounds = array<i64: 3, 64>}, {pipeline_mode = #tpu.pipeline_mode<synchronous>, transform_indices = @transform_5, window_bounds = array<i64: 9, 512>}, {pipeline_mode = #tpu.pipeline_mode<synchronous>, transform_indices = @transform_6, window_bounds = array<i64: 8, 24>}, {pipeline_mode = #tpu.pipeline_mode<synchronous>, transform_indices = @transform_7, window_bounds = array<i64: 8, 64>}, {pipeline_mode = #tpu.pipeline_mode<synchronous>, transform_indices = @transform_8, window_bounds = array<i64: 8, 24>}, {pipeline_mode = #tpu.pipeline_mode<synchronous>, transform_indices = @transform_9, window_bounds = array<i64: 8, 64>}, {pipeline_mode = #tpu.pipeline_mode<synchronous>, transform_indices = @transform_10, window_bounds = array<i64: 8, 144>}, {pipeline_mode = #tpu.pipeline_mode<synchronous>, transform_indices = @transform_11, window_bounds = array<i64: 8, 512>}, {pipeline_mode = #tpu.pipeline_mode<synchronous>, transform_indices = @transform_12, window_bounds = array<i64: 8, 72>}, {pipeline_mode = #tpu.pipeline_mode<synchronous>, transform_indices = @transform_13, window_bounds = array<i64: 8, 512>}, {transform_indices = @transform_14, window_bounds = array<i64: 1, 8, 512>}]} {
    %c0 = arith.constant 0 : index
    %c0_0 = arith.constant 0 : index
    %0 = vector.load %arg3[%c0, %c0_0] : memref<512x64xf32, #tpu.memory_space<vmem>>, vector<512x64xf32>
    %c0_1 = arith.constant 0 : index
    %c0_2 = arith.constant 0 : index
    %1 = vector.load %arg4[%c0_1, %c0_2] : memref<64x512xf32, #tpu.memory_space<vmem>>, vector<64x512xf32>
    %c0_3 = arith.constant 0 : index
    %c0_4 = arith.constant 0 : index
    %2 = vector.load %arg5[%c0_3, %c0_4] : memref<3x64xf32, #tpu.memory_space<vmem>>, vector<3x64xf32>
    %c0_5 = arith.constant 0 : index
    %c0_6 = arith.constant 0 : index
    %3 = vector.load %arg6[%c0_5, %c0_6] : memref<9x512xf32, #tpu.memory_space<vmem>>, vector<9x512xf32>
    %c0_7 = arith.constant 0 : index
    %c0_8 = arith.constant 0 : index
    %c0_9 = arith.constant 0 : index
    %4 = vector.load %arg1[%c0_7, %c0_8, %c0_9] : memref<1x8x512xf32, #tpu.memory_space<vmem>>, vector<1x8x512xf32>
    %5 = vector.shape_cast %4 : vector<1x8x512xf32> to vector<8x512xf32>
    %c0_10 = arith.constant 0 : index
    %c0_11 = arith.constant 0 : index
    %6 = vector.load %arg7[%c0_10, %c0_11] : memref<8x24xf32, #tpu.memory_space<vmem>>, vector<8x24xf32>
    %c0_12 = arith.constant 0 : index
    %c0_13 = arith.constant 0 : index
    %7 = vector.load %arg8[%c0_12, %c0_13] : memref<8x64xf32, #tpu.memory_space<vmem>>, vector<8x64xf32>
    %cst = arith.constant dense<0.000000e+00> : vector<8x64xf32>
    %8 = tpu.matmul %5, %0, %cst {dimension_numbers = #tpu.dot_dimension_numbers<[1], [0], [0], [1], [0, 0, 1, 1], [], []>, precision = #tpu.contract_precision<fp32>} : vector<8x512xf32>, vector<512x64xf32>, vector<8x64xf32> -> vector<8x64xf32>
    %9 = vector.extract_strided_slice %2 {offsets = [0, 0], sizes = [1, 64], strides = [1, 1]} : vector<3x64xf32> to vector<1x64xf32>
    %10 = vector.broadcast %9 : vector<1x64xf32> to vector<8x64xf32>
    %11 = arith.mulf %8, %10 : vector<8x64xf32>
    %12 = vector.extract_strided_slice %2 {offsets = [1, 0], sizes = [1, 64], strides = [1, 1]} : vector<3x64xf32> to vector<1x64xf32>
    %13 = vector.broadcast %12 : vector<1x64xf32> to vector<8x64xf32>
    %14 = arith.mulf %8, %13 : vector<8x64xf32>
    %15 = vector.extract_strided_slice %2 {offsets = [2, 0], sizes = [1, 64], strides = [1, 1]} : vector<3x64xf32> to vector<1x64xf32>
    %16 = vector.broadcast %15 : vector<1x64xf32> to vector<8x64xf32>
    %17 = arith.mulf %8, %16 : vector<8x64xf32>
    %18 = tpu.concatenate %11, %14, %17 in 0 : vector<8x64xf32>, vector<8x64xf32>, vector<8x64xf32> -> vector<24x64xf32>
    %cst_14 = arith.constant dense<0.000000e+00> : vector<8x64xf32>
    %19 = tpu.matmul %6, %18, %cst_14 {dimension_numbers = #tpu.dot_dimension_numbers<[1], [0], [0], [1], [0, 0, 1, 1], [], []>, precision = #tpu.contract_precision<fp32>} : vector<8x24xf32>, vector<24x64xf32>, vector<8x64xf32> -> vector<8x64xf32>
    %20 = arith.addf %19, %7 : vector<8x64xf32>
    %cst_15 = arith.constant 0.000000e+00 : f32
    %21 = vector.broadcast %cst_15 : f32 to vector<8x64xf32>
    %22 = arith.maximumf %20, %21 : vector<8x64xf32>
    %cst_16 = arith.constant dense<0.000000e+00> : vector<8x512xf32>
    %23 = tpu.matmul %22, %1, %cst_16 {dimension_numbers = #tpu.dot_dimension_numbers<[1], [0], [0], [1], [0, 0, 1, 1], [], []>, precision = #tpu.contract_precision<fp32>} : vector<8x64xf32>, vector<64x512xf32>, vector<8x512xf32> -> vector<8x512xf32>
    %c0_17 = arith.constant 0 : index
    %c0_18 = arith.constant 0 : index
    %c0_19 = arith.constant 0 : index
    %24 = vector.load %arg2[%c0_17, %c0_18, %c0_19] : memref<1x8x512xf32, #tpu.memory_space<vmem>>, vector<1x8x512xf32>
    %25 = vector.shape_cast %24 : vector<1x8x512xf32> to vector<8x512xf32>
    %c0_20 = arith.constant 0 : index
    %c0_21 = arith.constant 0 : index
    %26 = vector.load %arg9[%c0_20, %c0_21] : memref<8x24xf32, #tpu.memory_space<vmem>>, vector<8x24xf32>
    %c0_22 = arith.constant 0 : index
    %c0_23 = arith.constant 0 : index
    %27 = vector.load %arg10[%c0_22, %c0_23] : memref<8x64xf32, #tpu.memory_space<vmem>>, vector<8x64xf32>
    %cst_24 = arith.constant dense<0.000000e+00> : vector<8x64xf32>
    %28 = tpu.matmul %25, %0, %cst_24 {dimension_numbers = #tpu.dot_dimension_numbers<[1], [0], [0], [1], [0, 0, 1, 1], [], []>, precision = #tpu.contract_precision<fp32>} : vector<8x512xf32>, vector<512x64xf32>, vector<8x64xf32> -> vector<8x64xf32>
    %29 = vector.extract_strided_slice %2 {offsets = [0, 0], sizes = [1, 64], strides = [1, 1]} : vector<3x64xf32> to vector<1x64xf32>
    %30 = vector.broadcast %29 : vector<1x64xf32> to vector<8x64xf32>
    %31 = arith.mulf %28, %30 : vector<8x64xf32>
    %32 = vector.extract_strided_slice %2 {offsets = [1, 0], sizes = [1, 64], strides = [1, 1]} : vector<3x64xf32> to vector<1x64xf32>
    %33 = vector.broadcast %32 : vector<1x64xf32> to vector<8x64xf32>
    %34 = arith.mulf %28, %33 : vector<8x64xf32>
    %35 = vector.extract_strided_slice %2 {offsets = [2, 0], sizes = [1, 64], strides = [1, 1]} : vector<3x64xf32> to vector<1x64xf32>
    %36 = vector.broadcast %35 : vector<1x64xf32> to vector<8x64xf32>
    %37 = arith.mulf %28, %36 : vector<8x64xf32>
    %38 = tpu.concatenate %31, %34, %37 in 0 : vector<8x64xf32>, vector<8x64xf32>, vector<8x64xf32> -> vector<24x64xf32>
    %cst_25 = arith.constant dense<0.000000e+00> : vector<8x64xf32>
    %39 = tpu.matmul %26, %38, %cst_25 {dimension_numbers = #tpu.dot_dimension_numbers<[1], [0], [0], [1], [0, 0, 1, 1], [], []>, precision = #tpu.contract_precision<fp32>} : vector<8x24xf32>, vector<24x64xf32>, vector<8x64xf32> -> vector<8x64xf32>
    %40 = arith.addf %39, %27 : vector<8x64xf32>
    %cst_26 = arith.constant 0.000000e+00 : f32
    %41 = vector.broadcast %cst_26 : f32 to vector<8x64xf32>
    %42 = arith.maximumf %40, %41 : vector<8x64xf32>
    %cst_27 = arith.constant dense<0.000000e+00> : vector<8x512xf32>
    %43 = tpu.matmul %42, %1, %cst_27 {dimension_numbers = #tpu.dot_dimension_numbers<[1], [0], [0], [1], [0, 0, 1, 1], [], []>, precision = #tpu.contract_precision<fp32>} : vector<8x64xf32>, vector<64x512xf32>, vector<8x512xf32> -> vector<8x512xf32>
    %44 = tpu.concatenate %23, %43 in 0 : vector<8x512xf32>, vector<8x512xf32> -> vector<16x512xf32>
    %c0_28 = arith.constant 0 : index
    %c0_29 = arith.constant 0 : index
    %45 = vector.load %arg11[%c0_28, %c0_29] : memref<8x144xf32, #tpu.memory_space<vmem>>, vector<8x144xf32>
    %c0_30 = arith.constant 0 : index
    %c0_31 = arith.constant 0 : index
    %46 = vector.load %arg12[%c0_30, %c0_31] : memref<8x512xf32, #tpu.memory_space<vmem>>, vector<8x512xf32>
    %c17_i32 = arith.constant 17 : i32
    %47 = tpu.dynamic_rotate %44 by %c17_i32 dim 1 : vector<16x512xf32>, i32 -> vector<16x512xf32>
    %48 = vector.extract_strided_slice %3 {offsets = [0, 0], sizes = [1, 512], strides = [1, 1]} : vector<9x512xf32> to vector<1x512xf32>
    %49 = vector.broadcast %48 : vector<1x512xf32> to vector<16x512xf32>
    %50 = arith.mulf %47, %49 : vector<16x512xf32>
    %c0_32 = arith.constant 0 : index
    %c0_33 = arith.constant 0 : index
    %51 = vector.load %arg16[%c0_32, %c0_33] : memref<144x512xf32, #tpu.memory_space<vmem>>, vector<16x512xf32>
    tpu.vector_store %arg16[%c0_32, %c0_33], %50 {strides = array<i32>} : memref<144x512xf32, #tpu.memory_space<vmem>>, vector<16x512xf32>,
    %c16_i32 = arith.constant 16 : i32
    %52 = tpu.dynamic_rotate %44 by %c16_i32 dim 1 : vector<16x512xf32>, i32 -> vector<16x512xf32>
    %53 = vector.extract_strided_slice %3 {offsets = [1, 0], sizes = [1, 512], strides = [1, 1]} : vector<9x512xf32> to vector<1x512xf32>
    %54 = vector.broadcast %53 : vector<1x512xf32> to vector<16x512xf32>
    %55 = arith.mulf %52, %54 : vector<16x512xf32>
    %c16 = arith.constant 16 : index
    %c0_34 = arith.constant 0 : index
    %56 = vector.load %arg16[%c16, %c0_34] : memref<144x512xf32, #tpu.memory_space<vmem>>, vector<16x512xf32>
    tpu.vector_store %arg16[%c16, %c0_34], %55 {strides = array<i32>} : memref<144x512xf32, #tpu.memory_space<vmem>>, vector<16x512xf32>,
    %c15_i32 = arith.constant 15 : i32
    %57 = tpu.dynamic_rotate %44 by %c15_i32 dim 1 : vector<16x512xf32>, i32 -> vector<16x512xf32>
    %58 = vector.extract_strided_slice %3 {offsets = [2, 0], sizes = [1, 512], strides = [1, 1]} : vector<9x512xf32> to vector<1x512xf32>
    %59 = vector.broadcast %58 : vector<1x512xf32> to vector<16x512xf32>
    %60 = arith.mulf %57, %59 : vector<16x512xf32>
    %c32 = arith.constant 32 : index
    %c0_35 = arith.constant 0 : index
    %61 = vector.load %arg16[%c32, %c0_35] : memref<144x512xf32, #tpu.memory_space<vmem>>, vector<16x512xf32>
    tpu.vector_store %arg16[%c32, %c0_35], %60 {strides = array<i32>} : memref<144x512xf32, #tpu.memory_space<vmem>>, vector<16x512xf32>,
    %c1_i32 = arith.constant 1 : i32
    %62 = tpu.dynamic_rotate %44 by %c1_i32 dim 1 : vector<16x512xf32>, i32 -> vector<16x512xf32>
    %63 = vector.extract_strided_slice %3 {offsets = [3, 0], sizes = [1, 512], strides = [1, 1]} : vector<9x512xf32> to vector<1x512xf32>
    %64 = vector.broadcast %63 : vector<1x512xf32> to vector<16x512xf32>
    %65 = arith.mulf %62, %64 : vector<16x512xf32>
    %c48 = arith.constant 48 : index
    %c0_36 = arith.constant 0 : index
    %66 = vector.load %arg16[%c48, %c0_36] : memref<144x512xf32, #tpu.memory_space<vmem>>, vector<16x512xf32>
    tpu.vector_store %arg16[%c48, %c0_36], %65 {strides = array<i32>} : memref<144x512xf32, #tpu.memory_space<vmem>>, vector<16x512xf32>,
    %67 = vector.extract_strided_slice %3 {offsets = [4, 0], sizes = [1, 512], strides = [1, 1]} : vector<9x512xf32> to vector<1x512xf32>
    %68 = vector.broadcast %67 : vector<1x512xf32> to vector<16x512xf32>
    %69 = arith.mulf %44, %68 : vector<16x512xf32>
    %c64 = arith.constant 64 : index
    %c0_37 = arith.constant 0 : index
    %70 = vector.load %arg16[%c64, %c0_37] : memref<144x512xf32, #tpu.memory_space<vmem>>, vector<16x512xf32>
    tpu.vector_store %arg16[%c64, %c0_37], %69 {strides = array<i32>} : memref<144x512xf32, #tpu.memory_space<vmem>>, vector<16x512xf32>,
    %c511_i32 = arith.constant 511 : i32
    %71 = tpu.dynamic_rotate %44 by %c511_i32 dim 1 : vector<16x512xf32>, i32 -> vector<16x512xf32>
    %72 = vector.extract_strided_slice %3 {offsets = [5, 0], sizes = [1, 512], strides = [1, 1]} : vector<9x512xf32> to vector<1x512xf32>
    %73 = vector.broadcast %72 : vector<1x512xf32> to vector<16x512xf32>
    %74 = arith.mulf %71, %73 : vector<16x512xf32>
    %c80 = arith.constant 80 : index
    %c0_38 = arith.constant 0 : index
    %75 = vector.load %arg16[%c80, %c0_38] : memref<144x512xf32, #tpu.memory_space<vmem>>, vector<16x512xf32>
    tpu.vector_store %arg16[%c80, %c0_38], %74 {strides = array<i32>} : memref<144x512xf32, #tpu.memory_space<vmem>>, vector<16x512xf32>,
    %c497_i32 = arith.constant 497 : i32
    %76 = tpu.dynamic_rotate %44 by %c497_i32 dim 1 : vector<16x512xf32>, i32 -> vector<16x512xf32>
    %77 = vector.extract_strided_slice %3 {offsets = [6, 0], sizes = [1, 512], strides = [1, 1]} : vector<9x512xf32> to vector<1x512xf32>
    %78 = vector.broadcast %77 : vector<1x512xf32> to vector<16x512xf32>
    %79 = arith.mulf %76, %78 : vector<16x512xf32>
    %c96 = arith.constant 96 : index
    %c0_39 = arith.constant 0 : index
    %80 = vector.load %arg16[%c96, %c0_39] : memref<144x512xf32, #tpu.memory_space<vmem>>, vector<16x512xf32>
    tpu.vector_store %arg16[%c96, %c0_39], %79 {strides = array<i32>} : memref<144x512xf32, #tpu.memory_space<vmem>>, vector<16x512xf32>,
    %c496_i32 = arith.constant 496 : i32
    %81 = tpu.dynamic_rotate %44 by %c496_i32 dim 1 : vector<16x512xf32>, i32 -> vector<16x512xf32>
    %82 = vector.extract_strided_slice %3 {offsets = [7, 0], sizes = [1, 512], strides = [1, 1]} : vector<9x512xf32> to vector<1x512xf32>
    %83 = vector.broadcast %82 : vector<1x512xf32> to vector<16x512xf32>
    %84 = arith.mulf %81, %83 : vector<16x512xf32>
    %c112 = arith.constant 112 : index
    %c0_40 = arith.constant 0 : index
    %85 = vector.load %arg16[%c112, %c0_40] : memref<144x512xf32, #tpu.memory_space<vmem>>, vector<16x512xf32>
    tpu.vector_store %arg16[%c112, %c0_40], %84 {strides = array<i32>} : memref<144x512xf32, #tpu.memory_space<vmem>>, vector<16x512xf32>,
    %c495_i32 = arith.constant 495 : i32
    %86 = tpu.dynamic_rotate %44 by %c495_i32 dim 1 : vector<16x512xf32>, i32 -> vector<16x512xf32>
    %87 = vector.extract_strided_slice %3 {offsets = [8, 0], sizes = [1, 512], strides = [1, 1]} : vector<9x512xf32> to vector<1x512xf32>
    %88 = vector.broadcast %87 : vector<1x512xf32> to vector<16x512xf32>
    %89 = arith.mulf %86, %88 : vector<16x512xf32>
    %c128 = arith.constant 128 : index
    %c0_41 = arith.constant 0 : index
    %90 = vector.load %arg16[%c128, %c0_41] : memref<144x512xf32, #tpu.memory_space<vmem>>, vector<16x512xf32>
    tpu.vector_store %arg16[%c128, %c0_41], %89 {strides = array<i32>} : memref<144x512xf32, #tpu.memory_space<vmem>>, vector<16x512xf32>,
    %c0_42 = arith.constant 0 : index
    %c0_43 = arith.constant 0 : index
    %91 = vector.load %arg16[%c0_42, %c0_43] : memref<144x512xf32, #tpu.memory_space<vmem>>, vector<144x512xf32>
    %cst_44 = arith.constant dense<0.000000e+00> : vector<8x512xf32>
    %92 = tpu.matmul %45, %91, %cst_44 {dimension_numbers = #tpu.dot_dimension_numbers<[1], [0], [0], [1], [0, 0, 1, 1], [], []>, precision = #tpu.contract_precision<fp32>} : vector<8x144xf32>, vector<144x512xf32>, vector<8x512xf32> -> vector<8x512xf32>
    %93 = arith.addf %92, %46 : vector<8x512xf32>
    %cst_45 = arith.constant 0.000000e+00 : f32
    %94 = vector.broadcast %cst_45 : f32 to vector<8x512xf32>
    %95 = arith.maximumf %93, %94 : vector<8x512xf32>
    %c0_46 = arith.constant 0 : index
    %c0_47 = arith.constant 0 : index
    %96 = vector.load %arg13[%c0_46, %c0_47] : memref<8x72xf32, #tpu.memory_space<vmem>>, vector<8x72xf32>
    %c0_48 = arith.constant 0 : index
    %c0_49 = arith.constant 0 : index
    %97 = vector.load %arg14[%c0_48, %c0_49] : memref<8x512xf32, #tpu.memory_space<vmem>>, vector<8x512xf32>
    %c17_i32_50 = arith.constant 17 : i32
    %98 = tpu.dynamic_rotate %95 by %c17_i32_50 dim 1 : vector<8x512xf32>, i32 -> vector<8x512xf32>
    %99 = vector.extract_strided_slice %3 {offsets = [0, 0], sizes = [1, 512], strides = [1, 1]} : vector<9x512xf32> to vector<1x512xf32>
    %100 = vector.broadcast %99 : vector<1x512xf32> to vector<8x512xf32>
    %101 = arith.mulf %98, %100 : vector<8x512xf32>
    %c0_51 = arith.constant 0 : index
    %c0_52 = arith.constant 0 : index
    %102 = vector.load %arg17[%c0_51, %c0_52] : memref<72x512xf32, #tpu.memory_space<vmem>>, vector<8x512xf32>
    tpu.vector_store %arg17[%c0_51, %c0_52], %101 {strides = array<i32>} : memref<72x512xf32, #tpu.memory_space<vmem>>, vector<8x512xf32>,
    %c16_i32_53 = arith.constant 16 : i32
    %103 = tpu.dynamic_rotate %95 by %c16_i32_53 dim 1 : vector<8x512xf32>, i32 -> vector<8x512xf32>
    %104 = vector.extract_strided_slice %3 {offsets = [1, 0], sizes = [1, 512], strides = [1, 1]} : vector<9x512xf32> to vector<1x512xf32>
    %105 = vector.broadcast %104 : vector<1x512xf32> to vector<8x512xf32>
    %106 = arith.mulf %103, %105 : vector<8x512xf32>
    %c8 = arith.constant 8 : index
    %c0_54 = arith.constant 0 : index
    %107 = vector.load %arg17[%c8, %c0_54] : memref<72x512xf32, #tpu.memory_space<vmem>>, vector<8x512xf32>
    tpu.vector_store %arg17[%c8, %c0_54], %106 {strides = array<i32>} : memref<72x512xf32, #tpu.memory_space<vmem>>, vector<8x512xf32>,
    %c15_i32_55 = arith.constant 15 : i32
    %108 = tpu.dynamic_rotate %95 by %c15_i32_55 dim 1 : vector<8x512xf32>, i32 -> vector<8x512xf32>
    %109 = vector.extract_strided_slice %3 {offsets = [2, 0], sizes = [1, 512], strides = [1, 1]} : vector<9x512xf32> to vector<1x512xf32>
    %110 = vector.broadcast %109 : vector<1x512xf32> to vector<8x512xf32>
    %111 = arith.mulf %108, %110 : vector<8x512xf32>
    %c16_56 = arith.constant 16 : index
    %c0_57 = arith.constant 0 : index
    %112 = vector.load %arg17[%c16_56, %c0_57] : memref<72x512xf32, #tpu.memory_space<vmem>>, vector<8x512xf32>
    tpu.vector_store %arg17[%c16_56, %c0_57], %111 {strides = array<i32>} : memref<72x512xf32, #tpu.memory_space<vmem>>, vector<8x512xf32>,
    %c1_i32_58 = arith.constant 1 : i32
    %113 = tpu.dynamic_rotate %95 by %c1_i32_58 dim 1 : vector<8x512xf32>, i32 -> vector<8x512xf32>
    %114 = vector.extract_strided_slice %3 {offsets = [3, 0], sizes = [1, 512], strides = [1, 1]} : vector<9x512xf32> to vector<1x512xf32>
    %115 = vector.broadcast %114 : vector<1x512xf32> to vector<8x512xf32>
    %116 = arith.mulf %113, %115 : vector<8x512xf32>
    %c24 = arith.constant 24 : index
    %c0_59 = arith.constant 0 : index
    %117 = vector.load %arg17[%c24, %c0_59] : memref<72x512xf32, #tpu.memory_space<vmem>>, vector<8x512xf32>
    tpu.vector_store %arg17[%c24, %c0_59], %116 {strides = array<i32>} : memref<72x512xf32, #tpu.memory_space<vmem>>, vector<8x512xf32>,
    %118 = vector.extract_strided_slice %3 {offsets = [4, 0], sizes = [1, 512], strides = [1, 1]} : vector<9x512xf32> to vector<1x512xf32>
    %119 = vector.broadcast %118 : vector<1x512xf32> to vector<8x512xf32>
    %120 = arith.mulf %95, %119 : vector<8x512xf32>
    %c32_60 = arith.constant 32 : index
    %c0_61 = arith.constant 0 : index
    %121 = vector.load %arg17[%c32_60, %c0_61] : memref<72x512xf32, #tpu.memory_space<vmem>>, vector<8x512xf32>
    tpu.vector_store %arg17[%c32_60, %c0_61], %120 {strides = array<i32>} : memref<72x512xf32, #tpu.memory_space<vmem>>, vector<8x512xf32>,
    %c511_i32_62 = arith.constant 511 : i32
    %122 = tpu.dynamic_rotate %95 by %c511_i32_62 dim 1 : vector<8x512xf32>, i32 -> vector<8x512xf32>
    %123 = vector.extract_strided_slice %3 {offsets = [5, 0], sizes = [1, 512], strides = [1, 1]} : vector<9x512xf32> to vector<1x512xf32>
    %124 = vector.broadcast %123 : vector<1x512xf32> to vector<8x512xf32>
    %125 = arith.mulf %122, %124 : vector<8x512xf32>
    %c40 = arith.constant 40 : index
    %c0_63 = arith.constant 0 : index
    %126 = vector.load %arg17[%c40, %c0_63] : memref<72x512xf32, #tpu.memory_space<vmem>>, vector<8x512xf32>
    tpu.vector_store %arg17[%c40, %c0_63], %125 {strides = array<i32>} : memref<72x512xf32, #tpu.memory_space<vmem>>, vector<8x512xf32>,
    %c497_i32_64 = arith.constant 497 : i32
    %127 = tpu.dynamic_rotate %95 by %c497_i32_64 dim 1 : vector<8x512xf32>, i32 -> vector<8x512xf32>
    %128 = vector.extract_strided_slice %3 {offsets = [6, 0], sizes = [1, 512], strides = [1, 1]} : vector<9x512xf32> to vector<1x512xf32>
    %129 = vector.broadcast %128 : vector<1x512xf32> to vector<8x512xf32>
    %130 = arith.mulf %127, %129 : vector<8x512xf32>
    %c48_65 = arith.constant 48 : index
    %c0_66 = arith.constant 0 : index
    %131 = vector.load %arg17[%c48_65, %c0_66] : memref<72x512xf32, #tpu.memory_space<vmem>>, vector<8x512xf32>
    tpu.vector_store %arg17[%c48_65, %c0_66], %130 {strides = array<i32>} : memref<72x512xf32, #tpu.memory_space<vmem>>, vector<8x512xf32>,
    %c496_i32_67 = arith.constant 496 : i32
    %132 = tpu.dynamic_rotate %95 by %c496_i32_67 dim 1 : vector<8x512xf32>, i32 -> vector<8x512xf32>
    %133 = vector.extract_strided_slice %3 {offsets = [7, 0], sizes = [1, 512], strides = [1, 1]} : vector<9x512xf32> to vector<1x512xf32>
    %134 = vector.broadcast %133 : vector<1x512xf32> to vector<8x512xf32>
    %135 = arith.mulf %132, %134 : vector<8x512xf32>
    %c56 = arith.constant 56 : index
    %c0_68 = arith.constant 0 : index
    %136 = vector.load %arg17[%c56, %c0_68] : memref<72x512xf32, #tpu.memory_space<vmem>>, vector<8x512xf32>
    tpu.vector_store %arg17[%c56, %c0_68], %135 {strides = array<i32>} : memref<72x512xf32, #tpu.memory_space<vmem>>, vector<8x512xf32>,
    %c495_i32_69 = arith.constant 495 : i32
    %137 = tpu.dynamic_rotate %95 by %c495_i32_69 dim 1 : vector<8x512xf32>, i32 -> vector<8x512xf32>
    %138 = vector.extract_strided_slice %3 {offsets = [8, 0], sizes = [1, 512], strides = [1, 1]} : vector<9x512xf32> to vector<1x512xf32>
    %139 = vector.broadcast %138 : vector<1x512xf32> to vector<8x512xf32>
    %140 = arith.mulf %137, %139 : vector<8x512xf32>
    %c64_70 = arith.constant 64 : index
    %c0_71 = arith.constant 0 : index
    %141 = vector.load %arg17[%c64_70, %c0_71] : memref<72x512xf32, #tpu.memory_space<vmem>>, vector<8x512xf32>
    tpu.vector_store %arg17[%c64_70, %c0_71], %140 {strides = array<i32>} : memref<72x512xf32, #tpu.memory_space<vmem>>, vector<8x512xf32>,
    %c0_72 = arith.constant 0 : index
    %c0_73 = arith.constant 0 : index
    %142 = vector.load %arg17[%c0_72, %c0_73] : memref<72x512xf32, #tpu.memory_space<vmem>>, vector<72x512xf32>
    %cst_74 = arith.constant dense<0.000000e+00> : vector<8x512xf32>
    %143 = tpu.matmul %96, %142, %cst_74 {dimension_numbers = #tpu.dot_dimension_numbers<[1], [0], [0], [1], [0, 0, 1, 1], [], []>, precision = #tpu.contract_precision<fp32>} : vector<8x72xf32>, vector<72x512xf32>, vector<8x512xf32> -> vector<8x512xf32>
    %144 = arith.addf %143, %97 : vector<8x512xf32>
    %cst_75 = arith.constant 0.000000e+00 : f32
    %145 = vector.broadcast %cst_75 : f32 to vector<8x512xf32>
    %146 = arith.maximumf %144, %145 : vector<8x512xf32>
    %c0_76 = arith.constant 0 : index
    %c0_77 = arith.constant 0 : index
    %c0_78 = arith.constant 0 : index
    %147 = vector.load %arg15[%c0_76, %c0_77, %c0_78] : memref<1x8x512xf32, #tpu.memory_space<vmem>>, vector<1x8x512xf32>
    %148 = vector.shape_cast %147 : vector<1x8x512xf32> to vector<8x512xf32>
    %149 = vector.shape_cast %146 : vector<8x512xf32> to vector<1x8x512xf32>
    tpu.vector_store %arg15[%c0_76, %c0_77, %c0_78], %149 {strides = array<i32>} : memref<1x8x512xf32, #tpu.memory_space<vmem>>, vector<1x8x512xf32>,
    return
  }
  func.func @transform_0(%arg0: i32) -> (i32, i32, i32) {
    %c0_i32 = arith.constant 0 : i32
    %c0_i32_0 = arith.constant 0 : i32
    %c0_i32_1 = arith.constant 0 : i32
    return %arg0, %c0_i32, %c0_i32_0 : i32, i32, i32
  }
  func.func @transform_1(%arg0: i32) -> (i32, i32, i32) {
    %c0_i32 = arith.constant 0 : i32
    %c0_i32_0 = arith.constant 0 : i32
    %c0_i32_1 = arith.constant 0 : i32
    return %arg0, %c0_i32, %c0_i32_0 : i32, i32, i32
  }
  func.func @transform_2(%arg0: i32) -> (i32, i32) {
    %c0_i32 = arith.constant 0 : i32
    %c0_i32_0 = arith.constant 0 : i32
    %c0_i32_1 = arith.constant 0 : i32
    return %c0_i32, %c0_i32_0 : i32, i32
  }
  func.func @transform_3(%arg0: i32) -> (i32, i32) {
    %c0_i32 = arith.constant 0 : i32
    %c0_i32_0 = arith.constant 0 : i32
    %c0_i32_1 = arith.constant 0 : i32
    return %c0_i32, %c0_i32_0 : i32, i32
  }
  func.func @transform_4(%arg0: i32) -> (i32, i32) {
    %c0_i32 = arith.constant 0 : i32
    %c0_i32_0 = arith.constant 0 : i32
    %c0_i32_1 = arith.constant 0 : i32
    return %c0_i32, %c0_i32_0 : i32, i32
  }
  func.func @transform_5(%arg0: i32) -> (i32, i32) {
    %c0_i32 = arith.constant 0 : i32
    %c0_i32_0 = arith.constant 0 : i32
    %c0_i32_1 = arith.constant 0 : i32
    return %c0_i32, %c0_i32_0 : i32, i32
  }
  func.func @transform_6(%arg0: i32) -> (i32, i32) {
    %c0_i32 = arith.constant 0 : i32
    %c0_i32_0 = arith.constant 0 : i32
    %c0_i32_1 = arith.constant 0 : i32
    return %c0_i32, %c0_i32_0 : i32, i32
  }
  func.func @transform_7(%arg0: i32) -> (i32, i32) {
    %c0_i32 = arith.constant 0 : i32
    %c0_i32_0 = arith.constant 0 : i32
    %c0_i32_1 = arith.constant 0 : i32
    return %c0_i32, %c0_i32_0 : i32, i32
  }
  func.func @transform_8(%arg0: i32) -> (i32, i32) {
    %c0_i32 = arith.constant 0 : i32
    %c0_i32_0 = arith.constant 0 : i32
    %c0_i32_1 = arith.constant 0 : i32
    return %c0_i32, %c0_i32_0 : i32, i32
  }
  func.func @transform_9(%arg0: i32) -> (i32, i32) {
    %c0_i32 = arith.constant 0 : i32
    %c0_i32_0 = arith.constant 0 : i32
    %c0_i32_1 = arith.constant 0 : i32
    return %c0_i32, %c0_i32_0 : i32, i32
  }
  func.func @transform_10(%arg0: i32) -> (i32, i32) {
    %c0_i32 = arith.constant 0 : i32
    %c0_i32_0 = arith.constant 0 : i32
    %c0_i32_1 = arith.constant 0 : i32
    return %c0_i32, %c0_i32_0 : i32, i32
  }
  func.func @transform_11(%arg0: i32) -> (i32, i32) {
    %c0_i32 = arith.constant 0 : i32
    %c0_i32_0 = arith.constant 0 : i32
    %c0_i32_1 = arith.constant 0 : i32
    return %c0_i32, %c0_i32_0 : i32, i32
  }
  func.func @transform_12(%arg0: i32) -> (i32, i32) {
    %c0_i32 = arith.constant 0 : i32
    %c0_i32_0 = arith.constant 0 : i32
    %c0_i32_1 = arith.constant 0 : i32
    return %c0_i32, %c0_i32_0 : i32, i32
  }
  func.func @transform_13(%arg0: i32) -> (i32, i32) {
    %c0_i32 = arith.constant 0 : i32
    %c0_i32_0 = arith.constant 0 : i32
    %c0_i32_1 = arith.constant 0 : i32
    return %c0_i32, %c0_i32_0 : i32, i32
  }
  func.func @transform_14(%arg0: i32) -> (i32, i32, i32) {
    %c0_i32 = arith.constant 0 : i32
    %c0_i32_0 = arith.constant 0 : i32
    %c0_i32_1 = arith.constant 0 : i32
    return %arg0, %c0_i32, %c0_i32_0 : i32, i32, i32
  }
}

</mosaic_0001>

<llo_original>
// kernel: tpu_custom_call.1
$region0: #{tpu_custom_call.1}
  #allocation0 [shape = 'u32[]', space=smem, size = 0x4, offset = 0x4, fixed_abs, tag = 'smem constant byte address 0x4 - core index']
  #allocation1 [shape = 'u32[144,128]{1,0:T(1,128)}', space=vmem, size = 0x12000, scoped, tag = 'internal scratch']
  #allocation2 [shape = 'f32[144,512]{1,0:T(8,128)}', space=vmem, size = 0x48000, scoped, tag = 'scratch operand']
  #allocation3 [shape = 'f32[72,512]{1,0:T(8,128)}', space=vmem, size = 0x24000, scoped, tag = 'scratch operand']
  %s0 = inlined_call_operand.vmem [shape: f32[1,8,512], index: 0, kind: input, shape index: {}]
  %s1 = inlined_call_operand.vmem [shape: f32[1,8,512], index: 1, kind: input, shape index: {}]
  %s2 = inlined_call_operand.vmem [shape: f32[512,64], index: 2, kind: input, shape index: {}]
  %s3 = inlined_call_operand.vmem [shape: f32[64,512], index: 3, kind: input, shape index: {}]
  %s4 = inlined_call_operand.vmem [shape: f32[3,64], index: 4, kind: input, shape index: {}]
  %s5 = inlined_call_operand.vmem [shape: f32[9,512], index: 5, kind: input, shape index: {}]
  %s6 = inlined_call_operand.vmem [shape: f32[8,24], index: 6, kind: input, shape index: {}]
  %s7 = inlined_call_operand.vmem [shape: f32[8,64], index: 7, kind: input, shape index: {}]
  %s8 = inlined_call_operand.vmem [shape: f32[8,24], index: 8, kind: input, shape index: {}]
  %s9 = inlined_call_operand.vmem [shape: f32[8,64], index: 9, kind: input, shape index: {}]
  %s10 = inlined_call_operand.vmem [shape: f32[8,144], index: 10, kind: input, shape index: {}]
  %s11 = inlined_call_operand.vmem [shape: f32[8,512], index: 11, kind: input, shape index: {}]
  %s12 = inlined_call_operand.vmem [shape: f32[8,72], index: 12, kind: input, shape index: {}]
  %s13 = inlined_call_operand.vmem [shape: f32[8,512], index: 13, kind: input, shape index: {}]
  %s14 = inlined_call_operand.hbm [shape: f32[1,8,512], index: 14, kind: output, shape index: {}]
  %s15 = sld [smem:[#allocation0]]
  $region66: #{tpu_custom_call.1} parent=0
    _
  %s17 = ssub.s32 1, %s15
  %s18 = scalar_select 0, %s17, %s15
  $region1: #{tpu_custom_call.1} parent=0
    #allocation4 [shape = 'u8[16384]{0}', space=vmem, size = 0x4000, scoped, tag = 'output window, operand 0, single buffered']
    #allocation5 [shape = 's32[1]{0}', space=sflag, size = 0x4, scoped, tag = 'scoped memory for tpu_custom_call.1']
    %19 = vsyncpa [#allocation5], 0
    // Predicated region
    $region2: #{tpu_custom_call.1} parent=1 // pred_check
      _
    $region3: #{tpu_custom_call.1} parent=1 // pred_check_branch
      %21 = sbr.rel (0) target = $region5
    $region4: #{tpu_custom_call.1} parent=1 // pred_region
      _
    $region5: #{tpu_custom_call.1} parent=1 // pred_fallthru
      _
    // Predicated region
    $region6: #{tpu_custom_call.1} parent=1 // pred_check
      _
    $region7: #{tpu_custom_call.1} parent=1 // pred_check_branch
      %23 = sbr.rel (0) target = $region9
    $region8: #{tpu_custom_call.1} parent=1 // pred_region
      _
    $region9: #{tpu_custom_call.1} parent=1 // pred_fallthru
      _
    // Predicated region
    $region10: #{tpu_custom_call.1} parent=1 // pred_check
      _
    $region11: #{tpu_custom_call.1} parent=1 // pred_check_branch
      %25 = sbr.rel (0) target = $region13
    $region12: #{tpu_custom_call.1} parent=1 // pred_region
      _
    $region13: #{tpu_custom_call.1} parent=1 // pred_fallthru
      _
    // Predicated region
    $region14: #{tpu_custom_call.1} parent=1 // pred_check
      _
    $region15: #{tpu_custom_call.1} parent=1 // pred_check_branch
      %27 = sbr.rel (0) target = $region17
    $region16: #{tpu_custom_call.1} parent=1 // pred_region
      _
    $region17: #{tpu_custom_call.1} parent=1 // pred_fallthru
      _
    // Predicated region
    $region18: #{tpu_custom_call.1} parent=1 // pred_check
      _
    $region19: #{tpu_custom_call.1} parent=1 // pred_check_branch
      %29 = sbr.rel (0) target = $region21
    $region20: #{tpu_custom_call.1} parent=1 // pred_region
      _
    $region21: #{tpu_custom_call.1} parent=1 // pred_fallthru
      _
    // Predicated region
    $region22: #{tpu_custom_call.1} parent=1 // pred_check
      _
    $region23: #{tpu_custom_call.1} parent=1 // pred_check_branch
      %31 = sbr.rel (0) target = $region25
    $region24: #{tpu_custom_call.1} parent=1 // pred_region
      _
    $region25: #{tpu_custom_call.1} parent=1 // pred_fallthru
      _
    // Predicated region
    $region26: #{tpu_custom_call.1} parent=1 // pred_check
      _
    $region27: #{tpu_custom_call.1} parent=1 // pred_check_branch
      %33 = sbr.rel (0) target = $region29
    $region28: #{tpu_custom_call.1} parent=1 // pred_region
      _
    $region29: #{tpu_custom_call.1} parent=1 // pred_fallthru
      _
    // Predicated region
    $region30: #{tpu_custom_call.1} parent=1 // pred_check
      _
    $region31: #{tpu_custom_call.1} parent=1 // pred_check_branch
      %35 = sbr.rel (0) target = $region33
    $region32: #{tpu_custom_call.1} parent=1 // pred_region
      _
    $region33: #{tpu_custom_call.1} parent=1 // pred_fallthru
      _
    // Predicated region
    $region34: #{tpu_custom_call.1} parent=1 // pred_check
      _
    $region35: #{tpu_custom_call.1} parent=1 // pred_check_branch
      %37 = sbr.rel (0) target = $region37
    $region36: #{tpu_custom_call.1} parent=1 // pred_region
      _
    $region37: #{tpu_custom_call.1} parent=1 // pred_fallthru
      _
    // Predicated region
    $region38: #{tpu_custom_call.1} parent=1 // pred_check
      _
    $region39: #{tpu_custom_call.1} parent=1 // pred_check_branch
      %39 = sbr.rel (0) target = $region41
    $region40: #{tpu_custom_call.1} parent=1 // pred_region
      _
    $region41: #{tpu_custom_call.1} parent=1 // pred_fallthru
      _
    // Predicated region
    $region42: #{tpu_custom_call.1} parent=1 // pred_check
      _
    $region43: #{tpu_custom_call.1} parent=1 // pred_check_branch
      %41 = sbr.rel (0) target = $region45
    $region44: #{tpu_custom_call.1} parent=1 // pred_region
      _
    $region45: #{tpu_custom_call.1} parent=1 // pred_fallthru
      _
    // Predicated region
    $region46: #{tpu_custom_call.1} parent=1 // pred_check
      _
    $region47: #{tpu_custom_call.1} parent=1 // pred_check_branch
      %43 = sbr.rel (0) target = $region49
    $region48: #{tpu_custom_call.1} parent=1 // pred_region
      _
    $region49: #{tpu_custom_call.1} parent=1 // pred_fallthru
      _
    // Predicated region
    $region50: #{tpu_custom_call.1} parent=1 // pred_check
      _
    $region51: #{tpu_custom_call.1} parent=1 // pred_check_branch
      %45 = sbr.rel (0) target = $region53
    $region52: #{tpu_custom_call.1} parent=1 // pred_region
      _
    $region53: #{tpu_custom_call.1} parent=1 // pred_fallthru
      _
    // Predicated region
    $region54: #{tpu_custom_call.1} parent=1 // pred_check
      _
    $region55: #{tpu_custom_call.1} parent=1 // pred_check_branch
      %47 = sbr.rel (0) target = $region57
    $region56: #{tpu_custom_call.1} parent=1 // pred_region
      _
    $region57: #{tpu_custom_call.1} parent=1 // pred_fallthru
      _
    %v48 = vld [vmem:[%s2] sm:$0xff]
    %v49 = vld [vmem:[%s2 + $0x8] sm:$0xff]
    %v50 = vld [vmem:[%s2 + $0x10] sm:$0xff]
    %v51 = vld [vmem:[%s2 + $0x18] sm:$0xff]
    %v52 = vld [vmem:[%s2 + $0x20] sm:$0xff]
    %v53 = vld [vmem:[%s2 + $0x28] sm:$0xff]
    %v54 = vld [vmem:[%s2 + $0x30] sm:$0xff]
    %v55 = vld [vmem:[%s2 + $0x38] sm:$0xff]
    %v56 = vld [vmem:[%s2 + $0x40] sm:$0xff]
    %v57 = vld [vmem:[%s2 + $0x48] sm:$0xff]
    %v58 = vld [vmem:[%s2 + $0x50] sm:$0xff]
    %v59 = vld [vmem:[%s2 + $0x58] sm:$0xff]
    %v60 = vld [vmem:[%s2 + $0x60] sm:$0xff]
    %v61 = vld [vmem:[%s2 + $0x68] sm:$0xff]
    %v62 = vld [vmem:[%s2 + $0x70] sm:$0xff]
    %v63 = vld [vmem:[%s2 + $0x78] sm:$0xff]
    %v64 = vld [vmem:[%s2 + $0x80] sm:$0xff]
    %v65 = vld [vmem:[%s2 + $0x88] sm:$0xff]
    %v66 = vld [vmem:[%s2 + $0x90] sm:$0xff]
    %v67 = vld [vmem:[%s2 + $0x98] sm:$0xff]
    %v68 = vld [vmem:[%s2 + $0xa0] sm:$0xff]
    %v69 = vld [vmem:[%s2 + $0xa8] sm:$0xff]
    %v70 = vld [vmem:[%s2 + $0xb0] sm:$0xff]
    %v71 = vld [vmem:[%s2 + $0xb8] sm:$0xff]
    %v72 = vld [vmem:[%s2 + $0xc0] sm:$0xff]
    %v73 = vld [vmem:[%s2 + $0xc8] sm:$0xff]
    %v74 = vld [vmem:[%s2 + $0xd0] sm:$0xff]
    %v75 = vld [vmem:[%s2 + $0xd8] sm:$0xff]
    %v76 = vld [vmem:[%s2 + $0xe0] sm:$0xff]
    %v77 = vld [vmem:[%s2 + $0xe8] sm:$0xff]
    %v78 = vld [vmem:[%s2 + $0xf0] sm:$0xff]
    %v79 = vld [vmem:[%s2 + $0xf8] sm:$0xff]
    %v80 = vld [vmem:[%s2 + $0x100] sm:$0xff]
    %v81 = vld [vmem:[%s2 + $0x108] sm:$0xff]
    %v82 = vld [vmem:[%s2 + $0x110] sm:$0xff]
    %v83 = vld [vmem:[%s2 + $0x118] sm:$0xff]
    %v84 = vld [vmem:[%s2 + $0x120] sm:$0xff]
    %v85 = vld [vmem:[%s2 + $0x128] sm:$0xff]
    %v86 = vld [vmem:[%s2 + $0x130] sm:$0xff]
    %v87 = vld [vmem:[%s2 + $0x138] sm:$0xff]
    %v88 = vld [vmem:[%s2 + $0x140] sm:$0xff]
    %v89 = vld [vmem:[%s2 + $0x148] sm:$0xff]
    %v90 = vld [vmem:[%s2 + $0x150] sm:$0xff]
    %v91 = vld [vmem:[%s2 + $0x158] sm:$0xff]
    %v92 = vld [vmem:[%s2 + $0x160] sm:$0xff]
    %v93 = vld [vmem:[%s2 + $0x168] sm:$0xff]
    %v94 = vld [vmem:[%s2 + $0x170] sm:$0xff]
    %v95 = vld [vmem:[%s2 + $0x178] sm:$0xff]
    %v96 = vld [vmem:[%s2 + $0x180] sm:$0xff]
    %v97 = vld [vmem:[%s2 + $0x188] sm:$0xff]
    %v98 = vld [vmem:[%s2 + $0x190] sm:$0xff]
    %v99 = vld [vmem:[%s2 + $0x198] sm:$0xff]
    %v100 = vld [vmem:[%s2 + $0x1a0] sm:$0xff]
    %v101 = vld [vmem:[%s2 + $0x1a8] sm:$0xff]
    %v102 = vld [vmem:[%s2 + $0x1b0] sm:$0xff]
    %v103 = vld [vmem:[%s2 + $0x1b8] sm:$0xff]
    %v104 = vld [vmem:[%s2 + $0x1c0] sm:$0xff]
    %v105 = vld [vmem:[%s2 + $0x1c8] sm:$0xff]
    %v106 = vld [vmem:[%s2 + $0x1d0] sm:$0xff]
    %v107 = vld [vmem:[%s2 + $0x1d8] sm:$0xff]
    %v108 = vld [vmem:[%s2 + $0x1e0] sm:$0xff]
    %v109 = vld [vmem:[%s2 + $0x1e8] sm:$0xff]
    %v110 = vld [vmem:[%s2 + $0x1f0] sm:$0xff]
    %v111 = vld [vmem:[%s2 + $0x1f8] sm:$0xff]
    %v112 = vld [vmem:[%s3] sm:$0xff]
    %v113 = vld [vmem:[%s3 + $0x8] sm:$0xff]
    %v114 = vld [vmem:[%s3 + $0x10] sm:$0xff]
    %v115 = vld [vmem:[%s3 + $0x18] sm:$0xff]
    %v116 = vld [vmem:[%s3 + $0x20] sm:$0xff]
    %v117 = vld [vmem:[%s3 + $0x28] sm:$0xff]
    %v118 = vld [vmem:[%s3 + $0x30] sm:$0xff]
    %v119 = vld [vmem:[%s3 + $0x38] sm:$0xff]
    %v120 = vld [vmem:[%s3 + $0x40] sm:$0xff]
    %v121 = vld [vmem:[%s3 + $0x48] sm:$0xff]
    %v122 = vld [vmem:[%s3 + $0x50] sm:$0xff]
    %v123 = vld [vmem:[%s3 + $0x58] sm:$0xff]
    %v124 = vld [vmem:[%s3 + $0x60] sm:$0xff]
    %v125 = vld [vmem:[%s3 + $0x68] sm:$0xff]
    %v126 = vld [vmem:[%s3 + $0x70] sm:$0xff]
    %v127 = vld [vmem:[%s3 + $0x78] sm:$0xff]
    %v128 = vld [vmem:[%s3 + $0x80] sm:$0xff]
    %v129 = vld [vmem:[%s3 + $0x88] sm:$0xff]
    %v130 = vld [vmem:[%s3 + $0x90] sm:$0xff]
    %v131 = vld [vmem:[%s3 + $0x98] sm:$0xff]
    %v132 = vld [vmem:[%s3 + $0xa0] sm:$0xff]
    %v133 = vld [vmem:[%s3 + $0xa8] sm:$0xff]
    %v134 = vld [vmem:[%s3 + $0xb0] sm:$0xff]
    %v135 = vld [vmem:[%s3 + $0xb8] sm:$0xff]
    %v136 = vld [vmem:[%s3 + $0xc0] sm:$0xff]
    %v137 = vld [vmem:[%s3 + $0xc8] sm:$0xff]
    %v138 = vld [vmem:[%s3 + $0xd0] sm:$0xff]
    %v139 = vld [vmem:[%s3 + $0xd8] sm:$0xff]
    %v140 = vld [vmem:[%s3 + $0xe0] sm:$0xff]
    %v141 = vld [vmem:[%s3 + $0xe8] sm:$0xff]
    %v142 = vld [vmem:[%s3 + $0xf0] sm:$0xff]
    %v143 = vld [vmem:[%s3 + $0xf8] sm:$0xff]
    %v144 = vld [vmem:[%s4] sm:$0x7]
    %v145 = vld [vmem:[%s5] sm:$0xff]
    %v146 = vld [vmem:[%s5 + $0x8] sm:$0xff]
    %v147 = vld [vmem:[%s5 + $0x10] sm:$0xff]
    %v148 = vld [vmem:[%s5 + $0x18] sm:$0xff]
    %v149 = vld [vmem:[%s5 + $0x20] sm:$0x1]
    %v150 = vld [vmem:[%s5 + $0x28] sm:$0x1]
    %v151 = vld [vmem:[%s5 + $0x30] sm:$0x1]
    %v152 = vld [vmem:[%s5 + $0x38] sm:$0x1]
    %v153 = vld [vmem:[%s0] sm:$0xff]
    %v154 = vld [vmem:[%s0 + $0x8] sm:$0xff]
    %v155 = vld [vmem:[%s0 + $0x10] sm:$0xff]
    %v156 = vld [vmem:[%s0 + $0x18] sm:$0xff]
    %v157 = vld [vmem:[%s6] sm:$0xff]
    %v158 = vld [vmem:[%s7] sm:$0xff]
    %159 = vmatprep.subr.mxu0 0.0
    %v160 = vand.u32 %v48, 4294901760
    %161 = vmatpush1.msra.mxu0 %v160
    %162 = vmatprep.subr.mxu0 0.0
    %v163 = vand.u32 %v49, 4294901760
    %164 = vmatpush1.msra.mxu0 %v163
    %165 = vmatprep.subr.mxu0 0.0
    %v166 = vand.u32 %v50, 4294901760
    %167 = vmatpush1.msra.mxu0 %v166
    %168 = vmatprep.subr.mxu0 0.0
    %v169 = vand.u32 %v51, 4294901760
    %170 = vmatpush1.msra.mxu0 %v169
    %171 = vmatprep.subr.mxu0 0.0
    %v172 = vand.u32 %v52, 4294901760
    %173 = vmatpush1.msra.mxu0 %v172
    %174 = vmatprep.subr.mxu0 0.0
    %v175 = vand.u32 %v53, 4294901760
    %176 = vmatpush1.msra.mxu0 %v175
    %177 = vmatprep.subr.mxu0 0.0
    %v178 = vand.u32 %v54, 4294901760
    %179 = vmatpush1.msra.mxu0 %v178
    %180 = vmatprep.subr.mxu0 0.0
    %v181 = vand.u32 %v55, 4294901760
    %182 = vmatpush1.msra.mxu0 %v181
    %183 = vmatprep.subr.mxu0 0.0
    %v184 = vand.u32 %v56, 4294901760
    %185 = vmatpush1.msra.mxu0 %v184
    %186 = vmatprep.subr.mxu0 0.0
    %v187 = vand.u32 %v57, 4294901760
    %188 = vmatpush1.msra.mxu0 %v187
    %189 = vmatprep.subr.mxu0 0.0
    %v190 = vand.u32 %v58, 4294901760
    %191 = vmatpush1.msra.mxu0 %v190
    %192 = vmatprep.subr.mxu0 0.0
    %v193 = vand.u32 %v59, 4294901760
    %194 = vmatpush1.msra.mxu0 %v193
    %195 = vmatprep.subr.mxu0 0.0
    %v196 = vand.u32 %v60, 4294901760
    %197 = vmatpush1.msra.mxu0 %v196
    %198 = vmatprep.subr.mxu0 0.0
    %v199 = vand.u32 %v61, 4294901760
    %200 = vmatpush1.msra.mxu0 %v199
    %201 = vmatprep.subr.mxu0 0.0
    %v202 = vand.u32 %v62, 4294901760
    %203 = vmatpush1.msra.mxu0 %v202
    %204 = vmatprep.subr.mxu0 0.0
    %v205 = vand.u32 %v63, 4294901760
    %206 = vmatpush1.msra.mxu0 %v205
    %207 = vmatprep.subr.mxu0 0.0
    %v208 = vand.u32 %v64, 4294901760
    %209 = vmatpush1.msra.mxu0 %v208
    %210 = vmatprep.subr.mxu0 0.0
    %v211 = vand.u32 %v65, 4294901760
    %212 = vmatpush1.msra.mxu0 %v211
    %213 = vmatprep.subr.mxu0 0.0
    %v214 = vand.u32 %v66, 4294901760
    %215 = vmatpush1.msra.mxu0 %v214
    %216 = vmatprep.subr.mxu0 0.0
    %v217 = vand.u32 %v67, 4294901760
    %218 = vmatpush1.msra.mxu0 %v217
    %219 = vmatprep.subr.mxu0 0.0
    %v220 = vand.u32 %v68, 4294901760
    %221 = vmatpush1.msra.mxu0 %v220
    %222 = vmatprep.subr.mxu0 0.0
    %v223 = vand.u32 %v69, 4294901760
    %224 = vmatpush1.msra.mxu0 %v223
    %225 = vmatprep.subr.mxu0 0.0
    %v226 = vand.u32 %v70, 4294901760
    %227 = vmatpush1.msra.mxu0 %v226
    %228 = vmatprep.subr.mxu0 0.0
    %v229 = vand.u32 %v71, 4294901760
    %230 = vmatpush1.msra.mxu0 %v229
    %231 = vmatprep.subr.mxu0 0.0
    %v232 = vand.u32 %v72, 4294901760
    %233 = vmatpush1.msra.mxu0 %v232
    %234 = vmatprep.subr.mxu0 0.0
    %v235 = vand.u32 %v73, 4294901760
    %236 = vmatpush1.msra.mxu0 %v235
    %237 = vmatprep.subr.mxu0 0.0
    %v238 = vand.u32 %v74, 4294901760
    %239 = vmatpush1.msra.mxu0 %v238
    %240 = vmatprep.subr.mxu0 0.0
    %v241 = vand.u32 %v75, 4294901760
    %242 = vmatpush1.msra.mxu0 %v241
    %243 = vmatprep.subr.mxu0 0.0
    %v244 = vand.u32 %v76, 4294901760
    %245 = vmatpush1.msra.mxu0 %v244
    %246 = vmatprep.subr.mxu0 0.0
    %v247 = vand.u32 %v77, 4294901760
    %248 = vmatpush1.msra.mxu0 %v247
    %249 = vmatprep.subr.mxu0 0.0
    %v250 = vand.u32 %v78, 4294901760
    %251 = vmatpush1.msra.mxu0 %v250
    %252 = vmatprep.subr.mxu0 0.0
    %v253 = vand.u32 %v79, 4294901760
    %254 = vmatpush1.msra.mxu0 %v253
    %v255 = vand.u32 %v154, 4294901760
    %v256 = vsub.f32 %v154, %v255
    %v257 = vand.u32 %v256, 4294901760
    %v258 = vsub.f32 %v256, %v257
    %v259 = vand.u32 %v258, 4294901760
    %260 = vmatprep.mubr.f32.mxu0 %v259
    %v261 = vand.u32 %v153, 4294901760
    %v262 = vsub.f32 %v153, %v261
    %v263 = vand.u32 %v262, 4294901760
    %v264 = vsub.f32 %v262, %v263
    %v265 = vand.u32 %v264, 4294901760
    %266 = vmatmul.mubr.f32.gmra.mrb[0].mxu0 %v265
    %v267 = vpop.f32.mrb[0].mxu0
    %v268 = vadd.f32 0.0, %v267
    %v269 = vpop.f32.mrb[0].mxu0
    %270 = vdwg.mxu0
    %271 = vmatprep.subr.mxu0 0.0
    %v272 = vand.u32 %v48, 4294901760
    %v273 = vsub.f32 %v48, %v272
    %v274 = vand.u32 %v273, 4294901760
    %v275 = vsub.f32 %v273, %v274
    %v276 = vand.u32 %v275, 4294901760
    %277 = vmatpush1.msra.mxu0 %v276
    %278 = vmatprep.subr.mxu0 0.0
    %v279 = vand.u32 %v49, 4294901760
    %v280 = vsub.f32 %v49, %v279
    %v281 = vand.u32 %v280, 4294901760
    %v282 = vsub.f32 %v280, %v281
    %v283 = vand.u32 %v282, 4294901760
    %284 = vmatpush1.msra.mxu0 %v283
    %285 = vmatprep.subr.mxu0 0.0
    %v286 = vand.u32 %v50, 4294901760
    %v287 = vsub.f32 %v50, %v286
    %v288 = vand.u32 %v287, 4294901760
    %v289 = vsub.f32 %v287, %v288
    %v290 = vand.u32 %v289, 4294901760
    %291 = vmatpush1.msra.mxu0 %v290
    %292 = vmatprep.subr.mxu0 0.0
    %v293 = vand.u32 %v51, 4294901760
    %v294 = vsub.f32 %v51, %v293
    %v295 = vand.u32 %v294, 4294901760
    %v296 = vsub.f32 %v294, %v295
    %v297 = vand.u32 %v296, 4294901760
    %298 = vmatpush1.msra.mxu0 %v297
    %299 = vmatprep.subr.mxu0 0.0
    %v300 = vand.u32 %v52, 4294901760
    %v301 = vsub.f32 %v52, %v300
    %v302 = vand.u32 %v301, 4294901760
    %v303 = vsub.f32 %v301, %v302
    %v304 = vand.u32 %v303, 4294901760
    %305 = vmatpush1.msra.mxu0 %v304
    %306 = vmatprep.subr.mxu0 0.0
    %v307 = vand.u32 %v53, 4294901760
    %v308 = vsub.f32 %v53, %v307
    %v309 = vand.u32 %v308, 4294901760
    %v310 = vsub.f32 %v308, %v309
    %v311 = vand.u32 %v310, 4294901760
    %312 = vmatpush1.msra.mxu0 %v311
    %313 = vmatprep.subr.mxu0 0.0
    %v314 = vand.u32 %v54, 4294901760
    %v315 = vsub.f32 %v54, %v314
    %v316 = vand.u32 %v315, 4294901760
    %v317 = vsub.f32 %v315, %v316
    %v318 = vand.u32 %v317, 4294901760
    %319 = vmatpush1.msra.mxu0 %v318
    %320 = vmatprep.subr.mxu0 0.0
    %v321 = vand.u32 %v55, 4294901760
    %v322 = vsub.f32 %v55, %v321
    %v323 = vand.u32 %v322, 4294901760
    %v324 = vsub.f32 %v322, %v323
    %v325 = vand.u32 %v324, 4294901760
    %326 = vmatpush1.msra.mxu0 %v325
    %327 = vmatprep.subr.mxu0 0.0
    %v328 = vand.u32 %v56, 4294901760
    %v329 = vsub.f32 %v56, %v328
    %v330 = vand.u32 %v329, 4294901760
    %v331 = vsub.f32 %v329, %v330
    %v332 = vand.u32 %v331, 4294901760
    %333 = vmatpush1.msra.mxu0 %v332
    %334 = vmatprep.subr.mxu0 0.0
    %v335 = vand.u32 %v57, 4294901760
    %v336 = vsub.f32 %v57, %v335
    %v337 = vand.u32 %v336, 4294901760
    %v338 = vsub.f32 %v336, %v337
    %v339 = vand.u32 %v338, 4294901760
    %340 = vmatpush1.msra.mxu0 %v339
    %341 = vmatprep.subr.mxu0 0.0
    %v342 = vand.u32 %v58, 4294901760
    %v343 = vsub.f32 %v58, %v342
    %v344 = vand.u32 %v343, 4294901760
    %v345 = vsub.f32 %v343, %v344
    %v346 = vand.u32 %v345, 4294901760
    %347 = vmatpush1.msra.mxu0 %v346
    %348 = vmatprep.subr.mxu0 0.0
    %v349 = vand.u32 %v59, 4294901760
    %v350 = vsub.f32 %v59, %v349
    %v351 = vand.u32 %v350, 4294901760
    %v352 = vsub.f32 %v350, %v351
    %v353 = vand.u32 %v352, 4294901760
    %354 = vmatpush1.msra.mxu0 %v353
    %355 = vmatprep.subr.mxu0 0.0
    %v356 = vand.u32 %v60, 4294901760
    %v357 = vsub.f32 %v60, %v356
    %v358 = vand.u32 %v357, 4294901760
    %v359 = vsub.f32 %v357, %v358
    %v360 = vand.u32 %v359, 4294901760
    %361 = vmatpush1.msra.mxu0 %v360
    %362 = vmatprep.subr.mxu0 0.0
    %v363 = vand.u32 %v61, 4294901760
    %v364 = vsub.f32 %v61, %v363
    %v365 = vand.u32 %v364, 4294901760
    %v366 = vsub.f32 %v364, %v365
    %v367 = vand.u32 %v366, 4294901760
    %368 = vmatpush1.msra.mxu0 %v367
    %369 = vmatprep.subr.mxu0 0.0
    %v370 = vand.u32 %v62, 4294901760
    %v371 = vsub.f32 %v62, %v370
    %v372 = vand.u32 %v371, 4294901760
    %v373 = vsub.f32 %v371, %v372
    %v374 = vand.u32 %v373, 4294901760
    %375 = vmatpush1.msra.mxu0 %v374
    %376 = vmatprep.subr.mxu0 0.0
    %v377 = vand.u32 %v63, 4294901760
    %v378 = vsub.f32 %v63, %v377
    %v379 = vand.u32 %v378, 4294901760
    %v380 = vsub.f32 %v378, %v379
    %v381 = vand.u32 %v380, 4294901760
    %382 = vmatpush1.msra.mxu0 %v381
    %383 = vmatprep.subr.mxu0 0.0
    %v384 = vand.u32 %v64, 4294901760
    %v385 = vsub.f32 %v64, %v384
    %v386 = vand.u32 %v385, 4294901760
    %v387 = vsub.f32 %v385, %v386
    %v388 = vand.u32 %v387, 4294901760
    %389 = vmatpush1.msra.mxu0 %v388
    %390 = vmatprep.subr.mxu0 0.0
    %v391 = vand.u32 %v65, 4294901760
    %v392 = vsub.f32 %v65, %v391
    %v393 = vand.u32 %v392, 4294901760
    %v394 = vsub.f32 %v392, %v393
    %v395 = vand.u32 %v394, 4294901760
    %396 = vmatpush1.msra.mxu0 %v395
    %397 = vmatprep.subr.mxu0 0.0
    %v398 = vand.u32 %v66, 4294901760
    %v399 = vsub.f32 %v66, %v398
    %v400 = vand.u32 %v399, 4294901760
    %v401 = vsub.f32 %v399, %v400
    %v402 = vand.u32 %v401, 4294901760
    %403 = vmatpush1.msra.mxu0 %v402
    %404 = vmatprep.subr.mxu0 0.0
    %v405 = vand.u32 %v67, 4294901760
    %v406 = vsub.f32 %v67, %v405
    %v407 = vand.u32 %v406, 4294901760
    %v408 = vsub.f32 %v406, %v407
    %v409 = vand.u32 %v408, 4294901760
    %410 = vmatpush1.msra.mxu0 %v409
    %411 = vmatprep.subr.mxu0 0.0
    %v412 = vand.u32 %v68, 4294901760
    %v413 = vsub.f32 %v68, %v412
    %v414 = vand.u32 %v413, 4294901760
    %v415 = vsub.f32 %v413, %v414
    %v416 = vand.u32 %v415, 4294901760
    %417 = vmatpush1.msra.mxu0 %v416
    %418 = vmatprep.subr.mxu0 0.0
    %v419 = vand.u32 %v69, 4294901760
    %v420 = vsub.f32 %v69, %v419
    %v421 = vand.u32 %v420, 4294901760
    %v422 = vsub.f32 %v420, %v421
    %v423 = vand.u32 %v422, 4294901760
    %424 = vmatpush1.msra.mxu0 %v423
    %425 = vmatprep.subr.mxu0 0.0
    %v426 = vand.u32 %v70, 4294901760
    %v427 = vsub.f32 %v70, %v426
    %v428 = vand.u32 %v427, 4294901760
    %v429 = vsub.f32 %v427, %v428
    %v430 = vand.u32 %v429, 4294901760
    %431 = vmatpush1.msra.mxu0 %v430
    %432 = vmatprep.subr.mxu0 0.0
    %v433 = vand.u32 %v71, 4294901760
    %v434 = vsub.f32 %v71, %v433
    %v435 = vand.u32 %v434, 4294901760
    %v436 = vsub.f32 %v434, %v435
    %v437 = vand.u32 %v436, 4294901760
    %438 = vmatpush1.msra.mxu0 %v437
    %439 = vmatprep.subr.mxu0 0.0
    %v440 = vand.u32 %v72, 4294901760
    %v441 = vsub.f32 %v72, %v440
    %v442 = vand.u32 %v441, 4294901760
    %v443 = vsub.f32 %v441, %v442
    %v444 = vand.u32 %v443, 4294901760
    %445 = vmatpush1.msra.mxu0 %v444
    %446 = vmatprep.subr.mxu0 0.0
    %v447 = vand.u32 %v73, 4294901760
    %v448 = vsub.f32 %v73, %v447
    %v449 = vand.u32 %v448, 4294901760
    %v450 = vsub.f32 %v448, %v449
    %v451 = vand.u32 %v450, 4294901760
    %452 = vmatpush1.msra.mxu0 %v451
    %453 = vmatprep.subr.mxu0 0.0
    %v454 = vand.u32 %v74, 4294901760
    %v455 = vsub.f32 %v74, %v454
    %v456 = vand.u32 %v455, 4294901760
    %v457 = vsub.f32 %v455, %v456
    %v458 = vand.u32 %v457, 4294901760
    %459 = vmatpush1.msra.mxu0 %v458
    %460 = vmatprep.subr.mxu0 0.0
    %v461 = vand.u32 %v75, 4294901760
    %v462 = vsub.f32 %v75, %v461
    %v463 = vand.u32 %v462, 4294901760
    %v464 = vsub.f32 %v462, %v463
    %v465 = vand.u32 %v464, 4294901760
    %466 = vmatpush1.msra.mxu0 %v465
    %467 = vmatprep.subr.mxu0 0.0
    %v468 = vand.u32 %v76, 4294901760
    %v469 = vsub.f32 %v76, %v468
    %v470 = vand.u32 %v469, 4294901760
    %v471 = vsub.f32 %v469, %v470
    %v472 = vand.u32 %v471, 4294901760
    %473 = vmatpush1.msra.mxu0 %v472
    %474 = vmatprep.subr.mxu0 0.0
    %v475 = vand.u32 %v77, 4294901760
    %v476 = vsub.f32 %v77, %v475
    %v477 = vand.u32 %v476, 4294901760
    %v478 = vsub.f32 %v476, %v477
    %v479 = vand.u32 %v478, 4294901760
    %480 = vmatpush1.msra.mxu0 %v479
    %481 = vmatprep.subr.mxu0 0.0
    %v482 = vand.u32 %v78, 4294901760
    %v483 = vsub.f32 %v78, %v482
    %v484 = vand.u32 %v483, 4294901760
    %v485 = vsub.f32 %v483, %v484
    %v486 = vand.u32 %v485, 4294901760
    %487 = vmatpush1.msra.mxu0 %v486
    %488 = vmatprep.subr.mxu0 0.0
    %v489 = vand.u32 %v79, 4294901760
    %v490 = vsub.f32 %v79, %v489
    %v491 = vand.u32 %v490, 4294901760
    %v492 = vsub.f32 %v490, %v491
    %v493 = vand.u32 %v492, 4294901760
    %494 = vmatpush1.msra.mxu0 %v493
    %v495 = vand.u32 %v154, 4294901760
    %496 = vmatprep.mubr.f32.mxu0 %v495
    %v497 = vand.u32 %v153, 4294901760
    %498 = vmatmul.mubr.f32.gmra.mrb[0].mxu0 %v497
    %v499 = vpop.f32.mrb[0].mxu0
    %v500 = vadd.f32 %v268, %v499
    %v501 = vpop.f32.mrb[0].mxu0
    %502 = vdwg.mxu0
    %503 = vmatprep.subr.mxu0 0.0
    %v504 = vand.u32 %v48, 4294901760
    %v505 = vsub.f32 %v48, %v504
    %506 = vmatpush1.msra.mxu0 %v505
    %507 = vmatprep.subr.mxu0 0.0
    %v508 = vand.u32 %v49, 4294901760
    %v509 = vsub.f32 %v49, %v508
    %510 = vmatpush1.msra.mxu0 %v509
    %511 = vmatprep.subr.mxu0 0.0
    %v512 = vand.u32 %v50, 4294901760
    %v513 = vsub.f32 %v50, %v512
    %514 = vmatpush1.msra.mxu0 %v513
    %515 = vmatprep.subr.mxu0 0.0
    %v516 = vand.u32 %v51, 4294901760
    %v517 = vsub.f32 %v51, %v516
    %518 = vmatpush1.msra.mxu0 %v517
    %519 = vmatprep.subr.mxu0 0.0
    %v520 = vand.u32 %v52, 4294901760
    %v521 = vsub.f32 %v52, %v520
    %522 = vmatpush1.msra.mxu0 %v521
    %523 = vmatprep.subr.mxu0 0.0
    %v524 = vand.u32 %v53, 4294901760
    %v525 = vsub.f32 %v53, %v524
    %526 = vmatpush1.msra.mxu0 %v525
    %527 = vmatprep.subr.mxu0 0.0
    %v528 = vand.u32 %v54, 4294901760
    %v529 = vsub.f32 %v54, %v528
    %530 = vmatpush1.msra.mxu0 %v529
    %531 = vmatprep.subr.mxu0 0.0
    %v532 = vand.u32 %v55, 4294901760
    %v533 = vsub.f32 %v55, %v532
    %534 = vmatpush1.msra.mxu0 %v533
    %535 = vmatprep.subr.mxu0 0.0
    %v536 = vand.u32 %v56, 4294901760
    %v537 = vsub.f32 %v56, %v536
    %538 = vmatpush1.msra.mxu0 %v537
    %539 = vmatprep.subr.mxu0 0.0
    %v540 = vand.u32 %v57, 4294901760
    %v541 = vsub.f32 %v57, %v540
    %542 = vmatpush1.msra.mxu0 %v541
    %543 = vmatprep.subr.mxu0 0.0
    %v544 = vand.u32 %v58, 4294901760
    %v545 = vsub.f32 %v58, %v544
    %546 = vmatpush1.msra.mxu0 %v545
    %547 = vmatprep.subr.mxu0 0.0
    %v548 = vand.u32 %v59, 4294901760
    %v549 = vsub.f32 %v59, %v548
    %550 = vmatpush1.msra.mxu0 %v549
    %551 = vmatprep.subr.mxu0 0.0
    %v552 = vand.u32 %v60, 4294901760
    %v553 = vsub.f32 %v60, %v552
    %554 = vmatpush1.msra.mxu0 %v553
    %555 = vmatprep.subr.mxu0 0.0
    %v556 = vand.u32 %v61, 4294901760
    %v557 = vsub.f32 %v61, %v556
    %558 = vmatpush1.msra.mxu0 %v557
    %559 = vmatprep.subr.mxu0 0.0
    %v560 = vand.u32 %v62, 4294901760
    %v561 = vsub.f32 %v62, %v560
    %562 = vmatpush1.msra.mxu0 %v561
    %563 = vmatprep.subr.mxu0 0.0
    %v564 = vand.u32 %v63, 4294901760
    %v565 = vsub.f32 %v63, %v564
    %566 = vmatpush1.msra.mxu0 %v565
    %567 = vmatprep.subr.mxu0 0.0
    %v568 = vand.u32 %v64, 4294901760
    %v569 = vsub.f32 %v64, %v568
    %570 = vmatpush1.msra.mxu0 %v569
    %571 = vmatprep.subr.mxu0 0.0
    %v572 = vand.u32 %v65, 4294901760
    %v573 = vsub.f32 %v65, %v572
    %574 = vmatpush1.msra.mxu0 %v573
    %575 = vmatprep.subr.mxu0 0.0
    %v576 = vand.u32 %v66, 4294901760
    %v577 = vsub.f32 %v66, %v576
    %578 = vmatpush1.msra.mxu0 %v577
    %579 = vmatprep.subr.mxu0 0.0
    %v580 = vand.u32 %v67, 4294901760
    %v581 = vsub.f32 %v67, %v580
    %582 = vmatpush1.msra.mxu0 %v581
    %583 = vmatprep.subr.mxu0 0.0
    %v584 = vand.u32 %v68, 4294901760
    %v585 = vsub.f32 %v68, %v584
    %586 = vmatpush1.msra.mxu0 %v585
    %587 = vmatprep.subr.mxu0 0.0
    %v588 = vand.u32 %v69, 4294901760
    %v589 = vsub.f32 %v69, %v588
    %590 = vmatpush1.msra.mxu0 %v589
    %591 = vmatprep.subr.mxu0 0.0
    %v592 = vand.u32 %v70, 4294901760
    %v593 = vsub.f32 %v70, %v592
    %594 = vmatpush1.msra.mxu0 %v593
    %595 = vmatprep.subr.mxu0 0.0
    %v596 = vand.u32 %v71, 4294901760
    %v597 = vsub.f32 %v71, %v596
    %598 = vmatpush1.msra.mxu0 %v597
    %599 = vmatprep.subr.mxu0 0.0
    %v600 = vand.u32 %v72, 4294901760
    %v601 = vsub.f32 %v72, %v600
    %602 = vmatpush1.msra.mxu0 %v601
    %603 = vmatprep.subr.mxu0 0.0
    %v604 = vand.u32 %v73, 4294901760
    %v605 = vsub.f32 %v73, %v604
    %606 = vmatpush1.msra.mxu0 %v605
    %607 = vmatprep.subr.mxu0 0.0
    %v608 = vand.u32 %v74, 4294901760
    %v609 = vsub.f32 %v74, %v608
    %610 = vmatpush1.msra.mxu0 %v609
    %611 = vmatprep.subr.mxu0 0.0
    %v612 = vand.u32 %v75, 4294901760
    %v613 = vsub.f32 %v75, %v612
    %614 = vmatpush1.msra.mxu0 %v613
    %615 = vmatprep.subr.mxu0 0.0
    %v616 = vand.u32 %v76, 4294901760
    %v617 = vsub.f32 %v76, %v616
    %618 = vmatpush1.msra.mxu0 %v617
    %619 = vmatprep.subr.mxu0 0.0
    %v620 = vand.u32 %v77, 4294901760
    %v621 = vsub.f32 %v77, %v620
    %622 = vmatpush1.msra.mxu0 %v621
    %623 = vmatprep.subr.mxu0 0.0
    %v624 = vand.u32 %v78, 4294901760
    %v625 = vsub.f32 %v78, %v624
    %626 = vmatpush1.msra.mxu0 %v625
    %627 = vmatprep.subr.mxu0 0.0
    %v628 = vand.u32 %v79, 4294901760
    %v629 = vsub.f32 %v79, %v628
    %630 = vmatpush1.msra.mxu0 %v629
    %v631 = vand.u32 %v154, 4294901760
    %v632 = vsub.f32 %v154, %v631
    %633 = vmatprep.mubr.f32.mxu0 %v632
    %v634 = vand.u32 %v153, 4294901760
    %v635 = vsub.f32 %v153, %v634
    %636 = vmatmul.mubr.f32.gmra.mrb[0].mxu0 %v635
    %v637 = vpop.f32.mrb[0].mxu0
    %v638 = vadd.f32 %v500, %v637
    %v639 = vpop.f32.mrb[0].mxu0
    %640 = vdwg.mxu0
    %641 = vmatprep.subr.mxu0 0.0
    %v642 = vand.u32 %v48, 4294901760
    %643 = vmatpush1.msra.mxu0 %v642
    %644 = vmatprep.subr.mxu0 0.0
    %v645 = vand.u32 %v49, 4294901760
    %646 = vmatpush1.msra.mxu0 %v645
    %647 = vmatprep.subr.mxu0 0.0
    %v648 = vand.u32 %v50, 4294901760
    %649 = vmatpush1.msra.mxu0 %v648
    %650 = vmatprep.subr.mxu0 0.0
    %v651 = vand.u32 %v51, 4294901760
    %652 = vmatpush1.msra.mxu0 %v651
    %653 = vmatprep.subr.mxu0 0.0
    %v654 = vand.u32 %v52, 4294901760
    %655 = vmatpush1.msra.mxu0 %v654
    %656 = vmatprep.subr.mxu0 0.0
    %v657 = vand.u32 %v53, 4294901760
    %658 = vmatpush1.msra.mxu0 %v657
    %659 = vmatprep.subr.mxu0 0.0
    %v660 = vand.u32 %v54, 4294901760
    %661 = vmatpush1.msra.mxu0 %v660
    %662 = vmatprep.subr.mxu0 0.0
    %v663 = vand.u32 %v55, 4294901760
    %664 = vmatpush1.msra.mxu0 %v663
    %665 = vmatprep.subr.mxu0 0.0
    %v666 = vand.u32 %v56, 4294901760
    %667 = vmatpush1.msra.mxu0 %v666
    %668 = vmatprep.subr.mxu0 0.0
    %v669 = vand.u32 %v57, 4294901760
    %670 = vmatpush1.msra.mxu0 %v669
    %671 = vmatprep.subr.mxu0 0.0
    %v672 = vand.u32 %v58, 4294901760
    %673 = vmatpush1.msra.mxu0 %v672
    %674 = vmatprep.subr.mxu0 0.0
    %v675 = vand.u32 %v59, 4294901760
    %676 = vmatpush1.msra.mxu0 %v675
    %677 = vmatprep.subr.mxu0 0.0
    %v678 = vand.u32 %v60, 4294901760
    %679 = vmatpush1.msra.mxu0 %v678
    %680 = vmatprep.subr.mxu0 0.0
    %v681 = vand.u32 %v61, 4294901760
    %682 = vmatpush1.msra.mxu0 %v681
    %683 = vmatprep.subr.mxu0 0.0
    %v684 = vand.u32 %v62, 4294901760
    %685 = vmatpush1.msra.mxu0 %v684
    %686 = vmatprep.subr.mxu0 0.0
    %v687 = vand.u32 %v63, 4294901760
    %688 = vmatpush1.msra.mxu0 %v687
    %689 = vmatprep.subr.mxu0 0.0
    %v690 = vand.u32 %v64, 4294901760
    %691 = vmatpush1.msra.mxu0 %v690
    %692 = vmatprep.subr.mxu0 0.0
    %v693 = vand.u32 %v65, 4294901760
    %694 = vmatpush1.msra.mxu0 %v693
    %695 = vmatprep.subr.mxu0 0.0
    %v696 = vand.u32 %v66, 4294901760
    %697 = vmatpush1.msra.mxu0 %v696
    %698 = vmatprep.subr.mxu0 0.0
    %v699 = vand.u32 %v67, 4294901760
    %700 = vmatpush1.msra.mxu0 %v699
    %701 = vmatprep.subr.mxu0 0.0
    %v702 = vand.u32 %v68, 4294901760
    %703 = vmatpush1.msra.mxu0 %v702
    %704 = vmatprep.subr.mxu0 0.0
    %v705 = vand.u32 %v69, 4294901760
    %706 = vmatpush1.msra.mxu0 %v705
    %707 = vmatprep.subr.mxu0 0.0
    %v708 = vand.u32 %v70, 4294901760
    %709 = vmatpush1.msra.mxu0 %v708
    %710 = vmatprep.subr.mxu0 0.0
    %v711 = vand.u32 %v71, 4294901760
    %712 = vmatpush1.msra.mxu0 %v711
    %713 = vmatprep.subr.mxu0 0.0
    %v714 = vand.u32 %v72, 4294901760
    %715 = vmatpush1.msra.mxu0 %v714
    %716 = vmatprep.subr.mxu0 0.0
    %v717 = vand.u32 %v73, 4294901760
    %718 = vmatpush1.msra.mxu0 %v717
    %719 = vmatprep.subr.mxu0 0.0
    %v720 = vand.u32 %v74, 4294901760
    %721 = vmatpush1.msra.mxu0 %v720
    %722 = vmatprep.subr.mxu0 0.0
    %v723 = vand.u32 %v75, 4294901760
    %724 = vmatpush1.msra.mxu0 %v723
    %725 = vmatprep.subr.mxu0 0.0
    %v726 = vand.u32 %v76, 4294901760
    %727 = vmatpush1.msra.mxu0 %v726
    %728 = vmatprep.subr.mxu0 0.0
    %v729 = vand.u32 %v77, 4294901760
    %730 = vmatpush1.msra.mxu0 %v729
    %731 = vmatprep.subr.mxu0 0.0
    %v732 = vand.u32 %v78, 4294901760
    %733 = vmatpush1.msra.mxu0 %v732
    %734 = vmatprep.subr.mxu0 0.0
    %v735 = vand.u32 %v79, 4294901760
    %736 = vmatpush1.msra.mxu0 %v735
    %v737 = vand.u32 %v154, 4294901760
    %v738 = vsub.f32 %v154, %v737
    %v739 = vand.u32 %v738, 4294901760
    %740 = vmatprep.mubr.f32.mxu0 %v739
    %v741 = vand.u32 %v153, 4294901760
    %v742 = vsub.f32 %v153, %v741
    %v743 = vand.u32 %v742, 4294901760
    %744 = vmatmul.mubr.f32.gmra.mrb[0].mxu0 %v743
    %v745 = vpop.f32.mrb[0].mxu0
    %v746 = vadd.f32 %v638, %v745
    %v747 = vpop.f32.mrb[0].mxu0
    %748 = vdwg.mxu0
    %749 = vmatprep.subr.mxu0 0.0
    %v750 = vand.u32 %v48, 4294901760
    %v751 = vsub.f32 %v48, %v750
    %v752 = vand.u32 %v751, 4294901760
    %753 = vmatpush1.msra.mxu0 %v752
    %754 = vmatprep.subr.mxu0 0.0
    %v755 = vand.u32 %v49, 4294901760
    %v756 = vsub.f32 %v49, %v755
    %v757 = vand.u32 %v756, 4294901760
    %758 = vmatpush1.msra.mxu0 %v757
    %759 = vmatprep.subr.mxu0 0.0
    %v760 = vand.u32 %v50, 4294901760
    %v761 = vsub.f32 %v50, %v760
    %v762 = vand.u32 %v761, 4294901760
    %763 = vmatpush1.msra.mxu0 %v762
    %764 = vmatprep.subr.mxu0 0.0
    %v765 = vand.u32 %v51, 4294901760
    %v766 = vsub.f32 %v51, %v765
    %v767 = vand.u32 %v766, 4294901760
    %768 = vmatpush1.msra.mxu0 %v767
    %769 = vmatprep.subr.mxu0 0.0
    %v770 = vand.u32 %v52, 4294901760
    %v771 = vsub.f32 %v52, %v770
    %v772 = vand.u32 %v771, 4294901760
    %773 = vmatpush1.msra.mxu0 %v772
    %774 = vmatprep.subr.mxu0 0.0
    %v775 = vand.u32 %v53, 4294901760
    %v776 = vsub.f32 %v53, %v775
    %v777 = vand.u32 %v776, 4294901760
    %778 = vmatpush1.msra.mxu0 %v777
    %779 = vmatprep.subr.mxu0 0.0
    %v780 = vand.u32 %v54, 4294901760
    %v781 = vsub.f32 %v54, %v780
    %v782 = vand.u32 %v781, 4294901760
    %783 = vmatpush1.msra.mxu0 %v782
    %784 = vmatprep.subr.mxu0 0.0
    %v785 = vand.u32 %v55, 4294901760
    %v786 = vsub.f32 %v55, %v785
    %v787 = vand.u32 %v786, 4294901760
    %788 = vmatpush1.msra.mxu0 %v787
    %789 = vmatprep.subr.mxu0 0.0
    %v790 = vand.u32 %v56, 4294901760
    %v791 = vsub.f32 %v56, %v790
    %v792 = vand.u32 %v791, 4294901760
    %793 = vmatpush1.msra.mxu0 %v792
    %794 = vmatprep.subr.mxu0 0.0
    %v795 = vand.u32 %v57, 4294901760
    %v796 = vsub.f32 %v57, %v795
    %v797 = vand.u32 %v796, 4294901760
    %798 = vmatpush1.msra.mxu0 %v797
    %799 = vmatprep.subr.mxu0 0.0
    %v800 = vand.u32 %v58, 4294901760
    %v801 = vsub.f32 %v58, %v800
    %v802 = vand.u32 %v801, 4294901760
    %803 = vmatpush1.msra.mxu0 %v802
    %804 = vmatprep.subr.mxu0 0.0
    %v805 = vand.u32 %v59, 4294901760
    %v806 = vsub.f32 %v59, %v805
    %v807 = vand.u32 %v806, 4294901760
    %808 = vmatpush1.msra.mxu0 %v807
    %809 = vmatprep.subr.mxu0 0.0
    %v810 = vand.u32 %v60, 4294901760
    %v811 = vsub.f32 %v60, %v810
    %v812 = vand.u32 %v811, 4294901760
    %813 = vmatpush1.msra.mxu0 %v812
    %814 = vmatprep.subr.mxu0 0.0
    %v815 = vand.u32 %v61, 4294901760
    %v816 = vsub.f32 %v61, %v815
    %v817 = vand.u32 %v816, 4294901760
    %818 = vmatpush1.msra.mxu0 %v817
    %819 = vmatprep.subr.mxu0 0.0
    %v820 = vand.u32 %v62, 4294901760
    %v821 = vsub.f32 %v62, %v820
    %v822 = vand.u32 %v821, 4294901760
    %823 = vmatpush1.msra.mxu0 %v822
    %824 = vmatprep.subr.mxu0 0.0
    %v825 = vand.u32 %v63, 4294901760
    %v826 = vsub.f32 %v63, %v825
    %v827 = vand.u32 %v826, 4294901760
    %828 = vmatpush1.msra.mxu0 %v827
    %829 = vmatprep.subr.mxu0 0.0
    %v830 = vand.u32 %v64, 4294901760
    %v831 = vsub.f32 %v64, %v830
    %v832 = vand.u32 %v831, 4294901760
    %833 = vmatpush1.msra.mxu0 %v832
    %834 = vmatprep.subr.mxu0 0.0
    %v835 = vand.u32 %v65, 4294901760
    %v836 = vsub.f32 %v65, %v835
    %v837 = vand.u32 %v836, 4294901760
    %838 = vmatpush1.msra.mxu0 %v837
    %839 = vmatprep.subr.mxu0 0.0
    %v840 = vand.u32 %v66, 4294901760
    %v841 = vsub.f32 %v66, %v840
    %v842 = vand.u32 %v841, 4294901760
    %843 = vmatpush1.msra.mxu0 %v842
    %844 = vmatprep.subr.mxu0 0.0
    %v845 = vand.u32 %v67, 4294901760
    %v846 = vsub.f32 %v67, %v845
    %v847 = vand.u32 %v846, 4294901760
    %848 = vmatpush1.msra.mxu0 %v847
    %849 = vmatprep.subr.mxu0 0.0
    %v850 = vand.u32 %v68, 4294901760
    %v851 = vsub.f32 %v68, %v850
    %v852 = vand.u32 %v851, 4294901760
    %853 = vmatpush1.msra.mxu0 %v852
    %854 = vmatprep.subr.mxu0 0.0
    %v855 = vand.u32 %v69, 4294901760
    %v856 = vsub.f32 %v69, %v855
    %v857 = vand.u32 %v856, 4294901760
    %858 = vmatpush1.msra.mxu0 %v857
    %859 = vmatprep.subr.mxu0 0.0
    %v860 = vand.u32 %v70, 4294901760
    %v861 = vsub.f32 %v70, %v860
    %v862 = vand.u32 %v861, 4294901760
    %863 = vmatpush1.msra.mxu0 %v862
    %864 = vmatprep.subr.mxu0 0.0
    %v865 = vand.u32 %v71, 4294901760
    %v866 = vsub.f32 %v71, %v865
    %v867 = vand.u32 %v866, 4294901760
    %868 = vmatpush1.msra.mxu0 %v867
    %869 = vmatprep.subr.mxu0 0.0
    %v870 = vand.u32 %v72, 4294901760
    %v871 = vsub.f32 %v72, %v870
    %v872 = vand.u32 %v871, 4294901760
    %873 = vmatpush1.msra.mxu0 %v872
    %874 = vmatprep.subr.mxu0 0.0
    %v875 = vand.u32 %v73, 4294901760
    %v876 = vsub.f32 %v73, %v875
    %v877 = vand.u32 %v876, 4294901760
    %878 = vmatpush1.msra.mxu0 %v877
    %879 = vmatprep.subr.mxu0 0.0
    %v880 = vand.u32 %v74, 4294901760
    %v881 = vsub.f32 %v74, %v880
    %v882 = vand.u32 %v881, 4294901760
    %883 = vmatpush1.msra.mxu0 %v882
    %884 = vmatprep.subr.mxu0 0.0
    %v885 = vand.u32 %v75, 4294901760
    %v886 = vsub.f32 %v75, %v885
    %v887 = vand.u32 %v886, 4294901760
    %888 = vmatpush1.msra.mxu0 %v887
    %889 = vmatprep.subr.mxu0 0.0
    %v890 = vand.u32 %v76, 4294901760
    %v891 = vsub.f32 %v76, %v890
    %v892 = vand.u32 %v891, 4294901760
    %893 = vmatpush1.msra.mxu0 %v892
    %894 = vmatprep.subr.mxu0 0.0
    %v895 = vand.u32 %v77, 4294901760
    %v896 = vsub.f32 %v77, %v895
    %v897 = vand.u32 %v896, 4294901760
    %898 = vmatpush1.msra.mxu0 %v897
    %899 = vmatprep.subr.mxu0 0.0
    %v900 = vand.u32 %v78, 4294901760
    %v901 = vsub.f32 %v78, %v900
    %v902 = vand.u32 %v901, 4294901760
    %903 = vmatpush1.msra.mxu0 %v902
    %904 = vmatprep.subr.mxu0 0.0
    %v905 = vand.u32 %v79, 4294901760
    %v906 = vsub.f32 %v79, %v905
    %v907 = vand.u32 %v906, 4294901760
    %908 = vmatpush1.msra.mxu0 %v907
    %v909 = vand.u32 %v154, 4294901760
    %910 = vmatprep.mubr.f32.mxu0 %v909
    %v911 = vand.u32 %v153, 4294901760
    %912 = vmatmul.mubr.f32.gmra.mrb[0].mxu0 %v911
    %v913 = vpop.f32.mrb[0].mxu0
    %v914 = vadd.f32 %v746, %v913
    %v915 = vpop.f32.mrb[0].mxu0
    %916 = vdwg.mxu0
    %917 = vmatprep.subr.mxu0 0.0
    %v918 = vand.u32 %v48, 4294901760
    %919 = vmatpush1.msra.mxu0 %v918
    %920 = vmatprep.subr.mxu0 0.0
    %v921 = vand.u32 %v49, 4294901760
    %922 = vmatpush1.msra.mxu0 %v921
    %923 = vmatprep.subr.mxu0 0.0
    %v924 = vand.u32 %v50, 4294901760
    %925 = vmatpush1.msra.mxu0 %v924
    %926 = vmatprep.subr.mxu0 0.0
    %v927 = vand.u32 %v51, 4294901760
    %928 = vmatpush1.msra.mxu0 %v927
    %929 = vmatprep.subr.mxu0 0.0
    %v930 = vand.u32 %v52, 4294901760
    %931 = vmatpush1.msra.mxu0 %v930
    %932 = vmatprep.subr.mxu0 0.0
    %v933 = vand.u32 %v53, 4294901760
    %934 = vmatpush1.msra.mxu0 %v933
    %935 = vmatprep.subr.mxu0 0.0
    %v936 = vand.u32 %v54, 4294901760
    %937 = vmatpush1.msra.mxu0 %v936
    %938 = vmatprep.subr.mxu0 0.0
    %v939 = vand.u32 %v55, 4294901760
    %940 = vmatpush1.msra.mxu0 %v939
    %941 = vmatprep.subr.mxu0 0.0
    %v942 = vand.u32 %v56, 4294901760
    %943 = vmatpush1.msra.mxu0 %v942
    %944 = vmatprep.subr.mxu0 0.0
    %v945 = vand.u32 %v57, 4294901760
    %946 = vmatpush1.msra.mxu0 %v945
    %947 = vmatprep.subr.mxu0 0.0
    %v948 = vand.u32 %v58, 4294901760
    %949 = vmatpush1.msra.mxu0 %v948
    %950 = vmatprep.subr.mxu0 0.0
    %v951 = vand.u32 %v59, 4294901760
    %952 = vmatpush1.msra.mxu0 %v951
    %953 = vmatprep.subr.mxu0 0.0
    %v954 = vand.u32 %v60, 4294901760
    %955 = vmatpush1.msra.mxu0 %v954
    %956 = vmatprep.subr.mxu0 0.0
    %v957 = vand.u32 %v61, 4294901760
    %958 = vmatpush1.msra.mxu0 %v957
    %959 = vmatprep.subr.mxu0 0.0
    %v960 = vand.u32 %v62, 4294901760
    %961 = vmatpush1.msra.mxu0 %v960
    %962 = vmatprep.subr.mxu0 0.0
    %v963 = vand.u32 %v63, 4294901760
    %964 = vmatpush1.msra.mxu0 %v963
    %965 = vmatprep.subr.mxu0 0.0
    %v966 = vand.u32 %v64, 4294901760
    %967 = vmatpush1.msra.mxu0 %v966
    %968 = vmatprep.subr.mxu0 0.0
    %v969 = vand.u32 %v65, 4294901760
    %970 = vmatpush1.msra.mxu0 %v969
    %971 = vmatprep.subr.mxu0 0.0
    %v972 = vand.u32 %v66, 4294901760
    %973 = vmatpush1.msra.mxu0 %v972
    %974 = vmatprep.subr.mxu0 0.0
    %v975 = vand.u32 %v67, 4294901760
    %976 = vmatpush1.msra.mxu0 %v975
    %977 = vmatprep.subr.mxu0 0.0
    %v978 = vand.u32 %v68, 4294901760
    %979 = vmatpush1.msra.mxu0 %v978
    %980 = vmatprep.subr.mxu0 0.0
    %v981 = vand.u32 %v69, 4294901760
    %982 = vmatpush1.msra.mxu0 %v981
    %983 = vmatprep.subr.mxu0 0.0
    %v984 = vand.u32 %v70, 4294901760
    %985 = vmatpush1.msra.mxu0 %v984
    %986 = vmatprep.subr.mxu0 0.0
    %v987 = vand.u32 %v71, 4294901760
    %988 = vmatpush1.msra.mxu0 %v987
    %989 = vmatprep.subr.mxu0 0.0
    %v990 = vand.u32 %v72, 4294901760
    %991 = vmatpush1.msra.mxu0 %v990
    %992 = vmatprep.subr.mxu0 0.0
    %v993 = vand.u32 %v73, 4294901760
    %994 = vmatpush1.msra.mxu0 %v993
    %995 = vmatprep.subr.mxu0 0.0
    %v996 = vand.u32 %v74, 4294901760
    %997 = vmatpush1.msra.mxu0 %v996
    %998 = vmatprep.subr.mxu0 0.0
    %v999 = vand.u32 %v75, 4294901760
    %1000 = vmatpush1.msra.mxu0 %v999
    %1001 = vmatprep.subr.mxu0 0.0
    %v1002 = vand.u32 %v76, 4294901760
    %1003 = vmatpush1.msra.mxu0 %v1002
    %1004 = vmatprep.subr.mxu0 0.0
    %v1005 = vand.u32 %v77, 4294901760
    %1006 = vmatpush1.msra.mxu0 %v1005
    %1007 = vmatprep.subr.mxu0 0.0
    %v1008 = vand.u32 %v78, 4294901760
    %1009 = vmatpush1.msra.mxu0 %v1008
    %1010 = vmatprep.subr.mxu0 0.0
    %v1011 = vand.u32 %v79, 4294901760
    %1012 = vmatpush1.msra.mxu0 %v1011
    %v1013 = vand.u32 %v154, 4294901760
    %1014 = vmatprep.mubr.f32.mxu0 %v1013
    %v1015 = vand.u32 %v153, 4294901760
    %1016 = vmatmul.mubr.f32.gmra.mrb[0].mxu0 %v1015
    %v1017 = vpop.f32.mrb[0].mxu0
    %v1018 = vadd.f32 %v914, %v1017
    %v1019 = vpop.f32.mrb[0].mxu0
    %1020 = vdwg.mxu0
    %1021 = vmatprep.subr.mxu0 0.0
    %v1022 = vand.u32 %v80, 4294901760
    %1023 = vmatpush1.msra.mxu0 %v1022
    %1024 = vmatprep.subr.mxu0 0.0
    %v1025 = vand.u32 %v81, 4294901760
    %1026 = vmatpush1.msra.mxu0 %v1025
    %1027 = vmatprep.subr.mxu0 0.0
    %v1028 = vand.u32 %v82, 4294901760
    %1029 = vmatpush1.msra.mxu0 %v1028
    %1030 = vmatprep.subr.mxu0 0.0
    %v1031 = vand.u32 %v83, 4294901760
    %1032 = vmatpush1.msra.mxu0 %v1031
    %1033 = vmatprep.subr.mxu0 0.0
    %v1034 = vand.u32 %v84, 4294901760
    %1035 = vmatpush1.msra.mxu0 %v1034
    %1036 = vmatprep.subr.mxu0 0.0
    %v1037 = vand.u32 %v85, 4294901760
    %1038 = vmatpush1.msra.mxu0 %v1037
    %1039 = vmatprep.subr.mxu0 0.0
    %v1040 = vand.u32 %v86, 4294901760
    %1041 = vmatpush1.msra.mxu0 %v1040
    %1042 = vmatprep.subr.mxu0 0.0
    %v1043 = vand.u32 %v87, 4294901760
    %1044 = vmatpush1.msra.mxu0 %v1043
    %1045 = vmatprep.subr.mxu0 0.0
    %v1046 = vand.u32 %v88, 4294901760
    %1047 = vmatpush1.msra.mxu0 %v1046
    %1048 = vmatprep.subr.mxu0 0.0
    %v1049 = vand.u32 %v89, 4294901760
    %1050 = vmatpush1.msra.mxu0 %v1049
    %1051 = vmatprep.subr.mxu0 0.0
    %v1052 = vand.u32 %v90, 4294901760
    %1053 = vmatpush1.msra.mxu0 %v1052
    %1054 = vmatprep.subr.mxu0 0.0
    %v1055 = vand.u32 %v91, 4294901760
    %1056 = vmatpush1.msra.mxu0 %v1055
    %1057 = vmatprep.subr.mxu0 0.0
    %v1058 = vand.u32 %v92, 4294901760
    %1059 = vmatpush1.msra.mxu0 %v1058
    %1060 = vmatprep.subr.mxu0 0.0
    %v1061 = vand.u32 %v93, 4294901760
    %1062 = vmatpush1.msra.mxu0 %v1061
    %1063 = vmatprep.subr.mxu0 0.0
    %v1064 = vand.u32 %v94, 4294901760
    %1065 = vmatpush1.msra.mxu0 %v1064
    %1066 = vmatprep.subr.mxu0 0.0
    %v1067 = vand.u32 %v95, 4294901760
    %1068 = vmatpush1.msra.mxu0 %v1067
    %1069 = vmatprep.subr.mxu0 0.0
    %v1070 = vand.u32 %v96, 4294901760
    %1071 = vmatpush1.msra.mxu0 %v1070
    %1072 = vmatprep.subr.mxu0 0.0
    %v1073 = vand.u32 %v97, 4294901760
    %1074 = vmatpush1.msra.mxu0 %v1073
    %1075 = vmatprep.subr.mxu0 0.0
    %v1076 = vand.u32 %v98, 4294901760
    %1077 = vmatpush1.msra.mxu0 %v1076
    %1078 = vmatprep.subr.mxu0 0.0
    %v1079 = vand.u32 %v99, 4294901760
    %1080 = vmatpush1.msra.mxu0 %v1079
    %1081 = vmatprep.subr.mxu0 0.0
    %v1082 = vand.u32 %v100, 4294901760
    %1083 = vmatpush1.msra.mxu0 %v1082
    %1084 = vmatprep.subr.mxu0 0.0
    %v1085 = vand.u32 %v101, 4294901760
    %1086 = vmatpush1.msra.mxu0 %v1085
    %1087 = vmatprep.subr.mxu0 0.0
    %v1088 = vand.u32 %v102, 4294901760
    %1089 = vmatpush1.msra.mxu0 %v1088
    %1090 = vmatprep.subr.mxu0 0.0
    %v1091 = vand.u32 %v103, 4294901760
    %1092 = vmatpush1.msra.mxu0 %v1091
    %1093 = vmatprep.subr.mxu0 0.0
    %v1094 = vand.u32 %v104, 4294901760
    %1095 = vmatpush1.msra.mxu0 %v1094
    %1096 = vmatprep.subr.mxu0 0.0
    %v1097 = vand.u32 %v105, 4294901760
    %1098 = vmatpush1.msra.mxu0 %v1097
    %1099 = vmatprep.subr.mxu0 0.0
    %v1100 = vand.u32 %v106, 4294901760
    %1101 = vmatpush1.msra.mxu0 %v1100
    %1102 = vmatprep.subr.mxu0 0.0
    %v1103 = vand.u32 %v107, 4294901760
    %1104 = vmatpush1.msra.mxu0 %v1103
    %1105 = vmatprep.subr.mxu0 0.0
    %v1106 = vand.u32 %v108, 4294901760
    %1107 = vmatpush1.msra.mxu0 %v1106
    %1108 = vmatprep.subr.mxu0 0.0
    %v1109 = vand.u32 %v109, 4294901760
    %1110 = vmatpush1.msra.mxu0 %v1109
    %1111 = vmatprep.subr.mxu0 0.0
    %v1112 = vand.u32 %v110, 4294901760
    %1113 = vmatpush1.msra.mxu0 %v1112
    %1114 = vmatprep.subr.mxu0 0.0
    %v1115 = vand.u32 %v111, 4294901760
    %1116 = vmatpush1.msra.mxu0 %v1115
    %v1117 = vand.u32 %v156, 4294901760
    %v1118 = vsub.f32 %v156, %v1117
    %v1119 = vand.u32 %v1118, 4294901760
    %v1120 = vsub.f32 %v1118, %v1119
    %v1121 = vand.u32 %v1120, 4294901760
    %1122 = vmatprep.mubr.f32.mxu0 %v1121
    %v1123 = vand.u32 %v155, 4294901760
    %v1124 = vsub.f32 %v155, %v1123
    %v1125 = vand.u32 %v1124, 4294901760
    %v1126 = vsub.f32 %v1124, %v1125
    %v1127 = vand.u32 %v1126, 4294901760
    %1128 = vmatmul.mubr.f32.gmra.mrb[0].mxu0 %v1127
    %v1129 = vpop.f32.mrb[0].mxu0
    %v1130 = vadd.f32 %v1018, %v1129
    %v1131 = vpop.f32.mrb[0].mxu0
    %1132 = vdwg.mxu0
    %1133 = vmatprep.subr.mxu0 0.0
    %v1134 = vand.u32 %v80, 4294901760
    %v1135 = vsub.f32 %v80, %v1134
    %v1136 = vand.u32 %v1135, 4294901760
    %v1137 = vsub.f32 %v1135, %v1136
    %v1138 = vand.u32 %v1137, 4294901760
    %1139 = vmatpush1.msra.mxu0 %v1138
    %1140 = vmatprep.subr.mxu0 0.0
    %v1141 = vand.u32 %v81, 4294901760
    %v1142 = vsub.f32 %v81, %v1141
    %v1143 = vand.u32 %v1142, 4294901760
    %v1144 = vsub.f32 %v1142, %v1143
    %v1145 = vand.u32 %v1144, 4294901760
    %1146 = vmatpush1.msra.mxu0 %v1145
    %1147 = vmatprep.subr.mxu0 0.0
    %v1148 = vand.u32 %v82, 4294901760
    %v1149 = vsub.f32 %v82, %v1148
    %v1150 = vand.u32 %v1149, 4294901760
    %v1151 = vsub.f32 %v1149, %v1150
    %v1152 = vand.u32 %v1151, 4294901760
    %1153 = vmatpush1.msra.mxu0 %v1152
    %1154 = vmatprep.subr.mxu0 0.0
    %v1155 = vand.u32 %v83, 4294901760
    %v1156 = vsub.f32 %v83, %v1155
    %v1157 = vand.u32 %v1156, 4294901760
    %v1158 = vsub.f32 %v1156, %v1157
    %v1159 = vand.u32 %v1158, 4294901760
    %1160 = vmatpush1.msra.mxu0 %v1159
    %1161 = vmatprep.subr.mxu0 0.0
    %v1162 = vand.u32 %v84, 4294901760
    %v1163 = vsub.f32 %v84, %v1162
    %v1164 = vand.u32 %v1163, 4294901760
    %v1165 = vsub.f32 %v1163, %v1164
    %v1166 = vand.u32 %v1165, 4294901760
    %1167 = vmatpush1.msra.mxu0 %v1166
    %1168 = vmatprep.subr.mxu0 0.0
    %v1169 = vand.u32 %v85, 4294901760
    %v1170 = vsub.f32 %v85, %v1169
    %v1171 = vand.u32 %v1170, 4294901760
    %v1172 = vsub.f32 %v1170, %v1171
    %v1173 = vand.u32 %v1172, 4294901760
    %1174 = vmatpush1.msra.mxu0 %v1173
    %1175 = vmatprep.subr.mxu0 0.0
    %v1176 = vand.u32 %v86, 4294901760
    %v1177 = vsub.f32 %v86, %v1176
    %v1178 = vand.u32 %v1177, 4294901760
    %v1179 = vsub.f32 %v1177, %v1178
    %v1180 = vand.u32 %v1179, 4294901760
    %1181 = vmatpush1.msra.mxu0 %v1180
    %1182 = vmatprep.subr.mxu0 0.0
    %v1183 = vand.u32 %v87, 4294901760
    %v1184 = vsub.f32 %v87, %v1183
    %v1185 = vand.u32 %v1184, 4294901760
    %v1186 = vsub.f32 %v1184, %v1185
    %v1187 = vand.u32 %v1186, 4294901760
    %1188 = vmatpush1.msra.mxu0 %v1187
    %1189 = vmatprep.subr.mxu0 0.0
    %v1190 = vand.u32 %v88, 4294901760
    %v1191 = vsub.f32 %v88, %v1190
    %v1192 = vand.u32 %v1191, 4294901760
    %v1193 = vsub.f32 %v1191, %v1192
    %v1194 = vand.u32 %v1193, 4294901760
    %1195 = vmatpush1.msra.mxu0 %v1194
    %1196 = vmatprep.subr.mxu0 0.0
    %v1197 = vand.u32 %v89, 4294901760
    %v1198 = vsub.f32 %v89, %v1197
    %v1199 = vand.u32 %v1198, 4294901760
    %v1200 = vsub.f32 %v1198, %v1199
    %v1201 = vand.u32 %v1200, 4294901760
    %1202 = vmatpush1.msra.mxu0 %v1201
    %1203 = vmatprep.subr.mxu0 0.0
    %v1204 = vand.u32 %v90, 4294901760
    %v1205 = vsub.f32 %v90, %v1204
    %v1206 = vand.u32 %v1205, 4294901760
    %v1207 = vsub.f32 %v1205, %v1206
    %v1208 = vand.u32 %v1207, 4294901760
    %1209 = vmatpush1.msra.mxu0 %v1208
    %1210 = vmatprep.subr.mxu0 0.0
    %v1211 = vand.u32 %v91, 4294901760
    %v1212 = vsub.f32 %v91, %v1211
    %v1213 = vand.u32 %v1212, 4294901760
    %v1214 = vsub.f32 %v1212, %v1213
    %v1215 = vand.u32 %v1214, 4294901760
    %1216 = vmatpush1.msra.mxu0 %v1215
    %1217 = vmatprep.subr.mxu0 0.0
    %v1218 = vand.u32 %v92, 4294901760
    %v1219 = vsub.f32 %v92, %v1218
    %v1220 = vand.u32 %v1219, 4294901760
    %v1221 = vsub.f32 %v1219, %v1220
    %v1222 = vand.u32 %v1221, 4294901760
    %1223 = vmatpush1.msra.mxu0 %v1222
    %1224 = vmatprep.subr.mxu0 0.0
    %v1225 = vand.u32 %v93, 4294901760
    %v1226 = vsub.f32 %v93, %v1225
    %v1227 = vand.u32 %v1226, 4294901760
    %v1228 = vsub.f32 %v1226, %v1227
    %v1229 = vand.u32 %v1228, 4294901760
    %1230 = vmatpush1.msra.mxu0 %v1229
    %1231 = vmatprep.subr.mxu0 0.0
    %v1232 = vand.u32 %v94, 4294901760
    %v1233 = vsub.f32 %v94, %v1232
    %v1234 = vand.u32 %v1233, 4294901760
    %v1235 = vsub.f32 %v1233, %v1234
    %v1236 = vand.u32 %v1235, 4294901760
    %1237 = vmatpush1.msra.mxu0 %v1236
    %1238 = vmatprep.subr.mxu0 0.0
    %v1239 = vand.u32 %v95, 4294901760
    %v1240 = vsub.f32 %v95, %v1239
    %v1241 = vand.u32 %v1240, 4294901760
    %v1242 = vsub.f32 %v1240, %v1241
    %v1243 = vand.u32 %v1242, 4294901760
    %1244 = vmatpush1.msra.mxu0 %v1243
    %1245 = vmatprep.subr.mxu0 0.0
    %v1246 = vand.u32 %v96, 4294901760
    %v1247 = vsub.f32 %v96, %v1246
    %v1248 = vand.u32 %v1247, 4294901760
    %v1249 = vsub.f32 %v1247, %v1248
    %v1250 = vand.u32 %v1249, 4294901760
    %1251 = vmatpush1.msra.mxu0 %v1250
    %1252 = vmatprep.subr.mxu0 0.0
    %v1253 = vand.u32 %v97, 4294901760
    %v1254 = vsub.f32 %v97, %v1253
    %v1255 = vand.u32 %v1254, 4294901760
    %v1256 = vsub.f32 %v1254, %v1255
    %v1257 = vand.u32 %v1256, 4294901760
    %1258 = vmatpush1.msra.mxu0 %v1257
    %1259 = vmatprep.subr.mxu0 0.0
    %v1260 = vand.u32 %v98, 4294901760
    %v1261 = vsub.f32 %v98, %v1260
    %v1262 = vand.u32 %v1261, 4294901760
    %v1263 = vsub.f32 %v1261, %v1262
    %v1264 = vand.u32 %v1263, 4294901760
    %1265 = vmatpush1.msra.mxu0 %v1264
    %1266 = vmatprep.subr.mxu0 0.0
    %v1267 = vand.u32 %v99, 4294901760
    %v1268 = vsub.f32 %v99, %v1267
    %v1269 = vand.u32 %v1268, 4294901760
    %v1270 = vsub.f32 %v1268, %v1269
    %v1271 = vand.u32 %v1270, 4294901760
    %1272 = vmatpush1.msra.mxu0 %v1271
    %1273 = vmatprep.subr.mxu0 0.0
    %v1274 = vand.u32 %v100, 4294901760
    %v1275 = vsub.f32 %v100, %v1274
    %v1276 = vand.u32 %v1275, 4294901760
    %v1277 = vsub.f32 %v1275, %v1276
    %v1278 = vand.u32 %v1277, 4294901760
    %1279 = vmatpush1.msra.mxu0 %v1278
    %1280 = vmatprep.subr.mxu0 0.0
    %v1281 = vand.u32 %v101, 4294901760
    %v1282 = vsub.f32 %v101, %v1281
    %v1283 = vand.u32 %v1282, 4294901760
    %v1284 = vsub.f32 %v1282, %v1283
    %v1285 = vand.u32 %v1284, 4294901760
    %1286 = vmatpush1.msra.mxu0 %v1285
    %1287 = vmatprep.subr.mxu0 0.0
    %v1288 = vand.u32 %v102, 4294901760
    %v1289 = vsub.f32 %v102, %v1288
    %v1290 = vand.u32 %v1289, 4294901760
    %v1291 = vsub.f32 %v1289, %v1290
    %v1292 = vand.u32 %v1291, 4294901760
    %1293 = vmatpush1.msra.mxu0 %v1292
    %1294 = vmatprep.subr.mxu0 0.0
    %v1295 = vand.u32 %v103, 4294901760
    %v1296 = vsub.f32 %v103, %v1295
    %v1297 = vand.u32 %v1296, 4294901760
    %v1298 = vsub.f32 %v1296, %v1297
    %v1299 = vand.u32 %v1298, 4294901760
    %1300 = vmatpush1.msra.mxu0 %v1299
    %1301 = vmatprep.subr.mxu0 0.0
    %v1302 = vand.u32 %v104, 4294901760
    %v1303 = vsub.f32 %v104, %v1302
    %v1304 = vand.u32 %v1303, 4294901760
    %v1305 = vsub.f32 %v1303, %v1304
    %v1306 = vand.u32 %v1305, 4294901760
    %1307 = vmatpush1.msra.mxu0 %v1306
    %1308 = vmatprep.subr.mxu0 0.0
    %v1309 = vand.u32 %v105, 4294901760
    %v1310 = vsub.f32 %v105, %v1309
    %v1311 = vand.u32 %v1310, 4294901760
    %v1312 = vsub.f32 %v1310, %v1311
    %v1313 = vand.u32 %v1312, 4294901760
    %1314 = vmatpush1.msra.mxu0 %v1313
    %1315 = vmatprep.subr.mxu0 0.0
    %v1316 = vand.u32 %v106, 4294901760
    %v1317 = vsub.f32 %v106, %v1316
    %v1318 = vand.u32 %v1317, 4294901760
    %v1319 = vsub.f32 %v1317, %v1318
    %v1320 = vand.u32 %v1319, 4294901760
    %1321 = vmatpush1.msra.mxu0 %v1320
    %1322 = vmatprep.subr.mxu0 0.0
    %v1323 = vand.u32 %v107, 4294901760
    %v1324 = vsub.f32 %v107, %v1323
    %v1325 = vand.u32 %v1324, 4294901760
    %v1326 = vsub.f32 %v1324, %v1325
    %v1327 = vand.u32 %v1326, 4294901760
    %1328 = vmatpush1.msra.mxu0 %v1327
    %1329 = vmatprep.subr.mxu0 0.0
    %v1330 = vand.u32 %v108, 4294901760
    %v1331 = vsub.f32 %v108, %v1330
    %v1332 = vand.u32 %v1331, 4294901760
    %v1333 = vsub.f32 %v1331, %v1332
    %v1334 = vand.u32 %v1333, 4294901760
    %1335 = vmatpush1.msra.mxu0 %v1334
    %1336 = vmatprep.subr.mxu0 0.0
    %v1337 = vand.u32 %v109, 4294901760
    %v1338 = vsub.f32 %v109, %v1337
    %v1339 = vand.u32 %v1338, 4294901760
    %v1340 = vsub.f32 %v1338, %v1339
    %v1341 = vand.u32 %v1340, 4294901760
    %1342 = vmatpush1.msra.mxu0 %v1341
    %1343 = vmatprep.subr.mxu0 0.0
    %v1344 = vand.u32 %v110, 4294901760
    %v1345 = vsub.f32 %v110, %v1344
    %v1346 = vand.u32 %v1345, 4294901760
    %v1347 = vsub.f32 %v1345, %v1346
    %v1348 = vand.u32 %v1347, 4294901760
    %1349 = vmatpush1.msra.mxu0 %v1348
    %1350 = vmatprep.subr.mxu0 0.0
    %v1351 = vand.u32 %v111, 4294901760
    %v1352 = vsub.f32 %v111, %v1351
    %v1353 = vand.u32 %v1352, 4294901760
    %v1354 = vsub.f32 %v1352, %v1353
    %v1355 = vand.u32 %v1354, 4294901760
    %1356 = vmatpush1.msra.mxu0 %v1355
    %v1357 = vand.u32 %v156, 4294901760
    %1358 = vmatprep.mubr.f32.mxu0 %v1357
    %v1359 = vand.u32 %v155, 4294901760
    %1360 = vmatmul.mubr.f32.gmra.mrb[0].mxu0 %v1359
    %v1361 = vpop.f32.mrb[0].mxu0
    %v1362 = vadd.f32 %v1130, %v1361
    %v1363 = vpop.f32.mrb[0].mxu0
    %1364 = vdwg.mxu0
    %1365 = vmatprep.subr.mxu0 0.0
    %v1366 = vand.u32 %v80, 4294901760
    %v1367 = vsub.f32 %v80, %v1366
    %1368 = vmatpush1.msra.mxu0 %v1367
    %1369 = vmatprep.subr.mxu0 0.0
    %v1370 = vand.u32 %v81, 4294901760
    %v1371 = vsub.f32 %v81, %v1370
    %1372 = vmatpush1.msra.mxu0 %v1371
    %1373 = vmatprep.subr.mxu0 0.0
    %v1374 = vand.u32 %v82, 4294901760
    %v1375 = vsub.f32 %v82, %v1374
    %1376 = vmatpush1.msra.mxu0 %v1375
    %1377 = vmatprep.subr.mxu0 0.0
    %v1378 = vand.u32 %v83, 4294901760
    %v1379 = vsub.f32 %v83, %v1378
    %1380 = vmatpush1.msra.mxu0 %v1379
    %1381 = vmatprep.subr.mxu0 0.0
    %v1382 = vand.u32 %v84, 4294901760
    %v1383 = vsub.f32 %v84, %v1382
    %1384 = vmatpush1.msra.mxu0 %v1383
    %1385 = vmatprep.subr.mxu0 0.0
    %v1386 = vand.u32 %v85, 4294901760
    %v1387 = vsub.f32 %v85, %v1386
    %1388 = vmatpush1.msra.mxu0 %v1387
    %1389 = vmatprep.subr.mxu0 0.0
    %v1390 = vand.u32 %v86, 4294901760
    %v1391 = vsub.f32 %v86, %v1390
    %1392 = vmatpush1.msra.mxu0 %v1391
    %1393 = vmatprep.subr.mxu0 0.0
    %v1394 = vand.u32 %v87, 4294901760
    %v1395 = vsub.f32 %v87, %v1394
    %1396 = vmatpush1.msra.mxu0 %v1395
    %1397 = vmatprep.subr.mxu0 0.0
    %v1398 = vand.u32 %v88, 4294901760
    %v1399 = vsub.f32 %v88, %v1398
    %1400 = vmatpush1.msra.mxu0 %v1399
    %1401 = vmatprep.subr.mxu0 0.0
    %v1402 = vand.u32 %v89, 4294901760
    %v1403 = vsub.f32 %v89, %v1402
    %1404 = vmatpush1.msra.mxu0 %v1403
    %1405 = vmatprep.subr.mxu0 0.0
    %v1406 = vand.u32 %v90, 4294901760
    %v1407 = vsub.f32 %v90, %v1406
    %1408 = vmatpush1.msra.mxu0 %v1407
    %1409 = vmatprep.subr.mxu0 0.0
    %v1410 = vand.u32 %v91, 4294901760
    %v1411 = vsub.f32 %v91, %v1410
    %1412 = vmatpush1.msra.mxu0 %v1411
    %1413 = vmatprep.subr.mxu0 0.0
    %v1414 = vand.u32 %v92, 4294901760
    %v1415 = vsub.f32 %v92, %v1414
    %1416 = vmatpush1.msra.mxu0 %v1415
    %1417 = vmatprep.subr.mxu0 0.0
    %v1418 = vand.u32 %v93, 4294901760
    %v1419 = vsub.f32 %v93, %v1418
    %1420 = vmatpush1.msra.mxu0 %v1419
    %1421 = vmatprep.subr.mxu0 0.0
    %v1422 = vand.u32 %v94, 4294901760
    %v1423 = vsub.f32 %v94, %v1422
    %1424 = vmatpush1.msra.mxu0 %v1423
    %1425 = vmatprep.subr.mxu0 0.0
    %v1426 = vand.u32 %v95, 4294901760
    %v1427 = vsub.f32 %v95, %v1426
    %1428 = vmatpush1.msra.mxu0 %v1427
    %1429 = vmatprep.subr.mxu0 0.0
    %v1430 = vand.u32 %v96, 4294901760
    %v1431 = vsub.f32 %v96, %v1430
    %1432 = vmatpush1.msra.mxu0 %v1431
    %1433 = vmatprep.subr.mxu0 0.0
    %v1434 = vand.u32 %v97, 4294901760
    %v1435 = vsub.f32 %v97, %v1434
    %1436 = vmatpush1.msra.mxu0 %v1435
    %1437 = vmatprep.subr.mxu0 0.0
    %v1438 = vand.u32 %v98, 4294901760
    %v1439 = vsub.f32 %v98, %v1438
    %1440 = vmatpush1.msra.mxu0 %v1439
    %1441 = vmatprep.subr.mxu0 0.0
    %v1442 = vand.u32 %v99, 4294901760
    %v1443 = vsub.f32 %v99, %v1442
    %1444 = vmatpush1.msra.mxu0 %v1443
    %1445 = vmatprep.subr.mxu0 0.0
    %v1446 = vand.u32 %v100, 4294901760
    %v1447 = vsub.f32 %v100, %v1446
    %1448 = vmatpush1.msra.mxu0 %v1447
    %1449 = vmatprep.subr.mxu0 0.0
    %v1450 = vand.u32 %v101, 4294901760
    %v1451 = vsub.f32 %v101, %v1450
    %1452 = vmatpush1.msra.mxu0 %v1451
    %1453 = vmatprep.subr.mxu0 0.0
    %v1454 = vand.u32 %v102, 4294901760
    %v1455 = vsub.f32 %v102, %v1454
    %1456 = vmatpush1.msra.mxu0 %v1455
    %1457 = vmatprep.subr.mxu0 0.0
    %v1458 = vand.u32 %v103, 4294901760
    %v1459 = vsub.f32 %v103, %v1458
    %1460 = vmatpush1.msra.mxu0 %v1459
    %1461 = vmatprep.subr.mxu0 0.0
    %v1462 = vand.u32 %v104, 4294901760
    %v1463 = vsub.f32 %v104, %v1462
    %1464 = vmatpush1.msra.mxu0 %v1463
    %1465 = vmatprep.subr.mxu0 0.0
    %v1466 = vand.u32 %v105, 4294901760
    %v1467 = vsub.f32 %v105, %v1466
    %1468 = vmatpush1.msra.mxu0 %v1467
    %1469 = vmatprep.subr.mxu0 0.0
    %v1470 = vand.u32 %v106, 4294901760
    %v1471 = vsub.f32 %v106, %v1470
    %1472 = vmatpush1.msra.mxu0 %v1471
    %1473 = vmatprep.subr.mxu0 0.0
    %v1474 = vand.u32 %v107, 4294901760
    %v1475 = vsub.f32 %v107, %v1474
    %1476 = vmatpush1.msra.mxu0 %v1475
    %1477 = vmatprep.subr.mxu0 0.0
    %v1478 = vand.u32 %v108, 4294901760
    %v1479 = vsub.f32 %v108, %v1478
    %1480 = vmatpush1.msra.mxu0 %v1479
    %1481 = vmatprep.subr.mxu0 0.0
    %v1482 = vand.u32 %v109, 4294901760
    %v1483 = vsub.f32 %v109, %v1482
    %1484 = vmatpush1.msra.mxu0 %v1483
    %1485 = vmatprep.subr.mxu0 0.0
    %v1486 = vand.u32 %v110, 4294901760
    %v1487 = vsub.f32 %v110, %v1486
    %1488 = vmatpush1.msra.mxu0 %v1487
    %1489 = vmatprep.subr.mxu0 0.0
    %v1490 = vand.u32 %v111, 4294901760
    %v1491 = vsub.f32 %v111, %v1490
    %1492 = vmatpush1.msra.mxu0 %v1491
    %v1493 = vand.u32 %v156, 4294901760
    %v1494 = vsub.f32 %v156, %v1493
    %1495 = vmatprep.mubr.f32.mxu0 %v1494
    %v1496 = vand.u32 %v155, 4294901760
    %v1497 = vsub.f32 %v155, %v1496
    %1498 = vmatmul.mubr.f32.gmra.mrb[0].mxu0 %v1497
    %v1499 = vpop.f32.mrb[0].mxu0
    %v1500 = vadd.f32 %v1362, %v1499
    %v1501 = vpop.f32.mrb[0].mxu0
    %1502 = vdwg.mxu0
    %1503 = vmatprep.subr.mxu0 0.0
    %v1504 = vand.u32 %v80, 4294901760
    %1505 = vmatpush1.msra.mxu0 %v1504
    %1506 = vmatprep.subr.mxu0 0.0
    %v1507 = vand.u32 %v81, 4294901760
    %1508 = vmatpush1.msra.mxu0 %v1507
    %1509 = vmatprep.subr.mxu0 0.0
    %v1510 = vand.u32 %v82, 4294901760
    %1511 = vmatpush1.msra.mxu0 %v1510
    %1512 = vmatprep.subr.mxu0 0.0
    %v1513 = vand.u32 %v83, 4294901760
    %1514 = vmatpush1.msra.mxu0 %v1513
    %1515 = vmatprep.subr.mxu0 0.0
    %v1516 = vand.u32 %v84, 4294901760
    %1517 = vmatpush1.msra.mxu0 %v1516
    %1518 = vmatprep.subr.mxu0 0.0
    %v1519 = vand.u32 %v85, 4294901760
    %1520 = vmatpush1.msra.mxu0 %v1519
    %1521 = vmatprep.subr.mxu0 0.0
    %v1522 = vand.u32 %v86, 4294901760
    %1523 = vmatpush1.msra.mxu0 %v1522
    %1524 = vmatprep.subr.mxu0 0.0
    %v1525 = vand.u32 %v87, 4294901760
    %1526 = vmatpush1.msra.mxu0 %v1525
    %1527 = vmatprep.subr.mxu0 0.0
    %v1528 = vand.u32 %v88, 4294901760
    %1529 = vmatpush1.msra.mxu0 %v1528
    %1530 = vmatprep.subr.mxu0 0.0
    %v1531 = vand.u32 %v89, 4294901760
    %1532 = vmatpush1.msra.mxu0 %v1531
    %1533 = vmatprep.subr.mxu0 0.0
    %v1534 = vand.u32 %v90, 4294901760
    %1535 = vmatpush1.msra.mxu0 %v1534
    %1536 = vmatprep.subr.mxu0 0.0
    %v1537 = vand.u32 %v91, 4294901760
    %1538 = vmatpush1.msra.mxu0 %v1537
    %1539 = vmatprep.subr.mxu0 0.0
    %v1540 = vand.u32 %v92, 4294901760
    %1541 = vmatpush1.msra.mxu0 %v1540
    %1542 = vmatprep.subr.mxu0 0.0
    %v1543 = vand.u32 %v93, 4294901760
    %1544 = vmatpush1.msra.mxu0 %v1543
    %1545 = vmatprep.subr.mxu0 0.0
    %v1546 = vand.u32 %v94, 4294901760
    %1547 = vmatpush1.msra.mxu0 %v1546
    %1548 = vmatprep.subr.mxu0 0.0
    %v1549 = vand.u32 %v95, 4294901760
    %1550 = vmatpush1.msra.mxu0 %v1549
    %1551 = vmatprep.subr.mxu0 0.0
    %v1552 = vand.u32 %v96, 4294901760
    %1553 = vmatpush1.msra.mxu0 %v1552
    %1554 = vmatprep.subr.mxu0 0.0
    %v1555 = vand.u32 %v97, 4294901760
    %1556 = vmatpush1.msra.mxu0 %v1555
    %1557 = vmatprep.subr.mxu0 0.0
    %v1558 = vand.u32 %v98, 4294901760
    %1559 = vmatpush1.msra.mxu0 %v1558
    %1560 = vmatprep.subr.mxu0 0.0
    %v1561 = vand.u32 %v99, 4294901760
    %1562 = vmatpush1.msra.mxu0 %v1561
    %1563 = vmatprep.subr.mxu0 0.0
    %v1564 = vand.u32 %v100, 4294901760
    %1565 = vmatpush1.msra.mxu0 %v1564
    %1566 = vmatprep.subr.mxu0 0.0
    %v1567 = vand.u32 %v101, 4294901760
    %1568 = vmatpush1.msra.mxu0 %v1567
    %1569 = vmatprep.subr.mxu0 0.0
    %v1570 = vand.u32 %v102, 4294901760
    %1571 = vmatpush1.msra.mxu0 %v1570
    %1572 = vmatprep.subr.mxu0 0.0
    %v1573 = vand.u32 %v103, 4294901760
    %1574 = vmatpush1.msra.mxu0 %v1573
    %1575 = vmatprep.subr.mxu0 0.0
    %v1576 = vand.u32 %v104, 4294901760
    %1577 = vmatpush1.msra.mxu0 %v1576
    %1578 = vmatprep.subr.mxu0 0.0
    %v1579 = vand.u32 %v105, 4294901760
    %1580 = vmatpush1.msra.mxu0 %v1579
    %1581 = vmatprep.subr.mxu0 0.0
    %v1582 = vand.u32 %v106, 4294901760
    %1583 = vmatpush1.msra.mxu0 %v1582
    %1584 = vmatprep.subr.mxu0 0.0
    %v1585 = vand.u32 %v107, 4294901760
    %1586 = vmatpush1.msra.mxu0 %v1585
    %1587 = vmatprep.subr.mxu0 0.0
    %v1588 = vand.u32 %v108, 4294901760
    %1589 = vmatpush1.msra.mxu0 %v1588
    %1590 = vmatprep.subr.mxu0 0.0
    %v1591 = vand.u32 %v109, 4294901760
    %1592 = vmatpush1.msra.mxu0 %v1591
    %1593 = vmatprep.subr.mxu0 0.0
    %v1594 = vand.u32 %v110, 4294901760
    %1595 = vmatpush1.msra.mxu0 %v1594
    %1596 = vmatprep.subr.mxu0 0.0
    %v1597 = vand.u32 %v111, 4294901760
    %1598 = vmatpush1.msra.mxu0 %v1597
    %v1599 = vand.u32 %v156, 4294901760
    %v1600 = vsub.f32 %v156, %v1599
    %v1601 = vand.u32 %v1600, 4294901760
    %1602 = vmatprep.mubr.f32.mxu0 %v1601
    %v1603 = vand.u32 %v155, 4294901760
    %v1604 = vsub.f32 %v155, %v1603
    %v1605 = vand.u32 %v1604, 4294901760
    %1606 = vmatmul.mubr.f32.gmra.mrb[0].mxu0 %v1605
    %v1607 = vpop.f32.mrb[0].mxu0
    %v1608 = vadd.f32 %v1500, %v1607
    %v1609 = vpop.f32.mrb[0].mxu0
    %1610 = vdwg.mxu0
    %1611 = vmatprep.subr.mxu0 0.0
    %v1612 = vand.u32 %v80, 4294901760
    %v1613 = vsub.f32 %v80, %v1612
    %v1614 = vand.u32 %v1613, 4294901760
    %1615 = vmatpush1.msra.mxu0 %v1614
    %1616 = vmatprep.subr.mxu0 0.0
    %v1617 = vand.u32 %v81, 4294901760
    %v1618 = vsub.f32 %v81, %v1617
    %v1619 = vand.u32 %v1618, 4294901760
    %1620 = vmatpush1.msra.mxu0 %v1619
    %1621 = vmatprep.subr.mxu0 0.0
    %v1622 = vand.u32 %v82, 4294901760
    %v1623 = vsub.f32 %v82, %v1622
    %v1624 = vand.u32 %v1623, 4294901760
    %1625 = vmatpush1.msra.mxu0 %v1624
    %1626 = vmatprep.subr.mxu0 0.0
    %v1627 = vand.u32 %v83, 4294901760
    %v1628 = vsub.f32 %v83, %v1627
    %v1629 = vand.u32 %v1628, 4294901760
    %1630 = vmatpush1.msra.mxu0 %v1629
    %1631 = vmatprep.subr.mxu0 0.0
    %v1632 = vand.u32 %v84, 4294901760
    %v1633 = vsub.f32 %v84, %v1632
    %v1634 = vand.u32 %v1633, 4294901760
    %1635 = vmatpush1.msra.mxu0 %v1634
    %1636 = vmatprep.subr.mxu0 0.0
    %v1637 = vand.u32 %v85, 4294901760
    %v1638 = vsub.f32 %v85, %v1637
    %v1639 = vand.u32 %v1638, 4294901760
    %1640 = vmatpush1.msra.mxu0 %v1639
    %1641 = vmatprep.subr.mxu0 0.0
    %v1642 = vand.u32 %v86, 4294901760
    %v1643 = vsub.f32 %v86, %v1642
    %v1644 = vand.u32 %v1643, 4294901760
    %1645 = vmatpush1.msra.mxu0 %v1644
    %1646 = vmatprep.subr.mxu0 0.0
    %v1647 = vand.u32 %v87, 4294901760
    %v1648 = vsub.f32 %v87, %v1647
    %v1649 = vand.u32 %v1648, 4294901760
    %1650 = vmatpush1.msra.mxu0 %v1649
    %1651 = vmatprep.subr.mxu0 0.0
    %v1652 = vand.u32 %v88, 4294901760
    %v1653 = vsub.f32 %v88, %v1652
    %v1654 = vand.u32 %v1653, 4294901760
    %1655 = vmatpush1.msra.mxu0 %v1654
    %1656 = vmatprep.subr.mxu0 0.0
    %v1657 = vand.u32 %v89, 4294901760
    %v1658 = vsub.f32 %v89, %v1657
    %v1659 = vand.u32 %v1658, 4294901760
    %1660 = vmatpush1.msra.mxu0 %v1659
    %1661 = vmatprep.subr.mxu0 0.0
    %v1662 = vand.u32 %v90, 4294901760
    %v1663 = vsub.f32 %v90, %v1662
    %v1664 = vand.u32 %v1663, 4294901760
    %1665 = vmatpush1.msra.mxu0 %v1664
    %1666 = vmatprep.subr.mxu0 0.0
    %v1667 = vand.u32 %v91, 4294901760
    %v1668 = vsub.f32 %v91, %v1667
    %v1669 = vand.u32 %v1668, 4294901760
    %1670 = vmatpush1.msra.mxu0 %v1669
    %1671 = vmatprep.subr.mxu0 0.0
    %v1672 = vand.u32 %v92, 4294901760
    %v1673 = vsub.f32 %v92, %v1672
    %v1674 = vand.u32 %v1673, 4294901760
    %1675 = vmatpush1.msra.mxu0 %v1674
    %1676 = vmatprep.subr.mxu0 0.0
    %v1677 = vand.u32 %v93, 4294901760
    %v1678 = vsub.f32 %v93, %v1677
    %v1679 = vand.u32 %v1678, 4294901760
    %1680 = vmatpush1.msra.mxu0 %v1679
    %1681 = vmatprep.subr.mxu0 0.0
    %v1682 = vand.u32 %v94, 4294901760
    %v1683 = vsub.f32 %v94, %v1682
    %v1684 = vand.u32 %v1683, 4294901760
    %1685 = vmatpush1.msra.mxu0 %v1684
    %1686 = vmatprep.subr.mxu0 0.0
    %v1687 = vand.u32 %v95, 4294901760
    %v1688 = vsub.f32 %v95, %v1687
    %v1689 = vand.u32 %v1688, 4294901760
    %1690 = vmatpush1.msra.mxu0 %v1689
    %1691 = vmatprep.subr.mxu0 0.0
    %v1692 = vand.u32 %v96, 4294901760
    %v1693 = vsub.f32 %v96, %v1692
    %v1694 = vand.u32 %v1693, 4294901760
    %1695 = vmatpush1.msra.mxu0 %v1694
    %1696 = vmatprep.subr.mxu0 0.0
    %v1697 = vand.u32 %v97, 4294901760
    %v1698 = vsub.f32 %v97, %v1697
    %v1699 = vand.u32 %v1698, 4294901760
    %1700 = vmatpush1.msra.mxu0 %v1699
    %1701 = vmatprep.subr.mxu0 0.0
    %v1702 = vand.u32 %v98, 4294901760
    %v1703 = vsub.f32 %v98, %v1702
    %v1704 = vand.u32 %v1703, 4294901760
    %1705 = vmatpush1.msra.mxu0 %v1704
    %1706 = vmatprep.subr.mxu0 0.0
    %v1707 = vand.u32 %v99, 4294901760
    %v1708 = vsub.f32 %v99, %v1707
    %v1709 = vand.u32 %v1708, 4294901760
    %1710 = vmatpush1.msra.mxu0 %v1709
    %1711 = vmatprep.subr.mxu0 0.0
    %v1712 = vand.u32 %v100, 4294901760
    %v1713 = vsub.f32 %v100, %v1712
    %v1714 = vand.u32 %v1713, 4294901760
    %1715 = vmatpush1.msra.mxu0 %v1714
    %1716 = vmatprep.subr.mxu0 0.0
    %v1717 = vand.u32 %v101, 4294901760
    %v1718 = vsub.f32 %v101, %v1717
    %v1719 = vand.u32 %v1718, 4294901760
    %1720 = vmatpush1.msra.mxu0 %v1719
    %1721 = vmatprep.subr.mxu0 0.0
    %v1722 = vand.u32 %v102, 4294901760
    %v1723 = vsub.f32 %v102, %v1722
    %v1724 = vand.u32 %v1723, 4294901760
    %1725 = vmatpush1.msra.mxu0 %v1724
    %1726 = vmatprep.subr.mxu0 0.0
    %v1727 = vand.u32 %v103, 4294901760
    %v1728 = vsub.f32 %v103, %v1727
    %v1729 = vand.u32 %v1728, 4294901760
    %1730 = vmatpush1.msra.mxu0 %v1729
    %1731 = vmatprep.subr.mxu0 0.0
    %v1732 = vand.u32 %v104, 4294901760
    %v1733 = vsub.f32 %v104, %v1732
    %v1734 = vand.u32 %v1733, 4294901760
    %1735 = vmatpush1.msra.mxu0 %v1734
    %1736 = vmatprep.subr.mxu0 0.0
    %v1737 = vand.u32 %v105, 4294901760
    %v1738 = vsub.f32 %v105, %v1737
    %v1739 = vand.u32 %v1738, 4294901760
    %1740 = vmatpush1.msra.mxu0 %v1739
    %1741 = vmatprep.subr.mxu0 0.0
    %v1742 = vand.u32 %v106, 4294901760
    %v1743 = vsub.f32 %v106, %v1742
    %v1744 = vand.u32 %v1743, 4294901760
    %1745 = vmatpush1.msra.mxu0 %v1744
    %1746 = vmatprep.subr.mxu0 0.0
    %v1747 = vand.u32 %v107, 4294901760
    %v1748 = vsub.f32 %v107, %v1747
    %v1749 = vand.u32 %v1748, 4294901760
    %1750 = vmatpush1.msra.mxu0 %v1749
    %1751 = vmatprep.subr.mxu0 0.0
    %v1752 = vand.u32 %v108, 4294901760
    %v1753 = vsub.f32 %v108, %v1752
    %v1754 = vand.u32 %v1753, 4294901760
    %1755 = vmatpush1.msra.mxu0 %v1754
    %1756 = vmatprep.subr.mxu0 0.0
    %v1757 = vand.u32 %v109, 4294901760
    %v1758 = vsub.f32 %v109, %v1757
    %v1759 = vand.u32 %v1758, 4294901760
    %1760 = vmatpush1.msra.mxu0 %v1759
    %1761 = vmatprep.subr.mxu0 0.0
    %v1762 = vand.u32 %v110, 4294901760
    %v1763 = vsub.f32 %v110, %v1762
    %v1764 = vand.u32 %v1763, 4294901760
    %1765 = vmatpush1.msra.mxu0 %v1764
    %1766 = vmatprep.subr.mxu0 0.0
    %v1767 = vand.u32 %v111, 4294901760
    %v1768 = vsub.f32 %v111, %v1767
    %v1769 = vand.u32 %v1768, 4294901760
    %1770 = vmatpush1.msra.mxu0 %v1769
    %v1771 = vand.u32 %v156, 4294901760
    %1772 = vmatprep.mubr.f32.mxu0 %v1771
    %v1773 = vand.u32 %v155, 4294901760
    %1774 = vmatmul.mubr.f32.gmra.mrb[0].mxu0 %v1773
    %v1775 = vpop.f32.mrb[0].mxu0
    %v1776 = vadd.f32 %v1608, %v1775
    %v1777 = vpop.f32.mrb[0].mxu0
    %1778 = vdwg.mxu0
    %1779 = vmatprep.subr.mxu0 0.0
    %v1780 = vand.u32 %v80, 4294901760
    %1781 = vmatpush1.msra.mxu0 %v1780
    %1782 = vmatprep.subr.mxu0 0.0
    %v1783 = vand.u32 %v81, 4294901760
    %1784 = vmatpush1.msra.mxu0 %v1783
    %1785 = vmatprep.subr.mxu0 0.0
    %v1786 = vand.u32 %v82, 4294901760
    %1787 = vmatpush1.msra.mxu0 %v1786
    %1788 = vmatprep.subr.mxu0 0.0
    %v1789 = vand.u32 %v83, 4294901760
    %1790 = vmatpush1.msra.mxu0 %v1789
    %1791 = vmatprep.subr.mxu0 0.0
    %v1792 = vand.u32 %v84, 4294901760
    %1793 = vmatpush1.msra.mxu0 %v1792
    %1794 = vmatprep.subr.mxu0 0.0
    %v1795 = vand.u32 %v85, 4294901760
    %1796 = vmatpush1.msra.mxu0 %v1795
    %1797 = vmatprep.subr.mxu0 0.0
    %v1798 = vand.u32 %v86, 4294901760
    %1799 = vmatpush1.msra.mxu0 %v1798
    %1800 = vmatprep.subr.mxu0 0.0
    %v1801 = vand.u32 %v87, 4294901760
    %1802 = vmatpush1.msra.mxu0 %v1801
    %1803 = vmatprep.subr.mxu0 0.0
    %v1804 = vand.u32 %v88, 4294901760
    %1805 = vmatpush1.msra.mxu0 %v1804
    %1806 = vmatprep.subr.mxu0 0.0
    %v1807 = vand.u32 %v89, 4294901760
    %1808 = vmatpush1.msra.mxu0 %v1807
    %1809 = vmatprep.subr.mxu0 0.0
    %v1810 = vand.u32 %v90, 4294901760
    %1811 = vmatpush1.msra.mxu0 %v1810
    %1812 = vmatprep.subr.mxu0 0.0
    %v1813 = vand.u32 %v91, 4294901760
    %1814 = vmatpush1.msra.mxu0 %v1813
    %1815 = vmatprep.subr.mxu0 0.0
    %v1816 = vand.u32 %v92, 4294901760
    %1817 = vmatpush1.msra.mxu0 %v1816
    %1818 = vmatprep.subr.mxu0 0.0
    %v1819 = vand.u32 %v93, 4294901760
    %1820 = vmatpush1.msra.mxu0 %v1819
    %1821 = vmatprep.subr.mxu0 0.0
    %v1822 = vand.u32 %v94, 4294901760
    %1823 = vmatpush1.msra.mxu0 %v1822
    %1824 = vmatprep.subr.mxu0 0.0
    %v1825 = vand.u32 %v95, 4294901760
    %1826 = vmatpush1.msra.mxu0 %v1825
    %1827 = vmatprep.subr.mxu0 0.0
    %v1828 = vand.u32 %v96, 4294901760
    %1829 = vmatpush1.msra.mxu0 %v1828
    %1830 = vmatprep.subr.mxu0 0.0
    %v1831 = vand.u32 %v97, 4294901760
    %1832 = vmatpush1.msra.mxu0 %v1831
    %1833 = vmatprep.subr.mxu0 0.0
    %v1834 = vand.u32 %v98, 4294901760
    %1835 = vmatpush1.msra.mxu0 %v1834
    %1836 = vmatprep.subr.mxu0 0.0
    %v1837 = vand.u32 %v99, 4294901760
    %1838 = vmatpush1.msra.mxu0 %v1837
    %1839 = vmatprep.subr.mxu0 0.0
    %v1840 = vand.u32 %v100, 4294901760
    %1841 = vmatpush1.msra.mxu0 %v1840
    %1842 = vmatprep.subr.mxu0 0.0
    %v1843 = vand.u32 %v101, 4294901760
    %1844 = vmatpush1.msra.mxu0 %v1843
    %1845 = vmatprep.subr.mxu0 0.0
    %v1846 = vand.u32 %v102, 4294901760
    %1847 = vmatpush1.msra.mxu0 %v1846
    %1848 = vmatprep.subr.mxu0 0.0
    %v1849 = vand.u32 %v103, 4294901760
    %1850 = vmatpush1.msra.mxu0 %v1849
    %1851 = vmatprep.subr.mxu0 0.0
    %v1852 = vand.u32 %v104, 4294901760
    %1853 = vmatpush1.msra.mxu0 %v1852
    %1854 = vmatprep.subr.mxu0 0.0
    %v1855 = vand.u32 %v105, 4294901760
    %1856 = vmatpush1.msra.mxu0 %v1855
    %1857 = vmatprep.subr.mxu0 0.0
    %v1858 = vand.u32 %v106, 4294901760
    %1859 = vmatpush1.msra.mxu0 %v1858
    %1860 = vmatprep.subr.mxu0 0.0
    %v1861 = vand.u32 %v107, 4294901760
    %1862 = vmatpush1.msra.mxu0 %v1861
    %1863 = vmatprep.subr.mxu0 0.0
    %v1864 = vand.u32 %v108, 4294901760
    %1865 = vmatpush1.msra.mxu0 %v1864
    %1866 = vmatprep.subr.mxu0 0.0
    %v1867 = vand.u32 %v109, 4294901760
    %1868 = vmatpush1.msra.mxu0 %v1867
    %1869 = vmatprep.subr.mxu0 0.0
    %v1870 = vand.u32 %v110, 4294901760
    %1871 = vmatpush1.msra.mxu0 %v1870
    %1872 = vmatprep.subr.mxu0 0.0
    %v1873 = vand.u32 %v111, 4294901760
    %1874 = vmatpush1.msra.mxu0 %v1873
    %v1875 = vand.u32 %v156, 4294901760
    %1876 = vmatprep.mubr.f32.mxu0 %v1875
    %v1877 = vand.u32 %v155, 4294901760
    %1878 = vmatmul.mubr.f32.gmra.mrb[0].mxu0 %v1877
    %v1879 = vpop.f32.mrb[0].mxu0
    %v1880 = vadd.f32 %v1776, %v1879
    %v1881 = vpop.f32.mrb[0].mxu0
    %1882 = vdwg.mxu0
    %v1883 = vlaneseq
    %v1884 = vshrl.u32 %v1883, 7
    %v1885 = vsub.s32 0, %v1884
    %v1886 = vrot.slane %v144, %v1885
    %v1887 = vmul.f32 %v1880, %v1886
    %v1888 = vlaneseq
    %v1889 = vshrl.u32 %v1888, 7
    %v1890 = vsub.s32 1, %v1889
    %v1891 = vrot.slane %v144, %v1890
    %v1892 = vmul.f32 %v1880, %v1891
    %v1893 = vlaneseq
    %v1894 = vshrl.u32 %v1893, 7
    %v1895 = vsub.s32 2, %v1894
    %v1896 = vrot.slane %v144, %v1895
    %v1897 = vmul.f32 %v1880, %v1896
    %vm1898 = vcmask 195584
    %v1900 = vsel %vm1898, %v157, 0
    %1902 = vmatprep.subr.mxu0 0.0
    %v1903 = vand.u32 %v1887, 4294901760
    %1904 = vmatpush1.msra.mxu0 %v1903
    %1905 = vmatprep.subr.mxu0 0.0
    %v1906 = vand.u32 %v1892, 4294901760
    %1907 = vmatpush1.msra.mxu0 %v1906
    %1908 = vmatprep.subr.mxu0 0.0
    %v1909 = vand.u32 %v1897, 4294901760
    %1910 = vmatpush1.msra.mxu0 %v1909
    %1911 = vmatprep.subr.mxu0 0.0
    %1912 = vmatpush1.msra.mxu0 0.0
    %1913 = vmatprep.subr.mxu0 0.0
    %1914 = vmatpush1.msra.mxu0 0.0
    %1915 = vmatprep.subr.mxu0 0.0
    %1916 = vmatpush1.msra.mxu0 0.0
    %1917 = vmatprep.subr.mxu0 0.0
    %1918 = vmatpush1.msra.mxu0 0.0
    %1919 = vmatprep.subr.mxu0 0.0
    %1920 = vmatpush1.msra.mxu0 0.0
    %1921 = vmatprep.subr.mxu0 0.0
    %1922 = vmatpush1.msra.mxu0 0.0
    %1923 = vmatprep.subr.mxu0 0.0
    %1924 = vmatpush1.msra.mxu0 0.0
    %1925 = vmatprep.subr.mxu0 0.0
    %1926 = vmatpush1.msra.mxu0 0.0
    %1927 = vmatprep.subr.mxu0 0.0
    %1928 = vmatpush1.msra.mxu0 0.0
    %1929 = vmatprep.subr.mxu0 0.0
    %1930 = vmatpush1.msra.mxu0 0.0
    %1931 = vmatprep.subr.mxu0 0.0
    %1932 = vmatpush1.msra.mxu0 0.0
    %1933 = vmatprep.subr.mxu0 0.0
    %1934 = vmatpush1.msra.mxu0 0.0
    %1935 = vmatprep.subr.mxu0 0.0
    %1936 = vmatpush1.msra.mxu0 0.0
    %1937 = vmatprep.subr.mxu0 0.0
    %1938 = vmatpush1.msra.mxu0 0.0
    %1939 = vmatprep.subr.mxu0 0.0
    %1940 = vmatpush1.msra.mxu0 0.0
    %1941 = vmatprep.subr.mxu0 0.0
    %1942 = vmatpush1.msra.mxu0 0.0
    %1943 = vmatprep.subr.mxu0 0.0
    %1944 = vmatpush1.msra.mxu0 0.0
    %1945 = vmatprep.subr.mxu0 0.0
    %1946 = vmatpush1.msra.mxu0 0.0
    %1947 = vmatprep.subr.mxu0 0.0
    %1948 = vmatpush1.msra.mxu0 0.0
    %1949 = vmatprep.subr.mxu0 0.0
    %1950 = vmatpush1.msra.mxu0 0.0
    %1951 = vmatprep.subr.mxu0 0.0
    %1952 = vmatpush1.msra.mxu0 0.0
    %1953 = vmatprep.subr.mxu0 0.0
    %1954 = vmatpush1.msra.mxu0 0.0
    %1955 = vmatprep.subr.mxu0 0.0
    %1956 = vmatpush1.msra.mxu0 0.0
    %1957 = vmatprep.subr.mxu0 0.0
    %1958 = vmatpush1.msra.mxu0 0.0
    %1959 = vmatprep.subr.mxu0 0.0
    %1960 = vmatpush1.msra.mxu0 0.0
    %1961 = vmatprep.subr.mxu0 0.0
    %1962 = vmatpush1.msra.mxu0 0.0
    %1963 = vmatprep.subr.mxu0 0.0
    %1964 = vmatpush1.msra.mxu0 0.0
    %1965 = vmatprep.subr.mxu0 0.0
    %1966 = vmatpush1.msra.mxu0 0.0
    %1967 = vmatprep.subr.mxu0 0.0
    %1968 = vmatpush1.msra.mxu0 0.0
    %1969 = vmatprep.mubr.f32.mxu0 0.0
    %v1970 = vand.u32 %v1900, 4294901760
    %v1971 = vsub.f32 %v1900, %v1970
    %v1972 = vand.u32 %v1971, 4294901760
    %v1973 = vsub.f32 %v1971, %v1972
    %v1974 = vand.u32 %v1973, 4294901760
    %1975 = vmatmul.mubr.f32.gmra.mrb[0].mxu0 %v1974
    %v1976 = vpop.f32.mrb[0].mxu0
    %v1977 = vadd.f32 %v158, %v1976
    %v1978 = vpop.f32.mrb[0].mxu0
    %1979 = vdwg.mxu0
    %1980 = vmatprep.subr.mxu0 0.0
    %v1981 = vand.u32 %v1887, 4294901760
    %v1982 = vsub.f32 %v1887, %v1981
    %v1983 = vand.u32 %v1982, 4294901760
    %v1984 = vsub.f32 %v1982, %v1983
    %v1985 = vand.u32 %v1984, 4294901760
    %1986 = vmatpush1.msra.mxu0 %v1985
    %1987 = vmatprep.subr.mxu0 0.0
    %v1988 = vand.u32 %v1892, 4294901760
    %v1989 = vsub.f32 %v1892, %v1988
    %v1990 = vand.u32 %v1989, 4294901760
    %v1991 = vsub.f32 %v1989, %v1990
    %v1992 = vand.u32 %v1991, 4294901760
    %1993 = vmatpush1.msra.mxu0 %v1992
    %1994 = vmatprep.subr.mxu0 0.0
    %v1995 = vand.u32 %v1897, 4294901760
    %v1996 = vsub.f32 %v1897, %v1995
    %v1997 = vand.u32 %v1996, 4294901760
    %v1998 = vsub.f32 %v1996, %v1997
    %v1999 = vand.u32 %v1998, 4294901760
    %2000 = vmatpush1.msra.mxu0 %v1999
    %2001 = vmatprep.subr.mxu0 0.0
    %2002 = vmatpush1.msra.mxu0 0.0
    %2003 = vmatprep.subr.mxu0 0.0
    %2004 = vmatpush1.msra.mxu0 0.0
    %2005 = vmatprep.subr.mxu0 0.0
    %2006 = vmatpush1.msra.mxu0 0.0
    %2007 = vmatprep.subr.mxu0 0.0
    %2008 = vmatpush1.msra.mxu0 0.0
    %2009 = vmatprep.subr.mxu0 0.0
    %2010 = vmatpush1.msra.mxu0 0.0
    %2011 = vmatprep.subr.mxu0 0.0
    %2012 = vmatpush1.msra.mxu0 0.0
    %2013 = vmatprep.subr.mxu0 0.0
    %2014 = vmatpush1.msra.mxu0 0.0
    %2015 = vmatprep.subr.mxu0 0.0
    %2016 = vmatpush1.msra.mxu0 0.0
    %2017 = vmatprep.subr.mxu0 0.0
    %2018 = vmatpush1.msra.mxu0 0.0
    %2019 = vmatprep.subr.mxu0 0.0
    %2020 = vmatpush1.msra.mxu0 0.0
    %2021 = vmatprep.subr.mxu0 0.0
    %2022 = vmatpush1.msra.mxu0 0.0
    %2023 = vmatprep.subr.mxu0 0.0
    %2024 = vmatpush1.msra.mxu0 0.0
    %2025 = vmatprep.subr.mxu0 0.0
    %2026 = vmatpush1.msra.mxu0 0.0
    %2027 = vmatprep.subr.mxu0 0.0
    %2028 = vmatpush1.msra.mxu0 0.0
    %2029 = vmatprep.subr.mxu0 0.0
    %2030 = vmatpush1.msra.mxu0 0.0
    %2031 = vmatprep.subr.mxu0 0.0
    %2032 = vmatpush1.msra.mxu0 0.0
    %2033 = vmatprep.subr.mxu0 0.0
    %2034 = vmatpush1.msra.mxu0 0.0
    %2035 = vmatprep.subr.mxu0 0.0
    %2036 = vmatpush1.msra.mxu0 0.0
    %2037 = vmatprep.subr.mxu0 0.0
    %2038 = vmatpush1.msra.mxu0 0.0
    %2039 = vmatprep.subr.mxu0 0.0
    %2040 = vmatpush1.msra.mxu0 0.0
    %2041 = vmatprep.subr.mxu0 0.0
    %2042 = vmatpush1.msra.mxu0 0.0
    %2043 = vmatprep.subr.mxu0 0.0
    %2044 = vmatpush1.msra.mxu0 0.0
    %2045 = vmatprep.subr.mxu0 0.0
    %2046 = vmatpush1.msra.mxu0 0.0
    %2047 = vmatprep.subr.mxu0 0.0
    %2048 = vmatpush1.msra.mxu0 0.0
    %2049 = vmatprep.subr.mxu0 0.0
    %2050 = vmatpush1.msra.mxu0 0.0
    %2051 = vmatprep.subr.mxu0 0.0
    %2052 = vmatpush1.msra.mxu0 0.0
    %2053 = vmatprep.subr.mxu0 0.0
    %2054 = vmatpush1.msra.mxu0 0.0
    %2055 = vmatprep.subr.mxu0 0.0
    %2056 = vmatpush1.msra.mxu0 0.0
    %2057 = vmatprep.subr.mxu0 0.0
    %2058 = vmatpush1.msra.mxu0 0.0
    %2059 = vmatprep.mubr.f32.mxu0 0.0
    %v2060 = vand.u32 %v1900, 4294901760
    %2061 = vmatmul.mubr.f32.gmra.mrb[0].mxu0 %v2060
    %v2062 = vpop.f32.mrb[0].mxu0
    %v2063 = vadd.f32 %v1977, %v2062
    %v2064 = vpop.f32.mrb[0].mxu0
    %2065 = vdwg.mxu0
    %2066 = vmatprep.subr.mxu0 0.0
    %v2067 = vand.u32 %v1887, 4294901760
    %v2068 = vsub.f32 %v1887, %v2067
    %2069 = vmatpush1.msra.mxu0 %v2068
    %2070 = vmatprep.subr.mxu0 0.0
    %v2071 = vand.u32 %v1892, 4294901760
    %v2072 = vsub.f32 %v1892, %v2071
    %2073 = vmatpush1.msra.mxu0 %v2072
    %2074 = vmatprep.subr.mxu0 0.0
    %v2075 = vand.u32 %v1897, 4294901760
    %v2076 = vsub.f32 %v1897, %v2075
    %2077 = vmatpush1.msra.mxu0 %v2076
    %2078 = vmatprep.subr.mxu0 0.0
    %2079 = vmatpush1.msra.mxu0 0.0
    %2080 = vmatprep.subr.mxu0 0.0
    %2081 = vmatpush1.msra.mxu0 0.0
    %2082 = vmatprep.subr.mxu0 0.0
    %2083 = vmatpush1.msra.mxu0 0.0
    %2084 = vmatprep.subr.mxu0 0.0
    %2085 = vmatpush1.msra.mxu0 0.0
    %2086 = vmatprep.subr.mxu0 0.0
    %2087 = vmatpush1.msra.mxu0 0.0
    %2088 = vmatprep.subr.mxu0 0.0
    %2089 = vmatpush1.msra.mxu0 0.0
    %2090 = vmatprep.subr.mxu0 0.0
    %2091 = vmatpush1.msra.mxu0 0.0
    %2092 = vmatprep.subr.mxu0 0.0
    %2093 = vmatpush1.msra.mxu0 0.0
    %2094 = vmatprep.subr.mxu0 0.0
    %2095 = vmatpush1.msra.mxu0 0.0
    %2096 = vmatprep.subr.mxu0 0.0
    %2097 = vmatpush1.msra.mxu0 0.0
    %2098 = vmatprep.subr.mxu0 0.0
    %2099 = vmatpush1.msra.mxu0 0.0
    %2100 = vmatprep.subr.mxu0 0.0
    %2101 = vmatpush1.msra.mxu0 0.0
    %2102 = vmatprep.subr.mxu0 0.0
    %2103 = vmatpush1.msra.mxu0 0.0
    %2104 = vmatprep.subr.mxu0 0.0
    %2105 = vmatpush1.msra.mxu0 0.0
    %2106 = vmatprep.subr.mxu0 0.0
    %2107 = vmatpush1.msra.mxu0 0.0
    %2108 = vmatprep.subr.mxu0 0.0
    %2109 = vmatpush1.msra.mxu0 0.0
    %2110 = vmatprep.subr.mxu0 0.0
    %2111 = vmatpush1.msra.mxu0 0.0
    %2112 = vmatprep.subr.mxu0 0.0
    %2113 = vmatpush1.msra.mxu0 0.0
    %2114 = vmatprep.subr.mxu0 0.0
    %2115 = vmatpush1.msra.mxu0 0.0
    %2116 = vmatprep.subr.mxu0 0.0
    %2117 = vmatpush1.msra.mxu0 0.0
    %2118 = vmatprep.subr.mxu0 0.0
    %2119 = vmatpush1.msra.mxu0 0.0
    %2120 = vmatprep.subr.mxu0 0.0
    %2121 = vmatpush1.msra.mxu0 0.0
    %2122 = vmatprep.subr.mxu0 0.0
    %2123 = vmatpush1.msra.mxu0 0.0
    %2124 = vmatprep.subr.mxu0 0.0
    %2125 = vmatpush1.msra.mxu0 0.0
    %2126 = vmatprep.subr.mxu0 0.0
    %2127 = vmatpush1.msra.mxu0 0.0
    %2128 = vmatprep.subr.mxu0 0.0
    %2129 = vmatpush1.msra.mxu0 0.0
    %2130 = vmatprep.subr.mxu0 0.0
    %2131 = vmatpush1.msra.mxu0 0.0
    %2132 = vmatprep.subr.mxu0 0.0
    %2133 = vmatpush1.msra.mxu0 0.0
    %2134 = vmatprep.subr.mxu0 0.0
    %2135 = vmatpush1.msra.mxu0 0.0
    %2136 = vmatprep.mubr.f32.mxu0 0.0
    %v2137 = vand.u32 %v1900, 4294901760
    %v2138 = vsub.f32 %v1900, %v2137
    %2139 = vmatmul.mubr.f32.gmra.mrb[0].mxu0 %v2138
    %v2140 = vpop.f32.mrb[0].mxu0
    %v2141 = vadd.f32 %v2063, %v2140
    %v2142 = vpop.f32.mrb[0].mxu0
    %2143 = vdwg.mxu0
    %2144 = vmatprep.subr.mxu0 0.0
    %v2145 = vand.u32 %v1887, 4294901760
    %2146 = vmatpush1.msra.mxu0 %v2145
    %2147 = vmatprep.subr.mxu0 0.0
    %v2148 = vand.u32 %v1892, 4294901760
    %2149 = vmatpush1.msra.mxu0 %v2148
    %2150 = vmatprep.subr.mxu0 0.0
    %v2151 = vand.u32 %v1897, 4294901760
    %2152 = vmatpush1.msra.mxu0 %v2151
    %2153 = vmatprep.subr.mxu0 0.0
    %2154 = vmatpush1.msra.mxu0 0.0
    %2155 = vmatprep.subr.mxu0 0.0
    %2156 = vmatpush1.msra.mxu0 0.0
    %2157 = vmatprep.subr.mxu0 0.0
    %2158 = vmatpush1.msra.mxu0 0.0
    %2159 = vmatprep.subr.mxu0 0.0
    %2160 = vmatpush1.msra.mxu0 0.0
    %2161 = vmatprep.subr.mxu0 0.0
    %2162 = vmatpush1.msra.mxu0 0.0
    %2163 = vmatprep.subr.mxu0 0.0
    %2164 = vmatpush1.msra.mxu0 0.0
    %2165 = vmatprep.subr.mxu0 0.0
    %2166 = vmatpush1.msra.mxu0 0.0
    %2167 = vmatprep.subr.mxu0 0.0
    %2168 = vmatpush1.msra.mxu0 0.0
    %2169 = vmatprep.subr.mxu0 0.0
    %2170 = vmatpush1.msra.mxu0 0.0
    %2171 = vmatprep.subr.mxu0 0.0
    %2172 = vmatpush1.msra.mxu0 0.0
    %2173 = vmatprep.subr.mxu0 0.0
    %2174 = vmatpush1.msra.mxu0 0.0
    %2175 = vmatprep.subr.mxu0 0.0
    %2176 = vmatpush1.msra.mxu0 0.0
    %2177 = vmatprep.subr.mxu0 0.0
    %2178 = vmatpush1.msra.mxu0 0.0
    %2179 = vmatprep.subr.mxu0 0.0
    %2180 = vmatpush1.msra.mxu0 0.0
    %2181 = vmatprep.subr.mxu0 0.0
    %2182 = vmatpush1.msra.mxu0 0.0
    %2183 = vmatprep.subr.mxu0 0.0
    %2184 = vmatpush1.msra.mxu0 0.0
    %2185 = vmatprep.subr.mxu0 0.0
    %2186 = vmatpush1.msra.mxu0 0.0
    %2187 = vmatprep.subr.mxu0 0.0
    %2188 = vmatpush1.msra.mxu0 0.0
    %2189 = vmatprep.subr.mxu0 0.0
    %2190 = vmatpush1.msra.mxu0 0.0
    %2191 = vmatprep.subr.mxu0 0.0
    %2192 = vmatpush1.msra.mxu0 0.0
    %2193 = vmatprep.subr.mxu0 0.0
    %2194 = vmatpush1.msra.mxu0 0.0
    %2195 = vmatprep.subr.mxu0 0.0
    %2196 = vmatpush1.msra.mxu0 0.0
    %2197 = vmatprep.subr.mxu0 0.0
    %2198 = vmatpush1.msra.mxu0 0.0
    %2199 = vmatprep.subr.mxu0 0.0
    %2200 = vmatpush1.msra.mxu0 0.0
    %2201 = vmatprep.subr.mxu0 0.0
    %2202 = vmatpush1.msra.mxu0 0.0
    %2203 = vmatprep.subr.mxu0 0.0
    %2204 = vmatpush1.msra.mxu0 0.0
    %2205 = vmatprep.subr.mxu0 0.0
    %2206 = vmatpush1.msra.mxu0 0.0
    %2207 = vmatprep.subr.mxu0 0.0
    %2208 = vmatpush1.msra.mxu0 0.0
    %2209 = vmatprep.subr.mxu0 0.0
    %2210 = vmatpush1.msra.mxu0 0.0
    %2211 = vmatprep.mubr.f32.mxu0 0.0
    %v2212 = vand.u32 %v1900, 4294901760
    %v2213 = vsub.f32 %v1900, %v2212
    %v2214 = vand.u32 %v2213, 4294901760
    %2215 = vmatmul.mubr.f32.gmra.mrb[0].mxu0 %v2214
    %v2216 = vpop.f32.mrb[0].mxu0
    %v2217 = vadd.f32 %v2141, %v2216
    %v2218 = vpop.f32.mrb[0].mxu0
    %2219 = vdwg.mxu0
    %2220 = vmatprep.subr.mxu0 0.0
    %v2221 = vand.u32 %v1887, 4294901760
    %v2222 = vsub.f32 %v1887, %v2221
    %v2223 = vand.u32 %v2222, 4294901760
    %2224 = vmatpush1.msra.mxu0 %v2223
    %2225 = vmatprep.subr.mxu0 0.0
    %v2226 = vand.u32 %v1892, 4294901760
    %v2227 = vsub.f32 %v1892, %v2226
    %v2228 = vand.u32 %v2227, 4294901760
    %2229 = vmatpush1.msra.mxu0 %v2228
    %2230 = vmatprep.subr.mxu0 0.0
    %v2231 = vand.u32 %v1897, 4294901760
    %v2232 = vsub.f32 %v1897, %v2231
    %v2233 = vand.u32 %v2232, 4294901760
    %2234 = vmatpush1.msra.mxu0 %v2233
    %2235 = vmatprep.subr.mxu0 0.0
    %2236 = vmatpush1.msra.mxu0 0.0
    %2237 = vmatprep.subr.mxu0 0.0
    %2238 = vmatpush1.msra.mxu0 0.0
    %2239 = vmatprep.subr.mxu0 0.0
    %2240 = vmatpush1.msra.mxu0 0.0
    %2241 = vmatprep.subr.mxu0 0.0
    %2242 = vmatpush1.msra.mxu0 0.0
    %2243 = vmatprep.subr.mxu0 0.0
    %2244 = vmatpush1.msra.mxu0 0.0
    %2245 = vmatprep.subr.mxu0 0.0
    %2246 = vmatpush1.msra.mxu0 0.0
    %2247 = vmatprep.subr.mxu0 0.0
    %2248 = vmatpush1.msra.mxu0 0.0
    %2249 = vmatprep.subr.mxu0 0.0
    %2250 = vmatpush1.msra.mxu0 0.0
    %2251 = vmatprep.subr.mxu0 0.0
    %2252 = vmatpush1.msra.mxu0 0.0
    %2253 = vmatprep.subr.mxu0 0.0
    %2254 = vmatpush1.msra.mxu0 0.0
    %2255 = vmatprep.subr.mxu0 0.0
    %2256 = vmatpush1.msra.mxu0 0.0
    %2257 = vmatprep.subr.mxu0 0.0
    %2258 = vmatpush1.msra.mxu0 0.0
    %2259 = vmatprep.subr.mxu0 0.0
    %2260 = vmatpush1.msra.mxu0 0.0
    %2261 = vmatprep.subr.mxu0 0.0
    %2262 = vmatpush1.msra.mxu0 0.0
    %2263 = vmatprep.subr.mxu0 0.0
    %2264 = vmatpush1.msra.mxu0 0.0
    %2265 = vmatprep.subr.mxu0 0.0
    %2266 = vmatpush1.msra.mxu0 0.0
    %2267 = vmatprep.subr.mxu0 0.0
    %2268 = vmatpush1.msra.mxu0 0.0
    %2269 = vmatprep.subr.mxu0 0.0
    %2270 = vmatpush1.msra.mxu0 0.0
    %2271 = vmatprep.subr.mxu0 0.0
    %2272 = vmatpush1.msra.mxu0 0.0
    %2273 = vmatprep.subr.mxu0 0.0
    %2274 = vmatpush1.msra.mxu0 0.0
    %2275 = vmatprep.subr.mxu0 0.0
    %2276 = vmatpush1.msra.mxu0 0.0
    %2277 = vmatprep.subr.mxu0 0.0
    %2278 = vmatpush1.msra.mxu0 0.0
    %2279 = vmatprep.subr.mxu0 0.0
    %2280 = vmatpush1.msra.mxu0 0.0
    %2281 = vmatprep.subr.mxu0 0.0
    %2282 = vmatpush1.msra.mxu0 0.0
    %2283 = vmatprep.subr.mxu0 0.0
    %2284 = vmatpush1.msra.mxu0 0.0
    %2285 = vmatprep.subr.mxu0 0.0
    %2286 = vmatpush1.msra.mxu0 0.0
    %2287 = vmatprep.subr.mxu0 0.0
    %2288 = vmatpush1.msra.mxu0 0.0
    %2289 = vmatprep.subr.mxu0 0.0
    %2290 = vmatpush1.msra.mxu0 0.0
    %2291 = vmatprep.subr.mxu0 0.0
    %2292 = vmatpush1.msra.mxu0 0.0
    %2293 = vmatprep.mubr.f32.mxu0 0.0
    %v2294 = vand.u32 %v1900, 4294901760
    %2295 = vmatmul.mubr.f32.gmra.mrb[0].mxu0 %v2294
    %v2296 = vpop.f32.mrb[0].mxu0
    %v2297 = vadd.f32 %v2217, %v2296
    %v2298 = vpop.f32.mrb[0].mxu0
    %2299 = vdwg.mxu0
    %2300 = vmatprep.subr.mxu0 0.0
    %v2301 = vand.u32 %v1887, 4294901760
    %2302 = vmatpush1.msra.mxu0 %v2301
    %2303 = vmatprep.subr.mxu0 0.0
    %v2304 = vand.u32 %v1892, 4294901760
    %2305 = vmatpush1.msra.mxu0 %v2304
    %2306 = vmatprep.subr.mxu0 0.0
    %v2307 = vand.u32 %v1897, 4294901760
    %2308 = vmatpush1.msra.mxu0 %v2307
    %2309 = vmatprep.subr.mxu0 0.0
    %2310 = vmatpush1.msra.mxu0 0.0
    %2311 = vmatprep.subr.mxu0 0.0
    %2312 = vmatpush1.msra.mxu0 0.0
    %2313 = vmatprep.subr.mxu0 0.0
    %2314 = vmatpush1.msra.mxu0 0.0
    %2315 = vmatprep.subr.mxu0 0.0
    %2316 = vmatpush1.msra.mxu0 0.0
    %2317 = vmatprep.subr.mxu0 0.0
    %2318 = vmatpush1.msra.mxu0 0.0
    %2319 = vmatprep.subr.mxu0 0.0
    %2320 = vmatpush1.msra.mxu0 0.0
    %2321 = vmatprep.subr.mxu0 0.0
    %2322 = vmatpush1.msra.mxu0 0.0
    %2323 = vmatprep.subr.mxu0 0.0
    %2324 = vmatpush1.msra.mxu0 0.0
    %2325 = vmatprep.subr.mxu0 0.0
    %2326 = vmatpush1.msra.mxu0 0.0
    %2327 = vmatprep.subr.mxu0 0.0
    %2328 = vmatpush1.msra.mxu0 0.0
    %2329 = vmatprep.subr.mxu0 0.0
    %2330 = vmatpush1.msra.mxu0 0.0
    %2331 = vmatprep.subr.mxu0 0.0
    %2332 = vmatpush1.msra.mxu0 0.0
    %2333 = vmatprep.subr.mxu0 0.0
    %2334 = vmatpush1.msra.mxu0 0.0
    %2335 = vmatprep.subr.mxu0 0.0
    %2336 = vmatpush1.msra.mxu0 0.0
    %2337 = vmatprep.subr.mxu0 0.0
    %2338 = vmatpush1.msra.mxu0 0.0
    %2339 = vmatprep.subr.mxu0 0.0
    %2340 = vmatpush1.msra.mxu0 0.0
    %2341 = vmatprep.subr.mxu0 0.0
    %2342 = vmatpush1.msra.mxu0 0.0
    %2343 = vmatprep.subr.mxu0 0.0
    %2344 = vmatpush1.msra.mxu0 0.0
    %2345 = vmatprep.subr.mxu0 0.0
    %2346 = vmatpush1.msra.mxu0 0.0
    %2347 = vmatprep.subr.mxu0 0.0
    %2348 = vmatpush1.msra.mxu0 0.0
    %2349 = vmatprep.subr.mxu0 0.0
    %2350 = vmatpush1.msra.mxu0 0.0
    %2351 = vmatprep.subr.mxu0 0.0
    %2352 = vmatpush1.msra.mxu0 0.0
    %2353 = vmatprep.subr.mxu0 0.0
    %2354 = vmatpush1.msra.mxu0 0.0
    %2355 = vmatprep.subr.mxu0 0.0
    %2356 = vmatpush1.msra.mxu0 0.0
    %2357 = vmatprep.subr.mxu0 0.0
    %2358 = vmatpush1.msra.mxu0 0.0
    %2359 = vmatprep.subr.mxu0 0.0
    %2360 = vmatpush1.msra.mxu0 0.0
    %2361 = vmatprep.subr.mxu0 0.0
    %2362 = vmatpush1.msra.mxu0 0.0
    %2363 = vmatprep.subr.mxu0 0.0
    %2364 = vmatpush1.msra.mxu0 0.0
    %2365 = vmatprep.subr.mxu0 0.0
    %2366 = vmatpush1.msra.mxu0 0.0
    %2367 = vmatprep.mubr.f32.mxu0 0.0
    %v2368 = vand.u32 %v1900, 4294901760
    %2369 = vmatmul.mubr.f32.gmra.mrb[0].mxu0 %v2368
    %v2370 = vpop.f32.mrb[0].mxu0
    %v2371 = vadd.f32 %v2297, %v2370
    %v2372 = vpop.f32.mrb[0].mxu0
    %2373 = vdwg.mxu0
    %v2374 = vmax.f32 %v2371, 0.0
    %vm2375 = vcmask 523264
    %v2377 = vsel %vm2375, %v2374, 0
    %v2379 = vand.u32 %v113, 4294901760
    %2380 = vmatprep.subr.mxu0 %v2379
    %v2381 = vand.u32 %v112, 4294901760
    %2382 = vmatpush1.msra.mxu0 %v2381
    %v2383 = vand.u32 %v117, 4294901760
    %2384 = vmatprep.subr.mxu0 %v2383
    %v2385 = vand.u32 %v116, 4294901760
    %2386 = vmatpush1.msra.mxu0 %v2385
    %v2387 = vand.u32 %v121, 4294901760
    %2388 = vmatprep.subr.mxu0 %v2387
    %v2389 = vand.u32 %v120, 4294901760
    %2390 = vmatpush1.msra.mxu0 %v2389
    %v2391 = vand.u32 %v125, 4294901760
    %2392 = vmatprep.subr.mxu0 %v2391
    %v2393 = vand.u32 %v124, 4294901760
    %2394 = vmatpush1.msra.mxu0 %v2393
    %v2395 = vand.u32 %v129, 4294901760
    %2396 = vmatprep.subr.mxu0 %v2395
    %v2397 = vand.u32 %v128, 4294901760
    %2398 = vmatpush1.msra.mxu0 %v2397
    %v2399 = vand.u32 %v133, 4294901760
    %2400 = vmatprep.subr.mxu0 %v2399
    %v2401 = vand.u32 %v132, 4294901760
    %2402 = vmatpush1.msra.mxu0 %v2401
    %v2403 = vand.u32 %v137, 4294901760
    %2404 = vmatprep.subr.mxu0 %v2403
    %v2405 = vand.u32 %v136, 4294901760
    %2406 = vmatpush1.msra.mxu0 %v2405
    %v2407 = vand.u32 %v141, 4294901760
    %2408 = vmatprep.subr.mxu0 %v2407
    %v2409 = vand.u32 %v140, 4294901760
    %2410 = vmatpush1.msra.mxu0 %v2409
    %2411 = vmatprep.subr.mxu0 0.0
    %2412 = vmatpush1.msra.mxu0 0.0
    %2413 = vmatprep.subr.mxu0 0.0
    %2414 = vmatpush1.msra.mxu0 0.0
    %2415 = vmatprep.subr.mxu0 0.0
    %2416 = vmatpush1.msra.mxu0 0.0
    %2417 = vmatprep.subr.mxu0 0.0
    %2418 = vmatpush1.msra.mxu0 0.0
    %2419 = vmatprep.subr.mxu0 0.0
    %2420 = vmatpush1.msra.mxu0 0.0
    %2421 = vmatprep.subr.mxu0 0.0
    %2422 = vmatpush1.msra.mxu0 0.0
    %2423 = vmatprep.subr.mxu0 0.0
    %2424 = vmatpush1.msra.mxu0 0.0
    %2425 = vmatprep.subr.mxu0 0.0
    %2426 = vmatpush1.msra.mxu0 0.0
    %2427 = vmatprep.subr.mxu0 0.0
    %2428 = vmatpush1.msra.mxu0 0.0
    %2429 = vmatprep.subr.mxu0 0.0
    %2430 = vmatpush1.msra.mxu0 0.0
    %2431 = vmatprep.subr.mxu0 0.0
    %2432 = vmatpush1.msra.mxu0 0.0
    %2433 = vmatprep.subr.mxu0 0.0
    %2434 = vmatpush1.msra.mxu0 0.0
    %2435 = vmatprep.subr.mxu0 0.0
    %2436 = vmatpush1.msra.mxu0 0.0
    %2437 = vmatprep.subr.mxu0 0.0
    %2438 = vmatpush1.msra.mxu0 0.0
    %2439 = vmatprep.subr.mxu0 0.0
    %2440 = vmatpush1.msra.mxu0 0.0
    %2441 = vmatprep.subr.mxu0 0.0
    %2442 = vmatpush1.msra.mxu0 0.0
    %2443 = vmatprep.subr.mxu0 0.0
    %2444 = vmatpush1.msra.mxu0 0.0
    %2445 = vmatprep.subr.mxu0 0.0
    %2446 = vmatpush1.msra.mxu0 0.0
    %2447 = vmatprep.subr.mxu0 0.0
    %2448 = vmatpush1.msra.mxu0 0.0
    %2449 = vmatprep.subr.mxu0 0.0
    %2450 = vmatpush1.msra.mxu0 0.0
    %2451 = vmatprep.subr.mxu0 0.0
    %2452 = vmatpush1.msra.mxu0 0.0
    %2453 = vmatprep.subr.mxu0 0.0
    %2454 = vmatpush1.msra.mxu0 0.0
    %2455 = vmatprep.subr.mxu0 0.0
    %2456 = vmatpush1.msra.mxu0 0.0
    %2457 = vmatprep.subr.mxu0 0.0
    %2458 = vmatpush1.msra.mxu0 0.0
    %2459 = vmatprep.mubr.f32.mxu0 0.0
    %v2460 = vand.u32 %v2377, 4294901760
    %v2461 = vsub.f32 %v2377, %v2460
    %v2462 = vand.u32 %v2461, 4294901760
    %v2463 = vsub.f32 %v2461, %v2462
    %v2464 = vand.u32 %v2463, 4294901760
    %2465 = vmatmul.mubr.f32.gmra.mrb[0].mxu0 %v2464
    %v2466 = vpop.f32.mrb[0].mxu0
    %v2467 = vadd.f32 0.0, %v2466
    %v2468 = vpop.f32.mrb[0].mxu0
    %v2469 = vadd.f32 0.0, %v2468
    %2470 = vdwg.mxu0
    %v2471 = vand.u32 %v113, 4294901760
    %v2472 = vsub.f32 %v113, %v2471
    %v2473 = vand.u32 %v2472, 4294901760
    %v2474 = vsub.f32 %v2472, %v2473
    %v2475 = vand.u32 %v2474, 4294901760
    %2476 = vmatprep.subr.mxu0 %v2475
    %v2477 = vand.u32 %v112, 4294901760
    %v2478 = vsub.f32 %v112, %v2477
    %v2479 = vand.u32 %v2478, 4294901760
    %v2480 = vsub.f32 %v2478, %v2479
    %v2481 = vand.u32 %v2480, 4294901760
    %2482 = vmatpush1.msra.mxu0 %v2481
    %v2483 = vand.u32 %v117, 4294901760
    %v2484 = vsub.f32 %v117, %v2483
    %v2485 = vand.u32 %v2484, 4294901760
    %v2486 = vsub.f32 %v2484, %v2485
    %v2487 = vand.u32 %v2486, 4294901760
    %2488 = vmatprep.subr.mxu0 %v2487
    %v2489 = vand.u32 %v116, 4294901760
    %v2490 = vsub.f32 %v116, %v2489
    %v2491 = vand.u32 %v2490, 4294901760
    %v2492 = vsub.f32 %v2490, %v2491
    %v2493 = vand.u32 %v2492, 4294901760
    %2494 = vmatpush1.msra.mxu0 %v2493
    %v2495 = vand.u32 %v121, 4294901760
    %v2496 = vsub.f32 %v121, %v2495
    %v2497 = vand.u32 %v2496, 4294901760
    %v2498 = vsub.f32 %v2496, %v2497
    %v2499 = vand.u32 %v2498, 4294901760
    %2500 = vmatprep.subr.mxu0 %v2499
    %v2501 = vand.u32 %v120, 4294901760
    %v2502 = vsub.f32 %v120, %v2501
    %v2503 = vand.u32 %v2502, 4294901760
    %v2504 = vsub.f32 %v2502, %v2503
    %v2505 = vand.u32 %v2504, 4294901760
    %2506 = vmatpush1.msra.mxu0 %v2505
    %v2507 = vand.u32 %v125, 4294901760
    %v2508 = vsub.f32 %v125, %v2507
    %v2509 = vand.u32 %v2508, 4294901760
    %v2510 = vsub.f32 %v2508, %v2509
    %v2511 = vand.u32 %v2510, 4294901760
    %2512 = vmatprep.subr.mxu0 %v2511
    %v2513 = vand.u32 %v124, 4294901760
    %v2514 = vsub.f32 %v124, %v2513
    %v2515 = vand.u32 %v2514, 4294901760
    %v2516 = vsub.f32 %v2514, %v2515
    %v2517 = vand.u32 %v2516, 4294901760
    %2518 = vmatpush1.msra.mxu0 %v2517
    %v2519 = vand.u32 %v129, 4294901760
    %v2520 = vsub.f32 %v129, %v2519
    %v2521 = vand.u32 %v2520, 4294901760
    %v2522 = vsub.f32 %v2520, %v2521
    %v2523 = vand.u32 %v2522, 4294901760
    %2524 = vmatprep.subr.mxu0 %v2523
    %v2525 = vand.u32 %v128, 4294901760
    %v2526 = vsub.f32 %v128, %v2525
    %v2527 = vand.u32 %v2526, 4294901760
    %v2528 = vsub.f32 %v2526, %v2527
    %v2529 = vand.u32 %v2528, 4294901760
    %2530 = vmatpush1.msra.mxu0 %v2529
    %v2531 = vand.u32 %v133, 4294901760
    %v2532 = vsub.f32 %v133, %v2531
    %v2533 = vand.u32 %v2532, 4294901760
    %v2534 = vsub.f32 %v2532, %v2533
    %v2535 = vand.u32 %v2534, 4294901760
    %2536 = vmatprep.subr.mxu0 %v2535
    %v2537 = vand.u32 %v132, 4294901760
    %v2538 = vsub.f32 %v132, %v2537
    %v2539 = vand.u32 %v2538, 4294901760
    %v2540 = vsub.f32 %v2538, %v2539
    %v2541 = vand.u32 %v2540, 4294901760
    %2542 = vmatpush1.msra.mxu0 %v2541
    %v2543 = vand.u32 %v137, 4294901760
    %v2544 = vsub.f32 %v137, %v2543
    %v2545 = vand.u32 %v2544, 4294901760
    %v2546 = vsub.f32 %v2544, %v2545
    %v2547 = vand.u32 %v2546, 4294901760
    %2548 = vmatprep.subr.mxu0 %v2547
    %v2549 = vand.u32 %v136, 4294901760
    %v2550 = vsub.f32 %v136, %v2549
    %v2551 = vand.u32 %v2550, 4294901760
    %v2552 = vsub.f32 %v2550, %v2551
    %v2553 = vand.u32 %v2552, 4294901760
    %2554 = vmatpush1.msra.mxu0 %v2553
    %v2555 = vand.u32 %v141, 4294901760
    %v2556 = vsub.f32 %v141, %v2555
    %v2557 = vand.u32 %v2556, 4294901760
    %v2558 = vsub.f32 %v2556, %v2557
    %v2559 = vand.u32 %v2558, 4294901760
    %2560 = vmatprep.subr.mxu0 %v2559
    %v2561 = vand.u32 %v140, 4294901760
    %v2562 = vsub.f32 %v140, %v2561
    %v2563 = vand.u32 %v2562, 4294901760
    %v2564 = vsub.f32 %v2562, %v2563
    %v2565 = vand.u32 %v2564, 4294901760
    %2566 = vmatpush1.msra.mxu0 %v2565
    %2567 = vmatprep.subr.mxu0 0.0
    %2568 = vmatpush1.msra.mxu0 0.0
    %2569 = vmatprep.subr.mxu0 0.0
    %2570 = vmatpush1.msra.mxu0 0.0
    %2571 = vmatprep.subr.mxu0 0.0
    %2572 = vmatpush1.msra.mxu0 0.0
    %2573 = vmatprep.subr.mxu0 0.0
    %2574 = vmatpush1.msra.mxu0 0.0
    %2575 = vmatprep.subr.mxu0 0.0
    %2576 = vmatpush1.msra.mxu0 0.0
    %2577 = vmatprep.subr.mxu0 0.0
    %2578 = vmatpush1.msra.mxu0 0.0
    %2579 = vmatprep.subr.mxu0 0.0
    %2580 = vmatpush1.msra.mxu0 0.0
    %2581 = vmatprep.subr.mxu0 0.0
    %2582 = vmatpush1.msra.mxu0 0.0
    %2583 = vmatprep.subr.mxu0 0.0
    %2584 = vmatpush1.msra.mxu0 0.0
    %2585 = vmatprep.subr.mxu0 0.0
    %2586 = vmatpush1.msra.mxu0 0.0
    %2587 = vmatprep.subr.mxu0 0.0
    %2588 = vmatpush1.msra.mxu0 0.0
    %2589 = vmatprep.subr.mxu0 0.0
    %2590 = vmatpush1.msra.mxu0 0.0
    %2591 = vmatprep.subr.mxu0 0.0
    %2592 = vmatpush1.msra.mxu0 0.0
    %2593 = vmatprep.subr.mxu0 0.0
    %2594 = vmatpush1.msra.mxu0 0.0
    %2595 = vmatprep.subr.mxu0 0.0
    %2596 = vmatpush1.msra.mxu0 0.0
    %2597 = vmatprep.subr.mxu0 0.0
    %2598 = vmatpush1.msra.mxu0 0.0
    %2599 = vmatprep.subr.mxu0 0.0
    %2600 = vmatpush1.msra.mxu0 0.0
    %2601 = vmatprep.subr.mxu0 0.0
    %2602 = vmatpush1.msra.mxu0 0.0
    %2603 = vmatprep.subr.mxu0 0.0
    %2604 = vmatpush1.msra.mxu0 0.0
    %2605 = vmatprep.subr.mxu0 0.0
    %2606 = vmatpush1.msra.mxu0 0.0
    %2607 = vmatprep.subr.mxu0 0.0
    %2608 = vmatpush1.msra.mxu0 0.0
    %2609 = vmatprep.subr.mxu0 0.0
    %2610 = vmatpush1.msra.mxu0 0.0
    %2611 = vmatprep.subr.mxu0 0.0
    %2612 = vmatpush1.msra.mxu0 0.0
    %2613 = vmatprep.subr.mxu0 0.0
    %2614 = vmatpush1.msra.mxu0 0.0
    %2615 = vmatprep.mubr.f32.mxu0 0.0
    %v2616 = vand.u32 %v2377, 4294901760
    %2617 = vmatmul.mubr.f32.gmra.mrb[0].mxu0 %v2616
    %v2618 = vpop.f32.mrb[0].mxu0
    %v2619 = vadd.f32 %v2467, %v2618
    %v2620 = vpop.f32.mrb[0].mxu0
    %v2621 = vadd.f32 %v2469, %v2620
    %2622 = vdwg.mxu0
    %v2623 = vand.u32 %v113, 4294901760
    %v2624 = vsub.f32 %v113, %v2623
    %2625 = vmatprep.subr.mxu0 %v2624
    %v2626 = vand.u32 %v112, 4294901760
    %v2627 = vsub.f32 %v112, %v2626
    %2628 = vmatpush1.msra.mxu0 %v2627
    %v2629 = vand.u32 %v117, 4294901760
    %v2630 = vsub.f32 %v117, %v2629
    %2631 = vmatprep.subr.mxu0 %v2630
    %v2632 = vand.u32 %v116, 4294901760
    %v2633 = vsub.f32 %v116, %v2632
    %2634 = vmatpush1.msra.mxu0 %v2633
    %v2635 = vand.u32 %v121, 4294901760
    %v2636 = vsub.f32 %v121, %v2635
    %2637 = vmatprep.subr.mxu0 %v2636
    %v2638 = vand.u32 %v120, 4294901760
    %v2639 = vsub.f32 %v120, %v2638
    %2640 = vmatpush1.msra.mxu0 %v2639
    %v2641 = vand.u32 %v125, 4294901760
    %v2642 = vsub.f32 %v125, %v2641
    %2643 = vmatprep.subr.mxu0 %v2642
    %v2644 = vand.u32 %v124, 4294901760
    %v2645 = vsub.f32 %v124, %v2644
    %2646 = vmatpush1.msra.mxu0 %v2645
    %v2647 = vand.u32 %v129, 4294901760
    %v2648 = vsub.f32 %v129, %v2647
    %2649 = vmatprep.subr.mxu0 %v2648
    %v2650 = vand.u32 %v128, 4294901760
    %v2651 = vsub.f32 %v128, %v2650
    %2652 = vmatpush1.msra.mxu0 %v2651
    %v2653 = vand.u32 %v133, 4294901760
    %v2654 = vsub.f32 %v133, %v2653
    %2655 = vmatprep.subr.mxu0 %v2654
    %v2656 = vand.u32 %v132, 4294901760
    %v2657 = vsub.f32 %v132, %v2656
    %2658 = vmatpush1.msra.mxu0 %v2657
    %v2659 = vand.u32 %v137, 4294901760
    %v2660 = vsub.f32 %v137, %v2659
    %2661 = vmatprep.subr.mxu0 %v2660
    %v2662 = vand.u32 %v136, 4294901760
    %v2663 = vsub.f32 %v136, %v2662
    %2664 = vmatpush1.msra.mxu0 %v2663
    %v2665 = vand.u32 %v141, 4294901760
    %v2666 = vsub.f32 %v141, %v2665
    %2667 = vmatprep.subr.mxu0 %v2666
    %v2668 = vand.u32 %v140, 4294901760
    %v2669 = vsub.f32 %v140, %v2668
    %2670 = vmatpush1.msra.mxu0 %v2669
    %2671 = vmatprep.subr.mxu0 0.0
    %2672 = vmatpush1.msra.mxu0 0.0
    %2673 = vmatprep.subr.mxu0 0.0
    %2674 = vmatpush1.msra.mxu0 0.0
    %2675 = vmatprep.subr.mxu0 0.0
    %2676 = vmatpush1.msra.mxu0 0.0
    %2677 = vmatprep.subr.mxu0 0.0
    %2678 = vmatpush1.msra.mxu0 0.0
    %2679 = vmatprep.subr.mxu0 0.0
    %2680 = vmatpush1.msra.mxu0 0.0
    %2681 = vmatprep.subr.mxu0 0.0
    %2682 = vmatpush1.msra.mxu0 0.0
    %2683 = vmatprep.subr.mxu0 0.0
    %2684 = vmatpush1.msra.mxu0 0.0
    %2685 = vmatprep.subr.mxu0 0.0
    %2686 = vmatpush1.msra.mxu0 0.0
    %2687 = vmatprep.subr.mxu0 0.0
    %2688 = vmatpush1.msra.mxu0 0.0
    %2689 = vmatprep.subr.mxu0 0.0
    %2690 = vmatpush1.msra.mxu0 0.0
    %2691 = vmatprep.subr.mxu0 0.0
    %2692 = vmatpush1.msra.mxu0 0.0
    %2693 = vmatprep.subr.mxu0 0.0
    %2694 = vmatpush1.msra.mxu0 0.0
    %2695 = vmatprep.subr.mxu0 0.0
    %2696 = vmatpush1.msra.mxu0 0.0
    %2697 = vmatprep.subr.mxu0 0.0
    %2698 = vmatpush1.msra.mxu0 0.0
    %2699 = vmatprep.subr.mxu0 0.0
    %2700 = vmatpush1.msra.mxu0 0.0
    %2701 = vmatprep.subr.mxu0 0.0
    %2702 = vmatpush1.msra.mxu0 0.0
    %2703 = vmatprep.subr.mxu0 0.0
    %2704 = vmatpush1.msra.mxu0 0.0
    %2705 = vmatprep.subr.mxu0 0.0
    %2706 = vmatpush1.msra.mxu0 0.0
    %2707 = vmatprep.subr.mxu0 0.0
    %2708 = vmatpush1.msra.mxu0 0.0
    %2709 = vmatprep.subr.mxu0 0.0
    %2710 = vmatpush1.msra.mxu0 0.0
    %2711 = vmatprep.subr.mxu0 0.0
    %2712 = vmatpush1.msra.mxu0 0.0
    %2713 = vmatprep.subr.mxu0 0.0
    %2714 = vmatpush1.msra.mxu0 0.0
    %2715 = vmatprep.subr.mxu0 0.0
    %2716 = vmatpush1.msra.mxu0 0.0
    %2717 = vmatprep.subr.mxu0 0.0
    %2718 = vmatpush1.msra.mxu0 0.0
    %2719 = vmatprep.mubr.f32.mxu0 0.0
    %v2720 = vand.u32 %v2377, 4294901760
    %v2721 = vsub.f32 %v2377, %v2720
    %2722 = vmatmul.mubr.f32.gmra.mrb[0].mxu0 %v2721
    %v2723 = vpop.f32.mrb[0].mxu0
    %v2724 = vadd.f32 %v2619, %v2723
    %v2725 = vpop.f32.mrb[0].mxu0
    %v2726 = vadd.f32 %v2621, %v2725
    %2727 = vdwg.mxu0
    %v2728 = vand.u32 %v113, 4294901760
    %2729 = vmatprep.subr.mxu0 %v2728
    %v2730 = vand.u32 %v112, 4294901760
    %2731 = vmatpush1.msra.mxu0 %v2730
    %v2732 = vand.u32 %v117, 4294901760
    %2733 = vmatprep.subr.mxu0 %v2732
    %v2734 = vand.u32 %v116, 4294901760
    %2735 = vmatpush1.msra.mxu0 %v2734
    %v2736 = vand.u32 %v121, 4294901760
    %2737 = vmatprep.subr.mxu0 %v2736
    %v2738 = vand.u32 %v120, 4294901760
    %2739 = vmatpush1.msra.mxu0 %v2738
    %v2740 = vand.u32 %v125, 4294901760
    %2741 = vmatprep.subr.mxu0 %v2740
    %v2742 = vand.u32 %v124, 4294901760
    %2743 = vmatpush1.msra.mxu0 %v2742
    %v2744 = vand.u32 %v129, 4294901760
    %2745 = vmatprep.subr.mxu0 %v2744
    %v2746 = vand.u32 %v128, 4294901760
    %2747 = vmatpush1.msra.mxu0 %v2746
    %v2748 = vand.u32 %v133, 4294901760
    %2749 = vmatprep.subr.mxu0 %v2748
    %v2750 = vand.u32 %v132, 4294901760
    %2751 = vmatpush1.msra.mxu0 %v2750
    %v2752 = vand.u32 %v137, 4294901760
    %2753 = vmatprep.subr.mxu0 %v2752
    %v2754 = vand.u32 %v136, 4294901760
    %2755 = vmatpush1.msra.mxu0 %v2754
    %v2756 = vand.u32 %v141, 4294901760
    %2757 = vmatprep.subr.mxu0 %v2756
    %v2758 = vand.u32 %v140, 4294901760
    %2759 = vmatpush1.msra.mxu0 %v2758
    %2760 = vmatprep.subr.mxu0 0.0
    %2761 = vmatpush1.msra.mxu0 0.0
    %2762 = vmatprep.subr.mxu0 0.0
    %2763 = vmatpush1.msra.mxu0 0.0
    %2764 = vmatprep.subr.mxu0 0.0
    %2765 = vmatpush1.msra.mxu0 0.0
    %2766 = vmatprep.subr.mxu0 0.0
    %2767 = vmatpush1.msra.mxu0 0.0
    %2768 = vmatprep.subr.mxu0 0.0
    %2769 = vmatpush1.msra.mxu0 0.0
    %2770 = vmatprep.subr.mxu0 0.0
    %2771 = vmatpush1.msra.mxu0 0.0
    %2772 = vmatprep.subr.mxu0 0.0
    %2773 = vmatpush1.msra.mxu0 0.0
    %2774 = vmatprep.subr.mxu0 0.0
    %2775 = vmatpush1.msra.mxu0 0.0
    %2776 = vmatprep.subr.mxu0 0.0
    %2777 = vmatpush1.msra.mxu0 0.0
    %2778 = vmatprep.subr.mxu0 0.0
    %2779 = vmatpush1.msra.mxu0 0.0
    %2780 = vmatprep.subr.mxu0 0.0
    %2781 = vmatpush1.msra.mxu0 0.0
    %2782 = vmatprep.subr.mxu0 0.0
    %2783 = vmatpush1.msra.mxu0 0.0
    %2784 = vmatprep.subr.mxu0 0.0
    %2785 = vmatpush1.msra.mxu0 0.0
    %2786 = vmatprep.subr.mxu0 0.0
    %2787 = vmatpush1.msra.mxu0 0.0
    %2788 = vmatprep.subr.mxu0 0.0
    %2789 = vmatpush1.msra.mxu0 0.0
    %2790 = vmatprep.subr.mxu0 0.0
    %2791 = vmatpush1.msra.mxu0 0.0
    %2792 = vmatprep.subr.mxu0 0.0
    %2793 = vmatpush1.msra.mxu0 0.0
    %2794 = vmatprep.subr.mxu0 0.0
    %2795 = vmatpush1.msra.mxu0 0.0
    %2796 = vmatprep.subr.mxu0 0.0
    %2797 = vmatpush1.msra.mxu0 0.0
    %2798 = vmatprep.subr.mxu0 0.0
    %2799 = vmatpush1.msra.mxu0 0.0
    %2800 = vmatprep.subr.mxu0 0.0
    %2801 = vmatpush1.msra.mxu0 0.0
    %2802 = vmatprep.subr.mxu0 0.0
    %2803 = vmatpush1.msra.mxu0 0.0
    %2804 = vmatprep.subr.mxu0 0.0
    %2805 = vmatpush1.msra.mxu0 0.0
    %2806 = vmatprep.subr.mxu0 0.0
    %2807 = vmatpush1.msra.mxu0 0.0
    %2808 = vmatprep.mubr.f32.mxu0 0.0
    %v2809 = vand.u32 %v2377, 4294901760
    %v2810 = vsub.f32 %v2377, %v2809
    %v2811 = vand.u32 %v2810, 4294901760
    %2812 = vmatmul.mubr.f32.gmra.mrb[0].mxu0 %v2811
    %v2813 = vpop.f32.mrb[0].mxu0
    %v2814 = vadd.f32 %v2724, %v2813
    %v2815 = vpop.f32.mrb[0].mxu0
    %v2816 = vadd.f32 %v2726, %v2815
    %2817 = vdwg.mxu0
    %v2818 = vand.u32 %v113, 4294901760
    %v2819 = vsub.f32 %v113, %v2818
    %v2820 = vand.u32 %v2819, 4294901760
    %2821 = vmatprep.subr.mxu0 %v2820
    %v2822 = vand.u32 %v112, 4294901760
    %v2823 = vsub.f32 %v112, %v2822
    %v2824 = vand.u32 %v2823, 4294901760
    %2825 = vmatpush1.msra.mxu0 %v2824
    %v2826 = vand.u32 %v117, 4294901760
    %v2827 = vsub.f32 %v117, %v2826
    %v2828 = vand.u32 %v2827, 4294901760
    %2829 = vmatprep.subr.mxu0 %v2828
    %v2830 = vand.u32 %v116, 4294901760
    %v2831 = vsub.f32 %v116, %v2830
    %v2832 = vand.u32 %v2831, 4294901760
    %2833 = vmatpush1.msra.mxu0 %v2832
    %v2834 = vand.u32 %v121, 4294901760
    %v2835 = vsub.f32 %v121, %v2834
    %v2836 = vand.u32 %v2835, 4294901760
    %2837 = vmatprep.subr.mxu0 %v2836
    %v2838 = vand.u32 %v120, 4294901760
    %v2839 = vsub.f32 %v120, %v2838
    %v2840 = vand.u32 %v2839, 4294901760
    %2841 = vmatpush1.msra.mxu0 %v2840
    %v2842 = vand.u32 %v125, 4294901760
    %v2843 = vsub.f32 %v125, %v2842
    %v2844 = vand.u32 %v2843, 4294901760
    %2845 = vmatprep.subr.mxu0 %v2844
    %v2846 = vand.u32 %v124, 4294901760
    %v2847 = vsub.f32 %v124, %v2846
    %v2848 = vand.u32 %v2847, 4294901760
    %2849 = vmatpush1.msra.mxu0 %v2848
    %v2850 = vand.u32 %v129, 4294901760
    %v2851 = vsub.f32 %v129, %v2850
    %v2852 = vand.u32 %v2851, 4294901760
    %2853 = vmatprep.subr.mxu0 %v2852
    %v2854 = vand.u32 %v128, 4294901760
    %v2855 = vsub.f32 %v128, %v2854
    %v2856 = vand.u32 %v2855, 4294901760
    %2857 = vmatpush1.msra.mxu0 %v2856
    %v2858 = vand.u32 %v133, 4294901760
    %v2859 = vsub.f32 %v133, %v2858
    %v2860 = vand.u32 %v2859, 4294901760
    %2861 = vmatprep.subr.mxu0 %v2860
    %v2862 = vand.u32 %v132, 4294901760
    %v2863 = vsub.f32 %v132, %v2862
    %v2864 = vand.u32 %v2863, 4294901760
    %2865 = vmatpush1.msra.mxu0 %v2864
    %v2866 = vand.u32 %v137, 4294901760
    %v2867 = vsub.f32 %v137, %v2866
    %v2868 = vand.u32 %v2867, 4294901760
    %2869 = vmatprep.subr.mxu0 %v2868
    %v2870 = vand.u32 %v136, 4294901760
    %v2871 = vsub.f32 %v136, %v2870
    %v2872 = vand.u32 %v2871, 4294901760
    %2873 = vmatpush1.msra.mxu0 %v2872
    %v2874 = vand.u32 %v141, 4294901760
    %v2875 = vsub.f32 %v141, %v2874
    %v2876 = vand.u32 %v2875, 4294901760
    %2877 = vmatprep.subr.mxu0 %v2876
    %v2878 = vand.u32 %v140, 4294901760
    %v2879 = vsub.f32 %v140, %v2878
    %v2880 = vand.u32 %v2879, 4294901760
    %2881 = vmatpush1.msra.mxu0 %v2880
    %2882 = vmatprep.subr.mxu0 0.0
    %2883 = vmatpush1.msra.mxu0 0.0
    %2884 = vmatprep.subr.mxu0 0.0
    %2885 = vmatpush1.msra.mxu0 0.0
    %2886 = vmatprep.subr.mxu0 0.0
    %2887 = vmatpush1.msra.mxu0 0.0
    %2888 = vmatprep.subr.mxu0 0.0
    %2889 = vmatpush1.msra.mxu0 0.0
    %2890 = vmatprep.subr.mxu0 0.0
    %2891 = vmatpush1.msra.mxu0 0.0
    %2892 = vmatprep.subr.mxu0 0.0
    %2893 = vmatpush1.msra.mxu0 0.0
    %2894 = vmatprep.subr.mxu0 0.0
    %2895 = vmatpush1.msra.mxu0 0.0
    %2896 = vmatprep.subr.mxu0 0.0
    %2897 = vmatpush1.msra.mxu0 0.0
    %2898 = vmatprep.subr.mxu0 0.0
    %2899 = vmatpush1.msra.mxu0 0.0
    %2900 = vmatprep.subr.mxu0 0.0
    %2901 = vmatpush1.msra.mxu0 0.0
    %2902 = vmatprep.subr.mxu0 0.0
    %2903 = vmatpush1.msra.mxu0 0.0
    %2904 = vmatprep.subr.mxu0 0.0
    %2905 = vmatpush1.msra.mxu0 0.0
    %2906 = vmatprep.subr.mxu0 0.0
    %2907 = vmatpush1.msra.mxu0 0.0
    %2908 = vmatprep.subr.mxu0 0.0
    %2909 = vmatpush1.msra.mxu0 0.0
    %2910 = vmatprep.subr.mxu0 0.0
    %2911 = vmatpush1.msra.mxu0 0.0
    %2912 = vmatprep.subr.mxu0 0.0
    %2913 = vmatpush1.msra.mxu0 0.0
    %2914 = vmatprep.subr.mxu0 0.0
    %2915 = vmatpush1.msra.mxu0 0.0
    %2916 = vmatprep.subr.mxu0 0.0
    %2917 = vmatpush1.msra.mxu0 0.0
    %2918 = vmatprep.subr.mxu0 0.0
    %2919 = vmatpush1.msra.mxu0 0.0
    %2920 = vmatprep.subr.mxu0 0.0
    %2921 = vmatpush1.msra.mxu0 0.0
    %2922 = vmatprep.subr.mxu0 0.0
    %2923 = vmatpush1.msra.mxu0 0.0
    %2924 = vmatprep.subr.mxu0 0.0
    %2925 = vmatpush1.msra.mxu0 0.0
    %2926 = vmatprep.subr.mxu0 0.0
    %2927 = vmatpush1.msra.mxu0 0.0
    %2928 = vmatprep.subr.mxu0 0.0
    %2929 = vmatpush1.msra.mxu0 0.0
    %2930 = vmatprep.mubr.f32.mxu0 0.0
    %v2931 = vand.u32 %v2377, 4294901760
    %2932 = vmatmul.mubr.f32.gmra.mrb[0].mxu0 %v2931
    %v2933 = vpop.f32.mrb[0].mxu0
    %v2934 = vadd.f32 %v2814, %v2933
    %v2935 = vpop.f32.mrb[0].mxu0
    %v2936 = vadd.f32 %v2816, %v2935
    %2937 = vdwg.mxu0
    %v2938 = vand.u32 %v113, 4294901760
    %2939 = vmatprep.subr.mxu0 %v2938
    %v2940 = vand.u32 %v112, 4294901760
    %2941 = vmatpush1.msra.mxu0 %v2940
    %v2942 = vand.u32 %v117, 4294901760
    %2943 = vmatprep.subr.mxu0 %v2942
    %v2944 = vand.u32 %v116, 4294901760
    %2945 = vmatpush1.msra.mxu0 %v2944
    %v2946 = vand.u32 %v121, 4294901760
    %2947 = vmatprep.subr.mxu0 %v2946
    %v2948 = vand.u32 %v120, 4294901760
    %2949 = vmatpush1.msra.mxu0 %v2948
    %v2950 = vand.u32 %v125, 4294901760
    %2951 = vmatprep.subr.mxu0 %v2950
    %v2952 = vand.u32 %v124, 4294901760
    %2953 = vmatpush1.msra.mxu0 %v2952
    %v2954 = vand.u32 %v129, 4294901760
    %2955 = vmatprep.subr.mxu0 %v2954
    %v2956 = vand.u32 %v128, 4294901760
    %2957 = vmatpush1.msra.mxu0 %v2956
    %v2958 = vand.u32 %v133, 4294901760
    %2959 = vmatprep.subr.mxu0 %v2958
    %v2960 = vand.u32 %v132, 4294901760
    %2961 = vmatpush1.msra.mxu0 %v2960
    %v2962 = vand.u32 %v137, 4294901760
    %2963 = vmatprep.subr.mxu0 %v2962
    %v2964 = vand.u32 %v136, 4294901760
    %2965 = vmatpush1.msra.mxu0 %v2964
    %v2966 = vand.u32 %v141, 4294901760
    %2967 = vmatprep.subr.mxu0 %v2966
    %v2968 = vand.u32 %v140, 4294901760
    %2969 = vmatpush1.msra.mxu0 %v2968
    %2970 = vmatprep.subr.mxu0 0.0
    %2971 = vmatpush1.msra.mxu0 0.0
    %2972 = vmatprep.subr.mxu0 0.0
    %2973 = vmatpush1.msra.mxu0 0.0
    %2974 = vmatprep.subr.mxu0 0.0
    %2975 = vmatpush1.msra.mxu0 0.0
    %2976 = vmatprep.subr.mxu0 0.0
    %2977 = vmatpush1.msra.mxu0 0.0
    %2978 = vmatprep.subr.mxu0 0.0
    %2979 = vmatpush1.msra.mxu0 0.0
    %2980 = vmatprep.subr.mxu0 0.0
    %2981 = vmatpush1.msra.mxu0 0.0
    %2982 = vmatprep.subr.mxu0 0.0
    %2983 = vmatpush1.msra.mxu0 0.0
    %2984 = vmatprep.subr.mxu0 0.0
    %2985 = vmatpush1.msra.mxu0 0.0
    %2986 = vmatprep.subr.mxu0 0.0
    %2987 = vmatpush1.msra.mxu0 0.0
    %2988 = vmatprep.subr.mxu0 0.0
    %2989 = vmatpush1.msra.mxu0 0.0
    %2990 = vmatprep.subr.mxu0 0.0
    %2991 = vmatpush1.msra.mxu0 0.0
    %2992 = vmatprep.subr.mxu0 0.0
    %2993 = vmatpush1.msra.mxu0 0.0
    %2994 = vmatprep.subr.mxu0 0.0
    %2995 = vmatpush1.msra.mxu0 0.0
    %2996 = vmatprep.subr.mxu0 0.0
    %2997 = vmatpush1.msra.mxu0 0.0
    %2998 = vmatprep.subr.mxu0 0.0
    %2999 = vmatpush1.msra.mxu0 0.0
    %3000 = vmatprep.subr.mxu0 0.0
    %3001 = vmatpush1.msra.mxu0 0.0
    %3002 = vmatprep.subr.mxu0 0.0
    %3003 = vmatpush1.msra.mxu0 0.0
    %3004 = vmatprep.subr.mxu0 0.0
    %3005 = vmatpush1.msra.mxu0 0.0
    %3006 = vmatprep.subr.mxu0 0.0
    %3007 = vmatpush1.msra.mxu0 0.0
    %3008 = vmatprep.subr.mxu0 0.0
    %3009 = vmatpush1.msra.mxu0 0.0
    %3010 = vmatprep.subr.mxu0 0.0
    %3011 = vmatpush1.msra.mxu0 0.0
    %3012 = vmatprep.subr.mxu0 0.0
    %3013 = vmatpush1.msra.mxu0 0.0
    %3014 = vmatprep.subr.mxu0 0.0
    %3015 = vmatpush1.msra.mxu0 0.0
    %3016 = vmatprep.subr.mxu0 0.0
    %3017 = vmatpush1.msra.mxu0 0.0
    %3018 = vmatprep.mubr.f32.mxu0 0.0
    %v3019 = vand.u32 %v2377, 4294901760
    %3020 = vmatmul.mubr.f32.gmra.mrb[0].mxu0 %v3019
    %v3021 = vpop.f32.mrb[0].mxu0
    %v3022 = vadd.f32 %v2934, %v3021
    %v3023 = vpop.f32.mrb[0].mxu0
    %v3024 = vadd.f32 %v2936, %v3023
    %3025 = vdwg.mxu0
    %v3026 = vand.u32 %v115, 4294901760
    %3027 = vmatprep.subr.mxu0 %v3026
    %v3028 = vand.u32 %v114, 4294901760
    %3029 = vmatpush1.msra.mxu0 %v3028
    %v3030 = vand.u32 %v119, 4294901760
    %3031 = vmatprep.subr.mxu0 %v3030
    %v3032 = vand.u32 %v118, 4294901760
    %3033 = vmatpush1.msra.mxu0 %v3032
    %v3034 = vand.u32 %v123, 4294901760
    %3035 = vmatprep.subr.mxu0 %v3034
    %v3036 = vand.u32 %v122, 4294901760
    %3037 = vmatpush1.msra.mxu0 %v3036
    %v3038 = vand.u32 %v127, 4294901760
    %3039 = vmatprep.subr.mxu0 %v3038
    %v3040 = vand.u32 %v126, 4294901760
    %3041 = vmatpush1.msra.mxu0 %v3040
    %v3042 = vand.u32 %v131, 4294901760
    %3043 = vmatprep.subr.mxu0 %v3042
    %v3044 = vand.u32 %v130, 4294901760
    %3045 = vmatpush1.msra.mxu0 %v3044
    %v3046 = vand.u32 %v135, 4294901760
    %3047 = vmatprep.subr.mxu0 %v3046
    %v3048 = vand.u32 %v134, 4294901760
    %3049 = vmatpush1.msra.mxu0 %v3048
    %v3050 = vand.u32 %v139, 4294901760
    %3051 = vmatprep.subr.mxu0 %v3050
    %v3052 = vand.u32 %v138, 4294901760
    %3053 = vmatpush1.msra.mxu0 %v3052
    %v3054 = vand.u32 %v143, 4294901760
    %3055 = vmatprep.subr.mxu0 %v3054
    %v3056 = vand.u32 %v142, 4294901760
    %3057 = vmatpush1.msra.mxu0 %v3056
    %3058 = vmatprep.subr.mxu0 0.0
    %3059 = vmatpush1.msra.mxu0 0.0
    %3060 = vmatprep.subr.mxu0 0.0
    %3061 = vmatpush1.msra.mxu0 0.0
    %3062 = vmatprep.subr.mxu0 0.0
    %3063 = vmatpush1.msra.mxu0 0.0
    %3064 = vmatprep.subr.mxu0 0.0
    %3065 = vmatpush1.msra.mxu0 0.0
    %3066 = vmatprep.subr.mxu0 0.0
    %3067 = vmatpush1.msra.mxu0 0.0
    %3068 = vmatprep.subr.mxu0 0.0
    %3069 = vmatpush1.msra.mxu0 0.0
    %3070 = vmatprep.subr.mxu0 0.0
    %3071 = vmatpush1.msra.mxu0 0.0
    %3072 = vmatprep.subr.mxu0 0.0
    %3073 = vmatpush1.msra.mxu0 0.0
    %3074 = vmatprep.subr.mxu0 0.0
    %3075 = vmatpush1.msra.mxu0 0.0
    %3076 = vmatprep.subr.mxu0 0.0
    %3077 = vmatpush1.msra.mxu0 0.0
    %3078 = vmatprep.subr.mxu0 0.0
    %3079 = vmatpush1.msra.mxu0 0.0
    %3080 = vmatprep.subr.mxu0 0.0
    %3081 = vmatpush1.msra.mxu0 0.0
    %3082 = vmatprep.subr.mxu0 0.0
    %3083 = vmatpush1.msra.mxu0 0.0
    %3084 = vmatprep.subr.mxu0 0.0
    %3085 = vmatpush1.msra.mxu0 0.0
    %3086 = vmatprep.subr.mxu0 0.0
    %3087 = vmatpush1.msra.mxu0 0.0
    %3088 = vmatprep.subr.mxu0 0.0
    %3089 = vmatpush1.msra.mxu0 0.0
    %3090 = vmatprep.subr.mxu0 0.0
    %3091 = vmatpush1.msra.mxu0 0.0
    %3092 = vmatprep.subr.mxu0 0.0
    %3093 = vmatpush1.msra.mxu0 0.0
    %3094 = vmatprep.subr.mxu0 0.0
    %3095 = vmatpush1.msra.mxu0 0.0
    %3096 = vmatprep.subr.mxu0 0.0
    %3097 = vmatpush1.msra.mxu0 0.0
    %3098 = vmatprep.subr.mxu0 0.0
    %3099 = vmatpush1.msra.mxu0 0.0
    %3100 = vmatprep.subr.mxu0 0.0
    %3101 = vmatpush1.msra.mxu0 0.0
    %3102 = vmatprep.subr.mxu0 0.0
    %3103 = vmatpush1.msra.mxu0 0.0
    %3104 = vmatprep.subr.mxu0 0.0
    %3105 = vmatpush1.msra.mxu0 0.0
    %3106 = vmatprep.mubr.f32.mxu0 0.0
    %v3107 = vand.u32 %v2377, 4294901760
    %v3108 = vsub.f32 %v2377, %v3107
    %v3109 = vand.u32 %v3108, 4294901760
    %v3110 = vsub.f32 %v3108, %v3109
    %v3111 = vand.u32 %v3110, 4294901760
    %3112 = vmatmul.mubr.f32.gmra.mrb[0].mxu0 %v3111
    %v3113 = vpop.f32.mrb[0].mxu0
    %v3114 = vadd.f32 0.0, %v3113
    %v3115 = vpop.f32.mrb[0].mxu0
    %v3116 = vadd.f32 0.0, %v3115
    %3117 = vdwg.mxu0
    %v3118 = vand.u32 %v115, 4294901760
    %v3119 = vsub.f32 %v115, %v3118
    %v3120 = vand.u32 %v3119, 4294901760
    %v3121 = vsub.f32 %v3119, %v3120
    %v3122 = vand.u32 %v3121, 4294901760
    %3123 = vmatprep.subr.mxu0 %v3122
    %v3124 = vand.u32 %v114, 4294901760
    %v3125 = vsub.f32 %v114, %v3124
    %v3126 = vand.u32 %v3125, 4294901760
    %v3127 = vsub.f32 %v3125, %v3126
    %v3128 = vand.u32 %v3127, 4294901760
    %3129 = vmatpush1.msra.mxu0 %v3128
    %v3130 = vand.u32 %v119, 4294901760
    %v3131 = vsub.f32 %v119, %v3130
    %v3132 = vand.u32 %v3131, 4294901760
    %v3133 = vsub.f32 %v3131, %v3132
    %v3134 = vand.u32 %v3133, 4294901760
    %3135 = vmatprep.subr.mxu0 %v3134
    %v3136 = vand.u32 %v118, 4294901760
    %v3137 = vsub.f32 %v118, %v3136
    %v3138 = vand.u32 %v3137, 4294901760
    %v3139 = vsub.f32 %v3137, %v3138
    %v3140 = vand.u32 %v3139, 4294901760
    %3141 = vmatpush1.msra.mxu0 %v3140
    %v3142 = vand.u32 %v123, 4294901760
    %v3143 = vsub.f32 %v123, %v3142
    %v3144 = vand.u32 %v3143, 4294901760
    %v3145 = vsub.f32 %v3143, %v3144
    %v3146 = vand.u32 %v3145, 4294901760
    %3147 = vmatprep.subr.mxu0 %v3146
    %v3148 = vand.u32 %v122, 4294901760
    %v3149 = vsub.f32 %v122, %v3148
    %v3150 = vand.u32 %v3149, 4294901760
    %v3151 = vsub.f32 %v3149, %v3150
    %v3152 = vand.u32 %v3151, 4294901760
    %3153 = vmatpush1.msra.mxu0 %v3152
    %v3154 = vand.u32 %v127, 4294901760
    %v3155 = vsub.f32 %v127, %v3154
    %v3156 = vand.u32 %v3155, 4294901760
    %v3157 = vsub.f32 %v3155, %v3156
    %v3158 = vand.u32 %v3157, 4294901760
    %3159 = vmatprep.subr.mxu0 %v3158
    %v3160 = vand.u32 %v126, 4294901760
    %v3161 = vsub.f32 %v126, %v3160
    %v3162 = vand.u32 %v3161, 4294901760
    %v3163 = vsub.f32 %v3161, %v3162
    %v3164 = vand.u32 %v3163, 4294901760
    %3165 = vmatpush1.msra.mxu0 %v3164
    %v3166 = vand.u32 %v131, 4294901760
    %v3167 = vsub.f32 %v131, %v3166
    %v3168 = vand.u32 %v3167, 4294901760
    %v3169 = vsub.f32 %v3167, %v3168
    %v3170 = vand.u32 %v3169, 4294901760
    %3171 = vmatprep.subr.mxu0 %v3170
    %v3172 = vand.u32 %v130, 4294901760
    %v3173 = vsub.f32 %v130, %v3172
    %v3174 = vand.u32 %v3173, 4294901760
    %v3175 = vsub.f32 %v3173, %v3174
    %v3176 = vand.u32 %v3175, 4294901760
    %3177 = vmatpush1.msra.mxu0 %v3176
    %v3178 = vand.u32 %v135, 4294901760
    %v3179 = vsub.f32 %v135, %v3178
    %v3180 = vand.u32 %v3179, 4294901760
    %v3181 = vsub.f32 %v3179, %v3180
    %v3182 = vand.u32 %v3181, 4294901760
    %3183 = vmatprep.subr.mxu0 %v3182
    %v3184 = vand.u32 %v134, 4294901760
    %v3185 = vsub.f32 %v134, %v3184
    %v3186 = vand.u32 %v3185, 4294901760
    %v3187 = vsub.f32 %v3185, %v3186
    %v3188 = vand.u32 %v3187, 4294901760
    %3189 = vmatpush1.msra.mxu0 %v3188
    %v3190 = vand.u32 %v139, 4294901760
    %v3191 = vsub.f32 %v139, %v3190
    %v3192 = vand.u32 %v3191, 4294901760
    %v3193 = vsub.f32 %v3191, %v3192
    %v3194 = vand.u32 %v3193, 4294901760
    %3195 = vmatprep.subr.mxu0 %v3194
    %v3196 = vand.u32 %v138, 4294901760
    %v3197 = vsub.f32 %v138, %v3196
    %v3198 = vand.u32 %v3197, 4294901760
    %v3199 = vsub.f32 %v3197, %v3198
    %v3200 = vand.u32 %v3199, 4294901760
    %3201 = vmatpush1.msra.mxu0 %v3200
    %v3202 = vand.u32 %v143, 4294901760
    %v3203 = vsub.f32 %v143, %v3202
    %v3204 = vand.u32 %v3203, 4294901760
    %v3205 = vsub.f32 %v3203, %v3204
    %v3206 = vand.u32 %v3205, 4294901760
    %3207 = vmatprep.subr.mxu0 %v3206
    %v3208 = vand.u32 %v142, 4294901760
    %v3209 = vsub.f32 %v142, %v3208
    %v3210 = vand.u32 %v3209, 4294901760
    %v3211 = vsub.f32 %v3209, %v3210
    %v3212 = vand.u32 %v3211, 4294901760
    %3213 = vmatpush1.msra.mxu0 %v3212
    %3214 = vmatprep.subr.mxu0 0.0
    %3215 = vmatpush1.msra.mxu0 0.0
    %3216 = vmatprep.subr.mxu0 0.0
    %3217 = vmatpush1.msra.mxu0 0.0
    %3218 = vmatprep.subr.mxu0 0.0
    %3219 = vmatpush1.msra.mxu0 0.0
    %3220 = vmatprep.subr.mxu0 0.0
    %3221 = vmatpush1.msra.mxu0 0.0
    %3222 = vmatprep.subr.mxu0 0.0
    %3223 = vmatpush1.msra.mxu0 0.0
    %3224 = vmatprep.subr.mxu0 0.0
    %3225 = vmatpush1.msra.mxu0 0.0
    %3226 = vmatprep.subr.mxu0 0.0
    %3227 = vmatpush1.msra.mxu0 0.0
    %3228 = vmatprep.subr.mxu0 0.0
    %3229 = vmatpush1.msra.mxu0 0.0
    %3230 = vmatprep.subr.mxu0 0.0
    %3231 = vmatpush1.msra.mxu0 0.0
    %3232 = vmatprep.subr.mxu0 0.0
    %3233 = vmatpush1.msra.mxu0 0.0
    %3234 = vmatprep.subr.mxu0 0.0
    %3235 = vmatpush1.msra.mxu0 0.0
    %3236 = vmatprep.subr.mxu0 0.0
    %3237 = vmatpush1.msra.mxu0 0.0
    %3238 = vmatprep.subr.mxu0 0.0
    %3239 = vmatpush1.msra.mxu0 0.0
    %3240 = vmatprep.subr.mxu0 0.0
    %3241 = vmatpush1.msra.mxu0 0.0
    %3242 = vmatprep.subr.mxu0 0.0
    %3243 = vmatpush1.msra.mxu0 0.0
    %3244 = vmatprep.subr.mxu0 0.0
    %3245 = vmatpush1.msra.mxu0 0.0
    %3246 = vmatprep.subr.mxu0 0.0
    %3247 = vmatpush1.msra.mxu0 0.0
    %3248 = vmatprep.subr.mxu0 0.0
    %3249 = vmatpush1.msra.mxu0 0.0
    %3250 = vmatprep.subr.mxu0 0.0
    %3251 = vmatpush1.msra.mxu0 0.0
    %3252 = vmatprep.subr.mxu0 0.0
    %3253 = vmatpush1.msra.mxu0 0.0
    %3254 = vmatprep.subr.mxu0 0.0
    %3255 = vmatpush1.msra.mxu0 0.0
    %3256 = vmatprep.subr.mxu0 0.0
    %3257 = vmatpush1.msra.mxu0 0.0
    %3258 = vmatprep.subr.mxu0 0.0
    %3259 = vmatpush1.msra.mxu0 0.0
    %3260 = vmatprep.subr.mxu0 0.0
    %3261 = vmatpush1.msra.mxu0 0.0
    %3262 = vmatprep.mubr.f32.mxu0 0.0
    %v3263 = vand.u32 %v2377, 4294901760
    %3264 = vmatmul.mubr.f32.gmra.mrb[0].mxu0 %v3263
    %v3265 = vpop.f32.mrb[0].mxu0
    %v3266 = vadd.f32 %v3114, %v3265
    %v3267 = vpop.f32.mrb[0].mxu0
    %v3268 = vadd.f32 %v3116, %v3267
    %3269 = vdwg.mxu0
    %v3270 = vand.u32 %v115, 4294901760
    %v3271 = vsub.f32 %v115, %v3270
    %3272 = vmatprep.subr.mxu0 %v3271
    %v3273 = vand.u32 %v114, 4294901760
    %v3274 = vsub.f32 %v114, %v3273
    %3275 = vmatpush1.msra.mxu0 %v3274
    %v3276 = vand.u32 %v119, 4294901760
    %v3277 = vsub.f32 %v119, %v3276
    %3278 = vmatprep.subr.mxu0 %v3277
    %v3279 = vand.u32 %v118, 4294901760
    %v3280 = vsub.f32 %v118, %v3279
    %3281 = vmatpush1.msra.mxu0 %v3280
    %v3282 = vand.u32 %v123, 4294901760
    %v3283 = vsub.f32 %v123, %v3282
    %3284 = vmatprep.subr.mxu0 %v3283
    %v3285 = vand.u32 %v122, 4294901760
    %v3286 = vsub.f32 %v122, %v3285
    %3287 = vmatpush1.msra.mxu0 %v3286
    %v3288 = vand.u32 %v127, 4294901760
    %v3289 = vsub.f32 %v127, %v3288
    %3290 = vmatprep.subr.mxu0 %v3289
    %v3291 = vand.u32 %v126, 4294901760
    %v3292 = vsub.f32 %v126, %v3291
    %3293 = vmatpush1.msra.mxu0 %v3292
    %v3294 = vand.u32 %v131, 4294901760
    %v3295 = vsub.f32 %v131, %v3294
    %3296 = vmatprep.subr.mxu0 %v3295
    %v3297 = vand.u32 %v130, 4294901760
    %v3298 = vsub.f32 %v130, %v3297
    %3299 = vmatpush1.msra.mxu0 %v3298
    %v3300 = vand.u32 %v135, 4294901760
    %v3301 = vsub.f32 %v135, %v3300
    %3302 = vmatprep.subr.mxu0 %v3301
    %v3303 = vand.u32 %v134, 4294901760
    %v3304 = vsub.f32 %v134, %v3303
    %3305 = vmatpush1.msra.mxu0 %v3304
    %v3306 = vand.u32 %v139, 4294901760
    %v3307 = vsub.f32 %v139, %v3306
    %3308 = vmatprep.subr.mxu0 %v3307
    %v3309 = vand.u32 %v138, 4294901760
    %v3310 = vsub.f32 %v138, %v3309
    %3311 = vmatpush1.msra.mxu0 %v3310
    %v3312 = vand.u32 %v143, 4294901760
    %v3313 = vsub.f32 %v143, %v3312
    %3314 = vmatprep.subr.mxu0 %v3313
    %v3315 = vand.u32 %v142, 4294901760
    %v3316 = vsub.f32 %v142, %v3315
    %3317 = vmatpush1.msra.mxu0 %v3316
    %3318 = vmatprep.subr.mxu0 0.0
    %3319 = vmatpush1.msra.mxu0 0.0
    %3320 = vmatprep.subr.mxu0 0.0
    %3321 = vmatpush1.msra.mxu0 0.0
    %3322 = vmatprep.subr.mxu0 0.0
    %3323 = vmatpush1.msra.mxu0 0.0
    %3324 = vmatprep.subr.mxu0 0.0
    %3325 = vmatpush1.msra.mxu0 0.0
    %3326 = vmatprep.subr.mxu0 0.0
    %3327 = vmatpush1.msra.mxu0 0.0
    %3328 = vmatprep.subr.mxu0 0.0
    %3329 = vmatpush1.msra.mxu0 0.0
    %3330 = vmatprep.subr.mxu0 0.0
    %3331 = vmatpush1.msra.mxu0 0.0
    %3332 = vmatprep.subr.mxu0 0.0
    %3333 = vmatpush1.msra.mxu0 0.0
    %3334 = vmatprep.subr.mxu0 0.0
    %3335 = vmatpush1.msra.mxu0 0.0
    %3336 = vmatprep.subr.mxu0 0.0
    %3337 = vmatpush1.msra.mxu0 0.0
    %3338 = vmatprep.subr.mxu0 0.0
    %3339 = vmatpush1.msra.mxu0 0.0
    %3340 = vmatprep.subr.mxu0 0.0
    %3341 = vmatpush1.msra.mxu0 0.0
    %3342 = vmatprep.subr.mxu0 0.0
    %3343 = vmatpush1.msra.mxu0 0.0
    %3344 = vmatprep.subr.mxu0 0.0
    %3345 = vmatpush1.msra.mxu0 0.0
    %3346 = vmatprep.subr.mxu0 0.0
    %3347 = vmatpush1.msra.mxu0 0.0
    %3348 = vmatprep.subr.mxu0 0.0
    %3349 = vmatpush1.msra.mxu0 0.0
    %3350 = vmatprep.subr.mxu0 0.0
    %3351 = vmatpush1.msra.mxu0 0.0
    %3352 = vmatprep.subr.mxu0 0.0
    %3353 = vmatpush1.msra.mxu0 0.0
    %3354 = vmatprep.subr.mxu0 0.0
    %3355 = vmatpush1.msra.mxu0 0.0
    %3356 = vmatprep.subr.mxu0 0.0
    %3357 = vmatpush1.msra.mxu0 0.0
    %3358 = vmatprep.subr.mxu0 0.0
    %3359 = vmatpush1.msra.mxu0 0.0
    %3360 = vmatprep.subr.mxu0 0.0
    %3361 = vmatpush1.msra.mxu0 0.0
    %3362 = vmatprep.subr.mxu0 0.0
    %3363 = vmatpush1.msra.mxu0 0.0
    %3364 = vmatprep.subr.mxu0 0.0
    %3365 = vmatpush1.msra.mxu0 0.0
    %3366 = vmatprep.mubr.f32.mxu0 0.0
    %v3367 = vand.u32 %v2377, 4294901760
    %v3368 = vsub.f32 %v2377, %v3367
    %3369 = vmatmul.mubr.f32.gmra.mrb[0].mxu0 %v3368
    %v3370 = vpop.f32.mrb[0].mxu0
    %v3371 = vadd.f32 %v3266, %v3370
    %v3372 = vpop.f32.mrb[0].mxu0
    %v3373 = vadd.f32 %v3268, %v3372
    %3374 = vdwg.mxu0
    %v3375 = vand.u32 %v115, 4294901760
    %3376 = vmatprep.subr.mxu0 %v3375
    %v3377 = vand.u32 %v114, 4294901760
    %3378 = vmatpush1.msra.mxu0 %v3377
    %v3379 = vand.u32 %v119, 4294901760
    %3380 = vmatprep.subr.mxu0 %v3379
    %v3381 = vand.u32 %v118, 4294901760
    %3382 = vmatpush1.msra.mxu0 %v3381
    %v3383 = vand.u32 %v123, 4294901760
    %3384 = vmatprep.subr.mxu0 %v3383
    %v3385 = vand.u32 %v122, 4294901760
    %3386 = vmatpush1.msra.mxu0 %v3385
    %v3387 = vand.u32 %v127, 4294901760
    %3388 = vmatprep.subr.mxu0 %v3387
    %v3389 = vand.u32 %v126, 4294901760
    %3390 = vmatpush1.msra.mxu0 %v3389
    %v3391 = vand.u32 %v131, 4294901760
    %3392 = vmatprep.subr.mxu0 %v3391
    %v3393 = vand.u32 %v130, 4294901760
    %3394 = vmatpush1.msra.mxu0 %v3393
    %v3395 = vand.u32 %v135, 4294901760
    %3396 = vmatprep.subr.mxu0 %v3395
    %v3397 = vand.u32 %v134, 4294901760
    %3398 = vmatpush1.msra.mxu0 %v3397
    %v3399 = vand.u32 %v139, 4294901760
    %3400 = vmatprep.subr.mxu0 %v3399
    %v3401 = vand.u32 %v138, 4294901760
    %3402 = vmatpush1.msra.mxu0 %v3401
    %v3403 = vand.u32 %v143, 4294901760
    %3404 = vmatprep.subr.mxu0 %v3403
    %v3405 = vand.u32 %v142, 4294901760
    %3406 = vmatpush1.msra.mxu0 %v3405
    %3407 = vmatprep.subr.mxu0 0.0
    %3408 = vmatpush1.msra.mxu0 0.0
    %3409 = vmatprep.subr.mxu0 0.0
    %3410 = vmatpush1.msra.mxu0 0.0
    %3411 = vmatprep.subr.mxu0 0.0
    %3412 = vmatpush1.msra.mxu0 0.0
    %3413 = vmatprep.subr.mxu0 0.0
    %3414 = vmatpush1.msra.mxu0 0.0
    %3415 = vmatprep.subr.mxu0 0.0
    %3416 = vmatpush1.msra.mxu0 0.0
    %3417 = vmatprep.subr.mxu0 0.0
    %3418 = vmatpush1.msra.mxu0 0.0
    %3419 = vmatprep.subr.mxu0 0.0
    %3420 = vmatpush1.msra.mxu0 0.0
    %3421 = vmatprep.subr.mxu0 0.0
    %3422 = vmatpush1.msra.mxu0 0.0
    %3423 = vmatprep.subr.mxu0 0.0
    %3424 = vmatpush1.msra.mxu0 0.0
    %3425 = vmatprep.subr.mxu0 0.0
    %3426 = vmatpush1.msra.mxu0 0.0
    %3427 = vmatprep.subr.mxu0 0.0
    %3428 = vmatpush1.msra.mxu0 0.0
    %3429 = vmatprep.subr.mxu0 0.0
    %3430 = vmatpush1.msra.mxu0 0.0
    %3431 = vmatprep.subr.mxu0 0.0
    %3432 = vmatpush1.msra.mxu0 0.0
    %3433 = vmatprep.subr.mxu0 0.0
    %3434 = vmatpush1.msra.mxu0 0.0
    %3435 = vmatprep.subr.mxu0 0.0
    %3436 = vmatpush1.msra.mxu0 0.0
    %3437 = vmatprep.subr.mxu0 0.0
    %3438 = vmatpush1.msra.mxu0 0.0
    %3439 = vmatprep.subr.mxu0 0.0
    %3440 = vmatpush1.msra.mxu0 0.0
    %3441 = vmatprep.subr.mxu0 0.0
    %3442 = vmatpush1.msra.mxu0 0.0
    %3443 = vmatprep.subr.mxu0 0.0
    %3444 = vmatpush1.msra.mxu0 0.0
    %3445 = vmatprep.subr.mxu0 0.0
    %3446 = vmatpush1.msra.mxu0 0.0
    %3447 = vmatprep.subr.mxu0 0.0
    %3448 = vmatpush1.msra.mxu0 0.0
    %3449 = vmatprep.subr.mxu0 0.0
    %3450 = vmatpush1.msra.mxu0 0.0
    %3451 = vmatprep.subr.mxu0 0.0
    %3452 = vmatpush1.msra.mxu0 0.0
    %3453 = vmatprep.subr.mxu0 0.0
    %3454 = vmatpush1.msra.mxu0 0.0
    %3455 = vmatprep.mubr.f32.mxu0 0.0
    %v3456 = vand.u32 %v2377, 4294901760
    %v3457 = vsub.f32 %v2377, %v3456
    %v3458 = vand.u32 %v3457, 4294901760
    %3459 = vmatmul.mubr.f32.gmra.mrb[0].mxu0 %v3458
    %v3460 = vpop.f32.mrb[0].mxu0
    %v3461 = vadd.f32 %v3371, %v3460
    %v3462 = vpop.f32.mrb[0].mxu0
    %v3463 = vadd.f32 %v3373, %v3462
    %3464 = vdwg.mxu0
    %v3465 = vand.u32 %v115, 4294901760
    %v3466 = vsub.f32 %v115, %v3465
    %v3467 = vand.u32 %v3466, 4294901760
    %3468 = vmatprep.subr.mxu0 %v3467
    %v3469 = vand.u32 %v114, 4294901760
    %v3470 = vsub.f32 %v114, %v3469
    %v3471 = vand.u32 %v3470, 4294901760
    %3472 = vmatpush1.msra.mxu0 %v3471
    %v3473 = vand.u32 %v119, 4294901760
    %v3474 = vsub.f32 %v119, %v3473
    %v3475 = vand.u32 %v3474, 4294901760
    %3476 = vmatprep.subr.mxu0 %v3475
    %v3477 = vand.u32 %v118, 4294901760
    %v3478 = vsub.f32 %v118, %v3477
    %v3479 = vand.u32 %v3478, 4294901760
    %3480 = vmatpush1.msra.mxu0 %v3479
    %v3481 = vand.u32 %v123, 4294901760
    %v3482 = vsub.f32 %v123, %v3481
    %v3483 = vand.u32 %v3482, 4294901760
    %3484 = vmatprep.subr.mxu0 %v3483
    %v3485 = vand.u32 %v122, 4294901760
    %v3486 = vsub.f32 %v122, %v3485
    %v3487 = vand.u32 %v3486, 4294901760
    %3488 = vmatpush1.msra.mxu0 %v3487
    %v3489 = vand.u32 %v127, 4294901760
    %v3490 = vsub.f32 %v127, %v3489
    %v3491 = vand.u32 %v3490, 4294901760
    %3492 = vmatprep.subr.mxu0 %v3491
    %v3493 = vand.u32 %v126, 4294901760
    %v3494 = vsub.f32 %v126, %v3493
    %v3495 = vand.u32 %v3494, 4294901760
    %3496 = vmatpush1.msra.mxu0 %v3495
    %v3497 = vand.u32 %v131, 4294901760
    %v3498 = vsub.f32 %v131, %v3497
    %v3499 = vand.u32 %v3498, 4294901760
    %3500 = vmatprep.subr.mxu0 %v3499
    %v3501 = vand.u32 %v130, 4294901760
    %v3502 = vsub.f32 %v130, %v3501
    %v3503 = vand.u32 %v3502, 4294901760
    %3504 = vmatpush1.msra.mxu0 %v3503
    %v3505 = vand.u32 %v135, 4294901760
    %v3506 = vsub.f32 %v135, %v3505
    %v3507 = vand.u32 %v3506, 4294901760
    %3508 = vmatprep.subr.mxu0 %v3507
    %v3509 = vand.u32 %v134, 4294901760
    %v3510 = vsub.f32 %v134, %v3509
    %v3511 = vand.u32 %v3510, 4294901760
    %3512 = vmatpush1.msra.mxu0 %v3511
    %v3513 = vand.u32 %v139, 4294901760
    %v3514 = vsub.f32 %v139, %v3513
    %v3515 = vand.u32 %v3514, 4294901760
    %3516 = vmatprep.subr.mxu0 %v3515
    %v3517 = vand.u32 %v138, 4294901760
    %v3518 = vsub.f32 %v138, %v3517
    %v3519 = vand.u32 %v3518, 4294901760
    %3520 = vmatpush1.msra.mxu0 %v3519
    %v3521 = vand.u32 %v143, 4294901760
    %v3522 = vsub.f32 %v143, %v3521
    %v3523 = vand.u32 %v3522, 4294901760
    %3524 = vmatprep.subr.mxu0 %v3523
    %v3525 = vand.u32 %v142, 4294901760
    %v3526 = vsub.f32 %v142, %v3525
    %v3527 = vand.u32 %v3526, 4294901760
    %3528 = vmatpush1.msra.mxu0 %v3527
    %3529 = vmatprep.subr.mxu0 0.0
    %3530 = vmatpush1.msra.mxu0 0.0
    %3531 = vmatprep.subr.mxu0 0.0
    %3532 = vmatpush1.msra.mxu0 0.0
    %3533 = vmatprep.subr.mxu0 0.0
    %3534 = vmatpush1.msra.mxu0 0.0
    %3535 = vmatprep.subr.mxu0 0.0
    %3536 = vmatpush1.msra.mxu0 0.0
    %3537 = vmatprep.subr.mxu0 0.0
    %3538 = vmatpush1.msra.mxu0 0.0
    %3539 = vmatprep.subr.mxu0 0.0
    %3540 = vmatpush1.msra.mxu0 0.0
    %3541 = vmatprep.subr.mxu0 0.0
    %3542 = vmatpush1.msra.mxu0 0.0
    %3543 = vmatprep.subr.mxu0 0.0
    %3544 = vmatpush1.msra.mxu0 0.0
    %3545 = vmatprep.subr.mxu0 0.0
    %3546 = vmatpush1.msra.mxu0 0.0
    %3547 = vmatprep.subr.mxu0 0.0
    %3548 = vmatpush1.msra.mxu0 0.0
    %3549 = vmatprep.subr.mxu0 0.0
    %3550 = vmatpush1.msra.mxu0 0.0
    %3551 = vmatprep.subr.mxu0 0.0
    %3552 = vmatpush1.msra.mxu0 0.0
    %3553 = vmatprep.subr.mxu0 0.0
    %3554 = vmatpush1.msra.mxu0 0.0
    %3555 = vmatprep.subr.mxu0 0.0
    %3556 = vmatpush1.msra.mxu0 0.0
    %3557 = vmatprep.subr.mxu0 0.0
    %3558 = vmatpush1.msra.mxu0 0.0
    %3559 = vmatprep.subr.mxu0 0.0
    %3560 = vmatpush1.msra.mxu0 0.0
    %3561 = vmatprep.subr.mxu0 0.0
    %3562 = vmatpush1.msra.mxu0 0.0
    %3563 = vmatprep.subr.mxu0 0.0
    %3564 = vmatpush1.msra.mxu0 0.0
    %3565 = vmatprep.subr.mxu0 0.0
    %3566 = vmatpush1.msra.mxu0 0.0
    %3567 = vmatprep.subr.mxu0 0.0
    %3568 = vmatpush1.msra.mxu0 0.0
    %3569 = vmatprep.subr.mxu0 0.0
    %3570 = vmatpush1.msra.mxu0 0.0
    %3571 = vmatprep.subr.mxu0 0.0
    %3572 = vmatpush1.msra.mxu0 0.0
    %3573 = vmatprep.subr.mxu0 0.0
    %3574 = vmatpush1.msra.mxu0 0.0
    %3575 = vmatprep.subr.mxu0 0.0
    %3576 = vmatpush1.msra.mxu0 0.0
    %3577 = vmatprep.mubr.f32.mxu0 0.0
    %v3578 = vand.u32 %v2377, 4294901760
    %3579 = vmatmul.mubr.f32.gmra.mrb[0].mxu0 %v3578
    %v3580 = vpop.f32.mrb[0].mxu0
    %v3581 = vadd.f32 %v3461, %v3580
    %v3582 = vpop.f32.mrb[0].mxu0
    %v3583 = vadd.f32 %v3463, %v3582
    %3584 = vdwg.mxu0
    %v3585 = vand.u32 %v115, 4294901760
    %3586 = vmatprep.subr.mxu0 %v3585
    %v3587 = vand.u32 %v114, 4294901760
    %3588 = vmatpush1.msra.mxu0 %v3587
    %v3589 = vand.u32 %v119, 4294901760
    %3590 = vmatprep.subr.mxu0 %v3589
    %v3591 = vand.u32 %v118, 4294901760
    %3592 = vmatpush1.msra.mxu0 %v3591
    %v3593 = vand.u32 %v123, 4294901760
    %3594 = vmatprep.subr.mxu0 %v3593
    %v3595 = vand.u32 %v122, 4294901760
    %3596 = vmatpush1.msra.mxu0 %v3595
    %v3597 = vand.u32 %v127, 4294901760
    %3598 = vmatprep.subr.mxu0 %v3597
    %v3599 = vand.u32 %v126, 4294901760
    %3600 = vmatpush1.msra.mxu0 %v3599
    %v3601 = vand.u32 %v131, 4294901760
    %3602 = vmatprep.subr.mxu0 %v3601
    %v3603 = vand.u32 %v130, 4294901760
    %3604 = vmatpush1.msra.mxu0 %v3603
    %v3605 = vand.u32 %v135, 4294901760
    %3606 = vmatprep.subr.mxu0 %v3605
    %v3607 = vand.u32 %v134, 4294901760
    %3608 = vmatpush1.msra.mxu0 %v3607
    %v3609 = vand.u32 %v139, 4294901760
    %3610 = vmatprep.subr.mxu0 %v3609
    %v3611 = vand.u32 %v138, 4294901760
    %3612 = vmatpush1.msra.mxu0 %v3611
    %v3613 = vand.u32 %v143, 4294901760
    %3614 = vmatprep.subr.mxu0 %v3613
    %v3615 = vand.u32 %v142, 4294901760
    %3616 = vmatpush1.msra.mxu0 %v3615
    %3617 = vmatprep.subr.mxu0 0.0
    %3618 = vmatpush1.msra.mxu0 0.0
    %3619 = vmatprep.subr.mxu0 0.0
    %3620 = vmatpush1.msra.mxu0 0.0
    %3621 = vmatprep.subr.mxu0 0.0
    %3622 = vmatpush1.msra.mxu0 0.0
    %3623 = vmatprep.subr.mxu0 0.0
    %3624 = vmatpush1.msra.mxu0 0.0
    %3625 = vmatprep.subr.mxu0 0.0
    %3626 = vmatpush1.msra.mxu0 0.0
    %3627 = vmatprep.subr.mxu0 0.0
    %3628 = vmatpush1.msra.mxu0 0.0
    %3629 = vmatprep.subr.mxu0 0.0
    %3630 = vmatpush1.msra.mxu0 0.0
    %3631 = vmatprep.subr.mxu0 0.0
    %3632 = vmatpush1.msra.mxu0 0.0
    %3633 = vmatprep.subr.mxu0 0.0
    %3634 = vmatpush1.msra.mxu0 0.0
    %3635 = vmatprep.subr.mxu0 0.0
    %3636 = vmatpush1.msra.mxu0 0.0
    %3637 = vmatprep.subr.mxu0 0.0
    %3638 = vmatpush1.msra.mxu0 0.0
    %3639 = vmatprep.subr.mxu0 0.0
    %3640 = vmatpush1.msra.mxu0 0.0
    %3641 = vmatprep.subr.mxu0 0.0
    %3642 = vmatpush1.msra.mxu0 0.0
    %3643 = vmatprep.subr.mxu0 0.0
    %3644 = vmatpush1.msra.mxu0 0.0
    %3645 = vmatprep.subr.mxu0 0.0
    %3646 = vmatpush1.msra.mxu0 0.0
    %3647 = vmatprep.subr.mxu0 0.0
    %3648 = vmatpush1.msra.mxu0 0.0
    %3649 = vmatprep.subr.mxu0 0.0
    %3650 = vmatpush1.msra.mxu0 0.0
    %3651 = vmatprep.subr.mxu0 0.0
    %3652 = vmatpush1.msra.mxu0 0.0
    %3653 = vmatprep.subr.mxu0 0.0
    %3654 = vmatpush1.msra.mxu0 0.0
    %3655 = vmatprep.subr.mxu0 0.0
    %3656 = vmatpush1.msra.mxu0 0.0
    %3657 = vmatprep.subr.mxu0 0.0
    %3658 = vmatpush1.msra.mxu0 0.0
    %3659 = vmatprep.subr.mxu0 0.0
    %3660 = vmatpush1.msra.mxu0 0.0
    %3661 = vmatprep.subr.mxu0 0.0
    %3662 = vmatpush1.msra.mxu0 0.0
    %3663 = vmatprep.subr.mxu0 0.0
    %3664 = vmatpush1.msra.mxu0 0.0
    %3665 = vmatprep.mubr.f32.mxu0 0.0
    %v3666 = vand.u32 %v2377, 4294901760
    %3667 = vmatmul.mubr.f32.gmra.mrb[0].mxu0 %v3666
    %v3668 = vpop.f32.mrb[0].mxu0
    %v3669 = vadd.f32 %v3581, %v3668
    %v3670 = vpop.f32.mrb[0].mxu0
    %v3671 = vadd.f32 %v3583, %v3670
    %3672 = vdwg.mxu0
    %v3673 = vld [vmem:[%s1] sm:$0xff]
    %v3674 = vld [vmem:[%s1 + $0x8] sm:$0xff]
    %v3675 = vld [vmem:[%s1 + $0x10] sm:$0xff]
    %v3676 = vld [vmem:[%s1 + $0x18] sm:$0xff]
    %v3677 = vld [vmem:[%s8] sm:$0xff]
    %v3678 = vld [vmem:[%s9] sm:$0xff]
    %3679 = vmatprep.subr.mxu0 0.0
    %v3680 = vand.u32 %v48, 4294901760
    %3681 = vmatpush1.msra.mxu0 %v3680
    %3682 = vmatprep.subr.mxu0 0.0
    %v3683 = vand.u32 %v49, 4294901760
    %3684 = vmatpush1.msra.mxu0 %v3683
    %3685 = vmatprep.subr.mxu0 0.0
    %v3686 = vand.u32 %v50, 4294901760
    %3687 = vmatpush1.msra.mxu0 %v3686
    %3688 = vmatprep.subr.mxu0 0.0
    %v3689 = vand.u32 %v51, 4294901760
    %3690 = vmatpush1.msra.mxu0 %v3689
    %3691 = vmatprep.subr.mxu0 0.0
    %v3692 = vand.u32 %v52, 4294901760
    %3693 = vmatpush1.msra.mxu0 %v3692
    %3694 = vmatprep.subr.mxu0 0.0
    %v3695 = vand.u32 %v53, 4294901760
    %3696 = vmatpush1.msra.mxu0 %v3695
    %3697 = vmatprep.subr.mxu0 0.0
    %v3698 = vand.u32 %v54, 4294901760
    %3699 = vmatpush1.msra.mxu0 %v3698
    %3700 = vmatprep.subr.mxu0 0.0
    %v3701 = vand.u32 %v55, 4294901760
    %3702 = vmatpush1.msra.mxu0 %v3701
    %3703 = vmatprep.subr.mxu0 0.0
    %v3704 = vand.u32 %v56, 4294901760
    %3705 = vmatpush1.msra.mxu0 %v3704
    %3706 = vmatprep.subr.mxu0 0.0
    %v3707 = vand.u32 %v57, 4294901760
    %3708 = vmatpush1.msra.mxu0 %v3707
    %3709 = vmatprep.subr.mxu0 0.0
    %v3710 = vand.u32 %v58, 4294901760
    %3711 = vmatpush1.msra.mxu0 %v3710
    %3712 = vmatprep.subr.mxu0 0.0
    %v3713 = vand.u32 %v59, 4294901760
    %3714 = vmatpush1.msra.mxu0 %v3713
    %3715 = vmatprep.subr.mxu0 0.0
    %v3716 = vand.u32 %v60, 4294901760
    %3717 = vmatpush1.msra.mxu0 %v3716
    %3718 = vmatprep.subr.mxu0 0.0
    %v3719 = vand.u32 %v61, 4294901760
    %3720 = vmatpush1.msra.mxu0 %v3719
    %3721 = vmatprep.subr.mxu0 0.0
    %v3722 = vand.u32 %v62, 4294901760
    %3723 = vmatpush1.msra.mxu0 %v3722
    %3724 = vmatprep.subr.mxu0 0.0
    %v3725 = vand.u32 %v63, 4294901760
    %3726 = vmatpush1.msra.mxu0 %v3725
    %3727 = vmatprep.subr.mxu0 0.0
    %v3728 = vand.u32 %v64, 4294901760
    %3729 = vmatpush1.msra.mxu0 %v3728
    %3730 = vmatprep.subr.mxu0 0.0
    %v3731 = vand.u32 %v65, 4294901760
    %3732 = vmatpush1.msra.mxu0 %v3731
    %3733 = vmatprep.subr.mxu0 0.0
    %v3734 = vand.u32 %v66, 4294901760
    %3735 = vmatpush1.msra.mxu0 %v3734
    %3736 = vmatprep.subr.mxu0 0.0
    %v3737 = vand.u32 %v67, 4294901760
    %3738 = vmatpush1.msra.mxu0 %v3737
    %3739 = vmatprep.subr.mxu0 0.0
    %v3740 = vand.u32 %v68, 4294901760
    %3741 = vmatpush1.msra.mxu0 %v3740
    %3742 = vmatprep.subr.mxu0 0.0
    %v3743 = vand.u32 %v69, 4294901760
    %3744 = vmatpush1.msra.mxu0 %v3743
    %3745 = vmatprep.subr.mxu0 0.0
    %v3746 = vand.u32 %v70, 4294901760
    %3747 = vmatpush1.msra.mxu0 %v3746
    %3748 = vmatprep.subr.mxu0 0.0
    %v3749 = vand.u32 %v71, 4294901760
    %3750 = vmatpush1.msra.mxu0 %v3749
    %3751 = vmatprep.subr.mxu0 0.0
    %v3752 = vand.u32 %v72, 4294901760
    %3753 = vmatpush1.msra.mxu0 %v3752
    %3754 = vmatprep.subr.mxu0 0.0
    %v3755 = vand.u32 %v73, 4294901760
    %3756 = vmatpush1.msra.mxu0 %v3755
    %3757 = vmatprep.subr.mxu0 0.0
    %v3758 = vand.u32 %v74, 4294901760
    %3759 = vmatpush1.msra.mxu0 %v3758
    %3760 = vmatprep.subr.mxu0 0.0
    %v3761 = vand.u32 %v75, 4294901760
    %3762 = vmatpush1.msra.mxu0 %v3761
    %3763 = vmatprep.subr.mxu0 0.0
    %v3764 = vand.u32 %v76, 4294901760
    %3765 = vmatpush1.msra.mxu0 %v3764
    %3766 = vmatprep.subr.mxu0 0.0
    %v3767 = vand.u32 %v77, 4294901760
    %3768 = vmatpush1.msra.mxu0 %v3767
    %3769 = vmatprep.subr.mxu0 0.0
    %v3770 = vand.u32 %v78, 4294901760
    %3771 = vmatpush1.msra.mxu0 %v3770
    %3772 = vmatprep.subr.mxu0 0.0
    %v3773 = vand.u32 %v79, 4294901760
    %3774 = vmatpush1.msra.mxu0 %v3773
    %v3775 = vand.u32 %v3674, 4294901760
    %v3776 = vsub.f32 %v3674, %v3775
    %v3777 = vand.u32 %v3776, 4294901760
    %v3778 = vsub.f32 %v3776, %v3777
    %v3779 = vand.u32 %v3778, 4294901760
    %3780 = vmatprep.mubr.f32.mxu0 %v3779
    %v3781 = vand.u32 %v3673, 4294901760
    %v3782 = vsub.f32 %v3673, %v3781
    %v3783 = vand.u32 %v3782, 4294901760
    %v3784 = vsub.f32 %v3782, %v3783
    %v3785 = vand.u32 %v3784, 4294901760
    %3786 = vmatmul.mubr.f32.gmra.mrb[0].mxu0 %v3785
    %v3787 = vpop.f32.mrb[0].mxu0
    %v3788 = vadd.f32 0.0, %v3787
    %v3789 = vpop.f32.mrb[0].mxu0
    %3790 = vdwg.mxu0
    %3791 = vmatprep.subr.mxu0 0.0
    %v3792 = vand.u32 %v48, 4294901760
    %v3793 = vsub.f32 %v48, %v3792
    %v3794 = vand.u32 %v3793, 4294901760
    %v3795 = vsub.f32 %v3793, %v3794
    %v3796 = vand.u32 %v3795, 4294901760
    %3797 = vmatpush1.msra.mxu0 %v3796
    %3798 = vmatprep.subr.mxu0 0.0
    %v3799 = vand.u32 %v49, 4294901760
    %v3800 = vsub.f32 %v49, %v3799
    %v3801 = vand.u32 %v3800, 4294901760
    %v3802 = vsub.f32 %v3800, %v3801
    %v3803 = vand.u32 %v3802, 4294901760
    %3804 = vmatpush1.msra.mxu0 %v3803
    %3805 = vmatprep.subr.mxu0 0.0
    %v3806 = vand.u32 %v50, 4294901760
    %v3807 = vsub.f32 %v50, %v3806
    %v3808 = vand.u32 %v3807, 4294901760
    %v3809 = vsub.f32 %v3807, %v3808
    %v3810 = vand.u32 %v3809, 4294901760
    %3811 = vmatpush1.msra.mxu0 %v3810
    %3812 = vmatprep.subr.mxu0 0.0
    %v3813 = vand.u32 %v51, 4294901760
    %v3814 = vsub.f32 %v51, %v3813
    %v3815 = vand.u32 %v3814, 4294901760
    %v3816 = vsub.f32 %v3814, %v3815
    %v3817 = vand.u32 %v3816, 4294901760
    %3818 = vmatpush1.msra.mxu0 %v3817
    %3819 = vmatprep.subr.mxu0 0.0
    %v3820 = vand.u32 %v52, 4294901760
    %v3821 = vsub.f32 %v52, %v3820
    %v3822 = vand.u32 %v3821, 4294901760
    %v3823 = vsub.f32 %v3821, %v3822
    %v3824 = vand.u32 %v3823, 4294901760
    %3825 = vmatpush1.msra.mxu0 %v3824
    %3826 = vmatprep.subr.mxu0 0.0
    %v3827 = vand.u32 %v53, 4294901760
    %v3828 = vsub.f32 %v53, %v3827
    %v3829 = vand.u32 %v3828, 4294901760
    %v3830 = vsub.f32 %v3828, %v3829
    %v3831 = vand.u32 %v3830, 4294901760
    %3832 = vmatpush1.msra.mxu0 %v3831
    %3833 = vmatprep.subr.mxu0 0.0
    %v3834 = vand.u32 %v54, 4294901760
    %v3835 = vsub.f32 %v54, %v3834
    %v3836 = vand.u32 %v3835, 4294901760
    %v3837 = vsub.f32 %v3835, %v3836
    %v3838 = vand.u32 %v3837, 4294901760
    %3839 = vmatpush1.msra.mxu0 %v3838
    %3840 = vmatprep.subr.mxu0 0.0
    %v3841 = vand.u32 %v55, 4294901760
    %v3842 = vsub.f32 %v55, %v3841
    %v3843 = vand.u32 %v3842, 4294901760
    %v3844 = vsub.f32 %v3842, %v3843
    %v3845 = vand.u32 %v3844, 4294901760
    %3846 = vmatpush1.msra.mxu0 %v3845
    %3847 = vmatprep.subr.mxu0 0.0
    %v3848 = vand.u32 %v56, 4294901760
    %v3849 = vsub.f32 %v56, %v3848
    %v3850 = vand.u32 %v3849, 4294901760
    %v3851 = vsub.f32 %v3849, %v3850
    %v3852 = vand.u32 %v3851, 4294901760
    %3853 = vmatpush1.msra.mxu0 %v3852
    %3854 = vmatprep.subr.mxu0 0.0
    %v3855 = vand.u32 %v57, 4294901760
    %v3856 = vsub.f32 %v57, %v3855
    %v3857 = vand.u32 %v3856, 4294901760
    %v3858 = vsub.f32 %v3856, %v3857
    %v3859 = vand.u32 %v3858, 4294901760
    %3860 = vmatpush1.msra.mxu0 %v3859
    %3861 = vmatprep.subr.mxu0 0.0
    %v3862 = vand.u32 %v58, 4294901760
    %v3863 = vsub.f32 %v58, %v3862
    %v3864 = vand.u32 %v3863, 4294901760
    %v3865 = vsub.f32 %v3863, %v3864
    %v3866 = vand.u32 %v3865, 4294901760
    %3867 = vmatpush1.msra.mxu0 %v3866
    %3868 = vmatprep.subr.mxu0 0.0
    %v3869 = vand.u32 %v59, 4294901760
    %v3870 = vsub.f32 %v59, %v3869
    %v3871 = vand.u32 %v3870, 4294901760
    %v3872 = vsub.f32 %v3870, %v3871
    %v3873 = vand.u32 %v3872, 4294901760
    %3874 = vmatpush1.msra.mxu0 %v3873
    %3875 = vmatprep.subr.mxu0 0.0
    %v3876 = vand.u32 %v60, 4294901760
    %v3877 = vsub.f32 %v60, %v3876
    %v3878 = vand.u32 %v3877, 4294901760
    %v3879 = vsub.f32 %v3877, %v3878
    %v3880 = vand.u32 %v3879, 4294901760
    %3881 = vmatpush1.msra.mxu0 %v3880
    %3882 = vmatprep.subr.mxu0 0.0
    %v3883 = vand.u32 %v61, 4294901760
    %v3884 = vsub.f32 %v61, %v3883
    %v3885 = vand.u32 %v3884, 4294901760
    %v3886 = vsub.f32 %v3884, %v3885
    %v3887 = vand.u32 %v3886, 4294901760
    %3888 = vmatpush1.msra.mxu0 %v3887
    %3889 = vmatprep.subr.mxu0 0.0
    %v3890 = vand.u32 %v62, 4294901760
    %v3891 = vsub.f32 %v62, %v3890
    %v3892 = vand.u32 %v3891, 4294901760
    %v3893 = vsub.f32 %v3891, %v3892
    %v3894 = vand.u32 %v3893, 4294901760
    %3895 = vmatpush1.msra.mxu0 %v3894
    %3896 = vmatprep.subr.mxu0 0.0
    %v3897 = vand.u32 %v63, 4294901760
    %v3898 = vsub.f32 %v63, %v3897
    %v3899 = vand.u32 %v3898, 4294901760
    %v3900 = vsub.f32 %v3898, %v3899
    %v3901 = vand.u32 %v3900, 4294901760
    %3902 = vmatpush1.msra.mxu0 %v3901
    %3903 = vmatprep.subr.mxu0 0.0
    %v3904 = vand.u32 %v64, 4294901760
    %v3905 = vsub.f32 %v64, %v3904
    %v3906 = vand.u32 %v3905, 4294901760
    %v3907 = vsub.f32 %v3905, %v3906
    %v3908 = vand.u32 %v3907, 4294901760
    %3909 = vmatpush1.msra.mxu0 %v3908
    %3910 = vmatprep.subr.mxu0 0.0
    %v3911 = vand.u32 %v65, 4294901760
    %v3912 = vsub.f32 %v65, %v3911
    %v3913 = vand.u32 %v3912, 4294901760
    %v3914 = vsub.f32 %v3912, %v3913
    %v3915 = vand.u32 %v3914, 4294901760
    %3916 = vmatpush1.msra.mxu0 %v3915
    %3917 = vmatprep.subr.mxu0 0.0
    %v3918 = vand.u32 %v66, 4294901760
    %v3919 = vsub.f32 %v66, %v3918
    %v3920 = vand.u32 %v3919, 4294901760
    %v3921 = vsub.f32 %v3919, %v3920
    %v3922 = vand.u32 %v3921, 4294901760
    %3923 = vmatpush1.msra.mxu0 %v3922
    %3924 = vmatprep.subr.mxu0 0.0
    %v3925 = vand.u32 %v67, 4294901760
    %v3926 = vsub.f32 %v67, %v3925
    %v3927 = vand.u32 %v3926, 4294901760
    %v3928 = vsub.f32 %v3926, %v3927
    %v3929 = vand.u32 %v3928, 4294901760
    %3930 = vmatpush1.msra.mxu0 %v3929
    %3931 = vmatprep.subr.mxu0 0.0
    %v3932 = vand.u32 %v68, 4294901760
    %v3933 = vsub.f32 %v68, %v3932
    %v3934 = vand.u32 %v3933, 4294901760
    %v3935 = vsub.f32 %v3933, %v3934
    %v3936 = vand.u32 %v3935, 4294901760
    %3937 = vmatpush1.msra.mxu0 %v3936
    %3938 = vmatprep.subr.mxu0 0.0
    %v3939 = vand.u32 %v69, 4294901760
    %v3940 = vsub.f32 %v69, %v3939
    %v3941 = vand.u32 %v3940, 4294901760
    %v3942 = vsub.f32 %v3940, %v3941
    %v3943 = vand.u32 %v3942, 4294901760
    %3944 = vmatpush1.msra.mxu0 %v3943
    %3945 = vmatprep.subr.mxu0 0.0
    %v3946 = vand.u32 %v70, 4294901760
    %v3947 = vsub.f32 %v70, %v3946
    %v3948 = vand.u32 %v3947, 4294901760
    %v3949 = vsub.f32 %v3947, %v3948
    %v3950 = vand.u32 %v3949, 4294901760
    %3951 = vmatpush1.msra.mxu0 %v3950
    %3952 = vmatprep.subr.mxu0 0.0
    %v3953 = vand.u32 %v71, 4294901760
    %v3954 = vsub.f32 %v71, %v3953
    %v3955 = vand.u32 %v3954, 4294901760
    %v3956 = vsub.f32 %v3954, %v3955
    %v3957 = vand.u32 %v3956, 4294901760
    %3958 = vmatpush1.msra.mxu0 %v3957
    %3959 = vmatprep.subr.mxu0 0.0
    %v3960 = vand.u32 %v72, 4294901760
    %v3961 = vsub.f32 %v72, %v3960
    %v3962 = vand.u32 %v3961, 4294901760
    %v3963 = vsub.f32 %v3961, %v3962
    %v3964 = vand.u32 %v3963, 4294901760
    %3965 = vmatpush1.msra.mxu0 %v3964
    %3966 = vmatprep.subr.mxu0 0.0
    %v3967 = vand.u32 %v73, 4294901760
    %v3968 = vsub.f32 %v73, %v3967
    %v3969 = vand.u32 %v3968, 4294901760
    %v3970 = vsub.f32 %v3968, %v3969
    %v3971 = vand.u32 %v3970, 4294901760
    %3972 = vmatpush1.msra.mxu0 %v3971
    %3973 = vmatprep.subr.mxu0 0.0
    %v3974 = vand.u32 %v74, 4294901760
    %v3975 = vsub.f32 %v74, %v3974
    %v3976 = vand.u32 %v3975, 4294901760
    %v3977 = vsub.f32 %v3975, %v3976
    %v3978 = vand.u32 %v3977, 4294901760
    %3979 = vmatpush1.msra.mxu0 %v3978
    %3980 = vmatprep.subr.mxu0 0.0
    %v3981 = vand.u32 %v75, 4294901760
    %v3982 = vsub.f32 %v75, %v3981
    %v3983 = vand.u32 %v3982, 4294901760
    %v3984 = vsub.f32 %v3982, %v3983
    %v3985 = vand.u32 %v3984, 4294901760
    %3986 = vmatpush1.msra.mxu0 %v3985
    %3987 = vmatprep.subr.mxu0 0.0
    %v3988 = vand.u32 %v76, 4294901760
    %v3989 = vsub.f32 %v76, %v3988
    %v3990 = vand.u32 %v3989, 4294901760
    %v3991 = vsub.f32 %v3989, %v3990
    %v3992 = vand.u32 %v3991, 4294901760
    %3993 = vmatpush1.msra.mxu0 %v3992
    %3994 = vmatprep.subr.mxu0 0.0
    %v3995 = vand.u32 %v77, 4294901760
    %v3996 = vsub.f32 %v77, %v3995
    %v3997 = vand.u32 %v3996, 4294901760
    %v3998 = vsub.f32 %v3996, %v3997
    %v3999 = vand.u32 %v3998, 4294901760
    %4000 = vmatpush1.msra.mxu0 %v3999
    %4001 = vmatprep.subr.mxu0 0.0
    %v4002 = vand.u32 %v78, 4294901760
    %v4003 = vsub.f32 %v78, %v4002
    %v4004 = vand.u32 %v4003, 4294901760
    %v4005 = vsub.f32 %v4003, %v4004
    %v4006 = vand.u32 %v4005, 4294901760
    %4007 = vmatpush1.msra.mxu0 %v4006
    %4008 = vmatprep.subr.mxu0 0.0
    %v4009 = vand.u32 %v79, 4294901760
    %v4010 = vsub.f32 %v79, %v4009
    %v4011 = vand.u32 %v4010, 4294901760
    %v4012 = vsub.f32 %v4010, %v4011
    %v4013 = vand.u32 %v4012, 4294901760
    %4014 = vmatpush1.msra.mxu0 %v4013
    %v4015 = vand.u32 %v3674, 4294901760
    %4016 = vmatprep.mubr.f32.mxu0 %v4015
    %v4017 = vand.u32 %v3673, 4294901760
    %4018 = vmatmul.mubr.f32.gmra.mrb[0].mxu0 %v4017
    %v4019 = vpop.f32.mrb[0].mxu0
    %v4020 = vadd.f32 %v3788, %v4019
    %v4021 = vpop.f32.mrb[0].mxu0
    %4022 = vdwg.mxu0
    %4023 = vmatprep.subr.mxu0 0.0
    %v4024 = vand.u32 %v48, 4294901760
    %v4025 = vsub.f32 %v48, %v4024
    %4026 = vmatpush1.msra.mxu0 %v4025
    %4027 = vmatprep.subr.mxu0 0.0
    %v4028 = vand.u32 %v49, 4294901760
    %v4029 = vsub.f32 %v49, %v4028
    %4030 = vmatpush1.msra.mxu0 %v4029
    %4031 = vmatprep.subr.mxu0 0.0
    %v4032 = vand.u32 %v50, 4294901760
    %v4033 = vsub.f32 %v50, %v4032
    %4034 = vmatpush1.msra.mxu0 %v4033
    %4035 = vmatprep.subr.mxu0 0.0
    %v4036 = vand.u32 %v51, 4294901760
    %v4037 = vsub.f32 %v51, %v4036
    %4038 = vmatpush1.msra.mxu0 %v4037
    %4039 = vmatprep.subr.mxu0 0.0
    %v4040 = vand.u32 %v52, 4294901760
    %v4041 = vsub.f32 %v52, %v4040
    %4042 = vmatpush1.msra.mxu0 %v4041
    %4043 = vmatprep.subr.mxu0 0.0
    %v4044 = vand.u32 %v53, 4294901760
    %v4045 = vsub.f32 %v53, %v4044
    %4046 = vmatpush1.msra.mxu0 %v4045
    %4047 = vmatprep.subr.mxu0 0.0
    %v4048 = vand.u32 %v54, 4294901760
    %v4049 = vsub.f32 %v54, %v4048
    %4050 = vmatpush1.msra.mxu0 %v4049
    %4051 = vmatprep.subr.mxu0 0.0
    %v4052 = vand.u32 %v55, 4294901760
    %v4053 = vsub.f32 %v55, %v4052
    %4054 = vmatpush1.msra.mxu0 %v4053
    %4055 = vmatprep.subr.mxu0 0.0
    %v4056 = vand.u32 %v56, 4294901760
    %v4057 = vsub.f32 %v56, %v4056
    %4058 = vmatpush1.msra.mxu0 %v4057
    %4059 = vmatprep.subr.mxu0 0.0
    %v4060 = vand.u32 %v57, 4294901760
    %v4061 = vsub.f32 %v57, %v4060
    %4062 = vmatpush1.msra.mxu0 %v4061
    %4063 = vmatprep.subr.mxu0 0.0
    %v4064 = vand.u32 %v58, 4294901760
    %v4065 = vsub.f32 %v58, %v4064
    %4066 = vmatpush1.msra.mxu0 %v4065
    %4067 = vmatprep.subr.mxu0 0.0
    %v4068 = vand.u32 %v59, 4294901760
    %v4069 = vsub.f32 %v59, %v4068
    %4070 = vmatpush1.msra.mxu0 %v4069
    %4071 = vmatprep.subr.mxu0 0.0
    %v4072 = vand.u32 %v60, 4294901760
    %v4073 = vsub.f32 %v60, %v4072
    %4074 = vmatpush1.msra.mxu0 %v4073
    %4075 = vmatprep.subr.mxu0 0.0
    %v4076 = vand.u32 %v61, 4294901760
    %v4077 = vsub.f32 %v61, %v4076
    %4078 = vmatpush1.msra.mxu0 %v4077
    %4079 = vmatprep.subr.mxu0 0.0
    %v4080 = vand.u32 %v62, 4294901760
    %v4081 = vsub.f32 %v62, %v4080
    %4082 = vmatpush1.msra.mxu0 %v4081
    %4083 = vmatprep.subr.mxu0 0.0
    %v4084 = vand.u32 %v63, 4294901760
    %v4085 = vsub.f32 %v63, %v4084
    %4086 = vmatpush1.msra.mxu0 %v4085
    %4087 = vmatprep.subr.mxu0 0.0
    %v4088 = vand.u32 %v64, 4294901760
    %v4089 = vsub.f32 %v64, %v4088
    %4090 = vmatpush1.msra.mxu0 %v4089
    %4091 = vmatprep.subr.mxu0 0.0
    %v4092 = vand.u32 %v65, 4294901760
    %v4093 = vsub.f32 %v65, %v4092
    %4094 = vmatpush1.msra.mxu0 %v4093
    %4095 = vmatprep.subr.mxu0 0.0
    %v4096 = vand.u32 %v66, 4294901760
    %v4097 = vsub.f32 %v66, %v4096
    %4098 = vmatpush1.msra.mxu0 %v4097
    %4099 = vmatprep.subr.mxu0 0.0
    %v4100 = vand.u32 %v67, 4294901760
    %v4101 = vsub.f32 %v67, %v4100
    %4102 = vmatpush1.msra.mxu0 %v4101
    %4103 = vmatprep.subr.mxu0 0.0
    %v4104 = vand.u32 %v68, 4294901760
    %v4105 = vsub.f32 %v68, %v4104
    %4106 = vmatpush1.msra.mxu0 %v4105
    %4107 = vmatprep.subr.mxu0 0.0
    %v4108 = vand.u32 %v69, 4294901760
    %v4109 = vsub.f32 %v69, %v4108
    %4110 = vmatpush1.msra.mxu0 %v4109
    %4111 = vmatprep.subr.mxu0 0.0
    %v4112 = vand.u32 %v70, 4294901760
    %v4113 = vsub.f32 %v70, %v4112
    %4114 = vmatpush1.msra.mxu0 %v4113
    %4115 = vmatprep.subr.mxu0 0.0
    %v4116 = vand.u32 %v71, 4294901760
    %v4117 = vsub.f32 %v71, %v4116
    %4118 = vmatpush1.msra.mxu0 %v4117
    %4119 = vmatprep.subr.mxu0 0.0
    %v4120 = vand.u32 %v72, 4294901760
    %v4121 = vsub.f32 %v72, %v4120
    %4122 = vmatpush1.msra.mxu0 %v4121
    %4123 = vmatprep.subr.mxu0 0.0
    %v4124 = vand.u32 %v73, 4294901760
    %v4125 = vsub.f32 %v73, %v4124
    %4126 = vmatpush1.msra.mxu0 %v4125
    %4127 = vmatprep.subr.mxu0 0.0
    %v4128 = vand.u32 %v74, 4294901760
    %v4129 = vsub.f32 %v74, %v4128
    %4130 = vmatpush1.msra.mxu0 %v4129
    %4131 = vmatprep.subr.mxu0 0.0
    %v4132 = vand.u32 %v75, 4294901760
    %v4133 = vsub.f32 %v75, %v4132
    %4134 = vmatpush1.msra.mxu0 %v4133
    %4135 = vmatprep.subr.mxu0 0.0
    %v4136 = vand.u32 %v76, 4294901760
    %v4137 = vsub.f32 %v76, %v4136
    %4138 = vmatpush1.msra.mxu0 %v4137
    %4139 = vmatprep.subr.mxu0 0.0
    %v4140 = vand.u32 %v77, 4294901760
    %v4141 = vsub.f32 %v77, %v4140
    %4142 = vmatpush1.msra.mxu0 %v4141
    %4143 = vmatprep.subr.mxu0 0.0
    %v4144 = vand.u32 %v78, 4294901760
    %v4145 = vsub.f32 %v78, %v4144
    %4146 = vmatpush1.msra.mxu0 %v4145
    %4147 = vmatprep.subr.mxu0 0.0
    %v4148 = vand.u32 %v79, 4294901760
    %v4149 = vsub.f32 %v79, %v4148
    %4150 = vmatpush1.msra.mxu0 %v4149
    %v4151 = vand.u32 %v3674, 4294901760
    %v4152 = vsub.f32 %v3674, %v4151
    %4153 = vmatprep.mubr.f32.mxu0 %v4152
    %v4154 = vand.u32 %v3673, 4294901760
    %v4155 = vsub.f32 %v3673, %v4154
    %4156 = vmatmul.mubr.f32.gmra.mrb[0].mxu0 %v4155
    %v4157 = vpop.f32.mrb[0].mxu0
    %v4158 = vadd.f32 %v4020, %v4157
    %v4159 = vpop.f32.mrb[0].mxu0
    %4160 = vdwg.mxu0
    %4161 = vmatprep.subr.mxu0 0.0
    %v4162 = vand.u32 %v48, 4294901760
    %4163 = vmatpush1.msra.mxu0 %v4162
    %4164 = vmatprep.subr.mxu0 0.0
    %v4165 = vand.u32 %v49, 4294901760
    %4166 = vmatpush1.msra.mxu0 %v4165
    %4167 = vmatprep.subr.mxu0 0.0
    %v4168 = vand.u32 %v50, 4294901760
    %4169 = vmatpush1.msra.mxu0 %v4168
    %4170 = vmatprep.subr.mxu0 0.0
    %v4171 = vand.u32 %v51, 4294901760
    %4172 = vmatpush1.msra.mxu0 %v4171
    %4173 = vmatprep.subr.mxu0 0.0
    %v4174 = vand.u32 %v52, 4294901760
    %4175 = vmatpush1.msra.mxu0 %v4174
    %4176 = vmatprep.subr.mxu0 0.0
    %v4177 = vand.u32 %v53, 4294901760
    %4178 = vmatpush1.msra.mxu0 %v4177
    %4179 = vmatprep.subr.mxu0 0.0
    %v4180 = vand.u32 %v54, 4294901760
    %4181 = vmatpush1.msra.mxu0 %v4180
    %4182 = vmatprep.subr.mxu0 0.0
    %v4183 = vand.u32 %v55, 4294901760
    %4184 = vmatpush1.msra.mxu0 %v4183
    %4185 = vmatprep.subr.mxu0 0.0
    %v4186 = vand.u32 %v56, 4294901760
    %4187 = vmatpush1.msra.mxu0 %v4186
    %4188 = vmatprep.subr.mxu0 0.0
    %v4189 = vand.u32 %v57, 4294901760
    %4190 = vmatpush1.msra.mxu0 %v4189
    %4191 = vmatprep.subr.mxu0 0.0
    %v4192 = vand.u32 %v58, 4294901760
    %4193 = vmatpush1.msra.mxu0 %v4192
    %4194 = vmatprep.subr.mxu0 0.0
    %v4195 = vand.u32 %v59, 4294901760
    %4196 = vmatpush1.msra.mxu0 %v4195
    %4197 = vmatprep.subr.mxu0 0.0
    %v4198 = vand.u32 %v60, 4294901760
    %4199 = vmatpush1.msra.mxu0 %v4198
    %4200 = vmatprep.subr.mxu0 0.0
    %v4201 = vand.u32 %v61, 4294901760
    %4202 = vmatpush1.msra.mxu0 %v4201
    %4203 = vmatprep.subr.mxu0 0.0
    %v4204 = vand.u32 %v62, 4294901760
    %4205 = vmatpush1.msra.mxu0 %v4204
    %4206 = vmatprep.subr.mxu0 0.0
    %v4207 = vand.u32 %v63, 4294901760
    %4208 = vmatpush1.msra.mxu0 %v4207
    %4209 = vmatprep.subr.mxu0 0.0
    %v4210 = vand.u32 %v64, 4294901760
    %4211 = vmatpush1.msra.mxu0 %v4210
    %4212 = vmatprep.subr.mxu0 0.0
    %v4213 = vand.u32 %v65, 4294901760
    %4214 = vmatpush1.msra.mxu0 %v4213
    %4215 = vmatprep.subr.mxu0 0.0
    %v4216 = vand.u32 %v66, 4294901760
    %4217 = vmatpush1.msra.mxu0 %v4216
    %4218 = vmatprep.subr.mxu0 0.0
    %v4219 = vand.u32 %v67, 4294901760
    %4220 = vmatpush1.msra.mxu0 %v4219
    %4221 = vmatprep.subr.mxu0 0.0
    %v4222 = vand.u32 %v68, 4294901760
    %4223 = vmatpush1.msra.mxu0 %v4222
    %4224 = vmatprep.subr.mxu0 0.0
    %v4225 = vand.u32 %v69, 4294901760
    %4226 = vmatpush1.msra.mxu0 %v4225
    %4227 = vmatprep.subr.mxu0 0.0
    %v4228 = vand.u32 %v70, 4294901760
    %4229 = vmatpush1.msra.mxu0 %v4228
    %4230 = vmatprep.subr.mxu0 0.0
    %v4231 = vand.u32 %v71, 4294901760
    %4232 = vmatpush1.msra.mxu0 %v4231
    %4233 = vmatprep.subr.mxu0 0.0
    %v4234 = vand.u32 %v72, 4294901760
    %4235 = vmatpush1.msra.mxu0 %v4234
    %4236 = vmatprep.subr.mxu0 0.0
    %v4237 = vand.u32 %v73, 4294901760
    %4238 = vmatpush1.msra.mxu0 %v4237
    %4239 = vmatprep.subr.mxu0 0.0
    %v4240 = vand.u32 %v74, 4294901760
    %4241 = vmatpush1.msra.mxu0 %v4240
    %4242 = vmatprep.subr.mxu0 0.0
    %v4243 = vand.u32 %v75, 4294901760
    %4244 = vmatpush1.msra.mxu0 %v4243
    %4245 = vmatprep.subr.mxu0 0.0
    %v4246 = vand.u32 %v76, 4294901760
    %4247 = vmatpush1.msra.mxu0 %v4246
    %4248 = vmatprep.subr.mxu0 0.0
    %v4249 = vand.u32 %v77, 4294901760
    %4250 = vmatpush1.msra.mxu0 %v4249
    %4251 = vmatprep.subr.mxu0 0.0
    %v4252 = vand.u32 %v78, 4294901760
    %4253 = vmatpush1.msra.mxu0 %v4252
    %4254 = vmatprep.subr.mxu0 0.0
    %v4255 = vand.u32 %v79, 4294901760
    %4256 = vmatpush1.msra.mxu0 %v4255
    %v4257 = vand.u32 %v3674, 4294901760
    %v4258 = vsub.f32 %v3674, %v4257
    %v4259 = vand.u32 %v4258, 4294901760
    %4260 = vmatprep.mubr.f32.mxu0 %v4259
    %v4261 = vand.u32 %v3673, 4294901760
    %v4262 = vsub.f32 %v3673, %v4261
    %v4263 = vand.u32 %v4262, 4294901760
    %4264 = vmatmul.mubr.f32.gmra.mrb[0].mxu0 %v4263
    %v4265 = vpop.f32.mrb[0].mxu0
    %v4266 = vadd.f32 %v4158, %v4265
    %v4267 = vpop.f32.mrb[0].mxu0
    %4268 = vdwg.mxu0
    %4269 = vmatprep.subr.mxu0 0.0
    %v4270 = vand.u32 %v48, 4294901760
    %v4271 = vsub.f32 %v48, %v4270
    %v4272 = vand.u32 %v4271, 4294901760
    %4273 = vmatpush1.msra.mxu0 %v4272
    %4274 = vmatprep.subr.mxu0 0.0
    %v4275 = vand.u32 %v49, 4294901760
    %v4276 = vsub.f32 %v49, %v4275
    %v4277 = vand.u32 %v4276, 4294901760
    %4278 = vmatpush1.msra.mxu0 %v4277
    %4279 = vmatprep.subr.mxu0 0.0
    %v4280 = vand.u32 %v50, 4294901760
    %v4281 = vsub.f32 %v50, %v4280
    %v4282 = vand.u32 %v4281, 4294901760
    %4283 = vmatpush1.msra.mxu0 %v4282
    %4284 = vmatprep.subr.mxu0 0.0
    %v4285 = vand.u32 %v51, 4294901760
    %v4286 = vsub.f32 %v51, %v4285
    %v4287 = vand.u32 %v4286, 4294901760
    %4288 = vmatpush1.msra.mxu0 %v4287
    %4289 = vmatprep.subr.mxu0 0.0
    %v4290 = vand.u32 %v52, 4294901760
    %v4291 = vsub.f32 %v52, %v4290
    %v4292 = vand.u32 %v4291, 4294901760
    %4293 = vmatpush1.msra.mxu0 %v4292
    %4294 = vmatprep.subr.mxu0 0.0
    %v4295 = vand.u32 %v53, 4294901760
    %v4296 = vsub.f32 %v53, %v4295
    %v4297 = vand.u32 %v4296, 4294901760
    %4298 = vmatpush1.msra.mxu0 %v4297
    %4299 = vmatprep.subr.mxu0 0.0
    %v4300 = vand.u32 %v54, 4294901760
    %v4301 = vsub.f32 %v54, %v4300
    %v4302 = vand.u32 %v4301, 4294901760
    %4303 = vmatpush1.msra.mxu0 %v4302
    %4304 = vmatprep.subr.mxu0 0.0
    %v4305 = vand.u32 %v55, 4294901760
    %v4306 = vsub.f32 %v55, %v4305
    %v4307 = vand.u32 %v4306, 4294901760
    %4308 = vmatpush1.msra.mxu0 %v4307
    %4309 = vmatprep.subr.mxu0 0.0
    %v4310 = vand.u32 %v56, 4294901760
    %v4311 = vsub.f32 %v56, %v4310
    %v4312 = vand.u32 %v4311, 4294901760
    %4313 = vmatpush1.msra.mxu0 %v4312
    %4314 = vmatprep.subr.mxu0 0.0
    %v4315 = vand.u32 %v57, 4294901760
    %v4316 = vsub.f32 %v57, %v4315
    %v4317 = vand.u32 %v4316, 4294901760
    %4318 = vmatpush1.msra.mxu0 %v4317
    %4319 = vmatprep.subr.mxu0 0.0
    %v4320 = vand.u32 %v58, 4294901760
    %v4321 = vsub.f32 %v58, %v4320
    %v4322 = vand.u32 %v4321, 4294901760
    %4323 = vmatpush1.msra.mxu0 %v4322
    %4324 = vmatprep.subr.mxu0 0.0
    %v4325 = vand.u32 %v59, 4294901760
    %v4326 = vsub.f32 %v59, %v4325
    %v4327 = vand.u32 %v4326, 4294901760
    %4328 = vmatpush1.msra.mxu0 %v4327
    %4329 = vmatprep.subr.mxu0 0.0
    %v4330 = vand.u32 %v60, 4294901760
    %v4331 = vsub.f32 %v60, %v4330
    %v4332 = vand.u32 %v4331, 4294901760
    %4333 = vmatpush1.msra.mxu0 %v4332
    %4334 = vmatprep.subr.mxu0 0.0
    %v4335 = vand.u32 %v61, 4294901760
    %v4336 = vsub.f32 %v61, %v4335
    %v4337 = vand.u32 %v4336, 4294901760
    %4338 = vmatpush1.msra.mxu0 %v4337
    %4339 = vmatprep.subr.mxu0 0.0
    %v4340 = vand.u32 %v62, 4294901760
    %v4341 = vsub.f32 %v62, %v4340
    %v4342 = vand.u32 %v4341, 4294901760
    %4343 = vmatpush1.msra.mxu0 %v4342
    %4344 = vmatprep.subr.mxu0 0.0
    %v4345 = vand.u32 %v63, 4294901760
    %v4346 = vsub.f32 %v63, %v4345
    %v4347 = vand.u32 %v4346, 4294901760
    %4348 = vmatpush1.msra.mxu0 %v4347
    %4349 = vmatprep.subr.mxu0 0.0
    %v4350 = vand.u32 %v64, 4294901760
    %v4351 = vsub.f32 %v64, %v4350
    %v4352 = vand.u32 %v4351, 4294901760
    %4353 = vmatpush1.msra.mxu0 %v4352
    %4354 = vmatprep.subr.mxu0 0.0
    %v4355 = vand.u32 %v65, 4294901760
    %v4356 = vsub.f32 %v65, %v4355
    %v4357 = vand.u32 %v4356, 4294901760
    %4358 = vmatpush1.msra.mxu0 %v4357
    %4359 = vmatprep.subr.mxu0 0.0
    %v4360 = vand.u32 %v66, 4294901760
    %v4361 = vsub.f32 %v66, %v4360
    %v4362 = vand.u32 %v4361, 4294901760
    %4363 = vmatpush1.msra.mxu0 %v4362
    %4364 = vmatprep.subr.mxu0 0.0
    %v4365 = vand.u32 %v67, 4294901760
    %v4366 = vsub.f32 %v67, %v4365
    %v4367 = vand.u32 %v4366, 4294901760
    %4368 = vmatpush1.msra.mxu0 %v4367
    %4369 = vmatprep.subr.mxu0 0.0
    %v4370 = vand.u32 %v68, 4294901760
    %v4371 = vsub.f32 %v68, %v4370
    %v4372 = vand.u32 %v4371, 4294901760
    %4373 = vmatpush1.msra.mxu0 %v4372
    %4374 = vmatprep.subr.mxu0 0.0
    %v4375 = vand.u32 %v69, 4294901760
    %v4376 = vsub.f32 %v69, %v4375
    %v4377 = vand.u32 %v4376, 4294901760
    %4378 = vmatpush1.msra.mxu0 %v4377
    %4379 = vmatprep.subr.mxu0 0.0
    %v4380 = vand.u32 %v70, 4294901760
    %v4381 = vsub.f32 %v70, %v4380
    %v4382 = vand.u32 %v4381, 4294901760
    %4383 = vmatpush1.msra.mxu0 %v4382
    %4384 = vmatprep.subr.mxu0 0.0
    %v4385 = vand.u32 %v71, 4294901760
    %v4386 = vsub.f32 %v71, %v4385
    %v4387 = vand.u32 %v4386, 4294901760
    %4388 = vmatpush1.msra.mxu0 %v4387
    %4389 = vmatprep.subr.mxu0 0.0
    %v4390 = vand.u32 %v72, 4294901760
    %v4391 = vsub.f32 %v72, %v4390
    %v4392 = vand.u32 %v4391, 4294901760
    %4393 = vmatpush1.msra.mxu0 %v4392
    %4394 = vmatprep.subr.mxu0 0.0
    %v4395 = vand.u32 %v73, 4294901760
    %v4396 = vsub.f32 %v73, %v4395
    %v4397 = vand.u32 %v4396, 4294901760
    %4398 = vmatpush1.msra.mxu0 %v4397
    %4399 = vmatprep.subr.mxu0 0.0
    %v4400 = vand.u32 %v74, 4294901760
    %v4401 = vsub.f32 %v74, %v4400
    %v4402 = vand.u32 %v4401, 4294901760
    %4403 = vmatpush1.msra.mxu0 %v4402
    %4404 = vmatprep.subr.mxu0 0.0
    %v4405 = vand.u32 %v75, 4294901760
    %v4406 = vsub.f32 %v75, %v4405
    %v4407 = vand.u32 %v4406, 4294901760
    %4408 = vmatpush1.msra.mxu0 %v4407
    %4409 = vmatprep.subr.mxu0 0.0
    %v4410 = vand.u32 %v76, 4294901760
    %v4411 = vsub.f32 %v76, %v4410
    %v4412 = vand.u32 %v4411, 4294901760
    %4413 = vmatpush1.msra.mxu0 %v4412
    %4414 = vmatprep.subr.mxu0 0.0
    %v4415 = vand.u32 %v77, 4294901760
    %v4416 = vsub.f32 %v77, %v4415
    %v4417 = vand.u32 %v4416, 4294901760
    %4418 = vmatpush1.msra.mxu0 %v4417
    %4419 = vmatprep.subr.mxu0 0.0
    %v4420 = vand.u32 %v78, 4294901760
    %v4421 = vsub.f32 %v78, %v4420
    %v4422 = vand.u32 %v4421, 4294901760
    %4423 = vmatpush1.msra.mxu0 %v4422
    %4424 = vmatprep.subr.mxu0 0.0
    %v4425 = vand.u32 %v79, 4294901760
    %v4426 = vsub.f32 %v79, %v4425
    %v4427 = vand.u32 %v4426, 4294901760
    %4428 = vmatpush1.msra.mxu0 %v4427
    %v4429 = vand.u32 %v3674, 4294901760
    %4430 = vmatprep.mubr.f32.mxu0 %v4429
    %v4431 = vand.u32 %v3673, 4294901760
    %4432 = vmatmul.mubr.f32.gmra.mrb[0].mxu0 %v4431
    %v4433 = vpop.f32.mrb[0].mxu0
    %v4434 = vadd.f32 %v4266, %v4433
    %v4435 = vpop.f32.mrb[0].mxu0
    %4436 = vdwg.mxu0
    %4437 = vmatprep.subr.mxu0 0.0
    %v4438 = vand.u32 %v48, 4294901760
    %4439 = vmatpush1.msra.mxu0 %v4438
    %4440 = vmatprep.subr.mxu0 0.0
    %v4441 = vand.u32 %v49, 4294901760
    %4442 = vmatpush1.msra.mxu0 %v4441
    %4443 = vmatprep.subr.mxu0 0.0
    %v4444 = vand.u32 %v50, 4294901760
    %4445 = vmatpush1.msra.mxu0 %v4444
    %4446 = vmatprep.subr.mxu0 0.0
    %v4447 = vand.u32 %v51, 4294901760
    %4448 = vmatpush1.msra.mxu0 %v4447
    %4449 = vmatprep.subr.mxu0 0.0
    %v4450 = vand.u32 %v52, 4294901760
    %4451 = vmatpush1.msra.mxu0 %v4450
    %4452 = vmatprep.subr.mxu0 0.0
    %v4453 = vand.u32 %v53, 4294901760
    %4454 = vmatpush1.msra.mxu0 %v4453
    %4455 = vmatprep.subr.mxu0 0.0
    %v4456 = vand.u32 %v54, 4294901760
    %4457 = vmatpush1.msra.mxu0 %v4456
    %4458 = vmatprep.subr.mxu0 0.0
    %v4459 = vand.u32 %v55, 4294901760
    %4460 = vmatpush1.msra.mxu0 %v4459
    %4461 = vmatprep.subr.mxu0 0.0
    %v4462 = vand.u32 %v56, 4294901760
    %4463 = vmatpush1.msra.mxu0 %v4462
    %4464 = vmatprep.subr.mxu0 0.0
    %v4465 = vand.u32 %v57, 4294901760
    %4466 = vmatpush1.msra.mxu0 %v4465
    %4467 = vmatprep.subr.mxu0 0.0
    %v4468 = vand.u32 %v58, 4294901760
    %4469 = vmatpush1.msra.mxu0 %v4468
    %4470 = vmatprep.subr.mxu0 0.0
    %v4471 = vand.u32 %v59, 4294901760
    %4472 = vmatpush1.msra.mxu0 %v4471
    %4473 = vmatprep.subr.mxu0 0.0
    %v4474 = vand.u32 %v60, 4294901760
    %4475 = vmatpush1.msra.mxu0 %v4474
    %4476 = vmatprep.subr.mxu0 0.0
    %v4477 = vand.u32 %v61, 4294901760
    %4478 = vmatpush1.msra.mxu0 %v4477
    %4479 = vmatprep.subr.mxu0 0.0
    %v4480 = vand.u32 %v62, 4294901760
    %4481 = vmatpush1.msra.mxu0 %v4480
    %4482 = vmatprep.subr.mxu0 0.0
    %v4483 = vand.u32 %v63, 4294901760
    %4484 = vmatpush1.msra.mxu0 %v4483
    %4485 = vmatprep.subr.mxu0 0.0
    %v4486 = vand.u32 %v64, 4294901760
    %4487 = vmatpush1.msra.mxu0 %v4486
    %4488 = vmatprep.subr.mxu0 0.0
    %v4489 = vand.u32 %v65, 4294901760
    %4490 = vmatpush1.msra.mxu0 %v4489
    %4491 = vmatprep.subr.mxu0 0.0
    %v4492 = vand.u32 %v66, 4294901760
    %4493 = vmatpush1.msra.mxu0 %v4492
    %4494 = vmatprep.subr.mxu0 0.0
    %v4495 = vand.u32 %v67, 4294901760
    %4496 = vmatpush1.msra.mxu0 %v4495
    %4497 = vmatprep.subr.mxu0 0.0
    %v4498 = vand.u32 %v68, 4294901760
    %4499 = vmatpush1.msra.mxu0 %v4498
    %4500 = vmatprep.subr.mxu0 0.0
    %v4501 = vand.u32 %v69, 4294901760
    %4502 = vmatpush1.msra.mxu0 %v4501
    %4503 = vmatprep.subr.mxu0 0.0
    %v4504 = vand.u32 %v70, 4294901760
    %4505 = vmatpush1.msra.mxu0 %v4504
    %4506 = vmatprep.subr.mxu0 0.0
    %v4507 = vand.u32 %v71, 4294901760
    %4508 = vmatpush1.msra.mxu0 %v4507
    %4509 = vmatprep.subr.mxu0 0.0
    %v4510 = vand.u32 %v72, 4294901760
    %4511 = vmatpush1.msra.mxu0 %v4510
    %4512 = vmatprep.subr.mxu0 0.0
    %v4513 = vand.u32 %v73, 4294901760
    %4514 = vmatpush1.msra.mxu0 %v4513
    %4515 = vmatprep.subr.mxu0 0.0
    %v4516 = vand.u32 %v74, 4294901760
    %4517 = vmatpush1.msra.mxu0 %v4516
    %4518 = vmatprep.subr.mxu0 0.0
    %v4519 = vand.u32 %v75, 4294901760
    %4520 = vmatpush1.msra.mxu0 %v4519
    %4521 = vmatprep.subr.mxu0 0.0
    %v4522 = vand.u32 %v76, 4294901760
    %4523 = vmatpush1.msra.mxu0 %v4522
    %4524 = vmatprep.subr.mxu0 0.0
    %v4525 = vand.u32 %v77, 4294901760
    %4526 = vmatpush1.msra.mxu0 %v4525
    %4527 = vmatprep.subr.mxu0 0.0
    %v4528 = vand.u32 %v78, 4294901760
    %4529 = vmatpush1.msra.mxu0 %v4528
    %4530 = vmatprep.subr.mxu0 0.0
    %v4531 = vand.u32 %v79, 4294901760
    %4532 = vmatpush1.msra.mxu0 %v4531
    %v4533 = vand.u32 %v3674, 4294901760
    %4534 = vmatprep.mubr.f32.mxu0 %v4533
    %v4535 = vand.u32 %v3673, 4294901760
    %4536 = vmatmul.mubr.f32.gmra.mrb[0].mxu0 %v4535
    %v4537 = vpop.f32.mrb[0].mxu0
    %v4538 = vadd.f32 %v4434, %v4537
    %v4539 = vpop.f32.mrb[0].mxu0
    %4540 = vdwg.mxu0
    %4541 = vmatprep.subr.mxu0 0.0
    %v4542 = vand.u32 %v80, 4294901760
    %4543 = vmatpush1.msra.mxu0 %v4542
    %4544 = vmatprep.subr.mxu0 0.0
    %v4545 = vand.u32 %v81, 4294901760
    %4546 = vmatpush1.msra.mxu0 %v4545
    %4547 = vmatprep.subr.mxu0 0.0
    %v4548 = vand.u32 %v82, 4294901760
    %4549 = vmatpush1.msra.mxu0 %v4548
    %4550 = vmatprep.subr.mxu0 0.0
    %v4551 = vand.u32 %v83, 4294901760
    %4552 = vmatpush1.msra.mxu0 %v4551
    %4553 = vmatprep.subr.mxu0 0.0
    %v4554 = vand.u32 %v84, 4294901760
    %4555 = vmatpush1.msra.mxu0 %v4554
    %4556 = vmatprep.subr.mxu0 0.0
    %v4557 = vand.u32 %v85, 4294901760
    %4558 = vmatpush1.msra.mxu0 %v4557
    %4559 = vmatprep.subr.mxu0 0.0
    %v4560 = vand.u32 %v86, 4294901760
    %4561 = vmatpush1.msra.mxu0 %v4560
    %4562 = vmatprep.subr.mxu0 0.0
    %v4563 = vand.u32 %v87, 4294901760
    %4564 = vmatpush1.msra.mxu0 %v4563
    %4565 = vmatprep.subr.mxu0 0.0
    %v4566 = vand.u32 %v88, 4294901760
    %4567 = vmatpush1.msra.mxu0 %v4566
    %4568 = vmatprep.subr.mxu0 0.0
    %v4569 = vand.u32 %v89, 4294901760
    %4570 = vmatpush1.msra.mxu0 %v4569
    %4571 = vmatprep.subr.mxu0 0.0
    %v4572 = vand.u32 %v90, 4294901760
    %4573 = vmatpush1.msra.mxu0 %v4572
    %4574 = vmatprep.subr.mxu0 0.0
    %v4575 = vand.u32 %v91, 4294901760
    %4576 = vmatpush1.msra.mxu0 %v4575
    %4577 = vmatprep.subr.mxu0 0.0
    %v4578 = vand.u32 %v92, 4294901760
    %4579 = vmatpush1.msra.mxu0 %v4578
    %4580 = vmatprep.subr.mxu0 0.0
    %v4581 = vand.u32 %v93, 4294901760
    %4582 = vmatpush1.msra.mxu0 %v4581
    %4583 = vmatprep.subr.mxu0 0.0
    %v4584 = vand.u32 %v94, 4294901760
    %4585 = vmatpush1.msra.mxu0 %v4584
    %4586 = vmatprep.subr.mxu0 0.0
    %v4587 = vand.u32 %v95, 4294901760
    %4588 = vmatpush1.msra.mxu0 %v4587
    %4589 = vmatprep.subr.mxu0 0.0
    %v4590 = vand.u32 %v96, 4294901760
    %4591 = vmatpush1.msra.mxu0 %v4590
    %4592 = vmatprep.subr.mxu0 0.0
    %v4593 = vand.u32 %v97, 4294901760
    %4594 = vmatpush1.msra.mxu0 %v4593
    %4595 = vmatprep.subr.mxu0 0.0
    %v4596 = vand.u32 %v98, 4294901760
    %4597 = vmatpush1.msra.mxu0 %v4596
    %4598 = vmatprep.subr.mxu0 0.0
    %v4599 = vand.u32 %v99, 4294901760
    %4600 = vmatpush1.msra.mxu0 %v4599
    %4601 = vmatprep.subr.mxu0 0.0
    %v4602 = vand.u32 %v100, 4294901760
    %4603 = vmatpush1.msra.mxu0 %v4602
    %4604 = vmatprep.subr.mxu0 0.0
    %v4605 = vand.u32 %v101, 4294901760
    %4606 = vmatpush1.msra.mxu0 %v4605
    %4607 = vmatprep.subr.mxu0 0.0
    %v4608 = vand.u32 %v102, 4294901760
    %4609 = vmatpush1.msra.mxu0 %v4608
    %4610 = vmatprep.subr.mxu0 0.0
    %v4611 = vand.u32 %v103, 4294901760
    %4612 = vmatpush1.msra.mxu0 %v4611
    %4613 = vmatprep.subr.mxu0 0.0
    %v4614 = vand.u32 %v104, 4294901760
    %4615 = vmatpush1.msra.mxu0 %v4614
    %4616 = vmatprep.subr.mxu0 0.0
    %v4617 = vand.u32 %v105, 4294901760
    %4618 = vmatpush1.msra.mxu0 %v4617
    %4619 = vmatprep.subr.mxu0 0.0
    %v4620 = vand.u32 %v106, 4294901760
    %4621 = vmatpush1.msra.mxu0 %v4620
    %4622 = vmatprep.subr.mxu0 0.0
    %v4623 = vand.u32 %v107, 4294901760
    %4624 = vmatpush1.msra.mxu0 %v4623
    %4625 = vmatprep.subr.mxu0 0.0
    %v4626 = vand.u32 %v108, 4294901760
    %4627 = vmatpush1.msra.mxu0 %v4626
    %4628 = vmatprep.subr.mxu0 0.0
    %v4629 = vand.u32 %v109, 4294901760
    %4630 = vmatpush1.msra.mxu0 %v4629
    %4631 = vmatprep.subr.mxu0 0.0
    %v4632 = vand.u32 %v110, 4294901760
    %4633 = vmatpush1.msra.mxu0 %v4632
    %4634 = vmatprep.subr.mxu0 0.0
    %v4635 = vand.u32 %v111, 4294901760
    %4636 = vmatpush1.msra.mxu0 %v4635
    %v4637 = vand.u32 %v3676, 4294901760
    %v4638 = vsub.f32 %v3676, %v4637
    %v4639 = vand.u32 %v4638, 4294901760
    %v4640 = vsub.f32 %v4638, %v4639
    %v4641 = vand.u32 %v4640, 4294901760
    %4642 = vmatprep.mubr.f32.mxu0 %v4641
    %v4643 = vand.u32 %v3675, 4294901760
    %v4644 = vsub.f32 %v3675, %v4643
    %v4645 = vand.u32 %v4644, 4294901760
    %v4646 = vsub.f32 %v4644, %v4645
    %v4647 = vand.u32 %v4646, 4294901760
    %4648 = vmatmul.mubr.f32.gmra.mrb[0].mxu0 %v4647
    %v4649 = vpop.f32.mrb[0].mxu0
    %v4650 = vadd.f32 %v4538, %v4649
    %v4651 = vpop.f32.mrb[0].mxu0
    %4652 = vdwg.mxu0
    %4653 = vmatprep.subr.mxu0 0.0
    %v4654 = vand.u32 %v80, 4294901760
    %v4655 = vsub.f32 %v80, %v4654
    %v4656 = vand.u32 %v4655, 4294901760
    %v4657 = vsub.f32 %v4655, %v4656
    %v4658 = vand.u32 %v4657, 4294901760
    %4659 = vmatpush1.msra.mxu0 %v4658
    %4660 = vmatprep.subr.mxu0 0.0
    %v4661 = vand.u32 %v81, 4294901760
    %v4662 = vsub.f32 %v81, %v4661
    %v4663 = vand.u32 %v4662, 4294901760
    %v4664 = vsub.f32 %v4662, %v4663
    %v4665 = vand.u32 %v4664, 4294901760
    %4666 = vmatpush1.msra.mxu0 %v4665
    %4667 = vmatprep.subr.mxu0 0.0
    %v4668 = vand.u32 %v82, 4294901760
    %v4669 = vsub.f32 %v82, %v4668
    %v4670 = vand.u32 %v4669, 4294901760
    %v4671 = vsub.f32 %v4669, %v4670
    %v4672 = vand.u32 %v4671, 4294901760
    %4673 = vmatpush1.msra.mxu0 %v4672
    %4674 = vmatprep.subr.mxu0 0.0
    %v4675 = vand.u32 %v83, 4294901760
    %v4676 = vsub.f32 %v83, %v4675
    %v4677 = vand.u32 %v4676, 4294901760
    %v4678 = vsub.f32 %v4676, %v4677
    %v4679 = vand.u32 %v4678, 4294901760
    %4680 = vmatpush1.msra.mxu0 %v4679
    %4681 = vmatprep.subr.mxu0 0.0
    %v4682 = vand.u32 %v84, 4294901760
    %v4683 = vsub.f32 %v84, %v4682
    %v4684 = vand.u32 %v4683, 4294901760
    %v4685 = vsub.f32 %v4683, %v4684
    %v4686 = vand.u32 %v4685, 4294901760
    %4687 = vmatpush1.msra.mxu0 %v4686
    %4688 = vmatprep.subr.mxu0 0.0
    %v4689 = vand.u32 %v85, 4294901760
    %v4690 = vsub.f32 %v85, %v4689
    %v4691 = vand.u32 %v4690, 4294901760
    %v4692 = vsub.f32 %v4690, %v4691
    %v4693 = vand.u32 %v4692, 4294901760
    %4694 = vmatpush1.msra.mxu0 %v4693
    %4695 = vmatprep.subr.mxu0 0.0
    %v4696 = vand.u32 %v86, 4294901760
    %v4697 = vsub.f32 %v86, %v4696
    %v4698 = vand.u32 %v4697, 4294901760
    %v4699 = vsub.f32 %v4697, %v4698
    %v4700 = vand.u32 %v4699, 4294901760
    %4701 = vmatpush1.msra.mxu0 %v4700
    %4702 = vmatprep.subr.mxu0 0.0
    %v4703 = vand.u32 %v87, 4294901760
    %v4704 = vsub.f32 %v87, %v4703
    %v4705 = vand.u32 %v4704, 4294901760
    %v4706 = vsub.f32 %v4704, %v4705
    %v4707 = vand.u32 %v4706, 4294901760
    %4708 = vmatpush1.msra.mxu0 %v4707
    %4709 = vmatprep.subr.mxu0 0.0
    %v4710 = vand.u32 %v88, 4294901760
    %v4711 = vsub.f32 %v88, %v4710
    %v4712 = vand.u32 %v4711, 4294901760
    %v4713 = vsub.f32 %v4711, %v4712
    %v4714 = vand.u32 %v4713, 4294901760
    %4715 = vmatpush1.msra.mxu0 %v4714
    %4716 = vmatprep.subr.mxu0 0.0
    %v4717 = vand.u32 %v89, 4294901760
    %v4718 = vsub.f32 %v89, %v4717
    %v4719 = vand.u32 %v4718, 4294901760
    %v4720 = vsub.f32 %v4718, %v4719
    %v4721 = vand.u32 %v4720, 4294901760
    %4722 = vmatpush1.msra.mxu0 %v4721
    %4723 = vmatprep.subr.mxu0 0.0
    %v4724 = vand.u32 %v90, 4294901760
    %v4725 = vsub.f32 %v90, %v4724
    %v4726 = vand.u32 %v4725, 4294901760
    %v4727 = vsub.f32 %v4725, %v4726
    %v4728 = vand.u32 %v4727, 4294901760
    %4729 = vmatpush1.msra.mxu0 %v4728
    %4730 = vmatprep.subr.mxu0 0.0
    %v4731 = vand.u32 %v91, 4294901760
    %v4732 = vsub.f32 %v91, %v4731
    %v4733 = vand.u32 %v4732, 4294901760
    %v4734 = vsub.f32 %v4732, %v4733
    %v4735 = vand.u32 %v4734, 4294901760
    %4736 = vmatpush1.msra.mxu0 %v4735
    %4737 = vmatprep.subr.mxu0 0.0
    %v4738 = vand.u32 %v92, 4294901760
    %v4739 = vsub.f32 %v92, %v4738
    %v4740 = vand.u32 %v4739, 4294901760
    %v4741 = vsub.f32 %v4739, %v4740
    %v4742 = vand.u32 %v4741, 4294901760
    %4743 = vmatpush1.msra.mxu0 %v4742
    %4744 = vmatprep.subr.mxu0 0.0
    %v4745 = vand.u32 %v93, 4294901760
    %v4746 = vsub.f32 %v93, %v4745
    %v4747 = vand.u32 %v4746, 4294901760
    %v4748 = vsub.f32 %v4746, %v4747
    %v4749 = vand.u32 %v4748, 4294901760
    %4750 = vmatpush1.msra.mxu0 %v4749
    %4751 = vmatprep.subr.mxu0 0.0
    %v4752 = vand.u32 %v94, 4294901760
    %v4753 = vsub.f32 %v94, %v4752
    %v4754 = vand.u32 %v4753, 4294901760
    %v4755 = vsub.f32 %v4753, %v4754
    %v4756 = vand.u32 %v4755, 4294901760
    %4757 = vmatpush1.msra.mxu0 %v4756
    %4758 = vmatprep.subr.mxu0 0.0
    %v4759 = vand.u32 %v95, 4294901760
    %v4760 = vsub.f32 %v95, %v4759
    %v4761 = vand.u32 %v4760, 4294901760
    %v4762 = vsub.f32 %v4760, %v4761
    %v4763 = vand.u32 %v4762, 4294901760
    %4764 = vmatpush1.msra.mxu0 %v4763
    %4765 = vmatprep.subr.mxu0 0.0
    %v4766 = vand.u32 %v96, 4294901760
    %v4767 = vsub.f32 %v96, %v4766
    %v4768 = vand.u32 %v4767, 4294901760
    %v4769 = vsub.f32 %v4767, %v4768
    %v4770 = vand.u32 %v4769, 4294901760
    %4771 = vmatpush1.msra.mxu0 %v4770
    %4772 = vmatprep.subr.mxu0 0.0
    %v4773 = vand.u32 %v97, 4294901760
    %v4774 = vsub.f32 %v97, %v4773
    %v4775 = vand.u32 %v4774, 4294901760
    %v4776 = vsub.f32 %v4774, %v4775
    %v4777 = vand.u32 %v4776, 4294901760
    %4778 = vmatpush1.msra.mxu0 %v4777
    %4779 = vmatprep.subr.mxu0 0.0
    %v4780 = vand.u32 %v98, 4294901760
    %v4781 = vsub.f32 %v98, %v4780
    %v4782 = vand.u32 %v4781, 4294901760
    %v4783 = vsub.f32 %v4781, %v4782
    %v4784 = vand.u32 %v4783, 4294901760
    %4785 = vmatpush1.msra.mxu0 %v4784
    %4786 = vmatprep.subr.mxu0 0.0
    %v4787 = vand.u32 %v99, 4294901760
    %v4788 = vsub.f32 %v99, %v4787
    %v4789 = vand.u32 %v4788, 4294901760
    %v4790 = vsub.f32 %v4788, %v4789
    %v4791 = vand.u32 %v4790, 4294901760
    %4792 = vmatpush1.msra.mxu0 %v4791
    %4793 = vmatprep.subr.mxu0 0.0
    %v4794 = vand.u32 %v100, 4294901760
    %v4795 = vsub.f32 %v100, %v4794
    %v4796 = vand.u32 %v4795, 4294901760
    %v4797 = vsub.f32 %v4795, %v4796
    %v4798 = vand.u32 %v4797, 4294901760
    %4799 = vmatpush1.msra.mxu0 %v4798
    %4800 = vmatprep.subr.mxu0 0.0
    %v4801 = vand.u32 %v101, 4294901760
    %v4802 = vsub.f32 %v101, %v4801
    %v4803 = vand.u32 %v4802, 4294901760
    %v4804 = vsub.f32 %v4802, %v4803
    %v4805 = vand.u32 %v4804, 4294901760
    %4806 = vmatpush1.msra.mxu0 %v4805
    %4807 = vmatprep.subr.mxu0 0.0
    %v4808 = vand.u32 %v102, 4294901760
    %v4809 = vsub.f32 %v102, %v4808
    %v4810 = vand.u32 %v4809, 4294901760
    %v4811 = vsub.f32 %v4809, %v4810
    %v4812 = vand.u32 %v4811, 4294901760
    %4813 = vmatpush1.msra.mxu0 %v4812
    %4814 = vmatprep.subr.mxu0 0.0
    %v4815 = vand.u32 %v103, 4294901760
    %v4816 = vsub.f32 %v103, %v4815
    %v4817 = vand.u32 %v4816, 4294901760
    %v4818 = vsub.f32 %v4816, %v4817
    %v4819 = vand.u32 %v4818, 4294901760
    %4820 = vmatpush1.msra.mxu0 %v4819
    %4821 = vmatprep.subr.mxu0 0.0
    %v4822 = vand.u32 %v104, 4294901760
    %v4823 = vsub.f32 %v104, %v4822
    %v4824 = vand.u32 %v4823, 4294901760
    %v4825 = vsub.f32 %v4823, %v4824
    %v4826 = vand.u32 %v4825, 4294901760
    %4827 = vmatpush1.msra.mxu0 %v4826
    %4828 = vmatprep.subr.mxu0 0.0
    %v4829 = vand.u32 %v105, 4294901760
    %v4830 = vsub.f32 %v105, %v4829
    %v4831 = vand.u32 %v4830, 4294901760
    %v4832 = vsub.f32 %v4830, %v4831
    %v4833 = vand.u32 %v4832, 4294901760
    %4834 = vmatpush1.msra.mxu0 %v4833
    %4835 = vmatprep.subr.mxu0 0.0
    %v4836 = vand.u32 %v106, 4294901760
    %v4837 = vsub.f32 %v106, %v4836
    %v4838 = vand.u32 %v4837, 4294901760
    %v4839 = vsub.f32 %v4837, %v4838
    %v4840 = vand.u32 %v4839, 4294901760
    %4841 = vmatpush1.msra.mxu0 %v4840
    %4842 = vmatprep.subr.mxu0 0.0
    %v4843 = vand.u32 %v107, 4294901760
    %v4844 = vsub.f32 %v107, %v4843
    %v4845 = vand.u32 %v4844, 4294901760
    %v4846 = vsub.f32 %v4844, %v4845
    %v4847 = vand.u32 %v4846, 4294901760
    %4848 = vmatpush1.msra.mxu0 %v4847
    %4849 = vmatprep.subr.mxu0 0.0
    %v4850 = vand.u32 %v108, 4294901760
    %v4851 = vsub.f32 %v108, %v4850
    %v4852 = vand.u32 %v4851, 4294901760
    %v4853 = vsub.f32 %v4851, %v4852
    %v4854 = vand.u32 %v4853, 4294901760
    %4855 = vmatpush1.msra.mxu0 %v4854
    %4856 = vmatprep.subr.mxu0 0.0
    %v4857 = vand.u32 %v109, 4294901760
    %v4858 = vsub.f32 %v109, %v4857
    %v4859 = vand.u32 %v4858, 4294901760
    %v4860 = vsub.f32 %v4858, %v4859
    %v4861 = vand.u32 %v4860, 4294901760
    %4862 = vmatpush1.msra.mxu0 %v4861
    %4863 = vmatprep.subr.mxu0 0.0
    %v4864 = vand.u32 %v110, 4294901760
    %v4865 = vsub.f32 %v110, %v4864
    %v4866 = vand.u32 %v4865, 4294901760
    %v4867 = vsub.f32 %v4865, %v4866
    %v4868 = vand.u32 %v4867, 4294901760
    %4869 = vmatpush1.msra.mxu0 %v4868
    %4870 = vmatprep.subr.mxu0 0.0
    %v4871 = vand.u32 %v111, 4294901760
    %v4872 = vsub.f32 %v111, %v4871
    %v4873 = vand.u32 %v4872, 4294901760
    %v4874 = vsub.f32 %v4872, %v4873
    %v4875 = vand.u32 %v4874, 4294901760
    %4876 = vmatpush1.msra.mxu0 %v4875
    %v4877 = vand.u32 %v3676, 4294901760
    %4878 = vmatprep.mubr.f32.mxu0 %v4877
    %v4879 = vand.u32 %v3675, 4294901760
    %4880 = vmatmul.mubr.f32.gmra.mrb[0].mxu0 %v4879
    %v4881 = vpop.f32.mrb[0].mxu0
    %v4882 = vadd.f32 %v4650, %v4881
    %v4883 = vpop.f32.mrb[0].mxu0
    %4884 = vdwg.mxu0
    %4885 = vmatprep.subr.mxu0 0.0
    %v4886 = vand.u32 %v80, 4294901760
    %v4887 = vsub.f32 %v80, %v4886
    %4888 = vmatpush1.msra.mxu0 %v4887
    %4889 = vmatprep.subr.mxu0 0.0
    %v4890 = vand.u32 %v81, 4294901760
    %v4891 = vsub.f32 %v81, %v4890
    %4892 = vmatpush1.msra.mxu0 %v4891
    %4893 = vmatprep.subr.mxu0 0.0
    %v4894 = vand.u32 %v82, 4294901760
    %v4895 = vsub.f32 %v82, %v4894
    %4896 = vmatpush1.msra.mxu0 %v4895
    %4897 = vmatprep.subr.mxu0 0.0
    %v4898 = vand.u32 %v83, 4294901760
    %v4899 = vsub.f32 %v83, %v4898
    %4900 = vmatpush1.msra.mxu0 %v4899
    %4901 = vmatprep.subr.mxu0 0.0
    %v4902 = vand.u32 %v84, 4294901760
    %v4903 = vsub.f32 %v84, %v4902
    %4904 = vmatpush1.msra.mxu0 %v4903
    %4905 = vmatprep.subr.mxu0 0.0
    %v4906 = vand.u32 %v85, 4294901760
    %v4907 = vsub.f32 %v85, %v4906
    %4908 = vmatpush1.msra.mxu0 %v4907
    %4909 = vmatprep.subr.mxu0 0.0
    %v4910 = vand.u32 %v86, 4294901760
    %v4911 = vsub.f32 %v86, %v4910
    %4912 = vmatpush1.msra.mxu0 %v4911
    %4913 = vmatprep.subr.mxu0 0.0
    %v4914 = vand.u32 %v87, 4294901760
    %v4915 = vsub.f32 %v87, %v4914
    %4916 = vmatpush1.msra.mxu0 %v4915
    %4917 = vmatprep.subr.mxu0 0.0
    %v4918 = vand.u32 %v88, 4294901760
    %v4919 = vsub.f32 %v88, %v4918
    %4920 = vmatpush1.msra.mxu0 %v4919
    %4921 = vmatprep.subr.mxu0 0.0
    %v4922 = vand.u32 %v89, 4294901760
    %v4923 = vsub.f32 %v89, %v4922
    %4924 = vmatpush1.msra.mxu0 %v4923
    %4925 = vmatprep.subr.mxu0 0.0
    %v4926 = vand.u32 %v90, 4294901760
    %v4927 = vsub.f32 %v90, %v4926
    %4928 = vmatpush1.msra.mxu0 %v4927
    %4929 = vmatprep.subr.mxu0 0.0
    %v4930 = vand.u32 %v91, 4294901760
    %v4931 = vsub.f32 %v91, %v4930
    %4932 = vmatpush1.msra.mxu0 %v4931
    %4933 = vmatprep.subr.mxu0 0.0
    %v4934 = vand.u32 %v92, 4294901760
    %v4935 = vsub.f32 %v92, %v4934
    %4936 = vmatpush1.msra.mxu0 %v4935
    %4937 = vmatprep.subr.mxu0 0.0
    %v4938 = vand.u32 %v93, 4294901760
    %v4939 = vsub.f32 %v93, %v4938
    %4940 = vmatpush1.msra.mxu0 %v4939
    %4941 = vmatprep.subr.mxu0 0.0
    %v4942 = vand.u32 %v94, 4294901760
    %v4943 = vsub.f32 %v94, %v4942
    %4944 = vmatpush1.msra.mxu0 %v4943
    %4945 = vmatprep.subr.mxu0 0.0
    %v4946 = vand.u32 %v95, 4294901760
    %v4947 = vsub.f32 %v95, %v4946
    %4948 = vmatpush1.msra.mxu0 %v4947
    %4949 = vmatprep.subr.mxu0 0.0
    %v4950 = vand.u32 %v96, 4294901760
    %v4951 = vsub.f32 %v96, %v4950
    %4952 = vmatpush1.msra.mxu0 %v4951
    %4953 = vmatprep.subr.mxu0 0.0
    %v4954 = vand.u32 %v97, 4294901760
    %v4955 = vsub.f32 %v97, %v4954
    %4956 = vmatpush1.msra.mxu0 %v4955
    %4957 = vmatprep.subr.mxu0 0.0
    %v4958 = vand.u32 %v98, 4294901760
    %v4959 = vsub.f32 %v98, %v4958
    %4960 = vmatpush1.msra.mxu0 %v4959
    %4961 = vmatprep.subr.mxu0 0.0
    %v4962 = vand.u32 %v99, 4294901760
    %v4963 = vsub.f32 %v99, %v4962
    %4964 = vmatpush1.msra.mxu0 %v4963
    %4965 = vmatprep.subr.mxu0 0.0
    %v4966 = vand.u32 %v100, 4294901760
    %v4967 = vsub.f32 %v100, %v4966
    %4968 = vmatpush1.msra.mxu0 %v4967
    %4969 = vmatprep.subr.mxu0 0.0
    %v4970 = vand.u32 %v101, 4294901760
    %v4971 = vsub.f32 %v101, %v4970
    %4972 = vmatpush1.msra.mxu0 %v4971
    %4973 = vmatprep.subr.mxu0 0.0
    %v4974 = vand.u32 %v102, 4294901760
    %v4975 = vsub.f32 %v102, %v4974
    %4976 = vmatpush1.msra.mxu0 %v4975
    %4977 = vmatprep.subr.mxu0 0.0
    %v4978 = vand.u32 %v103, 4294901760
    %v4979 = vsub.f32 %v103, %v4978
    %4980 = vmatpush1.msra.mxu0 %v4979
    %4981 = vmatprep.subr.mxu0 0.0
    %v4982 = vand.u32 %v104, 4294901760
    %v4983 = vsub.f32 %v104, %v4982
    %4984 = vmatpush1.msra.mxu0 %v4983
    %4985 = vmatprep.subr.mxu0 0.0
    %v4986 = vand.u32 %v105, 4294901760
    %v4987 = vsub.f32 %v105, %v4986
    %4988 = vmatpush1.msra.mxu0 %v4987
    %4989 = vmatprep.subr.mxu0 0.0
    %v4990 = vand.u32 %v106, 4294901760
    %v4991 = vsub.f32 %v106, %v4990
    %4992 = vmatpush1.msra.mxu0 %v4991
    %4993 = vmatprep.subr.mxu0 0.0
    %v4994 = vand.u32 %v107, 4294901760
    %v4995 = vsub.f32 %v107, %v4994
    %4996 = vmatpush1.msra.mxu0 %v4995
    %4997 = vmatprep.subr.mxu0 0.0
    %v4998 = vand.u32 %v108, 4294901760
    %v4999 = vsub.f32 %v108, %v4998
    %5000 = vmatpush1.msra.mxu0 %v4999
    %5001 = vmatprep.subr.mxu0 0.0
    %v5002 = vand.u32 %v109, 4294901760
    %v5003 = vsub.f32 %v109, %v5002
    %5004 = vmatpush1.msra.mxu0 %v5003
    %5005 = vmatprep.subr.mxu0 0.0
    %v5006 = vand.u32 %v110, 4294901760
    %v5007 = vsub.f32 %v110, %v5006
    %5008 = vmatpush1.msra.mxu0 %v5007
    %5009 = vmatprep.subr.mxu0 0.0
    %v5010 = vand.u32 %v111, 4294901760
    %v5011 = vsub.f32 %v111, %v5010
    %5012 = vmatpush1.msra.mxu0 %v5011
    %v5013 = vand.u32 %v3676, 4294901760
    %v5014 = vsub.f32 %v3676, %v5013
    %5015 = vmatprep.mubr.f32.mxu0 %v5014
    %v5016 = vand.u32 %v3675, 4294901760
    %v5017 = vsub.f32 %v3675, %v5016
    %5018 = vmatmul.mubr.f32.gmra.mrb[0].mxu0 %v5017
    %v5019 = vpop.f32.mrb[0].mxu0
    %v5020 = vadd.f32 %v4882, %v5019
    %v5021 = vpop.f32.mrb[0].mxu0
    %5022 = vdwg.mxu0
    %5023 = vmatprep.subr.mxu0 0.0
    %v5024 = vand.u32 %v80, 4294901760
    %5025 = vmatpush1.msra.mxu0 %v5024
    %5026 = vmatprep.subr.mxu0 0.0
    %v5027 = vand.u32 %v81, 4294901760
    %5028 = vmatpush1.msra.mxu0 %v5027
    %5029 = vmatprep.subr.mxu0 0.0
    %v5030 = vand.u32 %v82, 4294901760
    %5031 = vmatpush1.msra.mxu0 %v5030
    %5032 = vmatprep.subr.mxu0 0.0
    %v5033 = vand.u32 %v83, 4294901760
    %5034 = vmatpush1.msra.mxu0 %v5033
    %5035 = vmatprep.subr.mxu0 0.0
    %v5036 = vand.u32 %v84, 4294901760
    %5037 = vmatpush1.msra.mxu0 %v5036
    %5038 = vmatprep.subr.mxu0 0.0
    %v5039 = vand.u32 %v85, 4294901760
    %5040 = vmatpush1.msra.mxu0 %v5039
    %5041 = vmatprep.subr.mxu0 0.0
    %v5042 = vand.u32 %v86, 4294901760
    %5043 = vmatpush1.msra.mxu0 %v5042
    %5044 = vmatprep.subr.mxu0 0.0
    %v5045 = vand.u32 %v87, 4294901760
    %5046 = vmatpush1.msra.mxu0 %v5045
    %5047 = vmatprep.subr.mxu0 0.0
    %v5048 = vand.u32 %v88, 4294901760
    %5049 = vmatpush1.msra.mxu0 %v5048
    %5050 = vmatprep.subr.mxu0 0.0
    %v5051 = vand.u32 %v89, 4294901760
    %5052 = vmatpush1.msra.mxu0 %v5051
    %5053 = vmatprep.subr.mxu0 0.0
    %v5054 = vand.u32 %v90, 4294901760
    %5055 = vmatpush1.msra.mxu0 %v5054
    %5056 = vmatprep.subr.mxu0 0.0
    %v5057 = vand.u32 %v91, 4294901760
    %5058 = vmatpush1.msra.mxu0 %v5057
    %5059 = vmatprep.subr.mxu0 0.0
    %v5060 = vand.u32 %v92, 4294901760
    %5061 = vmatpush1.msra.mxu0 %v5060
    %5062 = vmatprep.subr.mxu0 0.0
    %v5063 = vand.u32 %v93, 4294901760
    %5064 = vmatpush1.msra.mxu0 %v5063
    %5065 = vmatprep.subr.mxu0 0.0
    %v5066 = vand.u32 %v94, 4294901760
    %5067 = vmatpush1.msra.mxu0 %v5066
    %5068 = vmatprep.subr.mxu0 0.0
    %v5069 = vand.u32 %v95, 4294901760
    %5070 = vmatpush1.msra.mxu0 %v5069
    %5071 = vmatprep.subr.mxu0 0.0
    %v5072 = vand.u32 %v96, 4294901760
    %5073 = vmatpush1.msra.mxu0 %v5072
    %5074 = vmatprep.subr.mxu0 0.0
    %v5075 = vand.u32 %v97, 4294901760
    %5076 = vmatpush1.msra.mxu0 %v5075
    %5077 = vmatprep.subr.mxu0 0.0
    %v5078 = vand.u32 %v98, 4294901760
    %5079 = vmatpush1.msra.mxu0 %v5078
    %5080 = vmatprep.subr.mxu0 0.0
    %v5081 = vand.u32 %v99, 4294901760
    %5082 = vmatpush1.msra.mxu0 %v5081
    %5083 = vmatprep.subr.mxu0 0.0
    %v5084 = vand.u32 %v100, 4294901760
    %5085 = vmatpush1.msra.mxu0 %v5084
    %5086 = vmatprep.subr.mxu0 0.0
    %v5087 = vand.u32 %v101, 4294901760
    %5088 = vmatpush1.msra.mxu0 %v5087
    %5089 = vmatprep.subr.mxu0 0.0
    %v5090 = vand.u32 %v102, 4294901760
    %5091 = vmatpush1.msra.mxu0 %v5090
    %5092 = vmatprep.subr.mxu0 0.0
    %v5093 = vand.u32 %v103, 4294901760
    %5094 = vmatpush1.msra.mxu0 %v5093
    %5095 = vmatprep.subr.mxu0 0.0
    %v5096 = vand.u32 %v104, 4294901760
    %5097 = vmatpush1.msra.mxu0 %v5096
    %5098 = vmatprep.subr.mxu0 0.0
    %v5099 = vand.u32 %v105, 4294901760
    %5100 = vmatpush1.msra.mxu0 %v5099
    %5101 = vmatprep.subr.mxu0 0.0
    %v5102 = vand.u32 %v106, 4294901760
    %5103 = vmatpush1.msra.mxu0 %v5102
    %5104 = vmatprep.subr.mxu0 0.0
    %v5105 = vand.u32 %v107, 4294901760
    %5106 = vmatpush1.msra.mxu0 %v5105
    %5107 = vmatprep.subr.mxu0 0.0
    %v5108 = vand.u32 %v108, 4294901760
    %5109 = vmatpush1.msra.mxu0 %v5108
    %5110 = vmatprep.subr.mxu0 0.0
    %v5111 = vand.u32 %v109, 4294901760
    %5112 = vmatpush1.msra.mxu0 %v5111
    %5113 = vmatprep.subr.mxu0 0.0
    %v5114 = vand.u32 %v110, 4294901760
    %5115 = vmatpush1.msra.mxu0 %v5114
    %5116 = vmatprep.subr.mxu0 0.0
    %v5117 = vand.u32 %v111, 4294901760
    %5118 = vmatpush1.msra.mxu0 %v5117
    %v5119 = vand.u32 %v3676, 4294901760
    %v5120 = vsub.f32 %v3676, %v5119
    %v5121 = vand.u32 %v5120, 4294901760
    %5122 = vmatprep.mubr.f32.mxu0 %v5121
    %v5123 = vand.u32 %v3675, 4294901760
    %v5124 = vsub.f32 %v3675, %v5123
    %v5125 = vand.u32 %v5124, 4294901760
    %5126 = vmatmul.mubr.f32.gmra.mrb[0].mxu0 %v5125
    %v5127 = vpop.f32.mrb[0].mxu0
    %v5128 = vadd.f32 %v5020, %v5127
    %v5129 = vpop.f32.mrb[0].mxu0
    %5130 = vdwg.mxu0
    %5131 = vmatprep.subr.mxu0 0.0
    %v5132 = vand.u32 %v80, 4294901760
    %v5133 = vsub.f32 %v80, %v5132
    %v5134 = vand.u32 %v5133, 4294901760
    %5135 = vmatpush1.msra.mxu0 %v5134
    %5136 = vmatprep.subr.mxu0 0.0
    %v5137 = vand.u32 %v81, 4294901760
    %v5138 = vsub.f32 %v81, %v5137
    %v5139 = vand.u32 %v5138, 4294901760
    %5140 = vmatpush1.msra.mxu0 %v5139
    %5141 = vmatprep.subr.mxu0 0.0
    %v5142 = vand.u32 %v82, 4294901760
    %v5143 = vsub.f32 %v82, %v5142
    %v5144 = vand.u32 %v5143, 4294901760
    %5145 = vmatpush1.msra.mxu0 %v5144
    %5146 = vmatprep.subr.mxu0 0.0
    %v5147 = vand.u32 %v83, 4294901760
    %v5148 = vsub.f32 %v83, %v5147
    %v5149 = vand.u32 %v5148, 4294901760
    %5150 = vmatpush1.msra.mxu0 %v5149
    %5151 = vmatprep.subr.mxu0 0.0
    %v5152 = vand.u32 %v84, 4294901760
    %v5153 = vsub.f32 %v84, %v5152
    %v5154 = vand.u32 %v5153, 4294901760
    %5155 = vmatpush1.msra.mxu0 %v5154
    %5156 = vmatprep.subr.mxu0 0.0
    %v5157 = vand.u32 %v85, 4294901760
    %v5158 = vsub.f32 %v85, %v5157
    %v5159 = vand.u32 %v5158, 4294901760
    %5160 = vmatpush1.msra.mxu0 %v5159
    %5161 = vmatprep.subr.mxu0 0.0
    %v5162 = vand.u32 %v86, 4294901760
    %v5163 = vsub.f32 %v86, %v5162
    %v5164 = vand.u32 %v5163, 4294901760
    %5165 = vmatpush1.msra.mxu0 %v5164
    %5166 = vmatprep.subr.mxu0 0.0
    %v5167 = vand.u32 %v87, 4294901760
    %v5168 = vsub.f32 %v87, %v5167
    %v5169 = vand.u32 %v5168, 4294901760
    %5170 = vmatpush1.msra.mxu0 %v5169
    %5171 = vmatprep.subr.mxu0 0.0
    %v5172 = vand.u32 %v88, 4294901760
    %v5173 = vsub.f32 %v88, %v5172
    %v5174 = vand.u32 %v5173, 4294901760
    %5175 = vmatpush1.msra.mxu0 %v5174
    %5176 = vmatprep.subr.mxu0 0.0
    %v5177 = vand.u32 %v89, 4294901760
    %v5178 = vsub.f32 %v89, %v5177
    %v5179 = vand.u32 %v5178, 4294901760
    %5180 = vmatpush1.msra.mxu0 %v5179
    %5181 = vmatprep.subr.mxu0 0.0
    %v5182 = vand.u32 %v90, 4294901760
    %v5183 = vsub.f32 %v90, %v5182
    %v5184 = vand.u32 %v5183, 4294901760
    %5185 = vmatpush1.msra.mxu0 %v5184
    %5186 = vmatprep.subr.mxu0 0.0
    %v5187 = vand.u32 %v91, 4294901760
    %v5188 = vsub.f32 %v91, %v5187
    %v5189 = vand.u32 %v5188, 4294901760
    %5190 = vmatpush1.msra.mxu0 %v5189
    %5191 = vmatprep.subr.mxu0 0.0
    %v5192 = vand.u32 %v92, 4294901760
    %v5193 = vsub.f32 %v92, %v5192
    %v5194 = vand.u32 %v5193, 4294901760
    %5195 = vmatpush1.msra.mxu0 %v5194
    %5196 = vmatprep.subr.mxu0 0.0
    %v5197 = vand.u32 %v93, 4294901760
    %v5198 = vsub.f32 %v93, %v5197
    %v5199 = vand.u32 %v5198, 4294901760
    %5200 = vmatpush1.msra.mxu0 %v5199
    %5201 = vmatprep.subr.mxu0 0.0
    %v5202 = vand.u32 %v94, 4294901760
    %v5203 = vsub.f32 %v94, %v5202
    %v5204 = vand.u32 %v5203, 4294901760
    %5205 = vmatpush1.msra.mxu0 %v5204
    %5206 = vmatprep.subr.mxu0 0.0
    %v5207 = vand.u32 %v95, 4294901760
    %v5208 = vsub.f32 %v95, %v5207
    %v5209 = vand.u32 %v5208, 4294901760
    %5210 = vmatpush1.msra.mxu0 %v5209
    %5211 = vmatprep.subr.mxu0 0.0
    %v5212 = vand.u32 %v96, 4294901760
    %v5213 = vsub.f32 %v96, %v5212
    %v5214 = vand.u32 %v5213, 4294901760
    %5215 = vmatpush1.msra.mxu0 %v5214
    %5216 = vmatprep.subr.mxu0 0.0
    %v5217 = vand.u32 %v97, 4294901760
    %v5218 = vsub.f32 %v97, %v5217
    %v5219 = vand.u32 %v5218, 4294901760
    %5220 = vmatpush1.msra.mxu0 %v5219
    %5221 = vmatprep.subr.mxu0 0.0
    %v5222 = vand.u32 %v98, 4294901760
    %v5223 = vsub.f32 %v98, %v5222
    %v5224 = vand.u32 %v5223, 4294901760
    %5225 = vmatpush1.msra.mxu0 %v5224
    %5226 = vmatprep.subr.mxu0 0.0
    %v5227 = vand.u32 %v99, 4294901760
    %v5228 = vsub.f32 %v99, %v5227
    %v5229 = vand.u32 %v5228, 4294901760
    %5230 = vmatpush1.msra.mxu0 %v5229
    %5231 = vmatprep.subr.mxu0 0.0
    %v5232 = vand.u32 %v100, 4294901760
    %v5233 = vsub.f32 %v100, %v5232
    %v5234 = vand.u32 %v5233, 4294901760
    %5235 = vmatpush1.msra.mxu0 %v5234
    %5236 = vmatprep.subr.mxu0 0.0
    %v5237 = vand.u32 %v101, 4294901760
    %v5238 = vsub.f32 %v101, %v5237
    %v5239 = vand.u32 %v5238, 4294901760
    %5240 = vmatpush1.msra.mxu0 %v5239
    %5241 = vmatprep.subr.mxu0 0.0
    %v5242 = vand.u32 %v102, 4294901760
    %v5243 = vsub.f32 %v102, %v5242
    %v5244 = vand.u32 %v5243, 4294901760
    %5245 = vmatpush1.msra.mxu0 %v5244
    %5246 = vmatprep.subr.mxu0 0.0
    %v5247 = vand.u32 %v103, 4294901760
    %v5248 = vsub.f32 %v103, %v5247
    %v5249 = vand.u32 %v5248, 4294901760
    %5250 = vmatpush1.msra.mxu0 %v5249
    %5251 = vmatprep.subr.mxu0 0.0
    %v5252 = vand.u32 %v104, 4294901760
    %v5253 = vsub.f32 %v104, %v5252
    %v5254 = vand.u32 %v5253, 4294901760
    %5255 = vmatpush1.msra.mxu0 %v5254
    %5256 = vmatprep.subr.mxu0 0.0
    %v5257 = vand.u32 %v105, 4294901760
    %v5258 = vsub.f32 %v105, %v5257
    %v5259 = vand.u32 %v5258, 4294901760
    %5260 = vmatpush1.msra.mxu0 %v5259
    %5261 = vmatprep.subr.mxu0 0.0
    %v5262 = vand.u32 %v106, 4294901760
    %v5263 = vsub.f32 %v106, %v5262
    %v5264 = vand.u32 %v5263, 4294901760
    %5265 = vmatpush1.msra.mxu0 %v5264
    %5266 = vmatprep.subr.mxu0 0.0
    %v5267 = vand.u32 %v107, 4294901760
    %v5268 = vsub.f32 %v107, %v5267
    %v5269 = vand.u32 %v5268, 4294901760
    %5270 = vmatpush1.msra.mxu0 %v5269
    %5271 = vmatprep.subr.mxu0 0.0
    %v5272 = vand.u32 %v108, 4294901760
    %v5273 = vsub.f32 %v108, %v5272
    %v5274 = vand.u32 %v5273, 4294901760
    %5275 = vmatpush1.msra.mxu0 %v5274
    %5276 = vmatprep.subr.mxu0 0.0
    %v5277 = vand.u32 %v109, 4294901760
    %v5278 = vsub.f32 %v109, %v5277
    %v5279 = vand.u32 %v5278, 4294901760
    %5280 = vmatpush1.msra.mxu0 %v5279
    %5281 = vmatprep.subr.mxu0 0.0
    %v5282 = vand.u32 %v110, 4294901760
    %v5283 = vsub.f32 %v110, %v5282
    %v5284 = vand.u32 %v5283, 4294901760
    %5285 = vmatpush1.msra.mxu0 %v5284
    %5286 = vmatprep.subr.mxu0 0.0
    %v5287 = vand.u32 %v111, 4294901760
    %v5288 = vsub.f32 %v111, %v5287
    %v5289 = vand.u32 %v5288, 4294901760
    %5290 = vmatpush1.msra.mxu0 %v5289
    %v5291 = vand.u32 %v3676, 4294901760
    %5292 = vmatprep.mubr.f32.mxu0 %v5291
    %v5293 = vand.u32 %v3675, 4294901760
    %5294 = vmatmul.mubr.f32.gmra.mrb[0].mxu0 %v5293
    %v5295 = vpop.f32.mrb[0].mxu0
    %v5296 = vadd.f32 %v5128, %v5295
    %v5297 = vpop.f32.mrb[0].mxu0
    %5298 = vdwg.mxu0
    %5299 = vmatprep.subr.mxu0 0.0
    %v5300 = vand.u32 %v80, 4294901760
    %5301 = vmatpush1.msra.mxu0 %v5300
    %5302 = vmatprep.subr.mxu0 0.0
    %v5303 = vand.u32 %v81, 4294901760
    %5304 = vmatpush1.msra.mxu0 %v5303
    %5305 = vmatprep.subr.mxu0 0.0
    %v5306 = vand.u32 %v82, 4294901760
    %5307 = vmatpush1.msra.mxu0 %v5306
    %5308 = vmatprep.subr.mxu0 0.0
    %v5309 = vand.u32 %v83, 4294901760
    %5310 = vmatpush1.msra.mxu0 %v5309
    %5311 = vmatprep.subr.mxu0 0.0
    %v5312 = vand.u32 %v84, 4294901760
    %5313 = vmatpush1.msra.mxu0 %v5312
    %5314 = vmatprep.subr.mxu0 0.0
    %v5315 = vand.u32 %v85, 4294901760
    %5316 = vmatpush1.msra.mxu0 %v5315
    %5317 = vmatprep.subr.mxu0 0.0
    %v5318 = vand.u32 %v86, 4294901760
    %5319 = vmatpush1.msra.mxu0 %v5318
    %5320 = vmatprep.subr.mxu0 0.0
    %v5321 = vand.u32 %v87, 4294901760
    %5322 = vmatpush1.msra.mxu0 %v5321
    %5323 = vmatprep.subr.mxu0 0.0
    %v5324 = vand.u32 %v88, 4294901760
    %5325 = vmatpush1.msra.mxu0 %v5324
    %5326 = vmatprep.subr.mxu0 0.0
    %v5327 = vand.u32 %v89, 4294901760
    %5328 = vmatpush1.msra.mxu0 %v5327
    %5329 = vmatprep.subr.mxu0 0.0
    %v5330 = vand.u32 %v90, 4294901760
    %5331 = vmatpush1.msra.mxu0 %v5330
    %5332 = vmatprep.subr.mxu0 0.0
    %v5333 = vand.u32 %v91, 4294901760
    %5334 = vmatpush1.msra.mxu0 %v5333
    %5335 = vmatprep.subr.mxu0 0.0
    %v5336 = vand.u32 %v92, 4294901760
    %5337 = vmatpush1.msra.mxu0 %v5336
    %5338 = vmatprep.subr.mxu0 0.0
    %v5339 = vand.u32 %v93, 4294901760
    %5340 = vmatpush1.msra.mxu0 %v5339
    %5341 = vmatprep.subr.mxu0 0.0
    %v5342 = vand.u32 %v94, 4294901760
    %5343 = vmatpush1.msra.mxu0 %v5342
    %5344 = vmatprep.subr.mxu0 0.0
    %v5345 = vand.u32 %v95, 4294901760
    %5346 = vmatpush1.msra.mxu0 %v5345
    %5347 = vmatprep.subr.mxu0 0.0
    %v5348 = vand.u32 %v96, 4294901760
    %5349 = vmatpush1.msra.mxu0 %v5348
    %5350 = vmatprep.subr.mxu0 0.0
    %v5351 = vand.u32 %v97, 4294901760
    %5352 = vmatpush1.msra.mxu0 %v5351
    %5353 = vmatprep.subr.mxu0 0.0
    %v5354 = vand.u32 %v98, 4294901760
    %5355 = vmatpush1.msra.mxu0 %v5354
    %5356 = vmatprep.subr.mxu0 0.0
    %v5357 = vand.u32 %v99, 4294901760
    %5358 = vmatpush1.msra.mxu0 %v5357
    %5359 = vmatprep.subr.mxu0 0.0
    %v5360 = vand.u32 %v100, 4294901760
    %5361 = vmatpush1.msra.mxu0 %v5360
    %5362 = vmatprep.subr.mxu0 0.0
    %v5363 = vand.u32 %v101, 4294901760
    %5364 = vmatpush1.msra.mxu0 %v5363
    %5365 = vmatprep.subr.mxu0 0.0
    %v5366 = vand.u32 %v102, 4294901760
    %5367 = vmatpush1.msra.mxu0 %v5366
    %5368 = vmatprep.subr.mxu0 0.0
    %v5369 = vand.u32 %v103, 4294901760
    %5370 = vmatpush1.msra.mxu0 %v5369
    %5371 = vmatprep.subr.mxu0 0.0
    %v5372 = vand.u32 %v104, 4294901760
    %5373 = vmatpush1.msra.mxu0 %v5372
    %5374 = vmatprep.subr.mxu0 0.0
    %v5375 = vand.u32 %v105, 4294901760
    %5376 = vmatpush1.msra.mxu0 %v5375
    %5377 = vmatprep.subr.mxu0 0.0
    %v5378 = vand.u32 %v106, 4294901760
    %5379 = vmatpush1.msra.mxu0 %v5378
    %5380 = vmatprep.subr.mxu0 0.0
    %v5381 = vand.u32 %v107, 4294901760
    %5382 = vmatpush1.msra.mxu0 %v5381
    %5383 = vmatprep.subr.mxu0 0.0
    %v5384 = vand.u32 %v108, 4294901760
    %5385 = vmatpush1.msra.mxu0 %v5384
    %5386 = vmatprep.subr.mxu0 0.0
    %v5387 = vand.u32 %v109, 4294901760
    %5388 = vmatpush1.msra.mxu0 %v5387
    %5389 = vmatprep.subr.mxu0 0.0
    %v5390 = vand.u32 %v110, 4294901760
    %5391 = vmatpush1.msra.mxu0 %v5390
    %5392 = vmatprep.subr.mxu0 0.0
    %v5393 = vand.u32 %v111, 4294901760
    %5394 = vmatpush1.msra.mxu0 %v5393
    %v5395 = vand.u32 %v3676, 4294901760
    %5396 = vmatprep.mubr.f32.mxu0 %v5395
    %v5397 = vand.u32 %v3675, 4294901760
    %5398 = vmatmul.mubr.f32.gmra.mrb[0].mxu0 %v5397
    %v5399 = vpop.f32.mrb[0].mxu0
    %v5400 = vadd.f32 %v5296, %v5399
    %v5401 = vpop.f32.mrb[0].mxu0
    %5402 = vdwg.mxu0
    %v5403 = vmul.f32 %v5400, %v1886
    %v5404 = vmul.f32 %v5400, %v1891
    %v5405 = vmul.f32 %v5400, %v1896
    %v5407 = vsel %vm1898, %v3677, 0
    %5409 = vmatprep.subr.mxu0 0.0
    %v5410 = vand.u32 %v5403, 4294901760
    %5411 = vmatpush1.msra.mxu0 %v5410
    %5412 = vmatprep.subr.mxu0 0.0
    %v5413 = vand.u32 %v5404, 4294901760
    %5414 = vmatpush1.msra.mxu0 %v5413
    %5415 = vmatprep.subr.mxu0 0.0
    %v5416 = vand.u32 %v5405, 4294901760
    %5417 = vmatpush1.msra.mxu0 %v5416
    %5418 = vmatprep.subr.mxu0 0.0
    %5419 = vmatpush1.msra.mxu0 0.0
    %5420 = vmatprep.subr.mxu0 0.0
    %5421 = vmatpush1.msra.mxu0 0.0
    %5422 = vmatprep.subr.mxu0 0.0
    %5423 = vmatpush1.msra.mxu0 0.0
    %5424 = vmatprep.subr.mxu0 0.0
    %5425 = vmatpush1.msra.mxu0 0.0
    %5426 = vmatprep.subr.mxu0 0.0
    %5427 = vmatpush1.msra.mxu0 0.0
    %5428 = vmatprep.subr.mxu0 0.0
    %5429 = vmatpush1.msra.mxu0 0.0
    %5430 = vmatprep.subr.mxu0 0.0
    %5431 = vmatpush1.msra.mxu0 0.0
    %5432 = vmatprep.subr.mxu0 0.0
    %5433 = vmatpush1.msra.mxu0 0.0
    %5434 = vmatprep.subr.mxu0 0.0
    %5435 = vmatpush1.msra.mxu0 0.0
    %5436 = vmatprep.subr.mxu0 0.0
    %5437 = vmatpush1.msra.mxu0 0.0
    %5438 = vmatprep.subr.mxu0 0.0
    %5439 = vmatpush1.msra.mxu0 0.0
    %5440 = vmatprep.subr.mxu0 0.0
    %5441 = vmatpush1.msra.mxu0 0.0
    %5442 = vmatprep.subr.mxu0 0.0
    %5443 = vmatpush1.msra.mxu0 0.0
    %5444 = vmatprep.subr.mxu0 0.0
    %5445 = vmatpush1.msra.mxu0 0.0
    %5446 = vmatprep.subr.mxu0 0.0
    %5447 = vmatpush1.msra.mxu0 0.0
    %5448 = vmatprep.subr.mxu0 0.0
    %5449 = vmatpush1.msra.mxu0 0.0
    %5450 = vmatprep.subr.mxu0 0.0
    %5451 = vmatpush1.msra.mxu0 0.0
    %5452 = vmatprep.subr.mxu0 0.0
    %5453 = vmatpush1.msra.mxu0 0.0
    %5454 = vmatprep.subr.mxu0 0.0
    %5455 = vmatpush1.msra.mxu0 0.0
    %5456 = vmatprep.subr.mxu0 0.0
    %5457 = vmatpush1.msra.mxu0 0.0
    %5458 = vmatprep.subr.mxu0 0.0
    %5459 = vmatpush1.msra.mxu0 0.0
    %5460 = vmatprep.subr.mxu0 0.0
    %5461 = vmatpush1.msra.mxu0 0.0
    %5462 = vmatprep.subr.mxu0 0.0
    %5463 = vmatpush1.msra.mxu0 0.0
    %5464 = vmatprep.subr.mxu0 0.0
    %5465 = vmatpush1.msra.mxu0 0.0
    %5466 = vmatprep.subr.mxu0 0.0
    %5467 = vmatpush1.msra.mxu0 0.0
    %5468 = vmatprep.subr.mxu0 0.0
    %5469 = vmatpush1.msra.mxu0 0.0
    %5470 = vmatprep.subr.mxu0 0.0
    %5471 = vmatpush1.msra.mxu0 0.0
    %5472 = vmatprep.subr.mxu0 0.0
    %5473 = vmatpush1.msra.mxu0 0.0
    %5474 = vmatprep.subr.mxu0 0.0
    %5475 = vmatpush1.msra.mxu0 0.0
    %5476 = vmatprep.mubr.f32.mxu0 0.0
    %v5477 = vand.u32 %v5407, 4294901760
    %v5478 = vsub.f32 %v5407, %v5477
    %v5479 = vand.u32 %v5478, 4294901760
    %v5480 = vsub.f32 %v5478, %v5479
    %v5481 = vand.u32 %v5480, 4294901760
    %5482 = vmatmul.mubr.f32.gmra.mrb[0].mxu0 %v5481
    %v5483 = vpop.f32.mrb[0].mxu0
    %v5484 = vadd.f32 %v3678, %v5483
    %v5485 = vpop.f32.mrb[0].mxu0
    %5486 = vdwg.mxu0
    %5487 = vmatprep.subr.mxu0 0.0
    %v5488 = vand.u32 %v5403, 4294901760
    %v5489 = vsub.f32 %v5403, %v5488
    %v5490 = vand.u32 %v5489, 4294901760
    %v5491 = vsub.f32 %v5489, %v5490
    %v5492 = vand.u32 %v5491, 4294901760
    %5493 = vmatpush1.msra.mxu0 %v5492
    %5494 = vmatprep.subr.mxu0 0.0
    %v5495 = vand.u32 %v5404, 4294901760
    %v5496 = vsub.f32 %v5404, %v5495
    %v5497 = vand.u32 %v5496, 4294901760
    %v5498 = vsub.f32 %v5496, %v5497
    %v5499 = vand.u32 %v5498, 4294901760
    %5500 = vmatpush1.msra.mxu0 %v5499
    %5501 = vmatprep.subr.mxu0 0.0
    %v5502 = vand.u32 %v5405, 4294901760
    %v5503 = vsub.f32 %v5405, %v5502
    %v5504 = vand.u32 %v5503, 4294901760
    %v5505 = vsub.f32 %v5503, %v5504
    %v5506 = vand.u32 %v5505, 4294901760
    %5507 = vmatpush1.msra.mxu0 %v5506
    %5508 = vmatprep.subr.mxu0 0.0
    %5509 = vmatpush1.msra.mxu0 0.0
    %5510 = vmatprep.subr.mxu0 0.0
    %5511 = vmatpush1.msra.mxu0 0.0
    %5512 = vmatprep.subr.mxu0 0.0
    %5513 = vmatpush1.msra.mxu0 0.0
    %5514 = vmatprep.subr.mxu0 0.0
    %5515 = vmatpush1.msra.mxu0 0.0
    %5516 = vmatprep.subr.mxu0 0.0
    %5517 = vmatpush1.msra.mxu0 0.0
    %5518 = vmatprep.subr.mxu0 0.0
    %5519 = vmatpush1.msra.mxu0 0.0
    %5520 = vmatprep.subr.mxu0 0.0
    %5521 = vmatpush1.msra.mxu0 0.0
    %5522 = vmatprep.subr.mxu0 0.0
    %5523 = vmatpush1.msra.mxu0 0.0
    %5524 = vmatprep.subr.mxu0 0.0
    %5525 = vmatpush1.msra.mxu0 0.0
    %5526 = vmatprep.subr.mxu0 0.0
    %5527 = vmatpush1.msra.mxu0 0.0
    %5528 = vmatprep.subr.mxu0 0.0
    %5529 = vmatpush1.msra.mxu0 0.0
    %5530 = vmatprep.subr.mxu0 0.0
    %5531 = vmatpush1.msra.mxu0 0.0
    %5532 = vmatprep.subr.mxu0 0.0
    %5533 = vmatpush1.msra.mxu0 0.0
    %5534 = vmatprep.subr.mxu0 0.0
    %5535 = vmatpush1.msra.mxu0 0.0
    %5536 = vmatprep.subr.mxu0 0.0
    %5537 = vmatpush1.msra.mxu0 0.0
    %5538 = vmatprep.subr.mxu0 0.0
    %5539 = vmatpush1.msra.mxu0 0.0
    %5540 = vmatprep.subr.mxu0 0.0
    %5541 = vmatpush1.msra.mxu0 0.0
    %5542 = vmatprep.subr.mxu0 0.0
    %5543 = vmatpush1.msra.mxu0 0.0
    %5544 = vmatprep.subr.mxu0 0.0
    %5545 = vmatpush1.msra.mxu0 0.0
    %5546 = vmatprep.subr.mxu0 0.0
    %5547 = vmatpush1.msra.mxu0 0.0
    %5548 = vmatprep.subr.mxu0 0.0
    %5549 = vmatpush1.msra.mxu0 0.0
    %5550 = vmatprep.subr.mxu0 0.0
    %5551 = vmatpush1.msra.mxu0 0.0
    %5552 = vmatprep.subr.mxu0 0.0
    %5553 = vmatpush1.msra.mxu0 0.0
    %5554 = vmatprep.subr.mxu0 0.0
    %5555 = vmatpush1.msra.mxu0 0.0
    %5556 = vmatprep.subr.mxu0 0.0
    %5557 = vmatpush1.msra.mxu0 0.0
    %5558 = vmatprep.subr.mxu0 0.0
    %5559 = vmatpush1.msra.mxu0 0.0
    %5560 = vmatprep.subr.mxu0 0.0
    %5561 = vmatpush1.msra.mxu0 0.0
    %5562 = vmatprep.subr.mxu0 0.0
    %5563 = vmatpush1.msra.mxu0 0.0
    %5564 = vmatprep.subr.mxu0 0.0
    %5565 = vmatpush1.msra.mxu0 0.0
    %5566 = vmatprep.mubr.f32.mxu0 0.0
    %v5567 = vand.u32 %v5407, 4294901760
    %5568 = vmatmul.mubr.f32.gmra.mrb[0].mxu0 %v5567
    %v5569 = vpop.f32.mrb[0].mxu0
    %v5570 = vadd.f32 %v5484, %v5569
    %v5571 = vpop.f32.mrb[0].mxu0
    %5572 = vdwg.mxu0
    %5573 = vmatprep.subr.mxu0 0.0
    %v5574 = vand.u32 %v5403, 4294901760
    %v5575 = vsub.f32 %v5403, %v5574
    %5576 = vmatpush1.msra.mxu0 %v5575
    %5577 = vmatprep.subr.mxu0 0.0
    %v5578 = vand.u32 %v5404, 4294901760
    %v5579 = vsub.f32 %v5404, %v5578
    %5580 = vmatpush1.msra.mxu0 %v5579
    %5581 = vmatprep.subr.mxu0 0.0
    %v5582 = vand.u32 %v5405, 4294901760
    %v5583 = vsub.f32 %v5405, %v5582
    %5584 = vmatpush1.msra.mxu0 %v5583
    %5585 = vmatprep.subr.mxu0 0.0
    %5586 = vmatpush1.msra.mxu0 0.0
    %5587 = vmatprep.subr.mxu0 0.0
    %5588 = vmatpush1.msra.mxu0 0.0
    %5589 = vmatprep.subr.mxu0 0.0
    %5590 = vmatpush1.msra.mxu0 0.0
    %5591 = vmatprep.subr.mxu0 0.0
    %5592 = vmatpush1.msra.mxu0 0.0
    %5593 = vmatprep.subr.mxu0 0.0
    %5594 = vmatpush1.msra.mxu0 0.0
    %5595 = vmatprep.subr.mxu0 0.0
    %5596 = vmatpush1.msra.mxu0 0.0
    %5597 = vmatprep.subr.mxu0 0.0
    %5598 = vmatpush1.msra.mxu0 0.0
    %5599 = vmatprep.subr.mxu0 0.0
    %5600 = vmatpush1.msra.mxu0 0.0
    %5601 = vmatprep.subr.mxu0 0.0
    %5602 = vmatpush1.msra.mxu0 0.0
    %5603 = vmatprep.subr.mxu0 0.0
    %5604 = vmatpush1.msra.mxu0 0.0
    %5605 = vmatprep.subr.mxu0 0.0
    %5606 = vmatpush1.msra.mxu0 0.0
    %5607 = vmatprep.subr.mxu0 0.0
    %5608 = vmatpush1.msra.mxu0 0.0
    %5609 = vmatprep.subr.mxu0 0.0
    %5610 = vmatpush1.msra.mxu0 0.0
    %5611 = vmatprep.subr.mxu0 0.0
    %5612 = vmatpush1.msra.mxu0 0.0
    %5613 = vmatprep.subr.mxu0 0.0
    %5614 = vmatpush1.msra.mxu0 0.0
    %5615 = vmatprep.subr.mxu0 0.0
    %5616 = vmatpush1.msra.mxu0 0.0
    %5617 = vmatprep.subr.mxu0 0.0
    %5618 = vmatpush1.msra.mxu0 0.0
    %5619 = vmatprep.subr.mxu0 0.0
    %5620 = vmatpush1.msra.mxu0 0.0
    %5621 = vmatprep.subr.mxu0 0.0
    %5622 = vmatpush1.msra.mxu0 0.0
    %5623 = vmatprep.subr.mxu0 0.0
    %5624 = vmatpush1.msra.mxu0 0.0
    %5625 = vmatprep.subr.mxu0 0.0
    %5626 = vmatpush1.msra.mxu0 0.0
    %5627 = vmatprep.subr.mxu0 0.0
    %5628 = vmatpush1.msra.mxu0 0.0
    %5629 = vmatprep.subr.mxu0 0.0
    %5630 = vmatpush1.msra.mxu0 0.0
    %5631 = vmatprep.subr.mxu0 0.0
    %5632 = vmatpush1.msra.mxu0 0.0
    %5633 = vmatprep.subr.mxu0 0.0
    %5634 = vmatpush1.msra.mxu0 0.0
    %5635 = vmatprep.subr.mxu0 0.0
    %5636 = vmatpush1.msra.mxu0 0.0
    %5637 = vmatprep.subr.mxu0 0.0
    %5638 = vmatpush1.msra.mxu0 0.0
    %5639 = vmatprep.subr.mxu0 0.0
    %5640 = vmatpush1.msra.mxu0 0.0
    %5641 = vmatprep.subr.mxu0 0.0
    %5642 = vmatpush1.msra.mxu0 0.0
    %5643 = vmatprep.mubr.f32.mxu0 0.0
    %v5644 = vand.u32 %v5407, 4294901760
    %v5645 = vsub.f32 %v5407, %v5644
    %5646 = vmatmul.mubr.f32.gmra.mrb[0].mxu0 %v5645
    %v5647 = vpop.f32.mrb[0].mxu0
    %v5648 = vadd.f32 %v5570, %v5647
    %v5649 = vpop.f32.mrb[0].mxu0
    %5650 = vdwg.mxu0
    %5651 = vmatprep.subr.mxu0 0.0
    %v5652 = vand.u32 %v5403, 4294901760
    %5653 = vmatpush1.msra.mxu0 %v5652
    %5654 = vmatprep.subr.mxu0 0.0
    %v5655 = vand.u32 %v5404, 4294901760
    %5656 = vmatpush1.msra.mxu0 %v5655
    %5657 = vmatprep.subr.mxu0 0.0
    %v5658 = vand.u32 %v5405, 4294901760
    %5659 = vmatpush1.msra.mxu0 %v5658
    %5660 = vmatprep.subr.mxu0 0.0
    %5661 = vmatpush1.msra.mxu0 0.0
    %5662 = vmatprep.subr.mxu0 0.0
    %5663 = vmatpush1.msra.mxu0 0.0
    %5664 = vmatprep.subr.mxu0 0.0
    %5665 = vmatpush1.msra.mxu0 0.0
    %5666 = vmatprep.subr.mxu0 0.0
    %5667 = vmatpush1.msra.mxu0 0.0
    %5668 = vmatprep.subr.mxu0 0.0
    %5669 = vmatpush1.msra.mxu0 0.0
    %5670 = vmatprep.subr.mxu0 0.0
    %5671 = vmatpush1.msra.mxu0 0.0
    %5672 = vmatprep.subr.mxu0 0.0
    %5673 = vmatpush1.msra.mxu0 0.0
    %5674 = vmatprep.subr.mxu0 0.0
    %5675 = vmatpush1.msra.mxu0 0.0
    %5676 = vmatprep.subr.mxu0 0.0
    %5677 = vmatpush1.msra.mxu0 0.0
    %5678 = vmatprep.subr.mxu0 0.0
    %5679 = vmatpush1.msra.mxu0 0.0
    %5680 = vmatprep.subr.mxu0 0.0
    %5681 = vmatpush1.msra.mxu0 0.0
    %5682 = vmatprep.subr.mxu0 0.0
    %5683 = vmatpush1.msra.mxu0 0.0
    %5684 = vmatprep.subr.mxu0 0.0
    %5685 = vmatpush1.msra.mxu0 0.0
    %5686 = vmatprep.subr.mxu0 0.0
    %5687 = vmatpush1.msra.mxu0 0.0
    %5688 = vmatprep.subr.mxu0 0.0
    %5689 = vmatpush1.msra.mxu0 0.0
    %5690 = vmatprep.subr.mxu0 0.0
    %5691 = vmatpush1.msra.mxu0 0.0
    %5692 = vmatprep.subr.mxu0 0.0
    %5693 = vmatpush1.msra.mxu0 0.0
    %5694 = vmatprep.subr.mxu0 0.0
    %5695 = vmatpush1.msra.mxu0 0.0
    %5696 = vmatprep.subr.mxu0 0.0
    %5697 = vmatpush1.msra.mxu0 0.0
    %5698 = vmatprep.subr.mxu0 0.0
    %5699 = vmatpush1.msra.mxu0 0.0
    %5700 = vmatprep.subr.mxu0 0.0
    %5701 = vmatpush1.msra.mxu0 0.0
    %5702 = vmatprep.subr.mxu0 0.0
    %5703 = vmatpush1.msra.mxu0 0.0
    %5704 = vmatprep.subr.mxu0 0.0
    %5705 = vmatpush1.msra.mxu0 0.0
    %5706 = vmatprep.subr.mxu0 0.0
    %5707 = vmatpush1.msra.mxu0 0.0
    %5708 = vmatprep.subr.mxu0 0.0
    %5709 = vmatpush1.msra.mxu0 0.0
    %5710 = vmatprep.subr.mxu0 0.0
    %5711 = vmatpush1.msra.mxu0 0.0
    %5712 = vmatprep.subr.mxu0 0.0
    %5713 = vmatpush1.msra.mxu0 0.0
    %5714 = vmatprep.subr.mxu0 0.0
    %5715 = vmatpush1.msra.mxu0 0.0
    %5716 = vmatprep.subr.mxu0 0.0
    %5717 = vmatpush1.msra.mxu0 0.0
    %5718 = vmatprep.mubr.f32.mxu0 0.0
    %v5719 = vand.u32 %v5407, 4294901760
    %v5720 = vsub.f32 %v5407, %v5719
    %v5721 = vand.u32 %v5720, 4294901760
    %5722 = vmatmul.mubr.f32.gmra.mrb[0].mxu0 %v5721
    %v5723 = vpop.f32.mrb[0].mxu0
    %v5724 = vadd.f32 %v5648, %v5723
    %v5725 = vpop.f32.mrb[0].mxu0
    %5726 = vdwg.mxu0
    %5727 = vmatprep.subr.mxu0 0.0
    %v5728 = vand.u32 %v5403, 4294901760
    %v5729 = vsub.f32 %v5403, %v5728
    %v5730 = vand.u32 %v5729, 4294901760
    %5731 = vmatpush1.msra.mxu0 %v5730
    %5732 = vmatprep.subr.mxu0 0.0
    %v5733 = vand.u32 %v5404, 4294901760
    %v5734 = vsub.f32 %v5404, %v5733
    %v5735 = vand.u32 %v5734, 4294901760
    %5736 = vmatpush1.msra.mxu0 %v5735
    %5737 = vmatprep.subr.mxu0 0.0
    %v5738 = vand.u32 %v5405, 4294901760
    %v5739 = vsub.f32 %v5405, %v5738
    %v5740 = vand.u32 %v5739, 4294901760
    %5741 = vmatpush1.msra.mxu0 %v5740
    %5742 = vmatprep.subr.mxu0 0.0
    %5743 = vmatpush1.msra.mxu0 0.0
    %5744 = vmatprep.subr.mxu0 0.0
    %5745 = vmatpush1.msra.mxu0 0.0
    %5746 = vmatprep.subr.mxu0 0.0
    %5747 = vmatpush1.msra.mxu0 0.0
    %5748 = vmatprep.subr.mxu0 0.0
    %5749 = vmatpush1.msra.mxu0 0.0
    %5750 = vmatprep.subr.mxu0 0.0
    %5751 = vmatpush1.msra.mxu0 0.0
    %5752 = vmatprep.subr.mxu0 0.0
    %5753 = vmatpush1.msra.mxu0 0.0
    %5754 = vmatprep.subr.mxu0 0.0
    %5755 = vmatpush1.msra.mxu0 0.0
    %5756 = vmatprep.subr.mxu0 0.0
    %5757 = vmatpush1.msra.mxu0 0.0
    %5758 = vmatprep.subr.mxu0 0.0
    %5759 = vmatpush1.msra.mxu0 0.0
    %5760 = vmatprep.subr.mxu0 0.0
    %5761 = vmatpush1.msra.mxu0 0.0
    %5762 = vmatprep.subr.mxu0 0.0
    %5763 = vmatpush1.msra.mxu0 0.0
    %5764 = vmatprep.subr.mxu0 0.0
    %5765 = vmatpush1.msra.mxu0 0.0
    %5766 = vmatprep.subr.mxu0 0.0
    %5767 = vmatpush1.msra.mxu0 0.0
    %5768 = vmatprep.subr.mxu0 0.0
    %5769 = vmatpush1.msra.mxu0 0.0
    %5770 = vmatprep.subr.mxu0 0.0
    %5771 = vmatpush1.msra.mxu0 0.0
    %5772 = vmatprep.subr.mxu0 0.0
    %5773 = vmatpush1.msra.mxu0 0.0
    %5774 = vmatprep.subr.mxu0 0.0
    %5775 = vmatpush1.msra.mxu0 0.0
    %5776 = vmatprep.subr.mxu0 0.0
    %5777 = vmatpush1.msra.mxu0 0.0
    %5778 = vmatprep.subr.mxu0 0.0
    %5779 = vmatpush1.msra.mxu0 0.0
    %5780 = vmatprep.subr.mxu0 0.0
    %5781 = vmatpush1.msra.mxu0 0.0
    %5782 = vmatprep.subr.mxu0 0.0
    %5783 = vmatpush1.msra.mxu0 0.0
    %5784 = vmatprep.subr.mxu0 0.0
    %5785 = vmatpush1.msra.mxu0 0.0
    %5786 = vmatprep.subr.mxu0 0.0
    %5787 = vmatpush1.msra.mxu0 0.0
    %5788 = vmatprep.subr.mxu0 0.0
    %5789 = vmatpush1.msra.mxu0 0.0
    %5790 = vmatprep.subr.mxu0 0.0
    %5791 = vmatpush1.msra.mxu0 0.0
    %5792 = vmatprep.subr.mxu0 0.0
    %5793 = vmatpush1.msra.mxu0 0.0
    %5794 = vmatprep.subr.mxu0 0.0
    %5795 = vmatpush1.msra.mxu0 0.0
    %5796 = vmatprep.subr.mxu0 0.0
    %5797 = vmatpush1.msra.mxu0 0.0
    %5798 = vmatprep.subr.mxu0 0.0
    %5799 = vmatpush1.msra.mxu0 0.0
    %5800 = vmatprep.mubr.f32.mxu0 0.0
    %v5801 = vand.u32 %v5407, 4294901760
    %5802 = vmatmul.mubr.f32.gmra.mrb[0].mxu0 %v5801
    %v5803 = vpop.f32.mrb[0].mxu0
    %v5804 = vadd.f32 %v5724, %v5803
    %v5805 = vpop.f32.mrb[0].mxu0
    %5806 = vdwg.mxu0
    %5807 = vmatprep.subr.mxu0 0.0
    %v5808 = vand.u32 %v5403, 4294901760
    %5809 = vmatpush1.msra.mxu0 %v5808
    %5810 = vmatprep.subr.mxu0 0.0
    %v5811 = vand.u32 %v5404, 4294901760
    %5812 = vmatpush1.msra.mxu0 %v5811
    %5813 = vmatprep.subr.mxu0 0.0
    %v5814 = vand.u32 %v5405, 4294901760
    %5815 = vmatpush1.msra.mxu0 %v5814
    %5816 = vmatprep.subr.mxu0 0.0
    %5817 = vmatpush1.msra.mxu0 0.0
    %5818 = vmatprep.subr.mxu0 0.0
    %5819 = vmatpush1.msra.mxu0 0.0
    %5820 = vmatprep.subr.mxu0 0.0
    %5821 = vmatpush1.msra.mxu0 0.0
    %5822 = vmatprep.subr.mxu0 0.0
    %5823 = vmatpush1.msra.mxu0 0.0
    %5824 = vmatprep.subr.mxu0 0.0
    %5825 = vmatpush1.msra.mxu0 0.0
    %5826 = vmatprep.subr.mxu0 0.0
    %5827 = vmatpush1.msra.mxu0 0.0
    %5828 = vmatprep.subr.mxu0 0.0
    %5829 = vmatpush1.msra.mxu0 0.0
    %5830 = vmatprep.subr.mxu0 0.0
    %5831 = vmatpush1.msra.mxu0 0.0
    %5832 = vmatprep.subr.mxu0 0.0
    %5833 = vmatpush1.msra.mxu0 0.0
    %5834 = vmatprep.subr.mxu0 0.0
    %5835 = vmatpush1.msra.mxu0 0.0
    %5836 = vmatprep.subr.mxu0 0.0
    %5837 = vmatpush1.msra.mxu0 0.0
    %5838 = vmatprep.subr.mxu0 0.0
    %5839 = vmatpush1.msra.mxu0 0.0
    %5840 = vmatprep.subr.mxu0 0.0
    %5841 = vmatpush1.msra.mxu0 0.0
    %5842 = vmatprep.subr.mxu0 0.0
    %5843 = vmatpush1.msra.mxu0 0.0
    %5844 = vmatprep.subr.mxu0 0.0
    %5845 = vmatpush1.msra.mxu0 0.0
    %5846 = vmatprep.subr.mxu0 0.0
    %5847 = vmatpush1.msra.mxu0 0.0
    %5848 = vmatprep.subr.mxu0 0.0
    %5849 = vmatpush1.msra.mxu0 0.0
    %5850 = vmatprep.subr.mxu0 0.0
    %5851 = vmatpush1.msra.mxu0 0.0
    %5852 = vmatprep.subr.mxu0 0.0
    %5853 = vmatpush1.msra.mxu0 0.0
    %5854 = vmatprep.subr.mxu0 0.0
    %5855 = vmatpush1.msra.mxu0 0.0
    %5856 = vmatprep.subr.mxu0 0.0
    %5857 = vmatpush1.msra.mxu0 0.0
    %5858 = vmatprep.subr.mxu0 0.0
    %5859 = vmatpush1.msra.mxu0 0.0
    %5860 = vmatprep.subr.mxu0 0.0
    %5861 = vmatpush1.msra.mxu0 0.0
    %5862 = vmatprep.subr.mxu0 0.0
    %5863 = vmatpush1.msra.mxu0 0.0
    %5864 = vmatprep.subr.mxu0 0.0
    %5865 = vmatpush1.msra.mxu0 0.0
    %5866 = vmatprep.subr.mxu0 0.0
    %5867 = vmatpush1.msra.mxu0 0.0
    %5868 = vmatprep.subr.mxu0 0.0
    %5869 = vmatpush1.msra.mxu0 0.0
    %5870 = vmatprep.subr.mxu0 0.0
    %5871 = vmatpush1.msra.mxu0 0.0
    %5872 = vmatprep.subr.mxu0 0.0
    %5873 = vmatpush1.msra.mxu0 0.0
    %5874 = vmatprep.mubr.f32.mxu0 0.0
    %v5875 = vand.u32 %v5407, 4294901760
    %5876 = vmatmul.mubr.f32.gmra.mrb[0].mxu0 %v5875
    %v5877 = vpop.f32.mrb[0].mxu0
    %v5878 = vadd.f32 %v5804, %v5877
    %v5879 = vpop.f32.mrb[0].mxu0
    %5880 = vdwg.mxu0
    %v5881 = vmax.f32 %v5878, 0.0
    %v5883 = vsel %vm2375, %v5881, 0
    %v5885 = vand.u32 %v113, 4294901760
    %5886 = vmatprep.subr.mxu0 %v5885
    %v5887 = vand.u32 %v112, 4294901760
    %5888 = vmatpush1.msra.mxu0 %v5887
    %v5889 = vand.u32 %v117, 4294901760
    %5890 = vmatprep.subr.mxu0 %v5889
    %v5891 = vand.u32 %v116, 4294901760
    %5892 = vmatpush1.msra.mxu0 %v5891
    %v5893 = vand.u32 %v121, 4294901760
    %5894 = vmatprep.subr.mxu0 %v5893
    %v5895 = vand.u32 %v120, 4294901760
    %5896 = vmatpush1.msra.mxu0 %v5895
    %v5897 = vand.u32 %v125, 4294901760
    %5898 = vmatprep.subr.mxu0 %v5897
    %v5899 = vand.u32 %v124, 4294901760
    %5900 = vmatpush1.msra.mxu0 %v5899
    %v5901 = vand.u32 %v129, 4294901760
    %5902 = vmatprep.subr.mxu0 %v5901
    %v5903 = vand.u32 %v128, 4294901760
    %5904 = vmatpush1.msra.mxu0 %v5903
    %v5905 = vand.u32 %v133, 4294901760
    %5906 = vmatprep.subr.mxu0 %v5905
    %v5907 = vand.u32 %v132, 4294901760
    %5908 = vmatpush1.msra.mxu0 %v5907
    %v5909 = vand.u32 %v137, 4294901760
    %5910 = vmatprep.subr.mxu0 %v5909
    %v5911 = vand.u32 %v136, 4294901760
    %5912 = vmatpush1.msra.mxu0 %v5911
    %v5913 = vand.u32 %v141, 4294901760
    %5914 = vmatprep.subr.mxu0 %v5913
    %v5915 = vand.u32 %v140, 4294901760
    %5916 = vmatpush1.msra.mxu0 %v5915
    %5917 = vmatprep.subr.mxu0 0.0
    %5918 = vmatpush1.msra.mxu0 0.0
    %5919 = vmatprep.subr.mxu0 0.0
    %5920 = vmatpush1.msra.mxu0 0.0
    %5921 = vmatprep.subr.mxu0 0.0
    %5922 = vmatpush1.msra.mxu0 0.0
    %5923 = vmatprep.subr.mxu0 0.0
    %5924 = vmatpush1.msra.mxu0 0.0
    %5925 = vmatprep.subr.mxu0 0.0
    %5926 = vmatpush1.msra.mxu0 0.0
    %5927 = vmatprep.subr.mxu0 0.0
    %5928 = vmatpush1.msra.mxu0 0.0
    %5929 = vmatprep.subr.mxu0 0.0
    %5930 = vmatpush1.msra.mxu0 0.0
    %5931 = vmatprep.subr.mxu0 0.0
    %5932 = vmatpush1.msra.mxu0 0.0
    %5933 = vmatprep.subr.mxu0 0.0
    %5934 = vmatpush1.msra.mxu0 0.0
    %5935 = vmatprep.subr.mxu0 0.0
    %5936 = vmatpush1.msra.mxu0 0.0
    %5937 = vmatprep.subr.mxu0 0.0
    %5938 = vmatpush1.msra.mxu0 0.0
    %5939 = vmatprep.subr.mxu0 0.0
    %5940 = vmatpush1.msra.mxu0 0.0
    %5941 = vmatprep.subr.mxu0 0.0
    %5942 = vmatpush1.msra.mxu0 0.0
    %5943 = vmatprep.subr.mxu0 0.0
    %5944 = vmatpush1.msra.mxu0 0.0
    %5945 = vmatprep.subr.mxu0 0.0
    %5946 = vmatpush1.msra.mxu0 0.0
    %5947 = vmatprep.subr.mxu0 0.0
    %5948 = vmatpush1.msra.mxu0 0.0
    %5949 = vmatprep.subr.mxu0 0.0
    %5950 = vmatpush1.msra.mxu0 0.0
    %5951 = vmatprep.subr.mxu0 0.0
    %5952 = vmatpush1.msra.mxu0 0.0
    %5953 = vmatprep.subr.mxu0 0.0
    %5954 = vmatpush1.msra.mxu0 0.0
    %5955 = vmatprep.subr.mxu0 0.0
    %5956 = vmatpush1.msra.mxu0 0.0
    %5957 = vmatprep.subr.mxu0 0.0
    %5958 = vmatpush1.msra.mxu0 0.0
    %5959 = vmatprep.subr.mxu0 0.0
    %5960 = vmatpush1.msra.mxu0 0.0
    %5961 = vmatprep.subr.mxu0 0.0
    %5962 = vmatpush1.msra.mxu0 0.0
    %5963 = vmatprep.subr.mxu0 0.0
    %5964 = vmatpush1.msra.mxu0 0.0
    %5965 = vmatprep.mubr.f32.mxu0 0.0
    %v5966 = vand.u32 %v5883, 4294901760
    %v5967 = vsub.f32 %v5883, %v5966
    %v5968 = vand.u32 %v5967, 4294901760
    %v5969 = vsub.f32 %v5967, %v5968
    %v5970 = vand.u32 %v5969, 4294901760
    %5971 = vmatmul.mubr.f32.gmra.mrb[0].mxu0 %v5970
    %v5972 = vpop.f32.mrb[0].mxu0
    %v5973 = vadd.f32 0.0, %v5972
    %v5974 = vpop.f32.mrb[0].mxu0
    %v5975 = vadd.f32 0.0, %v5974
    %5976 = vdwg.mxu0
    %v5977 = vand.u32 %v113, 4294901760
    %v5978 = vsub.f32 %v113, %v5977
    %v5979 = vand.u32 %v5978, 4294901760
    %v5980 = vsub.f32 %v5978, %v5979
    %v5981 = vand.u32 %v5980, 4294901760
    %5982 = vmatprep.subr.mxu0 %v5981
    %v5983 = vand.u32 %v112, 4294901760
    %v5984 = vsub.f32 %v112, %v5983
    %v5985 = vand.u32 %v5984, 4294901760
    %v5986 = vsub.f32 %v5984, %v5985
    %v5987 = vand.u32 %v5986, 4294901760
    %5988 = vmatpush1.msra.mxu0 %v5987
    %v5989 = vand.u32 %v117, 4294901760
    %v5990 = vsub.f32 %v117, %v5989
    %v5991 = vand.u32 %v5990, 4294901760
    %v5992 = vsub.f32 %v5990, %v5991
    %v5993 = vand.u32 %v5992, 4294901760
    %5994 = vmatprep.subr.mxu0 %v5993
    %v5995 = vand.u32 %v116, 4294901760
    %v5996 = vsub.f32 %v116, %v5995
    %v5997 = vand.u32 %v5996, 4294901760
    %v5998 = vsub.f32 %v5996, %v5997
    %v5999 = vand.u32 %v5998, 4294901760
    %6000 = vmatpush1.msra.mxu0 %v5999
    %v6001 = vand.u32 %v121, 4294901760
    %v6002 = vsub.f32 %v121, %v6001
    %v6003 = vand.u32 %v6002, 4294901760
    %v6004 = vsub.f32 %v6002, %v6003
    %v6005 = vand.u32 %v6004, 4294901760
    %6006 = vmatprep.subr.mxu0 %v6005
    %v6007 = vand.u32 %v120, 4294901760
    %v6008 = vsub.f32 %v120, %v6007
    %v6009 = vand.u32 %v6008, 4294901760
    %v6010 = vsub.f32 %v6008, %v6009
    %v6011 = vand.u32 %v6010, 4294901760
    %6012 = vmatpush1.msra.mxu0 %v6011
    %v6013 = vand.u32 %v125, 4294901760
    %v6014 = vsub.f32 %v125, %v6013
    %v6015 = vand.u32 %v6014, 4294901760
    %v6016 = vsub.f32 %v6014, %v6015
    %v6017 = vand.u32 %v6016, 4294901760
    %6018 = vmatprep.subr.mxu0 %v6017
    %v6019 = vand.u32 %v124, 4294901760
    %v6020 = vsub.f32 %v124, %v6019
    %v6021 = vand.u32 %v6020, 4294901760
    %v6022 = vsub.f32 %v6020, %v6021
    %v6023 = vand.u32 %v6022, 4294901760
    %6024 = vmatpush1.msra.mxu0 %v6023
    %v6025 = vand.u32 %v129, 4294901760
    %v6026 = vsub.f32 %v129, %v6025
    %v6027 = vand.u32 %v6026, 4294901760
    %v6028 = vsub.f32 %v6026, %v6027
    %v6029 = vand.u32 %v6028, 4294901760
    %6030 = vmatprep.subr.mxu0 %v6029
    %v6031 = vand.u32 %v128, 4294901760
    %v6032 = vsub.f32 %v128, %v6031
    %v6033 = vand.u32 %v6032, 4294901760
    %v6034 = vsub.f32 %v6032, %v6033
    %v6035 = vand.u32 %v6034, 4294901760
    %6036 = vmatpush1.msra.mxu0 %v6035
    %v6037 = vand.u32 %v133, 4294901760
    %v6038 = vsub.f32 %v133, %v6037
    %v6039 = vand.u32 %v6038, 4294901760
    %v6040 = vsub.f32 %v6038, %v6039
    %v6041 = vand.u32 %v6040, 4294901760
    %6042 = vmatprep.subr.mxu0 %v6041
    %v6043 = vand.u32 %v132, 4294901760
    %v6044 = vsub.f32 %v132, %v6043
    %v6045 = vand.u32 %v6044, 4294901760
    %v6046 = vsub.f32 %v6044, %v6045
    %v6047 = vand.u32 %v6046, 4294901760
    %6048 = vmatpush1.msra.mxu0 %v6047
    %v6049 = vand.u32 %v137, 4294901760
    %v6050 = vsub.f32 %v137, %v6049
    %v6051 = vand.u32 %v6050, 4294901760
    %v6052 = vsub.f32 %v6050, %v6051
    %v6053 = vand.u32 %v6052, 4294901760
    %6054 = vmatprep.subr.mxu0 %v6053
    %v6055 = vand.u32 %v136, 4294901760
    %v6056 = vsub.f32 %v136, %v6055
    %v6057 = vand.u32 %v6056, 4294901760
    %v6058 = vsub.f32 %v6056, %v6057
    %v6059 = vand.u32 %v6058, 4294901760
    %6060 = vmatpush1.msra.mxu0 %v6059
    %v6061 = vand.u32 %v141, 4294901760
    %v6062 = vsub.f32 %v141, %v6061
    %v6063 = vand.u32 %v6062, 4294901760
    %v6064 = vsub.f32 %v6062, %v6063
    %v6065 = vand.u32 %v6064, 4294901760
    %6066 = vmatprep.subr.mxu0 %v6065
    %v6067 = vand.u32 %v140, 4294901760
    %v6068 = vsub.f32 %v140, %v6067
    %v6069 = vand.u32 %v6068, 4294901760
    %v6070 = vsub.f32 %v6068, %v6069
    %v6071 = vand.u32 %v6070, 4294901760
    %6072 = vmatpush1.msra.mxu0 %v6071
    %6073 = vmatprep.subr.mxu0 0.0
    %6074 = vmatpush1.msra.mxu0 0.0
    %6075 = vmatprep.subr.mxu0 0.0
    %6076 = vmatpush1.msra.mxu0 0.0
    %6077 = vmatprep.subr.mxu0 0.0
    %6078 = vmatpush1.msra.mxu0 0.0
    %6079 = vmatprep.subr.mxu0 0.0
    %6080 = vmatpush1.msra.mxu0 0.0
    %6081 = vmatprep.subr.mxu0 0.0
    %6082 = vmatpush1.msra.mxu0 0.0
    %6083 = vmatprep.subr.mxu0 0.0
    %6084 = vmatpush1.msra.mxu0 0.0
    %6085 = vmatprep.subr.mxu0 0.0
    %6086 = vmatpush1.msra.mxu0 0.0
    %6087 = vmatprep.subr.mxu0 0.0
    %6088 = vmatpush1.msra.mxu0 0.0
    %6089 = vmatprep.subr.mxu0 0.0
    %6090 = vmatpush1.msra.mxu0 0.0
    %6091 = vmatprep.subr.mxu0 0.0
    %6092 = vmatpush1.msra.mxu0 0.0
    %6093 = vmatprep.subr.mxu0 0.0
    %6094 = vmatpush1.msra.mxu0 0.0
    %6095 = vmatprep.subr.mxu0 0.0
    %6096 = vmatpush1.msra.mxu0 0.0
    %6097 = vmatprep.subr.mxu0 0.0
    %6098 = vmatpush1.msra.mxu0 0.0
    %6099 = vmatprep.subr.mxu0 0.0
    %6100 = vmatpush1.msra.mxu0 0.0
    %6101 = vmatprep.subr.mxu0 0.0
    %6102 = vmatpush1.msra.mxu0 0.0
    %6103 = vmatprep.subr.mxu0 0.0
    %6104 = vmatpush1.msra.mxu0 0.0
    %6105 = vmatprep.subr.mxu0 0.0
    %6106 = vmatpush1.msra.mxu0 0.0
    %6107 = vmatprep.subr.mxu0 0.0
    %6108 = vmatpush1.msra.mxu0 0.0
    %6109 = vmatprep.subr.mxu0 0.0
    %6110 = vmatpush1.msra.mxu0 0.0
    %6111 = vmatprep.subr.mxu0 0.0
    %6112 = vmatpush1.msra.mxu0 0.0
    %6113 = vmatprep.subr.mxu0 0.0
    %6114 = vmatpush1.msra.mxu0 0.0
    %6115 = vmatprep.subr.mxu0 0.0
    %6116 = vmatpush1.msra.mxu0 0.0
    %6117 = vmatprep.subr.mxu0 0.0
    %6118 = vmatpush1.msra.mxu0 0.0
    %6119 = vmatprep.subr.mxu0 0.0
    %6120 = vmatpush1.msra.mxu0 0.0
    %6121 = vmatprep.mubr.f32.mxu0 0.0
    %v6122 = vand.u32 %v5883, 4294901760
    %6123 = vmatmul.mubr.f32.gmra.mrb[0].mxu0 %v6122
    %v6124 = vpop.f32.mrb[0].mxu0
    %v6125 = vadd.f32 %v5973, %v6124
    %v6126 = vpop.f32.mrb[0].mxu0
    %v6127 = vadd.f32 %v5975, %v6126
    %6128 = vdwg.mxu0
    %v6129 = vand.u32 %v113, 4294901760
    %v6130 = vsub.f32 %v113, %v6129
    %6131 = vmatprep.subr.mxu0 %v6130
    %v6132 = vand.u32 %v112, 4294901760
    %v6133 = vsub.f32 %v112, %v6132
    %6134 = vmatpush1.msra.mxu0 %v6133
    %v6135 = vand.u32 %v117, 4294901760
    %v6136 = vsub.f32 %v117, %v6135
    %6137 = vmatprep.subr.mxu0 %v6136
    %v6138 = vand.u32 %v116, 4294901760
    %v6139 = vsub.f32 %v116, %v6138
    %6140 = vmatpush1.msra.mxu0 %v6139
    %v6141 = vand.u32 %v121, 4294901760
    %v6142 = vsub.f32 %v121, %v6141
    %6143 = vmatprep.subr.mxu0 %v6142
    %v6144 = vand.u32 %v120, 4294901760
    %v6145 = vsub.f32 %v120, %v6144
    %6146 = vmatpush1.msra.mxu0 %v6145
    %v6147 = vand.u32 %v125, 4294901760
    %v6148 = vsub.f32 %v125, %v6147
    %6149 = vmatprep.subr.mxu0 %v6148
    %v6150 = vand.u32 %v124, 4294901760
    %v6151 = vsub.f32 %v124, %v6150
    %6152 = vmatpush1.msra.mxu0 %v6151
    %v6153 = vand.u32 %v129, 4294901760
    %v6154 = vsub.f32 %v129, %v6153
    %6155 = vmatprep.subr.mxu0 %v6154
    %v6156 = vand.u32 %v128, 4294901760
    %v6157 = vsub.f32 %v128, %v6156
    %6158 = vmatpush1.msra.mxu0 %v6157
    %v6159 = vand.u32 %v133, 4294901760
    %v6160 = vsub.f32 %v133, %v6159
    %6161 = vmatprep.subr.mxu0 %v6160
    %v6162 = vand.u32 %v132, 4294901760
    %v6163 = vsub.f32 %v132, %v6162
    %6164 = vmatpush1.msra.mxu0 %v6163
    %v6165 = vand.u32 %v137, 4294901760
    %v6166 = vsub.f32 %v137, %v6165
    %6167 = vmatprep.subr.mxu0 %v6166
    %v6168 = vand.u32 %v136, 4294901760
    %v6169 = vsub.f32 %v136, %v6168
    %6170 = vmatpush1.msra.mxu0 %v6169
    %v6171 = vand.u32 %v141, 4294901760
    %v6172 = vsub.f32 %v141, %v6171
    %6173 = vmatprep.subr.mxu0 %v6172
    %v6174 = vand.u32 %v140, 4294901760
    %v6175 = vsub.f32 %v140, %v6174
    %6176 = vmatpush1.msra.mxu0 %v6175
    %6177 = vmatprep.subr.mxu0 0.0
    %6178 = vmatpush1.msra.mxu0 0.0
    %6179 = vmatprep.subr.mxu0 0.0
    %6180 = vmatpush1.msra.mxu0 0.0
    %6181 = vmatprep.subr.mxu0 0.0
    %6182 = vmatpush1.msra.mxu0 0.0
    %6183 = vmatprep.subr.mxu0 0.0
    %6184 = vmatpush1.msra.mxu0 0.0
    %6185 = vmatprep.subr.mxu0 0.0
    %6186 = vmatpush1.msra.mxu0 0.0
    %6187 = vmatprep.subr.mxu0 0.0
    %6188 = vmatpush1.msra.mxu0 0.0
    %6189 = vmatprep.subr.mxu0 0.0
    %6190 = vmatpush1.msra.mxu0 0.0
    %6191 = vmatprep.subr.mxu0 0.0
    %6192 = vmatpush1.msra.mxu0 0.0
    %6193 = vmatprep.subr.mxu0 0.0
    %6194 = vmatpush1.msra.mxu0 0.0
    %6195 = vmatprep.subr.mxu0 0.0
    %6196 = vmatpush1.msra.mxu0 0.0
    %6197 = vmatprep.subr.mxu0 0.0
    %6198 = vmatpush1.msra.mxu0 0.0
    %6199 = vmatprep.subr.mxu0 0.0
    %6200 = vmatpush1.msra.mxu0 0.0
    %6201 = vmatprep.subr.mxu0 0.0
    %6202 = vmatpush1.msra.mxu0 0.0
    %6203 = vmatprep.subr.mxu0 0.0
    %6204 = vmatpush1.msra.mxu0 0.0
    %6205 = vmatprep.subr.mxu0 0.0
    %6206 = vmatpush1.msra.mxu0 0.0
    %6207 = vmatprep.subr.mxu0 0.0
    %6208 = vmatpush1.msra.mxu0 0.0
    %6209 = vmatprep.subr.mxu0 0.0
    %6210 = vmatpush1.msra.mxu0 0.0
    %6211 = vmatprep.subr.mxu0 0.0
    %6212 = vmatpush1.msra.mxu0 0.0
    %6213 = vmatprep.subr.mxu0 0.0
    %6214 = vmatpush1.msra.mxu0 0.0
    %6215 = vmatprep.subr.mxu0 0.0
    %6216 = vmatpush1.msra.mxu0 0.0
    %6217 = vmatprep.subr.mxu0 0.0
    %6218 = vmatpush1.msra.mxu0 0.0
    %6219 = vmatprep.subr.mxu0 0.0
    %6220 = vmatpush1.msra.mxu0 0.0
    %6221 = vmatprep.subr.mxu0 0.0
    %6222 = vmatpush1.msra.mxu0 0.0
    %6223 = vmatprep.subr.mxu0 0.0
    %6224 = vmatpush1.msra.mxu0 0.0
    %6225 = vmatprep.mubr.f32.mxu0 0.0
    %v6226 = vand.u32 %v5883, 4294901760
    %v6227 = vsub.f32 %v5883, %v6226
    %6228 = vmatmul.mubr.f32.gmra.mrb[0].mxu0 %v6227
    %v6229 = vpop.f32.mrb[0].mxu0
    %v6230 = vadd.f32 %v6125, %v6229
    %v6231 = vpop.f32.mrb[0].mxu0
    %v6232 = vadd.f32 %v6127, %v6231
    %6233 = vdwg.mxu0
    %v6234 = vand.u32 %v113, 4294901760
    %6235 = vmatprep.subr.mxu0 %v6234
    %v6236 = vand.u32 %v112, 4294901760
    %6237 = vmatpush1.msra.mxu0 %v6236
    %v6238 = vand.u32 %v117, 4294901760
    %6239 = vmatprep.subr.mxu0 %v6238
    %v6240 = vand.u32 %v116, 4294901760
    %6241 = vmatpush1.msra.mxu0 %v6240
    %v6242 = vand.u32 %v121, 4294901760
    %6243 = vmatprep.subr.mxu0 %v6242
    %v6244 = vand.u32 %v120, 4294901760
    %6245 = vmatpush1.msra.mxu0 %v6244
    %v6246 = vand.u32 %v125, 4294901760
    %6247 = vmatprep.subr.mxu0 %v6246
    %v6248 = vand.u32 %v124, 4294901760
    %6249 = vmatpush1.msra.mxu0 %v6248
    %v6250 = vand.u32 %v129, 4294901760
    %6251 = vmatprep.subr.mxu0 %v6250
    %v6252 = vand.u32 %v128, 4294901760
    %6253 = vmatpush1.msra.mxu0 %v6252
    %v6254 = vand.u32 %v133, 4294901760
    %6255 = vmatprep.subr.mxu0 %v6254
    %v6256 = vand.u32 %v132, 4294901760
    %6257 = vmatpush1.msra.mxu0 %v6256
    %v6258 = vand.u32 %v137, 4294901760
    %6259 = vmatprep.subr.mxu0 %v6258
    %v6260 = vand.u32 %v136, 4294901760
    %6261 = vmatpush1.msra.mxu0 %v6260
    %v6262 = vand.u32 %v141, 4294901760
    %6263 = vmatprep.subr.mxu0 %v6262
    %v6264 = vand.u32 %v140, 4294901760
    %6265 = vmatpush1.msra.mxu0 %v6264
    %6266 = vmatprep.subr.mxu0 0.0
    %6267 = vmatpush1.msra.mxu0 0.0
    %6268 = vmatprep.subr.mxu0 0.0
    %6269 = vmatpush1.msra.mxu0 0.0
    %6270 = vmatprep.subr.mxu0 0.0
    %6271 = vmatpush1.msra.mxu0 0.0
    %6272 = vmatprep.subr.mxu0 0.0
    %6273 = vmatpush1.msra.mxu0 0.0
    %6274 = vmatprep.subr.mxu0 0.0
    %6275 = vmatpush1.msra.mxu0 0.0
    %6276 = vmatprep.subr.mxu0 0.0
    %6277 = vmatpush1.msra.mxu0 0.0
    %6278 = vmatprep.subr.mxu0 0.0
    %6279 = vmatpush1.msra.mxu0 0.0
    %6280 = vmatprep.subr.mxu0 0.0
    %6281 = vmatpush1.msra.mxu0 0.0
    %6282 = vmatprep.subr.mxu0 0.0
    %6283 = vmatpush1.msra.mxu0 0.0
    %6284 = vmatprep.subr.mxu0 0.0
    %6285 = vmatpush1.msra.mxu0 0.0
    %6286 = vmatprep.subr.mxu0 0.0
    %6287 = vmatpush1.msra.mxu0 0.0
    %6288 = vmatprep.subr.mxu0 0.0
    %6289 = vmatpush1.msra.mxu0 0.0
    %6290 = vmatprep.subr.mxu0 0.0
    %6291 = vmatpush1.msra.mxu0 0.0
    %6292 = vmatprep.subr.mxu0 0.0
    %6293 = vmatpush1.msra.mxu0 0.0
    %6294 = vmatprep.subr.mxu0 0.0
    %6295 = vmatpush1.msra.mxu0 0.0
    %6296 = vmatprep.subr.mxu0 0.0
    %6297 = vmatpush1.msra.mxu0 0.0
    %6298 = vmatprep.subr.mxu0 0.0
    %6299 = vmatpush1.msra.mxu0 0.0
    %6300 = vmatprep.subr.mxu0 0.0
    %6301 = vmatpush1.msra.mxu0 0.0
    %6302 = vmatprep.subr.mxu0 0.0
    %6303 = vmatpush1.msra.mxu0 0.0
    %6304 = vmatprep.subr.mxu0 0.0
    %6305 = vmatpush1.msra.mxu0 0.0
    %6306 = vmatprep.subr.mxu0 0.0
    %6307 = vmatpush1.msra.mxu0 0.0
    %6308 = vmatprep.subr.mxu0 0.0
    %6309 = vmatpush1.msra.mxu0 0.0
    %6310 = vmatprep.subr.mxu0 0.0
    %6311 = vmatpush1.msra.mxu0 0.0
    %6312 = vmatprep.subr.mxu0 0.0
    %6313 = vmatpush1.msra.mxu0 0.0
    %6314 = vmatprep.mubr.f32.mxu0 0.0
    %v6315 = vand.u32 %v5883, 4294901760
    %v6316 = vsub.f32 %v5883, %v6315
    %v6317 = vand.u32 %v6316, 4294901760
    %6318 = vmatmul.mubr.f32.gmra.mrb[0].mxu0 %v6317
    %v6319 = vpop.f32.mrb[0].mxu0
    %v6320 = vadd.f32 %v6230, %v6319
    %v6321 = vpop.f32.mrb[0].mxu0
    %v6322 = vadd.f32 %v6232, %v6321
    %6323 = vdwg.mxu0
    %v6324 = vand.u32 %v113, 4294901760
    %v6325 = vsub.f32 %v113, %v6324
    %v6326 = vand.u32 %v6325, 4294901760
    %6327 = vmatprep.subr.mxu0 %v6326
    %v6328 = vand.u32 %v112, 4294901760
    %v6329 = vsub.f32 %v112, %v6328
    %v6330 = vand.u32 %v6329, 4294901760
    %6331 = vmatpush1.msra.mxu0 %v6330
    %v6332 = vand.u32 %v117, 4294901760
    %v6333 = vsub.f32 %v117, %v6332
    %v6334 = vand.u32 %v6333, 4294901760
    %6335 = vmatprep.subr.mxu0 %v6334
    %v6336 = vand.u32 %v116, 4294901760
    %v6337 = vsub.f32 %v116, %v6336
    %v6338 = vand.u32 %v6337, 4294901760
    %6339 = vmatpush1.msra.mxu0 %v6338
    %v6340 = vand.u32 %v121, 4294901760
    %v6341 = vsub.f32 %v121, %v6340
    %v6342 = vand.u32 %v6341, 4294901760
    %6343 = vmatprep.subr.mxu0 %v6342
    %v6344 = vand.u32 %v120, 4294901760
    %v6345 = vsub.f32 %v120, %v6344
    %v6346 = vand.u32 %v6345, 4294901760
    %6347 = vmatpush1.msra.mxu0 %v6346
    %v6348 = vand.u32 %v125, 4294901760
    %v6349 = vsub.f32 %v125, %v6348
    %v6350 = vand.u32 %v6349, 4294901760
    %6351 = vmatprep.subr.mxu0 %v6350
    %v6352 = vand.u32 %v124, 4294901760
    %v6353 = vsub.f32 %v124, %v6352
    %v6354 = vand.u32 %v6353, 4294901760
    %6355 = vmatpush1.msra.mxu0 %v6354
    %v6356 = vand.u32 %v129, 4294901760
    %v6357 = vsub.f32 %v129, %v6356
    %v6358 = vand.u32 %v6357, 4294901760
    %6359 = vmatprep.subr.mxu0 %v6358
    %v6360 = vand.u32 %v128, 4294901760
    %v6361 = vsub.f32 %v128, %v6360
    %v6362 = vand.u32 %v6361, 4294901760
    %6363 = vmatpush1.msra.mxu0 %v6362
    %v6364 = vand.u32 %v133, 4294901760
    %v6365 = vsub.f32 %v133, %v6364
    %v6366 = vand.u32 %v6365, 4294901760
    %6367 = vmatprep.subr.mxu0 %v6366
    %v6368 = vand.u32 %v132, 4294901760
    %v6369 = vsub.f32 %v132, %v6368
    %v6370 = vand.u32 %v6369, 4294901760
    %6371 = vmatpush1.msra.mxu0 %v6370
    %v6372 = vand.u32 %v137, 4294901760
    %v6373 = vsub.f32 %v137, %v6372
    %v6374 = vand.u32 %v6373, 4294901760
    %6375 = vmatprep.subr.mxu0 %v6374
    %v6376 = vand.u32 %v136, 4294901760
    %v6377 = vsub.f32 %v136, %v6376
    %v6378 = vand.u32 %v6377, 4294901760
    %6379 = vmatpush1.msra.mxu0 %v6378
    %v6380 = vand.u32 %v141, 4294901760
    %v6381 = vsub.f32 %v141, %v6380
    %v6382 = vand.u32 %v6381, 4294901760
    %6383 = vmatprep.subr.mxu0 %v6382
    %v6384 = vand.u32 %v140, 4294901760
    %v6385 = vsub.f32 %v140, %v6384
    %v6386 = vand.u32 %v6385, 4294901760
    %6387 = vmatpush1.msra.mxu0 %v6386
    %6388 = vmatprep.subr.mxu0 0.0
    %6389 = vmatpush1.msra.mxu0 0.0
    %6390 = vmatprep.subr.mxu0 0.0
    %6391 = vmatpush1.msra.mxu0 0.0
    %6392 = vmatprep.subr.mxu0 0.0
    %6393 = vmatpush1.msra.mxu0 0.0
    %6394 = vmatprep.subr.mxu0 0.0
    %6395 = vmatpush1.msra.mxu0 0.0
    %6396 = vmatprep.subr.mxu0 0.0
    %6397 = vmatpush1.msra.mxu0 0.0
    %6398 = vmatprep.subr.mxu0 0.0
    %6399 = vmatpush1.msra.mxu0 0.0
    %6400 = vmatprep.subr.mxu0 0.0
    %6401 = vmatpush1.msra.mxu0 0.0
    %6402 = vmatprep.subr.mxu0 0.0
    %6403 = vmatpush1.msra.mxu0 0.0
    %6404 = vmatprep.subr.mxu0 0.0
    %6405 = vmatpush1.msra.mxu0 0.0
    %6406 = vmatprep.subr.mxu0 0.0
    %6407 = vmatpush1.msra.mxu0 0.0
    %6408 = vmatprep.subr.mxu0 0.0
    %6409 = vmatpush1.msra.mxu0 0.0
    %6410 = vmatprep.subr.mxu0 0.0
    %6411 = vmatpush1.msra.mxu0 0.0
    %6412 = vmatprep.subr.mxu0 0.0
    %6413 = vmatpush1.msra.mxu0 0.0
    %6414 = vmatprep.subr.mxu0 0.0
    %6415 = vmatpush1.msra.mxu0 0.0
    %6416 = vmatprep.subr.mxu0 0.0
    %6417 = vmatpush1.msra.mxu0 0.0
    %6418 = vmatprep.subr.mxu0 0.0
    %6419 = vmatpush1.msra.mxu0 0.0
    %6420 = vmatprep.subr.mxu0 0.0
    %6421 = vmatpush1.msra.mxu0 0.0
    %6422 = vmatprep.subr.mxu0 0.0
    %6423 = vmatpush1.msra.mxu0 0.0
    %6424 = vmatprep.subr.mxu0 0.0
    %6425 = vmatpush1.msra.mxu0 0.0
    %6426 = vmatprep.subr.mxu0 0.0
    %6427 = vmatpush1.msra.mxu0 0.0
    %6428 = vmatprep.subr.mxu0 0.0
    %6429 = vmatpush1.msra.mxu0 0.0
    %6430 = vmatprep.subr.mxu0 0.0
    %6431 = vmatpush1.msra.mxu0 0.0
    %6432 = vmatprep.subr.mxu0 0.0
    %6433 = vmatpush1.msra.mxu0 0.0
    %6434 = vmatprep.subr.mxu0 0.0
    %6435 = vmatpush1.msra.mxu0 0.0
    %6436 = vmatprep.mubr.f32.mxu0 0.0
    %v6437 = vand.u32 %v5883, 4294901760
    %6438 = vmatmul.mubr.f32.gmra.mrb[0].mxu0 %v6437
    %v6439 = vpop.f32.mrb[0].mxu0
    %v6440 = vadd.f32 %v6320, %v6439
    %v6441 = vpop.f32.mrb[0].mxu0
    %v6442 = vadd.f32 %v6322, %v6441
    %6443 = vdwg.mxu0
    %v6444 = vand.u32 %v113, 4294901760
    %6445 = vmatprep.subr.mxu0 %v6444
    %v6446 = vand.u32 %v112, 4294901760
    %6447 = vmatpush1.msra.mxu0 %v6446
    %v6448 = vand.u32 %v117, 4294901760
    %6449 = vmatprep.subr.mxu0 %v6448
    %v6450 = vand.u32 %v116, 4294901760
    %6451 = vmatpush1.msra.mxu0 %v6450
    %v6452 = vand.u32 %v121, 4294901760
    %6453 = vmatprep.subr.mxu0 %v6452
    %v6454 = vand.u32 %v120, 4294901760
    %6455 = vmatpush1.msra.mxu0 %v6454
    %v6456 = vand.u32 %v125, 4294901760
    %6457 = vmatprep.subr.mxu0 %v6456
    %v6458 = vand.u32 %v124, 4294901760
    %6459 = vmatpush1.msra.mxu0 %v6458
    %v6460 = vand.u32 %v129, 4294901760
    %6461 = vmatprep.subr.mxu0 %v6460
    %v6462 = vand.u32 %v128, 4294901760
    %6463 = vmatpush1.msra.mxu0 %v6462
    %v6464 = vand.u32 %v133, 4294901760
    %6465 = vmatprep.subr.mxu0 %v6464
    %v6466 = vand.u32 %v132, 4294901760
    %6467 = vmatpush1.msra.mxu0 %v6466
    %v6468 = vand.u32 %v137, 4294901760
    %6469 = vmatprep.subr.mxu0 %v6468
    %v6470 = vand.u32 %v136, 4294901760
    %6471 = vmatpush1.msra.mxu0 %v6470
    %v6472 = vand.u32 %v141, 4294901760
    %6473 = vmatprep.subr.mxu0 %v6472
    %v6474 = vand.u32 %v140, 4294901760
    %6475 = vmatpush1.msra.mxu0 %v6474
    %6476 = vmatprep.subr.mxu0 0.0
    %6477 = vmatpush1.msra.mxu0 0.0
    %6478 = vmatprep.subr.mxu0 0.0
    %6479 = vmatpush1.msra.mxu0 0.0
    %6480 = vmatprep.subr.mxu0 0.0
    %6481 = vmatpush1.msra.mxu0 0.0
    %6482 = vmatprep.subr.mxu0 0.0
    %6483 = vmatpush1.msra.mxu0 0.0
    %6484 = vmatprep.subr.mxu0 0.0
    %6485 = vmatpush1.msra.mxu0 0.0
    %6486 = vmatprep.subr.mxu0 0.0
    %6487 = vmatpush1.msra.mxu0 0.0
    %6488 = vmatprep.subr.mxu0 0.0
    %6489 = vmatpush1.msra.mxu0 0.0
    %6490 = vmatprep.subr.mxu0 0.0
    %6491 = vmatpush1.msra.mxu0 0.0
    %6492 = vmatprep.subr.mxu0 0.0
    %6493 = vmatpush1.msra.mxu0 0.0
    %6494 = vmatprep.subr.mxu0 0.0
    %6495 = vmatpush1.msra.mxu0 0.0
    %6496 = vmatprep.subr.mxu0 0.0
    %6497 = vmatpush1.msra.mxu0 0.0
    %6498 = vmatprep.subr.mxu0 0.0
    %6499 = vmatpush1.msra.mxu0 0.0
    %6500 = vmatprep.subr.mxu0 0.0
    %6501 = vmatpush1.msra.mxu0 0.0
    %6502 = vmatprep.subr.mxu0 0.0
    %6503 = vmatpush1.msra.mxu0 0.0
    %6504 = vmatprep.subr.mxu0 0.0
    %6505 = vmatpush1.msra.mxu0 0.0
    %6506 = vmatprep.subr.mxu0 0.0
    %6507 = vmatpush1.msra.mxu0 0.0
    %6508 = vmatprep.subr.mxu0 0.0
    %6509 = vmatpush1.msra.mxu0 0.0
    %6510 = vmatprep.subr.mxu0 0.0
    %6511 = vmatpush1.msra.mxu0 0.0
    %6512 = vmatprep.subr.mxu0 0.0
    %6513 = vmatpush1.msra.mxu0 0.0
    %6514 = vmatprep.subr.mxu0 0.0
    %6515 = vmatpush1.msra.mxu0 0.0
    %6516 = vmatprep.subr.mxu0 0.0
    %6517 = vmatpush1.msra.mxu0 0.0
    %6518 = vmatprep.subr.mxu0 0.0
    %6519 = vmatpush1.msra.mxu0 0.0
    %6520 = vmatprep.subr.mxu0 0.0
    %6521 = vmatpush1.msra.mxu0 0.0
    %6522 = vmatprep.subr.mxu0 0.0
    %6523 = vmatpush1.msra.mxu0 0.0
    %6524 = vmatprep.mubr.f32.mxu0 0.0
    %v6525 = vand.u32 %v5883, 4294901760
    %6526 = vmatmul.mubr.f32.gmra.mrb[0].mxu0 %v6525
    %v6527 = vpop.f32.mrb[0].mxu0
    %v6528 = vadd.f32 %v6440, %v6527
    %v6529 = vpop.f32.mrb[0].mxu0
    %v6530 = vadd.f32 %v6442, %v6529
    %6531 = vdwg.mxu0
    %v6532 = vand.u32 %v115, 4294901760
    %6533 = vmatprep.subr.mxu0 %v6532
    %v6534 = vand.u32 %v114, 4294901760
    %6535 = vmatpush1.msra.mxu0 %v6534
    %v6536 = vand.u32 %v119, 4294901760
    %6537 = vmatprep.subr.mxu0 %v6536
    %v6538 = vand.u32 %v118, 4294901760
    %6539 = vmatpush1.msra.mxu0 %v6538
    %v6540 = vand.u32 %v123, 4294901760
    %6541 = vmatprep.subr.mxu0 %v6540
    %v6542 = vand.u32 %v122, 4294901760
    %6543 = vmatpush1.msra.mxu0 %v6542
    %v6544 = vand.u32 %v127, 4294901760
    %6545 = vmatprep.subr.mxu0 %v6544
    %v6546 = vand.u32 %v126, 4294901760
    %6547 = vmatpush1.msra.mxu0 %v6546
    %v6548 = vand.u32 %v131, 4294901760
    %6549 = vmatprep.subr.mxu0 %v6548
    %v6550 = vand.u32 %v130, 4294901760
    %6551 = vmatpush1.msra.mxu0 %v6550
    %v6552 = vand.u32 %v135, 4294901760
    %6553 = vmatprep.subr.mxu0 %v6552
    %v6554 = vand.u32 %v134, 4294901760
    %6555 = vmatpush1.msra.mxu0 %v6554
    %v6556 = vand.u32 %v139, 4294901760
    %6557 = vmatprep.subr.mxu0 %v6556
    %v6558 = vand.u32 %v138, 4294901760
    %6559 = vmatpush1.msra.mxu0 %v6558
    %v6560 = vand.u32 %v143, 4294901760
    %6561 = vmatprep.subr.mxu0 %v6560
    %v6562 = vand.u32 %v142, 4294901760
    %6563 = vmatpush1.msra.mxu0 %v6562
    %6564 = vmatprep.subr.mxu0 0.0
    %6565 = vmatpush1.msra.mxu0 0.0
    %6566 = vmatprep.subr.mxu0 0.0
    %6567 = vmatpush1.msra.mxu0 0.0
    %6568 = vmatprep.subr.mxu0 0.0
    %6569 = vmatpush1.msra.mxu0 0.0
    %6570 = vmatprep.subr.mxu0 0.0
    %6571 = vmatpush1.msra.mxu0 0.0
    %6572 = vmatprep.subr.mxu0 0.0
    %6573 = vmatpush1.msra.mxu0 0.0
    %6574 = vmatprep.subr.mxu0 0.0
    %6575 = vmatpush1.msra.mxu0 0.0
    %6576 = vmatprep.subr.mxu0 0.0
    %6577 = vmatpush1.msra.mxu0 0.0
    %6578 = vmatprep.subr.mxu0 0.0
    %6579 = vmatpush1.msra.mxu0 0.0
    %6580 = vmatprep.subr.mxu0 0.0
    %6581 = vmatpush1.msra.mxu0 0.0
    %6582 = vmatprep.subr.mxu0 0.0
    %6583 = vmatpush1.msra.mxu0 0.0
    %6584 = vmatprep.subr.mxu0 0.0
    %6585 = vmatpush1.msra.mxu0 0.0
    %6586 = vmatprep.subr.mxu0 0.0
    %6587 = vmatpush1.msra.mxu0 0.0
    %6588 = vmatprep.subr.mxu0 0.0
    %6589 = vmatpush1.msra.mxu0 0.0
    %6590 = vmatprep.subr.mxu0 0.0
    %6591 = vmatpush1.msra.mxu0 0.0
    %6592 = vmatprep.subr.mxu0 0.0
    %6593 = vmatpush1.msra.mxu0 0.0
    %6594 = vmatprep.subr.mxu0 0.0
    %6595 = vmatpush1.msra.mxu0 0.0
    %6596 = vmatprep.subr.mxu0 0.0
    %6597 = vmatpush1.msra.mxu0 0.0
    %6598 = vmatprep.subr.mxu0 0.0
    %6599 = vmatpush1.msra.mxu0 0.0
    %6600 = vmatprep.subr.mxu0 0.0
    %6601 = vmatpush1.msra.mxu0 0.0
    %6602 = vmatprep.subr.mxu0 0.0
    %6603 = vmatpush1.msra.mxu0 0.0
    %6604 = vmatprep.subr.mxu0 0.0
    %6605 = vmatpush1.msra.mxu0 0.0
    %6606 = vmatprep.subr.mxu0 0.0
    %6607 = vmatpush1.msra.mxu0 0.0
    %6608 = vmatprep.subr.mxu0 0.0
    %6609 = vmatpush1.msra.mxu0 0.0
    %6610 = vmatprep.subr.mxu0 0.0
    %6611 = vmatpush1.msra.mxu0 0.0
    %6612 = vmatprep.mubr.f32.mxu0 0.0
    %v6613 = vand.u32 %v5883, 4294901760
    %v6614 = vsub.f32 %v5883, %v6613
    %v6615 = vand.u32 %v6614, 4294901760
    %v6616 = vsub.f32 %v6614, %v6615
    %v6617 = vand.u32 %v6616, 4294901760
    %6618 = vmatmul.mubr.f32.gmra.mrb[0].mxu0 %v6617
    %v6619 = vpop.f32.mrb[0].mxu0
    %v6620 = vadd.f32 0.0, %v6619
    %v6621 = vpop.f32.mrb[0].mxu0
    %v6622 = vadd.f32 0.0, %v6621
    %6623 = vdwg.mxu0
    %v6624 = vand.u32 %v115, 4294901760
    %v6625 = vsub.f32 %v115, %v6624
    %v6626 = vand.u32 %v6625, 4294901760
    %v6627 = vsub.f32 %v6625, %v6626
    %v6628 = vand.u32 %v6627, 4294901760
    %6629 = vmatprep.subr.mxu0 %v6628
    %v6630 = vand.u32 %v114, 4294901760
    %v6631 = vsub.f32 %v114, %v6630
    %v6632 = vand.u32 %v6631, 4294901760
    %v6633 = vsub.f32 %v6631, %v6632
    %v6634 = vand.u32 %v6633, 4294901760
    %6635 = vmatpush1.msra.mxu0 %v6634
    %v6636 = vand.u32 %v119, 4294901760
    %v6637 = vsub.f32 %v119, %v6636
    %v6638 = vand.u32 %v6637, 4294901760
    %v6639 = vsub.f32 %v6637, %v6638
    %v6640 = vand.u32 %v6639, 4294901760
    %6641 = vmatprep.subr.mxu0 %v6640
    %v6642 = vand.u32 %v118, 4294901760
    %v6643 = vsub.f32 %v118, %v6642
    %v6644 = vand.u32 %v6643, 4294901760
    %v6645 = vsub.f32 %v6643, %v6644
    %v6646 = vand.u32 %v6645, 4294901760
    %6647 = vmatpush1.msra.mxu0 %v6646
    %v6648 = vand.u32 %v123, 4294901760
    %v6649 = vsub.f32 %v123, %v6648
    %v6650 = vand.u32 %v6649, 4294901760
    %v6651 = vsub.f32 %v6649, %v6650
    %v6652 = vand.u32 %v6651, 4294901760
    %6653 = vmatprep.subr.mxu0 %v6652
    %v6654 = vand.u32 %v122, 4294901760
    %v6655 = vsub.f32 %v122, %v6654
    %v6656 = vand.u32 %v6655, 4294901760
    %v6657 = vsub.f32 %v6655, %v6656
    %v6658 = vand.u32 %v6657, 4294901760
    %6659 = vmatpush1.msra.mxu0 %v6658
    %v6660 = vand.u32 %v127, 4294901760
    %v6661 = vsub.f32 %v127, %v6660
    %v6662 = vand.u32 %v6661, 4294901760
    %v6663 = vsub.f32 %v6661, %v6662
    %v6664 = vand.u32 %v6663, 4294901760
    %6665 = vmatprep.subr.mxu0 %v6664
    %v6666 = vand.u32 %v126, 4294901760
    %v6667 = vsub.f32 %v126, %v6666
    %v6668 = vand.u32 %v6667, 4294901760
    %v6669 = vsub.f32 %v6667, %v6668
    %v6670 = vand.u32 %v6669, 4294901760
    %6671 = vmatpush1.msra.mxu0 %v6670
    %v6672 = vand.u32 %v131, 4294901760
    %v6673 = vsub.f32 %v131, %v6672
    %v6674 = vand.u32 %v6673, 4294901760
    %v6675 = vsub.f32 %v6673, %v6674
    %v6676 = vand.u32 %v6675, 4294901760
    %6677 = vmatprep.subr.mxu0 %v6676
    %v6678 = vand.u32 %v130, 4294901760
    %v6679 = vsub.f32 %v130, %v6678
    %v6680 = vand.u32 %v6679, 4294901760
    %v6681 = vsub.f32 %v6679, %v6680
    %v6682 = vand.u32 %v6681, 4294901760
    %6683 = vmatpush1.msra.mxu0 %v6682
    %v6684 = vand.u32 %v135, 4294901760
    %v6685 = vsub.f32 %v135, %v6684
    %v6686 = vand.u32 %v6685, 4294901760
    %v6687 = vsub.f32 %v6685, %v6686
    %v6688 = vand.u32 %v6687, 4294901760
    %6689 = vmatprep.subr.mxu0 %v6688
    %v6690 = vand.u32 %v134, 4294901760
    %v6691 = vsub.f32 %v134, %v6690
    %v6692 = vand.u32 %v6691, 4294901760
    %v6693 = vsub.f32 %v6691, %v6692
    %v6694 = vand.u32 %v6693, 4294901760
    %6695 = vmatpush1.msra.mxu0 %v6694
    %v6696 = vand.u32 %v139, 4294901760
    %v6697 = vsub.f32 %v139, %v6696
    %v6698 = vand.u32 %v6697, 4294901760
    %v6699 = vsub.f32 %v6697, %v6698
    %v6700 = vand.u32 %v6699, 4294901760
    %6701 = vmatprep.subr.mxu0 %v6700
    %v6702 = vand.u32 %v138, 4294901760
    %v6703 = vsub.f32 %v138, %v6702
    %v6704 = vand.u32 %v6703, 4294901760
    %v6705 = vsub.f32 %v6703, %v6704
    %v6706 = vand.u32 %v6705, 4294901760
    %6707 = vmatpush1.msra.mxu0 %v6706
    %v6708 = vand.u32 %v143, 4294901760
    %v6709 = vsub.f32 %v143, %v6708
    %v6710 = vand.u32 %v6709, 4294901760
    %v6711 = vsub.f32 %v6709, %v6710
    %v6712 = vand.u32 %v6711, 4294901760
    %6713 = vmatprep.subr.mxu0 %v6712
    %v6714 = vand.u32 %v142, 4294901760
    %v6715 = vsub.f32 %v142, %v6714
    %v6716 = vand.u32 %v6715, 4294901760
    %v6717 = vsub.f32 %v6715, %v6716
    %v6718 = vand.u32 %v6717, 4294901760
    %6719 = vmatpush1.msra.mxu0 %v6718
    %6720 = vmatprep.subr.mxu0 0.0
    %6721 = vmatpush1.msra.mxu0 0.0
    %6722 = vmatprep.subr.mxu0 0.0
    %6723 = vmatpush1.msra.mxu0 0.0
    %6724 = vmatprep.subr.mxu0 0.0
    %6725 = vmatpush1.msra.mxu0 0.0
    %6726 = vmatprep.subr.mxu0 0.0
    %6727 = vmatpush1.msra.mxu0 0.0
    %6728 = vmatprep.subr.mxu0 0.0
    %6729 = vmatpush1.msra.mxu0 0.0
    %6730 = vmatprep.subr.mxu0 0.0
    %6731 = vmatpush1.msra.mxu0 0.0
    %6732 = vmatprep.subr.mxu0 0.0
    %6733 = vmatpush1.msra.mxu0 0.0
    %6734 = vmatprep.subr.mxu0 0.0
    %6735 = vmatpush1.msra.mxu0 0.0
    %6736 = vmatprep.subr.mxu0 0.0
    %6737 = vmatpush1.msra.mxu0 0.0
    %6738 = vmatprep.subr.mxu0 0.0
    %6739 = vmatpush1.msra.mxu0 0.0
    %6740 = vmatprep.subr.mxu0 0.0
    %6741 = vmatpush1.msra.mxu0 0.0
    %6742 = vmatprep.subr.mxu0 0.0
    %6743 = vmatpush1.msra.mxu0 0.0
    %6744 = vmatprep.subr.mxu0 0.0
    %6745 = vmatpush1.msra.mxu0 0.0
    %6746 = vmatprep.subr.mxu0 0.0
    %6747 = vmatpush1.msra.mxu0 0.0
    %6748 = vmatprep.subr.mxu0 0.0
    %6749 = vmatpush1.msra.mxu0 0.0
    %6750 = vmatprep.subr.mxu0 0.0
    %6751 = vmatpush1.msra.mxu0 0.0
    %6752 = vmatprep.subr.mxu0 0.0
    %6753 = vmatpush1.msra.mxu0 0.0
    %6754 = vmatprep.subr.mxu0 0.0
    %6755 = vmatpush1.msra.mxu0 0.0
    %6756 = vmatprep.subr.mxu0 0.0
    %6757 = vmatpush1.msra.mxu0 0.0
    %6758 = vmatprep.subr.mxu0 0.0
    %6759 = vmatpush1.msra.mxu0 0.0
    %6760 = vmatprep.subr.mxu0 0.0
    %6761 = vmatpush1.msra.mxu0 0.0
    %6762 = vmatprep.subr.mxu0 0.0
    %6763 = vmatpush1.msra.mxu0 0.0
    %6764 = vmatprep.subr.mxu0 0.0
    %6765 = vmatpush1.msra.mxu0 0.0
    %6766 = vmatprep.subr.mxu0 0.0
    %6767 = vmatpush1.msra.mxu0 0.0
    %6768 = vmatprep.mubr.f32.mxu0 0.0
    %v6769 = vand.u32 %v5883, 4294901760
    %6770 = vmatmul.mubr.f32.gmra.mrb[0].mxu0 %v6769
    %v6771 = vpop.f32.mrb[0].mxu0
    %v6772 = vadd.f32 %v6620, %v6771
    %v6773 = vpop.f32.mrb[0].mxu0
    %v6774 = vadd.f32 %v6622, %v6773
    %6775 = vdwg.mxu0
    %v6776 = vand.u32 %v115, 4294901760
    %v6777 = vsub.f32 %v115, %v6776
    %6778 = vmatprep.subr.mxu0 %v6777
    %v6779 = vand.u32 %v114, 4294901760
    %v6780 = vsub.f32 %v114, %v6779
    %6781 = vmatpush1.msra.mxu0 %v6780
    %v6782 = vand.u32 %v119, 4294901760
    %v6783 = vsub.f32 %v119, %v6782
    %6784 = vmatprep.subr.mxu0 %v6783
    %v6785 = vand.u32 %v118, 4294901760
    %v6786 = vsub.f32 %v118, %v6785
    %6787 = vmatpush1.msra.mxu0 %v6786
    %v6788 = vand.u32 %v123, 4294901760
    %v6789 = vsub.f32 %v123, %v6788
    %6790 = vmatprep.subr.mxu0 %v6789
    %v6791 = vand.u32 %v122, 4294901760
    %v6792 = vsub.f32 %v122, %v6791
    %6793 = vmatpush1.msra.mxu0 %v6792
    %v6794 = vand.u32 %v127, 4294901760
    %v6795 = vsub.f32 %v127, %v6794
    %6796 = vmatprep.subr.mxu0 %v6795
    %v6797 = vand.u32 %v126, 4294901760
    %v6798 = vsub.f32 %v126, %v6797
    %6799 = vmatpush1.msra.mxu0 %v6798
    %v6800 = vand.u32 %v131, 4294901760
    %v6801 = vsub.f32 %v131, %v6800
    %6802 = vmatprep.subr.mxu0 %v6801
    %v6803 = vand.u32 %v130, 4294901760
    %v6804 = vsub.f32 %v130, %v6803
    %6805 = vmatpush1.msra.mxu0 %v6804
    %v6806 = vand.u32 %v135, 4294901760
    %v6807 = vsub.f32 %v135, %v6806
    %6808 = vmatprep.subr.mxu0 %v6807
    %v6809 = vand.u32 %v134, 4294901760
    %v6810 = vsub.f32 %v134, %v6809
    %6811 = vmatpush1.msra.mxu0 %v6810
    %v6812 = vand.u32 %v139, 4294901760
    %v6813 = vsub.f32 %v139, %v6812
    %6814 = vmatprep.subr.mxu0 %v6813
    %v6815 = vand.u32 %v138, 4294901760
    %v6816 = vsub.f32 %v138, %v6815
    %6817 = vmatpush1.msra.mxu0 %v6816
    %v6818 = vand.u32 %v143, 4294901760
    %v6819 = vsub.f32 %v143, %v6818
    %6820 = vmatprep.subr.mxu0 %v6819
    %v6821 = vand.u32 %v142, 4294901760
    %v6822 = vsub.f32 %v142, %v6821
    %6823 = vmatpush1.msra.mxu0 %v6822
    %6824 = vmatprep.subr.mxu0 0.0
    %6825 = vmatpush1.msra.mxu0 0.0
    %6826 = vmatprep.subr.mxu0 0.0
    %6827 = vmatpush1.msra.mxu0 0.0
    %6828 = vmatprep.subr.mxu0 0.0
    %6829 = vmatpush1.msra.mxu0 0.0
    %6830 = vmatprep.subr.mxu0 0.0
    %6831 = vmatpush1.msra.mxu0 0.0
    %6832 = vmatprep.subr.mxu0 0.0
    %6833 = vmatpush1.msra.mxu0 0.0
    %6834 = vmatprep.subr.mxu0 0.0
    %6835 = vmatpush1.msra.mxu0 0.0
    %6836 = vmatprep.subr.mxu0 0.0
    %6837 = vmatpush1.msra.mxu0 0.0
    %6838 = vmatprep.subr.mxu0 0.0
    %6839 = vmatpush1.msra.mxu0 0.0
    %6840 = vmatprep.subr.mxu0 0.0
    %6841 = vmatpush1.msra.mxu0 0.0
    %6842 = vmatprep.subr.mxu0 0.0
    %6843 = vmatpush1.msra.mxu0 0.0
    %6844 = vmatprep.subr.mxu0 0.0
    %6845 = vmatpush1.msra.mxu0 0.0
    %6846 = vmatprep.subr.mxu0 0.0
    %6847 = vmatpush1.msra.mxu0 0.0
    %6848 = vmatprep.subr.mxu0 0.0
    %6849 = vmatpush1.msra.mxu0 0.0
    %6850 = vmatprep.subr.mxu0 0.0
    %6851 = vmatpush1.msra.mxu0 0.0
    %6852 = vmatprep.subr.mxu0 0.0
    %6853 = vmatpush1.msra.mxu0 0.0
    %6854 = vmatprep.subr.mxu0 0.0
    %6855 = vmatpush1.msra.mxu0 0.0
    %6856 = vmatprep.subr.mxu0 0.0
    %6857 = vmatpush1.msra.mxu0 0.0
    %6858 = vmatprep.subr.mxu0 0.0
    %6859 = vmatpush1.msra.mxu0 0.0
    %6860 = vmatprep.subr.mxu0 0.0
    %6861 = vmatpush1.msra.mxu0 0.0
    %6862 = vmatprep.subr.mxu0 0.0
    %6863 = vmatpush1.msra.mxu0 0.0
    %6864 = vmatprep.subr.mxu0 0.0
    %6865 = vmatpush1.msra.mxu0 0.0
    %6866 = vmatprep.subr.mxu0 0.0
    %6867 = vmatpush1.msra.mxu0 0.0
    %6868 = vmatprep.subr.mxu0 0.0
    %6869 = vmatpush1.msra.mxu0 0.0
    %6870 = vmatprep.subr.mxu0 0.0
    %6871 = vmatpush1.msra.mxu0 0.0
    %6872 = vmatprep.mubr.f32.mxu0 0.0
    %v6873 = vand.u32 %v5883, 4294901760
    %v6874 = vsub.f32 %v5883, %v6873
    %6875 = vmatmul.mubr.f32.gmra.mrb[0].mxu0 %v6874
    %v6876 = vpop.f32.mrb[0].mxu0
    %v6877 = vadd.f32 %v6772, %v6876
    %v6878 = vpop.f32.mrb[0].mxu0
    %v6879 = vadd.f32 %v6774, %v6878
    %6880 = vdwg.mxu0
    %v6881 = vand.u32 %v115, 4294901760
    %6882 = vmatprep.subr.mxu0 %v6881
    %v6883 = vand.u32 %v114, 4294901760
    %6884 = vmatpush1.msra.mxu0 %v6883
    %v6885 = vand.u32 %v119, 4294901760
    %6886 = vmatprep.subr.mxu0 %v6885
    %v6887 = vand.u32 %v118, 4294901760
    %6888 = vmatpush1.msra.mxu0 %v6887
    %v6889 = vand.u32 %v123, 4294901760
    %6890 = vmatprep.subr.mxu0 %v6889
    %v6891 = vand.u32 %v122, 4294901760
    %6892 = vmatpush1.msra.mxu0 %v6891
    %v6893 = vand.u32 %v127, 4294901760
    %6894 = vmatprep.subr.mxu0 %v6893
    %v6895 = vand.u32 %v126, 4294901760
    %6896 = vmatpush1.msra.mxu0 %v6895
    %v6897 = vand.u32 %v131, 4294901760
    %6898 = vmatprep.subr.mxu0 %v6897
    %v6899 = vand.u32 %v130, 4294901760
    %6900 = vmatpush1.msra.mxu0 %v6899
    %v6901 = vand.u32 %v135, 4294901760
    %6902 = vmatprep.subr.mxu0 %v6901
    %v6903 = vand.u32 %v134, 4294901760
    %6904 = vmatpush1.msra.mxu0 %v6903
    %v6905 = vand.u32 %v139, 4294901760
    %6906 = vmatprep.subr.mxu0 %v6905
    %v6907 = vand.u32 %v138, 4294901760
    %6908 = vmatpush1.msra.mxu0 %v6907
    %v6909 = vand.u32 %v143, 4294901760
    %6910 = vmatprep.subr.mxu0 %v6909
    %v6911 = vand.u32 %v142, 4294901760
    %6912 = vmatpush1.msra.mxu0 %v6911
    %6913 = vmatprep.subr.mxu0 0.0
    %6914 = vmatpush1.msra.mxu0 0.0
    %6915 = vmatprep.subr.mxu0 0.0
    %6916 = vmatpush1.msra.mxu0 0.0
    %6917 = vmatprep.subr.mxu0 0.0
    %6918 = vmatpush1.msra.mxu0 0.0
    %6919 = vmatprep.subr.mxu0 0.0
    %6920 = vmatpush1.msra.mxu0 0.0
    %6921 = vmatprep.subr.mxu0 0.0
    %6922 = vmatpush1.msra.mxu0 0.0
    %6923 = vmatprep.subr.mxu0 0.0
    %6924 = vmatpush1.msra.mxu0 0.0
    %6925 = vmatprep.subr.mxu0 0.0
    %6926 = vmatpush1.msra.mxu0 0.0
    %6927 = vmatprep.subr.mxu0 0.0
    %6928 = vmatpush1.msra.mxu0 0.0
    %6929 = vmatprep.subr.mxu0 0.0
    %6930 = vmatpush1.msra.mxu0 0.0
    %6931 = vmatprep.subr.mxu0 0.0
    %6932 = vmatpush1.msra.mxu0 0.0
    %6933 = vmatprep.subr.mxu0 0.0
    %6934 = vmatpush1.msra.mxu0 0.0
    %6935 = vmatprep.subr.mxu0 0.0
    %6936 = vmatpush1.msra.mxu0 0.0
    %6937 = vmatprep.subr.mxu0 0.0
    %6938 = vmatpush1.msra.mxu0 0.0
    %6939 = vmatprep.subr.mxu0 0.0
    %6940 = vmatpush1.msra.mxu0 0.0
    %6941 = vmatprep.subr.mxu0 0.0
    %6942 = vmatpush1.msra.mxu0 0.0
    %6943 = vmatprep.subr.mxu0 0.0
    %6944 = vmatpush1.msra.mxu0 0.0
    %6945 = vmatprep.subr.mxu0 0.0
    %6946 = vmatpush1.msra.mxu0 0.0
    %6947 = vmatprep.subr.mxu0 0.0
    %6948 = vmatpush1.msra.mxu0 0.0
    %6949 = vmatprep.subr.mxu0 0.0
    %6950 = vmatpush1.msra.mxu0 0.0
    %6951 = vmatprep.subr.mxu0 0.0
    %6952 = vmatpush1.msra.mxu0 0.0
    %6953 = vmatprep.subr.mxu0 0.0
    %6954 = vmatpush1.msra.mxu0 0.0
    %6955 = vmatprep.subr.mxu0 0.0
    %6956 = vmatpush1.msra.mxu0 0.0
    %6957 = vmatprep.subr.mxu0 0.0
    %6958 = vmatpush1.msra.mxu0 0.0
    %6959 = vmatprep.subr.mxu0 0.0
    %6960 = vmatpush1.msra.mxu0 0.0
    %6961 = vmatprep.mubr.f32.mxu0 0.0
    %v6962 = vand.u32 %v5883, 4294901760
    %v6963 = vsub.f32 %v5883, %v6962
    %v6964 = vand.u32 %v6963, 4294901760
    %6965 = vmatmul.mubr.f32.gmra.mrb[0].mxu0 %v6964
    %v6966 = vpop.f32.mrb[0].mxu0
    %v6967 = vadd.f32 %v6877, %v6966
    %v6968 = vpop.f32.mrb[0].mxu0
    %v6969 = vadd.f32 %v6879, %v6968
    %6970 = vdwg.mxu0
    %v6971 = vand.u32 %v115, 4294901760
    %v6972 = vsub.f32 %v115, %v6971
    %v6973 = vand.u32 %v6972, 4294901760
    %6974 = vmatprep.subr.mxu0 %v6973
    %v6975 = vand.u32 %v114, 4294901760
    %v6976 = vsub.f32 %v114, %v6975
    %v6977 = vand.u32 %v6976, 4294901760
    %6978 = vmatpush1.msra.mxu0 %v6977
    %v6979 = vand.u32 %v119, 4294901760
    %v6980 = vsub.f32 %v119, %v6979
    %v6981 = vand.u32 %v6980, 4294901760
    %6982 = vmatprep.subr.mxu0 %v6981
    %v6983 = vand.u32 %v118, 4294901760
    %v6984 = vsub.f32 %v118, %v6983
    %v6985 = vand.u32 %v6984, 4294901760
    %6986 = vmatpush1.msra.mxu0 %v6985
    %v6987 = vand.u32 %v123, 4294901760
    %v6988 = vsub.f32 %v123, %v6987
    %v6989 = vand.u32 %v6988, 4294901760
    %6990 = vmatprep.subr.mxu0 %v6989
    %v6991 = vand.u32 %v122, 4294901760
    %v6992 = vsub.f32 %v122, %v6991
    %v6993 = vand.u32 %v6992, 4294901760
    %6994 = vmatpush1.msra.mxu0 %v6993
    %v6995 = vand.u32 %v127, 4294901760
    %v6996 = vsub.f32 %v127, %v6995
    %v6997 = vand.u32 %v6996, 4294901760
    %6998 = vmatprep.subr.mxu0 %v6997
    %v6999 = vand.u32 %v126, 4294901760
    %v7000 = vsub.f32 %v126, %v6999
    %v7001 = vand.u32 %v7000, 4294901760
    %7002 = vmatpush1.msra.mxu0 %v7001
    %v7003 = vand.u32 %v131, 4294901760
    %v7004 = vsub.f32 %v131, %v7003
    %v7005 = vand.u32 %v7004, 4294901760
    %7006 = vmatprep.subr.mxu0 %v7005
    %v7007 = vand.u32 %v130, 4294901760
    %v7008 = vsub.f32 %v130, %v7007
    %v7009 = vand.u32 %v7008, 4294901760
    %7010 = vmatpush1.msra.mxu0 %v7009
    %v7011 = vand.u32 %v135, 4294901760
    %v7012 = vsub.f32 %v135, %v7011
    %v7013 = vand.u32 %v7012, 4294901760
    %7014 = vmatprep.subr.mxu0 %v7013
    %v7015 = vand.u32 %v134, 4294901760
    %v7016 = vsub.f32 %v134, %v7015
    %v7017 = vand.u32 %v7016, 4294901760
    %7018 = vmatpush1.msra.mxu0 %v7017
    %v7019 = vand.u32 %v139, 4294901760
    %v7020 = vsub.f32 %v139, %v7019
    %v7021 = vand.u32 %v7020, 4294901760
    %7022 = vmatprep.subr.mxu0 %v7021
    %v7023 = vand.u32 %v138, 4294901760
    %v7024 = vsub.f32 %v138, %v7023
    %v7025 = vand.u32 %v7024, 4294901760
    %7026 = vmatpush1.msra.mxu0 %v7025
    %v7027 = vand.u32 %v143, 4294901760
    %v7028 = vsub.f32 %v143, %v7027
    %v7029 = vand.u32 %v7028, 4294901760
    %7030 = vmatprep.subr.mxu0 %v7029
    %v7031 = vand.u32 %v142, 4294901760
    %v7032 = vsub.f32 %v142, %v7031
    %v7033 = vand.u32 %v7032, 4294901760
    %7034 = vmatpush1.msra.mxu0 %v7033
    %7035 = vmatprep.subr.mxu0 0.0
    %7036 = vmatpush1.msra.mxu0 0.0
    %7037 = vmatprep.subr.mxu0 0.0
    %7038 = vmatpush1.msra.mxu0 0.0
    %7039 = vmatprep.subr.mxu0 0.0
    %7040 = vmatpush1.msra.mxu0 0.0
    %7041 = vmatprep.subr.mxu0 0.0
    %7042 = vmatpush1.msra.mxu0 0.0
    %7043 = vmatprep.subr.mxu0 0.0
    %7044 = vmatpush1.msra.mxu0 0.0
    %7045 = vmatprep.subr.mxu0 0.0
    %7046 = vmatpush1.msra.mxu0 0.0
    %7047 = vmatprep.subr.mxu0 0.0
    %7048 = vmatpush1.msra.mxu0 0.0
    %7049 = vmatprep.subr.mxu0 0.0
    %7050 = vmatpush1.msra.mxu0 0.0
    %7051 = vmatprep.subr.mxu0 0.0
    %7052 = vmatpush1.msra.mxu0 0.0
    %7053 = vmatprep.subr.mxu0 0.0
    %7054 = vmatpush1.msra.mxu0 0.0
    %7055 = vmatprep.subr.mxu0 0.0
    %7056 = vmatpush1.msra.mxu0 0.0
    %7057 = vmatprep.subr.mxu0 0.0
    %7058 = vmatpush1.msra.mxu0 0.0
    %7059 = vmatprep.subr.mxu0 0.0
    %7060 = vmatpush1.msra.mxu0 0.0
    %7061 = vmatprep.subr.mxu0 0.0
    %7062 = vmatpush1.msra.mxu0 0.0
    %7063 = vmatprep.subr.mxu0 0.0
    %7064 = vmatpush1.msra.mxu0 0.0
    %7065 = vmatprep.subr.mxu0 0.0
    %7066 = vmatpush1.msra.mxu0 0.0
    %7067 = vmatprep.subr.mxu0 0.0
    %7068 = vmatpush1.msra.mxu0 0.0
    %7069 = vmatprep.subr.mxu0 0.0
    %7070 = vmatpush1.msra.mxu0 0.0
    %7071 = vmatprep.subr.mxu0 0.0
    %7072 = vmatpush1.msra.mxu0 0.0
    %7073 = vmatprep.subr.mxu0 0.0
    %7074 = vmatpush1.msra.mxu0 0.0
    %7075 = vmatprep.subr.mxu0 0.0
    %7076 = vmatpush1.msra.mxu0 0.0
    %7077 = vmatprep.subr.mxu0 0.0
    %7078 = vmatpush1.msra.mxu0 0.0
    %7079 = vmatprep.subr.mxu0 0.0
    %7080 = vmatpush1.msra.mxu0 0.0
    %7081 = vmatprep.subr.mxu0 0.0
    %7082 = vmatpush1.msra.mxu0 0.0
    %7083 = vmatprep.mubr.f32.mxu0 0.0
    %v7084 = vand.u32 %v5883, 4294901760
    %7085 = vmatmul.mubr.f32.gmra.mrb[0].mxu0 %v7084
    %v7086 = vpop.f32.mrb[0].mxu0
    %v7087 = vadd.f32 %v6967, %v7086
    %v7088 = vpop.f32.mrb[0].mxu0
    %v7089 = vadd.f32 %v6969, %v7088
    %7090 = vdwg.mxu0
    %v7091 = vand.u32 %v115, 4294901760
    %7092 = vmatprep.subr.mxu0 %v7091
    %v7093 = vand.u32 %v114, 4294901760
    %7094 = vmatpush1.msra.mxu0 %v7093
    %v7095 = vand.u32 %v119, 4294901760
    %7096 = vmatprep.subr.mxu0 %v7095
    %v7097 = vand.u32 %v118, 4294901760
    %7098 = vmatpush1.msra.mxu0 %v7097
    %v7099 = vand.u32 %v123, 4294901760
    %7100 = vmatprep.subr.mxu0 %v7099
    %v7101 = vand.u32 %v122, 4294901760
    %7102 = vmatpush1.msra.mxu0 %v7101
    %v7103 = vand.u32 %v127, 4294901760
    %7104 = vmatprep.subr.mxu0 %v7103
    %v7105 = vand.u32 %v126, 4294901760
    %7106 = vmatpush1.msra.mxu0 %v7105
    %v7107 = vand.u32 %v131, 4294901760
    %7108 = vmatprep.subr.mxu0 %v7107
    %v7109 = vand.u32 %v130, 4294901760
    %7110 = vmatpush1.msra.mxu0 %v7109
    %v7111 = vand.u32 %v135, 4294901760
    %7112 = vmatprep.subr.mxu0 %v7111
    %v7113 = vand.u32 %v134, 4294901760
    %7114 = vmatpush1.msra.mxu0 %v7113
    %v7115 = vand.u32 %v139, 4294901760
    %7116 = vmatprep.subr.mxu0 %v7115
    %v7117 = vand.u32 %v138, 4294901760
    %7118 = vmatpush1.msra.mxu0 %v7117
    %v7119 = vand.u32 %v143, 4294901760
    %7120 = vmatprep.subr.mxu0 %v7119
    %v7121 = vand.u32 %v142, 4294901760
    %7122 = vmatpush1.msra.mxu0 %v7121
    %7123 = vmatprep.subr.mxu0 0.0
    %7124 = vmatpush1.msra.mxu0 0.0
    %7125 = vmatprep.subr.mxu0 0.0
    %7126 = vmatpush1.msra.mxu0 0.0
    %7127 = vmatprep.subr.mxu0 0.0
    %7128 = vmatpush1.msra.mxu0 0.0
    %7129 = vmatprep.subr.mxu0 0.0
    %7130 = vmatpush1.msra.mxu0 0.0
    %7131 = vmatprep.subr.mxu0 0.0
    %7132 = vmatpush1.msra.mxu0 0.0
    %7133 = vmatprep.subr.mxu0 0.0
    %7134 = vmatpush1.msra.mxu0 0.0
    %7135 = vmatprep.subr.mxu0 0.0
    %7136 = vmatpush1.msra.mxu0 0.0
    %7137 = vmatprep.subr.mxu0 0.0
    %7138 = vmatpush1.msra.mxu0 0.0
    %7139 = vmatprep.subr.mxu0 0.0
    %7140 = vmatpush1.msra.mxu0 0.0
    %7141 = vmatprep.subr.mxu0 0.0
    %7142 = vmatpush1.msra.mxu0 0.0
    %7143 = vmatprep.subr.mxu0 0.0
    %7144 = vmatpush1.msra.mxu0 0.0
    %7145 = vmatprep.subr.mxu0 0.0
    %7146 = vmatpush1.msra.mxu0 0.0
    %7147 = vmatprep.subr.mxu0 0.0
    %7148 = vmatpush1.msra.mxu0 0.0
    %7149 = vmatprep.subr.mxu0 0.0
    %7150 = vmatpush1.msra.mxu0 0.0
    %7151 = vmatprep.subr.mxu0 0.0
    %7152 = vmatpush1.msra.mxu0 0.0
    %7153 = vmatprep.subr.mxu0 0.0
    %7154 = vmatpush1.msra.mxu0 0.0
    %7155 = vmatprep.subr.mxu0 0.0
    %7156 = vmatpush1.msra.mxu0 0.0
    %7157 = vmatprep.subr.mxu0 0.0
    %7158 = vmatpush1.msra.mxu0 0.0
    %7159 = vmatprep.subr.mxu0 0.0
    %7160 = vmatpush1.msra.mxu0 0.0
    %7161 = vmatprep.subr.mxu0 0.0
    %7162 = vmatpush1.msra.mxu0 0.0
    %7163 = vmatprep.subr.mxu0 0.0
    %7164 = vmatpush1.msra.mxu0 0.0
    %7165 = vmatprep.subr.mxu0 0.0
    %7166 = vmatpush1.msra.mxu0 0.0
    %7167 = vmatprep.subr.mxu0 0.0
    %7168 = vmatpush1.msra.mxu0 0.0
    %7169 = vmatprep.subr.mxu0 0.0
    %7170 = vmatpush1.msra.mxu0 0.0
    %7171 = vmatprep.mubr.f32.mxu0 0.0
    %v7172 = vand.u32 %v5883, 4294901760
    %7173 = vmatmul.mubr.f32.gmra.mrb[0].mxu0 %v7172
    %v7174 = vpop.f32.mrb[0].mxu0
    %v7175 = vadd.f32 %v7087, %v7174
    %v7176 = vpop.f32.mrb[0].mxu0
    %v7177 = vadd.f32 %v7089, %v7176
    %7178 = vdwg.mxu0
    %v7179 = vld [vmem:[%s10] sm:$0xff]
    %v7180 = vld [vmem:[%s10 + $0x8] sm:$0xff]
    %v7181 = vld [vmem:[%s11] sm:$0xff]
    %v7182 = vld [vmem:[%s11 + $0x8] sm:$0xff]
    %v7183 = vld [vmem:[%s11 + $0x10] sm:$0xff]
    %v7184 = vld [vmem:[%s11 + $0x18] sm:$0xff]
    %7185 = vrot.lane.b32.xlu0 %v3022, 17
    %v7186 = vpop.permute.xlu0 %7185
    %7187 = vrot.lane.b32.xlu0 %v6528, 17
    %v7188 = vpop.permute.xlu0 %7187
    %7189 = vrot.lane.b32.xlu0 %v3024, 17
    %v7190 = vpop.permute.xlu0 %7189
    %7191 = vrot.lane.b32.xlu0 %v6530, 17
    %v7192 = vpop.permute.xlu0 %7191
    %7193 = vrot.lane.b32.xlu0 %v3669, 17
    %v7194 = vpop.permute.xlu0 %7193
    %7195 = vrot.lane.b32.xlu0 %v7175, 17
    %v7196 = vpop.permute.xlu0 %7195
    %7197 = vrot.lane.b32.xlu0 %v3671, 17
    %v7198 = vpop.permute.xlu0 %7197
    %7199 = vrot.lane.b32.xlu0 %v7177, 17
    %v7200 = vpop.permute.xlu0 %7199
    %v7201 = vlaneseq
    %v7202 = vand.u32 %v7201, 127
    %vm7203 = vcmp.lt.s32.totalorder %v7202, 17
    %v7204 = vsel %vm7203, %v7194, %v7198
    %v7205 = vsel %vm7203, %v7196, %v7200
    %v7206 = vsel %vm7203, %v7190, %v7194
    %v7207 = vsel %vm7203, %v7192, %v7196
    %v7208 = vsel %vm7203, %v7186, %v7190
    %v7209 = vsel %vm7203, %v7188, %v7192
    %v7210 = vsel %vm7203, %v7198, %v7186
    %v7211 = vsel %vm7203, %v7200, %v7188
    %v7212 = vlaneseq
    %v7213 = vshrl.u32 %v7212, 7
    %v7214 = vsub.s32 0, %v7213
    %v7215 = vrot.slane %v145, %v7214
    %v7216 = vlaneseq
    %v7217 = vshrl.u32 %v7216, 7
    %v7218 = vsub.s32 0, %v7217
    %v7219 = vrot.slane %v146, %v7218
    %v7220 = vlaneseq
    %v7221 = vshrl.u32 %v7220, 7
    %v7222 = vsub.s32 0, %v7221
    %v7223 = vrot.slane %v147, %v7222
    %v7224 = vlaneseq
    %v7225 = vshrl.u32 %v7224, 7
    %v7226 = vsub.s32 0, %v7225
    %v7227 = vrot.slane %v148, %v7226
    %v7228 = vmul.f32 %v7210, %v7215
    %v7229 = vmul.f32 %v7208, %v7219
    %v7230 = vmul.f32 %v7206, %v7223
    %v7231 = vmul.f32 %v7204, %v7227
    %v7232 = vmul.f32 %v7211, %v7215
    %v7233 = vmul.f32 %v7209, %v7219
    %v7234 = vmul.f32 %v7207, %v7223
    %v7235 = vmul.f32 %v7205, %v7227
    %7236 = vst [vmem:[#allocation2] sm:$0xff] %v7228
    %7237 = vst [vmem:[#allocation2 + $0x8] sm:$0xff] %v7229
    %7238 = vst [vmem:[#allocation2 + $0x10] sm:$0xff] %v7230
    %7239 = vst [vmem:[#allocation2 + $0x18] sm:$0xff] %v7231
    %7240 = vst [vmem:[#allocation2 + $0x20] sm:$0xff] %v7232
    %7241 = vst [vmem:[#allocation2 + $0x28] sm:$0xff] %v7233
    %7242 = vst [vmem:[#allocation2 + $0x30] sm:$0xff] %v7234
    %7243 = vst [vmem:[#allocation2 + $0x38] sm:$0xff] %v7235
    %7244 = vrot.lane.b32.xlu0 %v3022, 16
    %v7245 = vpop.permute.xlu0 %7244
    %7246 = vrot.lane.b32.xlu0 %v6528, 16
    %v7247 = vpop.permute.xlu0 %7246
    %7248 = vrot.lane.b32.xlu0 %v3024, 16
    %v7249 = vpop.permute.xlu0 %7248
    %7250 = vrot.lane.b32.xlu0 %v6530, 16
    %v7251 = vpop.permute.xlu0 %7250
    %7252 = vrot.lane.b32.xlu0 %v3669, 16
    %v7253 = vpop.permute.xlu0 %7252
    %7254 = vrot.lane.b32.xlu0 %v7175, 16
    %v7255 = vpop.permute.xlu0 %7254
    %7256 = vrot.lane.b32.xlu0 %v3671, 16
    %v7257 = vpop.permute.xlu0 %7256
    %7258 = vrot.lane.b32.xlu0 %v7177, 16
    %v7259 = vpop.permute.xlu0 %7258
    %vm7260 = vcmp.lt.s32.totalorder %v7202, 16
    %v7261 = vsel %vm7260, %v7253, %v7257
    %v7262 = vsel %vm7260, %v7255, %v7259
    %v7263 = vsel %vm7260, %v7249, %v7253
    %v7264 = vsel %vm7260, %v7251, %v7255
    %v7265 = vsel %vm7260, %v7245, %v7249
    %v7266 = vsel %vm7260, %v7247, %v7251
    %v7267 = vsel %vm7260, %v7257, %v7245
    %v7268 = vsel %vm7260, %v7259, %v7247
    %v7269 = vlaneseq
    %v7270 = vshrl.u32 %v7269, 7
    %v7271 = vsub.s32 1, %v7270
    %v7272 = vrot.slane %v145, %v7271
    %v7273 = vlaneseq
    %v7274 = vshrl.u32 %v7273, 7
    %v7275 = vsub.s32 1, %v7274
    %v7276 = vrot.slane %v146, %v7275
    %v7277 = vlaneseq
    %v7278 = vshrl.u32 %v7277, 7
    %v7279 = vsub.s32 1, %v7278
    %v7280 = vrot.slane %v147, %v7279
    %v7281 = vlaneseq
    %v7282 = vshrl.u32 %v7281, 7
    %v7283 = vsub.s32 1, %v7282
    %v7284 = vrot.slane %v148, %v7283
    %v7285 = vmul.f32 %v7267, %v7272
    %v7286 = vmul.f32 %v7265, %v7276
    %v7287 = vmul.f32 %v7263, %v7280
    %v7288 = vmul.f32 %v7261, %v7284
    %v7289 = vmul.f32 %v7268, %v7272
    %v7290 = vmul.f32 %v7266, %v7276
    %v7291 = vmul.f32 %v7264, %v7280
    %v7292 = vmul.f32 %v7262, %v7284
    %7293 = vst [vmem:[#allocation2 + $0x40] sm:$0xff] %v7285
    %7294 = vst [vmem:[#allocation2 + $0x48] sm:$0xff] %v7286
    %7295 = vst [vmem:[#allocation2 + $0x50] sm:$0xff] %v7287
    %7296 = vst [vmem:[#allocation2 + $0x58] sm:$0xff] %v7288
    %7297 = vst [vmem:[#allocation2 + $0x60] sm:$0xff] %v7289
    %7298 = vst [vmem:[#allocation2 + $0x68] sm:$0xff] %v7290
    %7299 = vst [vmem:[#allocation2 + $0x70] sm:$0xff] %v7291
    %7300 = vst [vmem:[#allocation2 + $0x78] sm:$0xff] %v7292
    %7301 = vrot.lane.b32.xlu0 %v3022, 15
    %v7302 = vpop.permute.xlu0 %7301
    %7303 = vrot.lane.b32.xlu0 %v6528, 15
    %v7304 = vpop.permute.xlu0 %7303
    %7305 = vrot.lane.b32.xlu0 %v3024, 15
    %v7306 = vpop.permute.xlu0 %7305
    %7307 = vrot.lane.b32.xlu0 %v6530, 15
    %v7308 = vpop.permute.xlu0 %7307
    %7309 = vrot.lane.b32.xlu0 %v3669, 15
    %v7310 = vpop.permute.xlu0 %7309
    %7311 = vrot.lane.b32.xlu0 %v7175, 15
    %v7312 = vpop.permute.xlu0 %7311
    %7313 = vrot.lane.b32.xlu0 %v3671, 15
    %v7314 = vpop.permute.xlu0 %7313
    %7315 = vrot.lane.b32.xlu0 %v7177, 15
    %v7316 = vpop.permute.xlu0 %7315
    %vm7317 = vcmp.lt.s32.totalorder %v7202, 15
    %v7318 = vsel %vm7317, %v7310, %v7314
    %v7319 = vsel %vm7317, %v7312, %v7316
    %v7320 = vsel %vm7317, %v7306, %v7310
    %v7321 = vsel %vm7317, %v7308, %v7312
    %v7322 = vsel %vm7317, %v7302, %v7306
    %v7323 = vsel %vm7317, %v7304, %v7308
    %v7324 = vsel %vm7317, %v7314, %v7302
    %v7325 = vsel %vm7317, %v7316, %v7304
    %v7326 = vlaneseq
    %v7327 = vshrl.u32 %v7326, 7
    %v7328 = vsub.s32 2, %v7327
    %v7329 = vrot.slane %v145, %v7328
    %v7330 = vlaneseq
    %v7331 = vshrl.u32 %v7330, 7
    %v7332 = vsub.s32 2, %v7331
    %v7333 = vrot.slane %v146, %v7332
    %v7334 = vlaneseq
    %v7335 = vshrl.u32 %v7334, 7
    %v7336 = vsub.s32 2, %v7335
    %v7337 = vrot.slane %v147, %v7336
    %v7338 = vlaneseq
    %v7339 = vshrl.u32 %v7338, 7
    %v7340 = vsub.s32 2, %v7339
    %v7341 = vrot.slane %v148, %v7340
    %v7342 = vmul.f32 %v7324, %v7329
    %v7343 = vmul.f32 %v7322, %v7333
    %v7344 = vmul.f32 %v7320, %v7337
    %v7345 = vmul.f32 %v7318, %v7341
    %v7346 = vmul.f32 %v7325, %v7329
    %v7347 = vmul.f32 %v7323, %v7333
    %v7348 = vmul.f32 %v7321, %v7337
    %v7349 = vmul.f32 %v7319, %v7341
    %7350 = vst [vmem:[#allocation2 + $0x80] sm:$0xff] %v7342
    %7351 = vst [vmem:[#allocation2 + $0x88] sm:$0xff] %v7343
    %7352 = vst [vmem:[#allocation2 + $0x90] sm:$0xff] %v7344
    %7353 = vst [vmem:[#allocation2 + $0x98] sm:$0xff] %v7345
    %7354 = vst [vmem:[#allocation2 + $0xa0] sm:$0xff] %v7346
    %7355 = vst [vmem:[#allocation2 + $0xa8] sm:$0xff] %v7347
    %7356 = vst [vmem:[#allocation2 + $0xb0] sm:$0xff] %v7348
    %7357 = vst [vmem:[#allocation2 + $0xb8] sm:$0xff] %v7349
    %7358 = vrot.lane.b32.xlu0 %v3022, 1
    %v7359 = vpop.permute.xlu0 %7358
    %7360 = vrot.lane.b32.xlu0 %v6528, 1
    %v7361 = vpop.permute.xlu0 %7360
    %7362 = vrot.lane.b32.xlu0 %v3024, 1
    %v7363 = vpop.permute.xlu0 %7362
    %7364 = vrot.lane.b32.xlu0 %v6530, 1
    %v7365 = vpop.permute.xlu0 %7364
    %7366 = vrot.lane.b32.xlu0 %v3669, 1
    %v7367 = vpop.permute.xlu0 %7366
    %7368 = vrot.lane.b32.xlu0 %v7175, 1
    %v7369 = vpop.permute.xlu0 %7368
    %7370 = vrot.lane.b32.xlu0 %v3671, 1
    %v7371 = vpop.permute.xlu0 %7370
    %7372 = vrot.lane.b32.xlu0 %v7177, 1
    %v7373 = vpop.permute.xlu0 %7372
    %vm7374 = vcmp.lt.s32.totalorder %v7202, 1
    %v7375 = vsel %vm7374, %v7367, %v7371
    %v7376 = vsel %vm7374, %v7369, %v7373
    %v7377 = vsel %vm7374, %v7363, %v7367
    %v7378 = vsel %vm7374, %v7365, %v7369
    %v7379 = vsel %vm7374, %v7359, %v7363
    %v7380 = vsel %vm7374, %v7361, %v7365
    %v7381 = vsel %vm7374, %v7371, %v7359
    %v7382 = vsel %vm7374, %v7373, %v7361
    %v7383 = vlaneseq
    %v7384 = vshrl.u32 %v7383, 7
    %v7385 = vsub.s32 3, %v7384
    %v7386 = vrot.slane %v145, %v7385
    %v7387 = vlaneseq
    %v7388 = vshrl.u32 %v7387, 7
    %v7389 = vsub.s32 3, %v7388
    %v7390 = vrot.slane %v146, %v7389
    %v7391 = vlaneseq
    %v7392 = vshrl.u32 %v7391, 7
    %v7393 = vsub.s32 3, %v7392
    %v7394 = vrot.slane %v147, %v7393
    %v7395 = vlaneseq
    %v7396 = vshrl.u32 %v7395, 7
    %v7397 = vsub.s32 3, %v7396
    %v7398 = vrot.slane %v148, %v7397
    %v7399 = vmul.f32 %v7381, %v7386
    %v7400 = vmul.f32 %v7379, %v7390
    %v7401 = vmul.f32 %v7377, %v7394
    %v7402 = vmul.f32 %v7375, %v7398
    %v7403 = vmul.f32 %v7382, %v7386
    %v7404 = vmul.f32 %v7380, %v7390
    %v7405 = vmul.f32 %v7378, %v7394
    %v7406 = vmul.f32 %v7376, %v7398
    %7407 = vst [vmem:[#allocation2 + $0xc0] sm:$0xff] %v7399
    %7408 = vst [vmem:[#allocation2 + $0xc8] sm:$0xff] %v7400
    %7409 = vst [vmem:[#allocation2 + $0xd0] sm:$0xff] %v7401
    %7410 = vst [vmem:[#allocation2 + $0xd8] sm:$0xff] %v7402
    %7411 = vst [vmem:[#allocation2 + $0xe0] sm:$0xff] %v7403
    %7412 = vst [vmem:[#allocation2 + $0xe8] sm:$0xff] %v7404
    %7413 = vst [vmem:[#allocation2 + $0xf0] sm:$0xff] %v7405
    %7414 = vst [vmem:[#allocation2 + $0xf8] sm:$0xff] %v7406
    %v7415 = vlaneseq
    %v7416 = vshrl.u32 %v7415, 7
    %v7417 = vsub.s32 4, %v7416
    %v7418 = vrot.slane %v145, %v7417
    %v7419 = vlaneseq
    %v7420 = vshrl.u32 %v7419, 7
    %v7421 = vsub.s32 4, %v7420
    %v7422 = vrot.slane %v146, %v7421
    %v7423 = vlaneseq
    %v7424 = vshrl.u32 %v7423, 7
    %v7425 = vsub.s32 4, %v7424
    %v7426 = vrot.slane %v147, %v7425
    %v7427 = vlaneseq
    %v7428 = vshrl.u32 %v7427, 7
    %v7429 = vsub.s32 4, %v7428
    %v7430 = vrot.slane %v148, %v7429
    %v7431 = vmul.f32 %v3022, %v7418
    %v7432 = vmul.f32 %v3024, %v7422
    %v7433 = vmul.f32 %v3669, %v7426
    %v7434 = vmul.f32 %v3671, %v7430
    %v7435 = vmul.f32 %v6528, %v7418
    %v7436 = vmul.f32 %v6530, %v7422
    %v7437 = vmul.f32 %v7175, %v7426
    %v7438 = vmul.f32 %v7177, %v7430
    %7439 = vst [vmem:[#allocation2 + $0x100] sm:$0xff] %v7431
    %7440 = vst [vmem:[#allocation2 + $0x108] sm:$0xff] %v7432
    %7441 = vst [vmem:[#allocation2 + $0x110] sm:$0xff] %v7433
    %7442 = vst [vmem:[#allocation2 + $0x118] sm:$0xff] %v7434
    %7443 = vst [vmem:[#allocation2 + $0x120] sm:$0xff] %v7435
    %7444 = vst [vmem:[#allocation2 + $0x128] sm:$0xff] %v7436
    %7445 = vst [vmem:[#allocation2 + $0x130] sm:$0xff] %v7437
    %7446 = vst [vmem:[#allocation2 + $0x138] sm:$0xff] %v7438
    %7447 = vrot.lane.b32.xlu0 %v3022, 127
    %v7448 = vpop.permute.xlu0 %7447
    %7449 = vrot.lane.b32.xlu0 %v6528, 127
    %v7450 = vpop.permute.xlu0 %7449
    %7451 = vrot.lane.b32.xlu0 %v3024, 127
    %v7452 = vpop.permute.xlu0 %7451
    %7453 = vrot.lane.b32.xlu0 %v6530, 127
    %v7454 = vpop.permute.xlu0 %7453
    %7455 = vrot.lane.b32.xlu0 %v3669, 127
    %v7456 = vpop.permute.xlu0 %7455
    %7457 = vrot.lane.b32.xlu0 %v7175, 127
    %v7458 = vpop.permute.xlu0 %7457
    %7459 = vrot.lane.b32.xlu0 %v3671, 127
    %v7460 = vpop.permute.xlu0 %7459
    %7461 = vrot.lane.b32.xlu0 %v7177, 127
    %v7462 = vpop.permute.xlu0 %7461
    %vm7463 = vcmp.lt.s32.totalorder %v7202, 127
    %v7464 = vsel %vm7463, %v7456, %v7460
    %v7465 = vsel %vm7463, %v7458, %v7462
    %v7466 = vsel %vm7463, %v7452, %v7456
    %v7467 = vsel %vm7463, %v7454, %v7458
    %v7468 = vsel %vm7463, %v7448, %v7452
    %v7469 = vsel %vm7463, %v7450, %v7454
    %v7470 = vsel %vm7463, %v7460, %v7448
    %v7471 = vsel %vm7463, %v7462, %v7450
    %v7472 = vlaneseq
    %v7473 = vshrl.u32 %v7472, 7
    %v7474 = vsub.s32 5, %v7473
    %v7475 = vrot.slane %v145, %v7474
    %v7476 = vlaneseq
    %v7477 = vshrl.u32 %v7476, 7
    %v7478 = vsub.s32 5, %v7477
    %v7479 = vrot.slane %v146, %v7478
    %v7480 = vlaneseq
    %v7481 = vshrl.u32 %v7480, 7
    %v7482 = vsub.s32 5, %v7481
    %v7483 = vrot.slane %v147, %v7482
    %v7484 = vlaneseq
    %v7485 = vshrl.u32 %v7484, 7
    %v7486 = vsub.s32 5, %v7485
    %v7487 = vrot.slane %v148, %v7486
    %v7488 = vmul.f32 %v7468, %v7475
    %v7489 = vmul.f32 %v7466, %v7479
    %v7490 = vmul.f32 %v7464, %v7483
    %v7491 = vmul.f32 %v7470, %v7487
    %v7492 = vmul.f32 %v7469, %v7475
    %v7493 = vmul.f32 %v7467, %v7479
    %v7494 = vmul.f32 %v7465, %v7483
    %v7495 = vmul.f32 %v7471, %v7487
    %7496 = vst [vmem:[#allocation2 + $0x140] sm:$0xff] %v7488
    %7497 = vst [vmem:[#allocation2 + $0x148] sm:$0xff] %v7489
    %7498 = vst [vmem:[#allocation2 + $0x150] sm:$0xff] %v7490
    %7499 = vst [vmem:[#allocation2 + $0x158] sm:$0xff] %v7491
    %7500 = vst [vmem:[#allocation2 + $0x160] sm:$0xff] %v7492
    %7501 = vst [vmem:[#allocation2 + $0x168] sm:$0xff] %v7493
    %7502 = vst [vmem:[#allocation2 + $0x170] sm:$0xff] %v7494
    %7503 = vst [vmem:[#allocation2 + $0x178] sm:$0xff] %v7495
    %7504 = vrot.lane.b32.xlu0 %v3022, 113
    %v7505 = vpop.permute.xlu0 %7504
    %7506 = vrot.lane.b32.xlu0 %v6528, 113
    %v7507 = vpop.permute.xlu0 %7506
    %7508 = vrot.lane.b32.xlu0 %v3024, 113
    %v7509 = vpop.permute.xlu0 %7508
    %7510 = vrot.lane.b32.xlu0 %v6530, 113
    %v7511 = vpop.permute.xlu0 %7510
    %7512 = vrot.lane.b32.xlu0 %v3669, 113
    %v7513 = vpop.permute.xlu0 %7512
    %7514 = vrot.lane.b32.xlu0 %v7175, 113
    %v7515 = vpop.permute.xlu0 %7514
    %7516 = vrot.lane.b32.xlu0 %v3671, 113
    %v7517 = vpop.permute.xlu0 %7516
    %7518 = vrot.lane.b32.xlu0 %v7177, 113
    %v7519 = vpop.permute.xlu0 %7518
    %vm7520 = vcmp.lt.s32.totalorder %v7202, 113
    %v7521 = vsel %vm7520, %v7513, %v7517
    %v7522 = vsel %vm7520, %v7515, %v7519
    %v7523 = vsel %vm7520, %v7509, %v7513
    %v7524 = vsel %vm7520, %v7511, %v7515
    %v7525 = vsel %vm7520, %v7505, %v7509
    %v7526 = vsel %vm7520, %v7507, %v7511
    %v7527 = vsel %vm7520, %v7517, %v7505
    %v7528 = vsel %vm7520, %v7519, %v7507
    %v7529 = vlaneseq
    %v7530 = vshrl.u32 %v7529, 7
    %v7531 = vsub.s32 6, %v7530
    %v7532 = vrot.slane %v145, %v7531
    %v7533 = vlaneseq
    %v7534 = vshrl.u32 %v7533, 7
    %v7535 = vsub.s32 6, %v7534
    %v7536 = vrot.slane %v146, %v7535
    %v7537 = vlaneseq
    %v7538 = vshrl.u32 %v7537, 7
    %v7539 = vsub.s32 6, %v7538
    %v7540 = vrot.slane %v147, %v7539
    %v7541 = vlaneseq
    %v7542 = vshrl.u32 %v7541, 7
    %v7543 = vsub.s32 6, %v7542
    %v7544 = vrot.slane %v148, %v7543
    %v7545 = vmul.f32 %v7525, %v7532
    %v7546 = vmul.f32 %v7523, %v7536
    %v7547 = vmul.f32 %v7521, %v7540
    %v7548 = vmul.f32 %v7527, %v7544
    %v7549 = vmul.f32 %v7526, %v7532
    %v7550 = vmul.f32 %v7524, %v7536
    %v7551 = vmul.f32 %v7522, %v7540
    %v7552 = vmul.f32 %v7528, %v7544
    %7553 = vst [vmem:[#allocation2 + $0x180] sm:$0xff] %v7545
    %7554 = vst [vmem:[#allocation2 + $0x188] sm:$0xff] %v7546
    %7555 = vst [vmem:[#allocation2 + $0x190] sm:$0xff] %v7547
    %7556 = vst [vmem:[#allocation2 + $0x198] sm:$0xff] %v7548
    %7557 = vst [vmem:[#allocation2 + $0x1a0] sm:$0xff] %v7549
    %7558 = vst [vmem:[#allocation2 + $0x1a8] sm:$0xff] %v7550
    %7559 = vst [vmem:[#allocation2 + $0x1b0] sm:$0xff] %v7551
    %7560 = vst [vmem:[#allocation2 + $0x1b8] sm:$0xff] %v7552
    %7561 = vrot.lane.b32.xlu0 %v3022, 112
    %v7562 = vpop.permute.xlu0 %7561
    %7563 = vrot.lane.b32.xlu0 %v6528, 112
    %v7564 = vpop.permute.xlu0 %7563
    %7565 = vrot.lane.b32.xlu0 %v3024, 112
    %v7566 = vpop.permute.xlu0 %7565
    %7567 = vrot.lane.b32.xlu0 %v6530, 112
    %v7568 = vpop.permute.xlu0 %7567
    %7569 = vrot.lane.b32.xlu0 %v3669, 112
    %v7570 = vpop.permute.xlu0 %7569
    %7571 = vrot.lane.b32.xlu0 %v7175, 112
    %v7572 = vpop.permute.xlu0 %7571
    %7573 = vrot.lane.b32.xlu0 %v3671, 112
    %v7574 = vpop.permute.xlu0 %7573
    %7575 = vrot.lane.b32.xlu0 %v7177, 112
    %v7576 = vpop.permute.xlu0 %7575
    %vm7577 = vcmp.lt.s32.totalorder %v7202, 112
    %v7578 = vsel %vm7577, %v7570, %v7574
    %v7579 = vsel %vm7577, %v7572, %v7576
    %v7580 = vsel %vm7577, %v7566, %v7570
    %v7581 = vsel %vm7577, %v7568, %v7572
    %v7582 = vsel %vm7577, %v7562, %v7566
    %v7583 = vsel %vm7577, %v7564, %v7568
    %v7584 = vsel %vm7577, %v7574, %v7562
    %v7585 = vsel %vm7577, %v7576, %v7564
    %v7586 = vlaneseq
    %v7587 = vshrl.u32 %v7586, 7
    %v7588 = vsub.s32 7, %v7587
    %v7589 = vrot.slane %v145, %v7588
    %v7590 = vlaneseq
    %v7591 = vshrl.u32 %v7590, 7
    %v7592 = vsub.s32 7, %v7591
    %v7593 = vrot.slane %v146, %v7592
    %v7594 = vlaneseq
    %v7595 = vshrl.u32 %v7594, 7
    %v7596 = vsub.s32 7, %v7595
    %v7597 = vrot.slane %v147, %v7596
    %v7598 = vlaneseq
    %v7599 = vshrl.u32 %v7598, 7
    %v7600 = vsub.s32 7, %v7599
    %v7601 = vrot.slane %v148, %v7600
    %v7602 = vmul.f32 %v7582, %v7589
    %v7603 = vmul.f32 %v7580, %v7593
    %v7604 = vmul.f32 %v7578, %v7597
    %v7605 = vmul.f32 %v7584, %v7601
    %v7606 = vmul.f32 %v7583, %v7589
    %v7607 = vmul.f32 %v7581, %v7593
    %v7608 = vmul.f32 %v7579, %v7597
    %v7609 = vmul.f32 %v7585, %v7601
    %7610 = vst [vmem:[#allocation2 + $0x1c0] sm:$0xff] %v7602
    %7611 = vst [vmem:[#allocation2 + $0x1c8] sm:$0xff] %v7603
    %7612 = vst [vmem:[#allocation2 + $0x1d0] sm:$0xff] %v7604
    %7613 = vst [vmem:[#allocation2 + $0x1d8] sm:$0xff] %v7605
    %7614 = vst [vmem:[#allocation2 + $0x1e0] sm:$0xff] %v7606
    %7615 = vst [vmem:[#allocation2 + $0x1e8] sm:$0xff] %v7607
    %7616 = vst [vmem:[#allocation2 + $0x1f0] sm:$0xff] %v7608
    %7617 = vst [vmem:[#allocation2 + $0x1f8] sm:$0xff] %v7609
    %7618 = vrot.lane.b32.xlu0 %v3022, 111
    %v7619 = vpop.permute.xlu0 %7618
    %7620 = vrot.lane.b32.xlu0 %v6528, 111
    %v7621 = vpop.permute.xlu0 %7620
    %7622 = vrot.lane.b32.xlu0 %v3024, 111
    %v7623 = vpop.permute.xlu0 %7622
    %7624 = vrot.lane.b32.xlu0 %v6530, 111
    %v7625 = vpop.permute.xlu0 %7624
    %7626 = vrot.lane.b32.xlu0 %v3669, 111
    %v7627 = vpop.permute.xlu0 %7626
    %7628 = vrot.lane.b32.xlu0 %v7175, 111
    %v7629 = vpop.permute.xlu0 %7628
    %7630 = vrot.lane.b32.xlu0 %v3671, 111
    %v7631 = vpop.permute.xlu0 %7630
    %7632 = vrot.lane.b32.xlu0 %v7177, 111
    %v7633 = vpop.permute.xlu0 %7632
    %vm7634 = vcmp.lt.s32.totalorder %v7202, 111
    %v7635 = vsel %vm7634, %v7627, %v7631
    %v7636 = vsel %vm7634, %v7629, %v7633
    %v7637 = vsel %vm7634, %v7623, %v7627
    %v7638 = vsel %vm7634, %v7625, %v7629
    %v7639 = vsel %vm7634, %v7619, %v7623
    %v7640 = vsel %vm7634, %v7621, %v7625
    %v7641 = vsel %vm7634, %v7631, %v7619
    %v7642 = vsel %vm7634, %v7633, %v7621
    %v7643 = vlaneseq
    %v7644 = vshrl.u32 %v7643, 7
    %v7645 = vsub.s32 0, %v7644
    %v7646 = vrot.slane %v149, %v7645
    %v7647 = vlaneseq
    %v7648 = vshrl.u32 %v7647, 7
    %v7649 = vsub.s32 0, %v7648
    %v7650 = vrot.slane %v150, %v7649
    %v7651 = vlaneseq
    %v7652 = vshrl.u32 %v7651, 7
    %v7653 = vsub.s32 0, %v7652
    %v7654 = vrot.slane %v151, %v7653
    %v7655 = vlaneseq
    %v7656 = vshrl.u32 %v7655, 7
    %v7657 = vsub.s32 0, %v7656
    %v7658 = vrot.slane %v152, %v7657
    %v7659 = vmul.f32 %v7639, %v7646
    %v7660 = vmul.f32 %v7637, %v7650
    %v7661 = vmul.f32 %v7635, %v7654
    %v7662 = vmul.f32 %v7641, %v7658
    %v7663 = vmul.f32 %v7640, %v7646
    %v7664 = vmul.f32 %v7638, %v7650
    %v7665 = vmul.f32 %v7636, %v7654
    %v7666 = vmul.f32 %v7642, %v7658
    %7667 = vst [vmem:[#allocation2 + $0x200] sm:$0xff] %v7659
    %7668 = vst [vmem:[#allocation2 + $0x208] sm:$0xff] %v7660
    %7669 = vst [vmem:[#allocation2 + $0x210] sm:$0xff] %v7661
    %7670 = vst [vmem:[#allocation2 + $0x218] sm:$0xff] %v7662
    %7671 = vst [vmem:[#allocation2 + $0x220] sm:$0xff] %v7663
    %7672 = vst [vmem:[#allocation2 + $0x228] sm:$0xff] %v7664
    %7673 = vst [vmem:[#allocation2 + $0x230] sm:$0xff] %v7665
    %7674 = vst [vmem:[#allocation2 + $0x238] sm:$0xff] %v7666
    %v7675 = vld [vmem:[#allocation2] sm:$0xff]
    %v7676 = vld [vmem:[#allocation2 + $0x8] sm:$0xff]
    %v7677 = vld [vmem:[#allocation2 + $0x10] sm:$0xff]
    %v7678 = vld [vmem:[#allocation2 + $0x18] sm:$0xff]
    %v7679 = vld [vmem:[#allocation2 + $0x20] sm:$0xff]
    %v7680 = vld [vmem:[#allocation2 + $0x28] sm:$0xff]
    %v7681 = vld [vmem:[#allocation2 + $0x30] sm:$0xff]
    %v7682 = vld [vmem:[#allocation2 + $0x38] sm:$0xff]
    %v7683 = vld [vmem:[#allocation2 + $0x40] sm:$0xff]
    %v7684 = vld [vmem:[#allocation2 + $0x48] sm:$0xff]
    %v7685 = vld [vmem:[#allocation2 + $0x50] sm:$0xff]
    %v7686 = vld [vmem:[#allocation2 + $0x58] sm:$0xff]
    %v7687 = vld [vmem:[#allocation2 + $0x60] sm:$0xff]
    %v7688 = vld [vmem:[#allocation2 + $0x68] sm:$0xff]
    %v7689 = vld [vmem:[#allocation2 + $0x70] sm:$0xff]
    %v7690 = vld [vmem:[#allocation2 + $0x78] sm:$0xff]
    %v7691 = vld [vmem:[#allocation2 + $0x80] sm:$0xff]
    %v7692 = vld [vmem:[#allocation2 + $0x88] sm:$0xff]
    %v7693 = vld [vmem:[#allocation2 + $0x90] sm:$0xff]
    %v7694 = vld [vmem:[#allocation2 + $0x98] sm:$0xff]
    %v7695 = vld [vmem:[#allocation2 + $0xa0] sm:$0xff]
    %v7696 = vld [vmem:[#allocation2 + $0xa8] sm:$0xff]
    %v7697 = vld [vmem:[#allocation2 + $0xb0] sm:$0xff]
    %v7698 = vld [vmem:[#allocation2 + $0xb8] sm:$0xff]
    %v7699 = vld [vmem:[#allocation2 + $0xc0] sm:$0xff]
    %v7700 = vld [vmem:[#allocation2 + $0xc8] sm:$0xff]
    %v7701 = vld [vmem:[#allocation2 + $0xd0] sm:$0xff]
    %v7702 = vld [vmem:[#allocation2 + $0xd8] sm:$0xff]
    %v7703 = vld [vmem:[#allocation2 + $0xe0] sm:$0xff]
    %v7704 = vld [vmem:[#allocation2 + $0xe8] sm:$0xff]
    %v7705 = vld [vmem:[#allocation2 + $0xf0] sm:$0xff]
    %v7706 = vld [vmem:[#allocation2 + $0xf8] sm:$0xff]
    %v7707 = vld [vmem:[#allocation2 + $0x100] sm:$0xff]
    %v7708 = vld [vmem:[#allocation2 + $0x108] sm:$0xff]
    %v7709 = vld [vmem:[#allocation2 + $0x110] sm:$0xff]
    %v7710 = vld [vmem:[#allocation2 + $0x118] sm:$0xff]
    %v7711 = vld [vmem:[#allocation2 + $0x120] sm:$0xff]
    %v7712 = vld [vmem:[#allocation2 + $0x128] sm:$0xff]
    %v7713 = vld [vmem:[#allocation2 + $0x130] sm:$0xff]
    %v7714 = vld [vmem:[#allocation2 + $0x138] sm:$0xff]
    %v7715 = vld [vmem:[#allocation2 + $0x140] sm:$0xff]
    %v7716 = vld [vmem:[#allocation2 + $0x148] sm:$0xff]
    %v7717 = vld [vmem:[#allocation2 + $0x150] sm:$0xff]
    %v7718 = vld [vmem:[#allocation2 + $0x158] sm:$0xff]
    %v7719 = vld [vmem:[#allocation2 + $0x160] sm:$0xff]
    %v7720 = vld [vmem:[#allocation2 + $0x168] sm:$0xff]
    %v7721 = vld [vmem:[#allocation2 + $0x170] sm:$0xff]
    %v7722 = vld [vmem:[#allocation2 + $0x178] sm:$0xff]
    %v7723 = vld [vmem:[#allocation2 + $0x180] sm:$0xff]
    %v7724 = vld [vmem:[#allocation2 + $0x188] sm:$0xff]
    %v7725 = vld [vmem:[#allocation2 + $0x190] sm:$0xff]
    %v7726 = vld [vmem:[#allocation2 + $0x198] sm:$0xff]
    %v7727 = vld [vmem:[#allocation2 + $0x1a0] sm:$0xff]
    %v7728 = vld [vmem:[#allocation2 + $0x1a8] sm:$0xff]
    %v7729 = vld [vmem:[#allocation2 + $0x1b0] sm:$0xff]
    %v7730 = vld [vmem:[#allocation2 + $0x1b8] sm:$0xff]
    %v7731 = vld [vmem:[#allocation2 + $0x1c0] sm:$0xff]
    %v7732 = vld [vmem:[#allocation2 + $0x1c8] sm:$0xff]
    %v7733 = vld [vmem:[#allocation2 + $0x1d0] sm:$0xff]
    %v7734 = vld [vmem:[#allocation2 + $0x1d8] sm:$0xff]
    %v7735 = vld [vmem:[#allocation2 + $0x1e0] sm:$0xff]
    %v7736 = vld [vmem:[#allocation2 + $0x1e8] sm:$0xff]
    %v7737 = vld [vmem:[#allocation2 + $0x1f0] sm:$0xff]
    %v7738 = vld [vmem:[#allocation2 + $0x1f8] sm:$0xff]
    %v7739 = vld [vmem:[#allocation2 + $0x200] sm:$0xff]
    %v7740 = vld [vmem:[#allocation2 + $0x208] sm:$0xff]
    %v7741 = vld [vmem:[#allocation2 + $0x210] sm:$0xff]
    %v7742 = vld [vmem:[#allocation2 + $0x218] sm:$0xff]
    %v7743 = vld [vmem:[#allocation2 + $0x220] sm:$0xff]
    %v7744 = vld [vmem:[#allocation2 + $0x228] sm:$0xff]
    %v7745 = vld [vmem:[#allocation2 + $0x230] sm:$0xff]
    %v7746 = vld [vmem:[#allocation2 + $0x238] sm:$0xff]
    %vm7747 = vcmask 130048
    %v7749 = vsel %vm7747, %v7180, 0
    %v7751 = vand.u32 %v7676, 4294901760
    %7752 = vmatprep.subr.mxu0 %v7751
    %v7753 = vand.u32 %v7675, 4294901760
    %7754 = vmatpush1.msra.mxu0 %v7753
    %v7755 = vand.u32 %v7680, 4294901760
    %7756 = vmatprep.subr.mxu0 %v7755
    %v7757 = vand.u32 %v7679, 4294901760
    %7758 = vmatpush1.msra.mxu0 %v7757
    %v7759 = vand.u32 %v7684, 4294901760
    %7760 = vmatprep.subr.mxu0 %v7759
    %v7761 = vand.u32 %v7683, 4294901760
    %7762 = vmatpush1.msra.mxu0 %v7761
    %v7763 = vand.u32 %v7688, 4294901760
    %7764 = vmatprep.subr.mxu0 %v7763
    %v7765 = vand.u32 %v7687, 4294901760
    %7766 = vmatpush1.msra.mxu0 %v7765
    %v7767 = vand.u32 %v7692, 4294901760
    %7768 = vmatprep.subr.mxu0 %v7767
    %v7769 = vand.u32 %v7691, 4294901760
    %7770 = vmatpush1.msra.mxu0 %v7769
    %v7771 = vand.u32 %v7696, 4294901760
    %7772 = vmatprep.subr.mxu0 %v7771
    %v7773 = vand.u32 %v7695, 4294901760
    %7774 = vmatpush1.msra.mxu0 %v7773
    %v7775 = vand.u32 %v7700, 4294901760
    %7776 = vmatprep.subr.mxu0 %v7775
    %v7777 = vand.u32 %v7699, 4294901760
    %7778 = vmatpush1.msra.mxu0 %v7777
    %v7779 = vand.u32 %v7704, 4294901760
    %7780 = vmatprep.subr.mxu0 %v7779
    %v7781 = vand.u32 %v7703, 4294901760
    %7782 = vmatpush1.msra.mxu0 %v7781
    %v7783 = vand.u32 %v7708, 4294901760
    %7784 = vmatprep.subr.mxu0 %v7783
    %v7785 = vand.u32 %v7707, 4294901760
    %7786 = vmatpush1.msra.mxu0 %v7785
    %v7787 = vand.u32 %v7712, 4294901760
    %7788 = vmatprep.subr.mxu0 %v7787
    %v7789 = vand.u32 %v7711, 4294901760
    %7790 = vmatpush1.msra.mxu0 %v7789
    %v7791 = vand.u32 %v7716, 4294901760
    %7792 = vmatprep.subr.mxu0 %v7791
    %v7793 = vand.u32 %v7715, 4294901760
    %7794 = vmatpush1.msra.mxu0 %v7793
    %v7795 = vand.u32 %v7720, 4294901760
    %7796 = vmatprep.subr.mxu0 %v7795
    %v7797 = vand.u32 %v7719, 4294901760
    %7798 = vmatpush1.msra.mxu0 %v7797
    %v7799 = vand.u32 %v7724, 4294901760
    %7800 = vmatprep.subr.mxu0 %v7799
    %v7801 = vand.u32 %v7723, 4294901760
    %7802 = vmatpush1.msra.mxu0 %v7801
    %v7803 = vand.u32 %v7728, 4294901760
    %7804 = vmatprep.subr.mxu0 %v7803
    %v7805 = vand.u32 %v7727, 4294901760
    %7806 = vmatpush1.msra.mxu0 %v7805
    %v7807 = vand.u32 %v7732, 4294901760
    %7808 = vmatprep.subr.mxu0 %v7807
    %v7809 = vand.u32 %v7731, 4294901760
    %7810 = vmatpush1.msra.mxu0 %v7809
    %v7811 = vand.u32 %v7736, 4294901760
    %7812 = vmatprep.subr.mxu0 %v7811
    %v7813 = vand.u32 %v7735, 4294901760
    %7814 = vmatpush1.msra.mxu0 %v7813
    %v7815 = vand.u32 %v7740, 4294901760
    %7816 = vmatprep.subr.mxu0 %v7815
    %v7817 = vand.u32 %v7739, 4294901760
    %7818 = vmatpush1.msra.mxu0 %v7817
    %v7819 = vand.u32 %v7744, 4294901760
    %7820 = vmatprep.subr.mxu0 %v7819
    %v7821 = vand.u32 %v7743, 4294901760
    %7822 = vmatpush1.msra.mxu0 %v7821
    %7823 = vmatprep.subr.mxu0 0.0
    %7824 = vmatpush1.msra.mxu0 0.0
    %7825 = vmatprep.subr.mxu0 0.0
    %7826 = vmatpush1.msra.mxu0 0.0
    %7827 = vmatprep.subr.mxu0 0.0
    %7828 = vmatpush1.msra.mxu0 0.0
    %7829 = vmatprep.subr.mxu0 0.0
    %7830 = vmatpush1.msra.mxu0 0.0
    %7831 = vmatprep.subr.mxu0 0.0
    %7832 = vmatpush1.msra.mxu0 0.0
    %7833 = vmatprep.subr.mxu0 0.0
    %7834 = vmatpush1.msra.mxu0 0.0
    %7835 = vmatprep.subr.mxu0 0.0
    %7836 = vmatpush1.msra.mxu0 0.0
    %7837 = vmatprep.subr.mxu0 0.0
    %7838 = vmatpush1.msra.mxu0 0.0
    %7839 = vmatprep.subr.mxu0 0.0
    %7840 = vmatpush1.msra.mxu0 0.0
    %7841 = vmatprep.subr.mxu0 0.0
    %7842 = vmatpush1.msra.mxu0 0.0
    %7843 = vmatprep.subr.mxu0 0.0
    %7844 = vmatpush1.msra.mxu0 0.0
    %7845 = vmatprep.subr.mxu0 0.0
    %7846 = vmatpush1.msra.mxu0 0.0
    %7847 = vmatprep.subr.mxu0 0.0
    %7848 = vmatpush1.msra.mxu0 0.0
    %7849 = vmatprep.subr.mxu0 0.0
    %7850 = vmatpush1.msra.mxu0 0.0
    %v7851 = vand.u32 %v7749, 4294901760
    %v7852 = vsub.f32 %v7749, %v7851
    %v7853 = vand.u32 %v7852, 4294901760
    %v7854 = vsub.f32 %v7852, %v7853
    %v7855 = vand.u32 %v7854, 4294901760
    %7856 = vmatprep.mubr.f32.mxu0 %v7855
    %v7857 = vand.u32 %v7179, 4294901760
    %v7858 = vsub.f32 %v7179, %v7857
    %v7859 = vand.u32 %v7858, 4294901760
    %v7860 = vsub.f32 %v7858, %v7859
    %v7861 = vand.u32 %v7860, 4294901760
    %7862 = vmatmul.mubr.f32.gmra.mrb[0].mxu0 %v7861
    %v7863 = vpop.f32.mrb[0].mxu0
    %v7864 = vadd.f32 %v7181, %v7863
    %v7865 = vpop.f32.mrb[0].mxu0
    %v7866 = vadd.f32 %v7182, %v7865
    %7867 = vdwg.mxu0
    %v7868 = vand.u32 %v7676, 4294901760
    %v7869 = vsub.f32 %v7676, %v7868
    %v7870 = vand.u32 %v7869, 4294901760
    %v7871 = vsub.f32 %v7869, %v7870
    %v7872 = vand.u32 %v7871, 4294901760
    %7873 = vmatprep.subr.mxu0 %v7872
    %v7874 = vand.u32 %v7675, 4294901760
    %v7875 = vsub.f32 %v7675, %v7874
    %v7876 = vand.u32 %v7875, 4294901760
    %v7877 = vsub.f32 %v7875, %v7876
    %v7878 = vand.u32 %v7877, 4294901760
    %7879 = vmatpush1.msra.mxu0 %v7878
    %v7880 = vand.u32 %v7680, 4294901760
    %v7881 = vsub.f32 %v7680, %v7880
    %v7882 = vand.u32 %v7881, 4294901760
    %v7883 = vsub.f32 %v7881, %v7882
    %v7884 = vand.u32 %v7883, 4294901760
    %7885 = vmatprep.subr.mxu0 %v7884
    %v7886 = vand.u32 %v7679, 4294901760
    %v7887 = vsub.f32 %v7679, %v7886
    %v7888 = vand.u32 %v7887, 4294901760
    %v7889 = vsub.f32 %v7887, %v7888
    %v7890 = vand.u32 %v7889, 4294901760
    %7891 = vmatpush1.msra.mxu0 %v7890
    %v7892 = vand.u32 %v7684, 4294901760
    %v7893 = vsub.f32 %v7684, %v7892
    %v7894 = vand.u32 %v7893, 4294901760
    %v7895 = vsub.f32 %v7893, %v7894
    %v7896 = vand.u32 %v7895, 4294901760
    %7897 = vmatprep.subr.mxu0 %v7896
    %v7898 = vand.u32 %v7683, 4294901760
    %v7899 = vsub.f32 %v7683, %v7898
    %v7900 = vand.u32 %v7899, 4294901760
    %v7901 = vsub.f32 %v7899, %v7900
    %v7902 = vand.u32 %v7901, 4294901760
    %7903 = vmatpush1.msra.mxu0 %v7902
    %v7904 = vand.u32 %v7688, 4294901760
    %v7905 = vsub.f32 %v7688, %v7904
    %v7906 = vand.u32 %v7905, 4294901760
    %v7907 = vsub.f32 %v7905, %v7906
    %v7908 = vand.u32 %v7907, 4294901760
    %7909 = vmatprep.subr.mxu0 %v7908
    %v7910 = vand.u32 %v7687, 4294901760
    %v7911 = vsub.f32 %v7687, %v7910
    %v7912 = vand.u32 %v7911, 4294901760
    %v7913 = vsub.f32 %v7911, %v7912
    %v7914 = vand.u32 %v7913, 4294901760
    %7915 = vmatpush1.msra.mxu0 %v7914
    %v7916 = vand.u32 %v7692, 4294901760
    %v7917 = vsub.f32 %v7692, %v7916
    %v7918 = vand.u32 %v7917, 4294901760
    %v7919 = vsub.f32 %v7917, %v7918
    %v7920 = vand.u32 %v7919, 4294901760
    %7921 = vmatprep.subr.mxu0 %v7920
    %v7922 = vand.u32 %v7691, 4294901760
    %v7923 = vsub.f32 %v7691, %v7922
    %v7924 = vand.u32 %v7923, 4294901760
    %v7925 = vsub.f32 %v7923, %v7924
    %v7926 = vand.u32 %v7925, 4294901760
    %7927 = vmatpush1.msra.mxu0 %v7926
    %v7928 = vand.u32 %v7696, 4294901760
    %v7929 = vsub.f32 %v7696, %v7928
    %v7930 = vand.u32 %v7929, 4294901760
    %v7931 = vsub.f32 %v7929, %v7930
    %v7932 = vand.u32 %v7931, 4294901760
    %7933 = vmatprep.subr.mxu0 %v7932
    %v7934 = vand.u32 %v7695, 4294901760
    %v7935 = vsub.f32 %v7695, %v7934
    %v7936 = vand.u32 %v7935, 4294901760
    %v7937 = vsub.f32 %v7935, %v7936
    %v7938 = vand.u32 %v7937, 4294901760
    %7939 = vmatpush1.msra.mxu0 %v7938
    %v7940 = vand.u32 %v7700, 4294901760
    %v7941 = vsub.f32 %v7700, %v7940
    %v7942 = vand.u32 %v7941, 4294901760
    %v7943 = vsub.f32 %v7941, %v7942
    %v7944 = vand.u32 %v7943, 4294901760
    %7945 = vmatprep.subr.mxu0 %v7944
    %v7946 = vand.u32 %v7699, 4294901760
    %v7947 = vsub.f32 %v7699, %v7946
    %v7948 = vand.u32 %v7947, 4294901760
    %v7949 = vsub.f32 %v7947, %v7948
    %v7950 = vand.u32 %v7949, 4294901760
    %7951 = vmatpush1.msra.mxu0 %v7950
    %v7952 = vand.u32 %v7704, 4294901760
    %v7953 = vsub.f32 %v7704, %v7952
    %v7954 = vand.u32 %v7953, 4294901760
    %v7955 = vsub.f32 %v7953, %v7954
    %v7956 = vand.u32 %v7955, 4294901760
    %7957 = vmatprep.subr.mxu0 %v7956
    %v7958 = vand.u32 %v7703, 4294901760
    %v7959 = vsub.f32 %v7703, %v7958
    %v7960 = vand.u32 %v7959, 4294901760
    %v7961 = vsub.f32 %v7959, %v7960
    %v7962 = vand.u32 %v7961, 4294901760
    %7963 = vmatpush1.msra.mxu0 %v7962
    %v7964 = vand.u32 %v7708, 4294901760
    %v7965 = vsub.f32 %v7708, %v7964
    %v7966 = vand.u32 %v7965, 4294901760
    %v7967 = vsub.f32 %v7965, %v7966
    %v7968 = vand.u32 %v7967, 4294901760
    %7969 = vmatprep.subr.mxu0 %v7968
    %v7970 = vand.u32 %v7707, 4294901760
    %v7971 = vsub.f32 %v7707, %v7970
    %v7972 = vand.u32 %v7971, 4294901760
    %v7973 = vsub.f32 %v7971, %v7972
    %v7974 = vand.u32 %v7973, 4294901760
    %7975 = vmatpush1.msra.mxu0 %v7974
    %v7976 = vand.u32 %v7712, 4294901760
    %v7977 = vsub.f32 %v7712, %v7976
    %v7978 = vand.u32 %v7977, 4294901760
    %v7979 = vsub.f32 %v7977, %v7978
    %v7980 = vand.u32 %v7979, 4294901760
    %7981 = vmatprep.subr.mxu0 %v7980
    %v7982 = vand.u32 %v7711, 4294901760
    %v7983 = vsub.f32 %v7711, %v7982
    %v7984 = vand.u32 %v7983, 4294901760
    %v7985 = vsub.f32 %v7983, %v7984
    %v7986 = vand.u32 %v7985, 4294901760
    %7987 = vmatpush1.msra.mxu0 %v7986
    %v7988 = vand.u32 %v7716, 4294901760
    %v7989 = vsub.f32 %v7716, %v7988
    %v7990 = vand.u32 %v7989, 4294901760
    %v7991 = vsub.f32 %v7989, %v7990
    %v7992 = vand.u32 %v7991, 4294901760
    %7993 = vmatprep.subr.mxu0 %v7992
    %v7994 = vand.u32 %v7715, 4294901760
    %v7995 = vsub.f32 %v7715, %v7994
    %v7996 = vand.u32 %v7995, 4294901760
    %v7997 = vsub.f32 %v7995, %v7996
    %v7998 = vand.u32 %v7997, 4294901760
    %7999 = vmatpush1.msra.mxu0 %v7998
    %v8000 = vand.u32 %v7720, 4294901760
    %v8001 = vsub.f32 %v7720, %v8000
    %v8002 = vand.u32 %v8001, 4294901760
    %v8003 = vsub.f32 %v8001, %v8002
    %v8004 = vand.u32 %v8003, 4294901760
    %8005 = vmatprep.subr.mxu0 %v8004
    %v8006 = vand.u32 %v7719, 4294901760
    %v8007 = vsub.f32 %v7719, %v8006
    %v8008 = vand.u32 %v8007, 4294901760
    %v8009 = vsub.f32 %v8007, %v8008
    %v8010 = vand.u32 %v8009, 4294901760
    %8011 = vmatpush1.msra.mxu0 %v8010
    %v8012 = vand.u32 %v7724, 4294901760
    %v8013 = vsub.f32 %v7724, %v8012
    %v8014 = vand.u32 %v8013, 4294901760
    %v8015 = vsub.f32 %v8013, %v8014
    %v8016 = vand.u32 %v8015, 4294901760
    %8017 = vmatprep.subr.mxu0 %v8016
    %v8018 = vand.u32 %v7723, 4294901760
    %v8019 = vsub.f32 %v7723, %v8018
    %v8020 = vand.u32 %v8019, 4294901760
    %v8021 = vsub.f32 %v8019, %v8020
    %v8022 = vand.u32 %v8021, 4294901760
    %8023 = vmatpush1.msra.mxu0 %v8022
    %v8024 = vand.u32 %v7728, 4294901760
    %v8025 = vsub.f32 %v7728, %v8024
    %v8026 = vand.u32 %v8025, 4294901760
    %v8027 = vsub.f32 %v8025, %v8026
    %v8028 = vand.u32 %v8027, 4294901760
    %8029 = vmatprep.subr.mxu0 %v8028
    %v8030 = vand.u32 %v7727, 4294901760
    %v8031 = vsub.f32 %v7727, %v8030
    %v8032 = vand.u32 %v8031, 4294901760
    %v8033 = vsub.f32 %v8031, %v8032
    %v8034 = vand.u32 %v8033, 4294901760
    %8035 = vmatpush1.msra.mxu0 %v8034
    %v8036 = vand.u32 %v7732, 4294901760
    %v8037 = vsub.f32 %v7732, %v8036
    %v8038 = vand.u32 %v8037, 4294901760
    %v8039 = vsub.f32 %v8037, %v8038
    %v8040 = vand.u32 %v8039, 4294901760
    %8041 = vmatprep.subr.mxu0 %v8040
    %v8042 = vand.u32 %v7731, 4294901760
    %v8043 = vsub.f32 %v7731, %v8042
    %v8044 = vand.u32 %v8043, 4294901760
    %v8045 = vsub.f32 %v8043, %v8044
    %v8046 = vand.u32 %v8045, 4294901760
    %8047 = vmatpush1.msra.mxu0 %v8046
    %v8048 = vand.u32 %v7736, 4294901760
    %v8049 = vsub.f32 %v7736, %v8048
    %v8050 = vand.u32 %v8049, 4294901760
    %v8051 = vsub.f32 %v8049, %v8050
    %v8052 = vand.u32 %v8051, 4294901760
    %8053 = vmatprep.subr.mxu0 %v8052
    %v8054 = vand.u32 %v7735, 4294901760
    %v8055 = vsub.f32 %v7735, %v8054
    %v8056 = vand.u32 %v8055, 4294901760
    %v8057 = vsub.f32 %v8055, %v8056
    %v8058 = vand.u32 %v8057, 4294901760
    %8059 = vmatpush1.msra.mxu0 %v8058
    %v8060 = vand.u32 %v7740, 4294901760
    %v8061 = vsub.f32 %v7740, %v8060
    %v8062 = vand.u32 %v8061, 4294901760
    %v8063 = vsub.f32 %v8061, %v8062
    %v8064 = vand.u32 %v8063, 4294901760
    %8065 = vmatprep.subr.mxu0 %v8064
    %v8066 = vand.u32 %v7739, 4294901760
    %v8067 = vsub.f32 %v7739, %v8066
    %v8068 = vand.u32 %v8067, 4294901760
    %v8069 = vsub.f32 %v8067, %v8068
    %v8070 = vand.u32 %v8069, 4294901760
    %8071 = vmatpush1.msra.mxu0 %v8070
    %v8072 = vand.u32 %v7744, 4294901760
    %v8073 = vsub.f32 %v7744, %v8072
    %v8074 = vand.u32 %v8073, 4294901760
    %v8075 = vsub.f32 %v8073, %v8074
    %v8076 = vand.u32 %v8075, 4294901760
    %8077 = vmatprep.subr.mxu0 %v8076
    %v8078 = vand.u32 %v7743, 4294901760
    %v8079 = vsub.f32 %v7743, %v8078
    %v8080 = vand.u32 %v8079, 4294901760
    %v8081 = vsub.f32 %v8079, %v8080
    %v8082 = vand.u32 %v8081, 4294901760
    %8083 = vmatpush1.msra.mxu0 %v8082
    %8084 = vmatprep.subr.mxu0 0.0
    %8085 = vmatpush1.msra.mxu0 0.0
    %8086 = vmatprep.subr.mxu0 0.0
    %8087 = vmatpush1.msra.mxu0 0.0
    %8088 = vmatprep.subr.mxu0 0.0
    %8089 = vmatpush1.msra.mxu0 0.0
    %8090 = vmatprep.subr.mxu0 0.0
    %8091 = vmatpush1.msra.mxu0 0.0
    %8092 = vmatprep.subr.mxu0 0.0
    %8093 = vmatpush1.msra.mxu0 0.0
    %8094 = vmatprep.subr.mxu0 0.0
    %8095 = vmatpush1.msra.mxu0 0.0
    %8096 = vmatprep.subr.mxu0 0.0
    %8097 = vmatpush1.msra.mxu0 0.0
    %8098 = vmatprep.subr.mxu0 0.0
    %8099 = vmatpush1.msra.mxu0 0.0
    %8100 = vmatprep.subr.mxu0 0.0
    %8101 = vmatpush1.msra.mxu0 0.0
    %8102 = vmatprep.subr.mxu0 0.0
    %8103 = vmatpush1.msra.mxu0 0.0
    %8104 = vmatprep.subr.mxu0 0.0
    %8105 = vmatpush1.msra.mxu0 0.0
    %8106 = vmatprep.subr.mxu0 0.0
    %8107 = vmatpush1.msra.mxu0 0.0
    %8108 = vmatprep.subr.mxu0 0.0
    %8109 = vmatpush1.msra.mxu0 0.0
    %8110 = vmatprep.subr.mxu0 0.0
    %8111 = vmatpush1.msra.mxu0 0.0
    %v8112 = vand.u32 %v7749, 4294901760
    %8113 = vmatprep.mubr.f32.mxu0 %v8112
    %v8114 = vand.u32 %v7179, 4294901760
    %8115 = vmatmul.mubr.f32.gmra.mrb[0].mxu0 %v8114
    %v8116 = vpop.f32.mrb[0].mxu0
    %v8117 = vadd.f32 %v7864, %v8116
    %v8118 = vpop.f32.mrb[0].mxu0
    %v8119 = vadd.f32 %v7866, %v8118
    %8120 = vdwg.mxu0
    %v8121 = vand.u32 %v7676, 4294901760
    %v8122 = vsub.f32 %v7676, %v8121
    %8123 = vmatprep.subr.mxu0 %v8122
    %v8124 = vand.u32 %v7675, 4294901760
    %v8125 = vsub.f32 %v7675, %v8124
    %8126 = vmatpush1.msra.mxu0 %v8125
    %v8127 = vand.u32 %v7680, 4294901760
    %v8128 = vsub.f32 %v7680, %v8127
    %8129 = vmatprep.subr.mxu0 %v8128
    %v8130 = vand.u32 %v7679, 4294901760
    %v8131 = vsub.f32 %v7679, %v8130
    %8132 = vmatpush1.msra.mxu0 %v8131
    %v8133 = vand.u32 %v7684, 4294901760
    %v8134 = vsub.f32 %v7684, %v8133
    %8135 = vmatprep.subr.mxu0 %v8134
    %v8136 = vand.u32 %v7683, 4294901760
    %v8137 = vsub.f32 %v7683, %v8136
    %8138 = vmatpush1.msra.mxu0 %v8137
    %v8139 = vand.u32 %v7688, 4294901760
    %v8140 = vsub.f32 %v7688, %v8139
    %8141 = vmatprep.subr.mxu0 %v8140
    %v8142 = vand.u32 %v7687, 4294901760
    %v8143 = vsub.f32 %v7687, %v8142
    %8144 = vmatpush1.msra.mxu0 %v8143
    %v8145 = vand.u32 %v7692, 4294901760
    %v8146 = vsub.f32 %v7692, %v8145
    %8147 = vmatprep.subr.mxu0 %v8146
    %v8148 = vand.u32 %v7691, 4294901760
    %v8149 = vsub.f32 %v7691, %v8148
    %8150 = vmatpush1.msra.mxu0 %v8149
    %v8151 = vand.u32 %v7696, 4294901760
    %v8152 = vsub.f32 %v7696, %v8151
    %8153 = vmatprep.subr.mxu0 %v8152
    %v8154 = vand.u32 %v7695, 4294901760
    %v8155 = vsub.f32 %v7695, %v8154
    %8156 = vmatpush1.msra.mxu0 %v8155
    %v8157 = vand.u32 %v7700, 4294901760
    %v8158 = vsub.f32 %v7700, %v8157
    %8159 = vmatprep.subr.mxu0 %v8158
    %v8160 = vand.u32 %v7699, 4294901760
    %v8161 = vsub.f32 %v7699, %v8160
    %8162 = vmatpush1.msra.mxu0 %v8161
    %v8163 = vand.u32 %v7704, 4294901760
    %v8164 = vsub.f32 %v7704, %v8163
    %8165 = vmatprep.subr.mxu0 %v8164
    %v8166 = vand.u32 %v7703, 4294901760
    %v8167 = vsub.f32 %v7703, %v8166
    %8168 = vmatpush1.msra.mxu0 %v8167
    %v8169 = vand.u32 %v7708, 4294901760
    %v8170 = vsub.f32 %v7708, %v8169
    %8171 = vmatprep.subr.mxu0 %v8170
    %v8172 = vand.u32 %v7707, 4294901760
    %v8173 = vsub.f32 %v7707, %v8172
    %8174 = vmatpush1.msra.mxu0 %v8173
    %v8175 = vand.u32 %v7712, 4294901760
    %v8176 = vsub.f32 %v7712, %v8175
    %8177 = vmatprep.subr.mxu0 %v8176
    %v8178 = vand.u32 %v7711, 4294901760
    %v8179 = vsub.f32 %v7711, %v8178
    %8180 = vmatpush1.msra.mxu0 %v8179
    %v8181 = vand.u32 %v7716, 4294901760
    %v8182 = vsub.f32 %v7716, %v8181
    %8183 = vmatprep.subr.mxu0 %v8182
    %v8184 = vand.u32 %v7715, 4294901760
    %v8185 = vsub.f32 %v7715, %v8184
    %8186 = vmatpush1.msra.mxu0 %v8185
    %v8187 = vand.u32 %v7720, 4294901760
    %v8188 = vsub.f32 %v7720, %v8187
    %8189 = vmatprep.subr.mxu0 %v8188
    %v8190 = vand.u32 %v7719, 4294901760
    %v8191 = vsub.f32 %v7719, %v8190
    %8192 = vmatpush1.msra.mxu0 %v8191
    %v8193 = vand.u32 %v7724, 4294901760
    %v8194 = vsub.f32 %v7724, %v8193
    %8195 = vmatprep.subr.mxu0 %v8194
    %v8196 = vand.u32 %v7723, 4294901760
    %v8197 = vsub.f32 %v7723, %v8196
    %8198 = vmatpush1.msra.mxu0 %v8197
    %v8199 = vand.u32 %v7728, 4294901760
    %v8200 = vsub.f32 %v7728, %v8199
    %8201 = vmatprep.subr.mxu0 %v8200
    %v8202 = vand.u32 %v7727, 4294901760
    %v8203 = vsub.f32 %v7727, %v8202
    %8204 = vmatpush1.msra.mxu0 %v8203
    %v8205 = vand.u32 %v7732, 4294901760
    %v8206 = vsub.f32 %v7732, %v8205
    %8207 = vmatprep.subr.mxu0 %v8206
    %v8208 = vand.u32 %v7731, 4294901760
    %v8209 = vsub.f32 %v7731, %v8208
    %8210 = vmatpush1.msra.mxu0 %v8209
    %v8211 = vand.u32 %v7736, 4294901760
    %v8212 = vsub.f32 %v7736, %v8211
    %8213 = vmatprep.subr.mxu0 %v8212
    %v8214 = vand.u32 %v7735, 4294901760
    %v8215 = vsub.f32 %v7735, %v8214
    %8216 = vmatpush1.msra.mxu0 %v8215
    %v8217 = vand.u32 %v7740, 4294901760
    %v8218 = vsub.f32 %v7740, %v8217
    %8219 = vmatprep.subr.mxu0 %v8218
    %v8220 = vand.u32 %v7739, 4294901760
    %v8221 = vsub.f32 %v7739, %v8220
    %8222 = vmatpush1.msra.mxu0 %v8221
    %v8223 = vand.u32 %v7744, 4294901760
    %v8224 = vsub.f32 %v7744, %v8223
    %8225 = vmatprep.subr.mxu0 %v8224
    %v8226 = vand.u32 %v7743, 4294901760
    %v8227 = vsub.f32 %v7743, %v8226
    %8228 = vmatpush1.msra.mxu0 %v8227
    %8229 = vmatprep.subr.mxu0 0.0
    %8230 = vmatpush1.msra.mxu0 0.0
    %8231 = vmatprep.subr.mxu0 0.0
    %8232 = vmatpush1.msra.mxu0 0.0
    %8233 = vmatprep.subr.mxu0 0.0
    %8234 = vmatpush1.msra.mxu0 0.0
    %8235 = vmatprep.subr.mxu0 0.0
    %8236 = vmatpush1.msra.mxu0 0.0
    %8237 = vmatprep.subr.mxu0 0.0
    %8238 = vmatpush1.msra.mxu0 0.0
    %8239 = vmatprep.subr.mxu0 0.0
    %8240 = vmatpush1.msra.mxu0 0.0
    %8241 = vmatprep.subr.mxu0 0.0
    %8242 = vmatpush1.msra.mxu0 0.0
    %8243 = vmatprep.subr.mxu0 0.0
    %8244 = vmatpush1.msra.mxu0 0.0
    %8245 = vmatprep.subr.mxu0 0.0
    %8246 = vmatpush1.msra.mxu0 0.0
    %8247 = vmatprep.subr.mxu0 0.0
    %8248 = vmatpush1.msra.mxu0 0.0
    %8249 = vmatprep.subr.mxu0 0.0
    %8250 = vmatpush1.msra.mxu0 0.0
    %8251 = vmatprep.subr.mxu0 0.0
    %8252 = vmatpush1.msra.mxu0 0.0
    %8253 = vmatprep.subr.mxu0 0.0
    %8254 = vmatpush1.msra.mxu0 0.0
    %8255 = vmatprep.subr.mxu0 0.0
    %8256 = vmatpush1.msra.mxu0 0.0
    %v8257 = vand.u32 %v7749, 4294901760
    %v8258 = vsub.f32 %v7749, %v8257
    %8259 = vmatprep.mubr.f32.mxu0 %v8258
    %v8260 = vand.u32 %v7179, 4294901760
    %v8261 = vsub.f32 %v7179, %v8260
    %8262 = vmatmul.mubr.f32.gmra.mrb[0].mxu0 %v8261
    %v8263 = vpop.f32.mrb[0].mxu0
    %v8264 = vadd.f32 %v8117, %v8263
    %v8265 = vpop.f32.mrb[0].mxu0
    %v8266 = vadd.f32 %v8119, %v8265
    %8267 = vdwg.mxu0
    %v8268 = vand.u32 %v7676, 4294901760
    %8269 = vmatprep.subr.mxu0 %v8268
    %v8270 = vand.u32 %v7675, 4294901760
    %8271 = vmatpush1.msra.mxu0 %v8270
    %v8272 = vand.u32 %v7680, 4294901760
    %8273 = vmatprep.subr.mxu0 %v8272
    %v8274 = vand.u32 %v7679, 4294901760
    %8275 = vmatpush1.msra.mxu0 %v8274
    %v8276 = vand.u32 %v7684, 4294901760
    %8277 = vmatprep.subr.mxu0 %v8276
    %v8278 = vand.u32 %v7683, 4294901760
    %8279 = vmatpush1.msra.mxu0 %v8278
    %v8280 = vand.u32 %v7688, 4294901760
    %8281 = vmatprep.subr.mxu0 %v8280
    %v8282 = vand.u32 %v7687, 4294901760
    %8283 = vmatpush1.msra.mxu0 %v8282
    %v8284 = vand.u32 %v7692, 4294901760
    %8285 = vmatprep.subr.mxu0 %v8284
    %v8286 = vand.u32 %v7691, 4294901760
    %8287 = vmatpush1.msra.mxu0 %v8286
    %v8288 = vand.u32 %v7696, 4294901760
    %8289 = vmatprep.subr.mxu0 %v8288
    %v8290 = vand.u32 %v7695, 4294901760
    %8291 = vmatpush1.msra.mxu0 %v8290
    %v8292 = vand.u32 %v7700, 4294901760
    %8293 = vmatprep.subr.mxu0 %v8292
    %v8294 = vand.u32 %v7699, 4294901760
    %8295 = vmatpush1.msra.mxu0 %v8294
    %v8296 = vand.u32 %v7704, 4294901760
    %8297 = vmatprep.subr.mxu0 %v8296
    %v8298 = vand.u32 %v7703, 4294901760
    %8299 = vmatpush1.msra.mxu0 %v8298
    %v8300 = vand.u32 %v7708, 4294901760
    %8301 = vmatprep.subr.mxu0 %v8300
    %v8302 = vand.u32 %v7707, 4294901760
    %8303 = vmatpush1.msra.mxu0 %v8302
    %v8304 = vand.u32 %v7712, 4294901760
    %8305 = vmatprep.subr.mxu0 %v8304
    %v8306 = vand.u32 %v7711, 4294901760
    %8307 = vmatpush1.msra.mxu0 %v8306
    %v8308 = vand.u32 %v7716, 4294901760
    %8309 = vmatprep.subr.mxu0 %v8308
    %v8310 = vand.u32 %v7715, 4294901760
    %8311 = vmatpush1.msra.mxu0 %v8310
    %v8312 = vand.u32 %v7720, 4294901760
    %8313 = vmatprep.subr.mxu0 %v8312
    %v8314 = vand.u32 %v7719, 4294901760
    %8315 = vmatpush1.msra.mxu0 %v8314
    %v8316 = vand.u32 %v7724, 4294901760
    %8317 = vmatprep.subr.mxu0 %v8316
    %v8318 = vand.u32 %v7723, 4294901760
    %8319 = vmatpush1.msra.mxu0 %v8318
    %v8320 = vand.u32 %v7728, 4294901760
    %8321 = vmatprep.subr.mxu0 %v8320
    %v8322 = vand.u32 %v7727, 4294901760
    %8323 = vmatpush1.msra.mxu0 %v8322
    %v8324 = vand.u32 %v7732, 4294901760
    %8325 = vmatprep.subr.mxu0 %v8324
    %v8326 = vand.u32 %v7731, 4294901760
    %8327 = vmatpush1.msra.mxu0 %v8326
    %v8328 = vand.u32 %v7736, 4294901760
    %8329 = vmatprep.subr.mxu0 %v8328
    %v8330 = vand.u32 %v7735, 4294901760
    %8331 = vmatpush1.msra.mxu0 %v8330
    %v8332 = vand.u32 %v7740, 4294901760
    %8333 = vmatprep.subr.mxu0 %v8332
    %v8334 = vand.u32 %v7739, 4294901760
    %8335 = vmatpush1.msra.mxu0 %v8334
    %v8336 = vand.u32 %v7744, 4294901760
    %8337 = vmatprep.subr.mxu0 %v8336
    %v8338 = vand.u32 %v7743, 4294901760
    %8339 = vmatpush1.msra.mxu0 %v8338
    %8340 = vmatprep.subr.mxu0 0.0
    %8341 = vmatpush1.msra.mxu0 0.0
    %8342 = vmatprep.subr.mxu0 0.0
    %8343 = vmatpush1.msra.mxu0 0.0
    %8344 = vmatprep.subr.mxu0 0.0
    %8345 = vmatpush1.msra.mxu0 0.0
    %8346 = vmatprep.subr.mxu0 0.0
    %8347 = vmatpush1.msra.mxu0 0.0
    %8348 = vmatprep.subr.mxu0 0.0
    %8349 = vmatpush1.msra.mxu0 0.0
    %8350 = vmatprep.subr.mxu0 0.0
    %8351 = vmatpush1.msra.mxu0 0.0
    %8352 = vmatprep.subr.mxu0 0.0
    %8353 = vmatpush1.msra.mxu0 0.0
    %8354 = vmatprep.subr.mxu0 0.0
    %8355 = vmatpush1.msra.mxu0 0.0
    %8356 = vmatprep.subr.mxu0 0.0
    %8357 = vmatpush1.msra.mxu0 0.0
    %8358 = vmatprep.subr.mxu0 0.0
    %8359 = vmatpush1.msra.mxu0 0.0
    %8360 = vmatprep.subr.mxu0 0.0
    %8361 = vmatpush1.msra.mxu0 0.0
    %8362 = vmatprep.subr.mxu0 0.0
    %8363 = vmatpush1.msra.mxu0 0.0
    %8364 = vmatprep.subr.mxu0 0.0
    %8365 = vmatpush1.msra.mxu0 0.0
    %8366 = vmatprep.subr.mxu0 0.0
    %8367 = vmatpush1.msra.mxu0 0.0
    %v8368 = vand.u32 %v7749, 4294901760
    %v8369 = vsub.f32 %v7749, %v8368
    %v8370 = vand.u32 %v8369, 4294901760
    %8371 = vmatprep.mubr.f32.mxu0 %v8370
    %v8372 = vand.u32 %v7179, 4294901760
    %v8373 = vsub.f32 %v7179, %v8372
    %v8374 = vand.u32 %v8373, 4294901760
    %8375 = vmatmul.mubr.f32.gmra.mrb[0].mxu0 %v8374
    %v8376 = vpop.f32.mrb[0].mxu0
    %v8377 = vadd.f32 %v8264, %v8376
    %v8378 = vpop.f32.mrb[0].mxu0
    %v8379 = vadd.f32 %v8266, %v8378
    %8380 = vdwg.mxu0
    %v8381 = vand.u32 %v7676, 4294901760
    %v8382 = vsub.f32 %v7676, %v8381
    %v8383 = vand.u32 %v8382, 4294901760
    %8384 = vmatprep.subr.mxu0 %v8383
    %v8385 = vand.u32 %v7675, 4294901760
    %v8386 = vsub.f32 %v7675, %v8385
    %v8387 = vand.u32 %v8386, 4294901760
    %8388 = vmatpush1.msra.mxu0 %v8387
    %v8389 = vand.u32 %v7680, 4294901760
    %v8390 = vsub.f32 %v7680, %v8389
    %v8391 = vand.u32 %v8390, 4294901760
    %8392 = vmatprep.subr.mxu0 %v8391
    %v8393 = vand.u32 %v7679, 4294901760
    %v8394 = vsub.f32 %v7679, %v8393
    %v8395 = vand.u32 %v8394, 4294901760
    %8396 = vmatpush1.msra.mxu0 %v8395
    %v8397 = vand.u32 %v7684, 4294901760
    %v8398 = vsub.f32 %v7684, %v8397
    %v8399 = vand.u32 %v8398, 4294901760
    %8400 = vmatprep.subr.mxu0 %v8399
    %v8401 = vand.u32 %v7683, 4294901760
    %v8402 = vsub.f32 %v7683, %v8401
    %v8403 = vand.u32 %v8402, 4294901760
    %8404 = vmatpush1.msra.mxu0 %v8403
    %v8405 = vand.u32 %v7688, 4294901760
    %v8406 = vsub.f32 %v7688, %v8405
    %v8407 = vand.u32 %v8406, 4294901760
    %8408 = vmatprep.subr.mxu0 %v8407
    %v8409 = vand.u32 %v7687, 4294901760
    %v8410 = vsub.f32 %v7687, %v8409
    %v8411 = vand.u32 %v8410, 4294901760
    %8412 = vmatpush1.msra.mxu0 %v8411
    %v8413 = vand.u32 %v7692, 4294901760
    %v8414 = vsub.f32 %v7692, %v8413
    %v8415 = vand.u32 %v8414, 4294901760
    %8416 = vmatprep.subr.mxu0 %v8415
    %v8417 = vand.u32 %v7691, 4294901760
    %v8418 = vsub.f32 %v7691, %v8417
    %v8419 = vand.u32 %v8418, 4294901760
    %8420 = vmatpush1.msra.mxu0 %v8419
    %v8421 = vand.u32 %v7696, 4294901760
    %v8422 = vsub.f32 %v7696, %v8421
    %v8423 = vand.u32 %v8422, 4294901760
    %8424 = vmatprep.subr.mxu0 %v8423
    %v8425 = vand.u32 %v7695, 4294901760
    %v8426 = vsub.f32 %v7695, %v8425
    %v8427 = vand.u32 %v8426, 4294901760
    %8428 = vmatpush1.msra.mxu0 %v8427
    %v8429 = vand.u32 %v7700, 4294901760
    %v8430 = vsub.f32 %v7700, %v8429
    %v8431 = vand.u32 %v8430, 4294901760
    %8432 = vmatprep.subr.mxu0 %v8431
    %v8433 = vand.u32 %v7699, 4294901760
    %v8434 = vsub.f32 %v7699, %v8433
    %v8435 = vand.u32 %v8434, 4294901760
    %8436 = vmatpush1.msra.mxu0 %v8435
    %v8437 = vand.u32 %v7704, 4294901760
    %v8438 = vsub.f32 %v7704, %v8437
    %v8439 = vand.u32 %v8438, 4294901760
    %8440 = vmatprep.subr.mxu0 %v8439
    %v8441 = vand.u32 %v7703, 4294901760
    %v8442 = vsub.f32 %v7703, %v8441
    %v8443 = vand.u32 %v8442, 4294901760
    %8444 = vmatpush1.msra.mxu0 %v8443
    %v8445 = vand.u32 %v7708, 4294901760
    %v8446 = vsub.f32 %v7708, %v8445
    %v8447 = vand.u32 %v8446, 4294901760
    %8448 = vmatprep.subr.mxu0 %v8447
    %v8449 = vand.u32 %v7707, 4294901760
    %v8450 = vsub.f32 %v7707, %v8449
    %v8451 = vand.u32 %v8450, 4294901760
    %8452 = vmatpush1.msra.mxu0 %v8451
    %v8453 = vand.u32 %v7712, 4294901760
    %v8454 = vsub.f32 %v7712, %v8453
    %v8455 = vand.u32 %v8454, 4294901760
    %8456 = vmatprep.subr.mxu0 %v8455
    %v8457 = vand.u32 %v7711, 4294901760
    %v8458 = vsub.f32 %v7711, %v8457
    %v8459 = vand.u32 %v8458, 4294901760
    %8460 = vmatpush1.msra.mxu0 %v8459
    %v8461 = vand.u32 %v7716, 4294901760
    %v8462 = vsub.f32 %v7716, %v8461
    %v8463 = vand.u32 %v8462, 4294901760
    %8464 = vmatprep.subr.mxu0 %v8463
    %v8465 = vand.u32 %v7715, 4294901760
    %v8466 = vsub.f32 %v7715, %v8465
    %v8467 = vand.u32 %v8466, 4294901760
    %8468 = vmatpush1.msra.mxu0 %v8467
    %v8469 = vand.u32 %v7720, 4294901760
    %v8470 = vsub.f32 %v7720, %v8469
    %v8471 = vand.u32 %v8470, 4294901760
    %8472 = vmatprep.subr.mxu0 %v8471
    %v8473 = vand.u32 %v7719, 4294901760
    %v8474 = vsub.f32 %v7719, %v8473
    %v8475 = vand.u32 %v8474, 4294901760
    %8476 = vmatpush1.msra.mxu0 %v8475
    %v8477 = vand.u32 %v7724, 4294901760
    %v8478 = vsub.f32 %v7724, %v8477
    %v8479 = vand.u32 %v8478, 4294901760
    %8480 = vmatprep.subr.mxu0 %v8479
    %v8481 = vand.u32 %v7723, 4294901760
    %v8482 = vsub.f32 %v7723, %v8481
    %v8483 = vand.u32 %v8482, 4294901760
    %8484 = vmatpush1.msra.mxu0 %v8483
    %v8485 = vand.u32 %v7728, 4294901760
    %v8486 = vsub.f32 %v7728, %v8485
    %v8487 = vand.u32 %v8486, 4294901760
    %8488 = vmatprep.subr.mxu0 %v8487
    %v8489 = vand.u32 %v7727, 4294901760
    %v8490 = vsub.f32 %v7727, %v8489
    %v8491 = vand.u32 %v8490, 4294901760
    %8492 = vmatpush1.msra.mxu0 %v8491
    %v8493 = vand.u32 %v7732, 4294901760
    %v8494 = vsub.f32 %v7732, %v8493
    %v8495 = vand.u32 %v8494, 4294901760
    %8496 = vmatprep.subr.mxu0 %v8495
    %v8497 = vand.u32 %v7731, 4294901760
    %v8498 = vsub.f32 %v7731, %v8497
    %v8499 = vand.u32 %v8498, 4294901760
    %8500 = vmatpush1.msra.mxu0 %v8499
    %v8501 = vand.u32 %v7736, 4294901760
    %v8502 = vsub.f32 %v7736, %v8501
    %v8503 = vand.u32 %v8502, 4294901760
    %8504 = vmatprep.subr.mxu0 %v8503
    %v8505 = vand.u32 %v7735, 4294901760
    %v8506 = vsub.f32 %v7735, %v8505
    %v8507 = vand.u32 %v8506, 4294901760
    %8508 = vmatpush1.msra.mxu0 %v8507
    %v8509 = vand.u32 %v7740, 4294901760
    %v8510 = vsub.f32 %v7740, %v8509
    %v8511 = vand.u32 %v8510, 4294901760
    %8512 = vmatprep.subr.mxu0 %v8511
    %v8513 = vand.u32 %v7739, 4294901760
    %v8514 = vsub.f32 %v7739, %v8513
    %v8515 = vand.u32 %v8514, 4294901760
    %8516 = vmatpush1.msra.mxu0 %v8515
    %v8517 = vand.u32 %v7744, 4294901760
    %v8518 = vsub.f32 %v7744, %v8517
    %v8519 = vand.u32 %v8518, 4294901760
    %8520 = vmatprep.subr.mxu0 %v8519
    %v8521 = vand.u32 %v7743, 4294901760
    %v8522 = vsub.f32 %v7743, %v8521
    %v8523 = vand.u32 %v8522, 4294901760
    %8524 = vmatpush1.msra.mxu0 %v8523
    %8525 = vmatprep.subr.mxu0 0.0
    %8526 = vmatpush1.msra.mxu0 0.0
    %8527 = vmatprep.subr.mxu0 0.0
    %8528 = vmatpush1.msra.mxu0 0.0
    %8529 = vmatprep.subr.mxu0 0.0
    %8530 = vmatpush1.msra.mxu0 0.0
    %8531 = vmatprep.subr.mxu0 0.0
    %8532 = vmatpush1.msra.mxu0 0.0
    %8533 = vmatprep.subr.mxu0 0.0
    %8534 = vmatpush1.msra.mxu0 0.0
    %8535 = vmatprep.subr.mxu0 0.0
    %8536 = vmatpush1.msra.mxu0 0.0
    %8537 = vmatprep.subr.mxu0 0.0
    %8538 = vmatpush1.msra.mxu0 0.0
    %8539 = vmatprep.subr.mxu0 0.0
    %8540 = vmatpush1.msra.mxu0 0.0
    %8541 = vmatprep.subr.mxu0 0.0
    %8542 = vmatpush1.msra.mxu0 0.0
    %8543 = vmatprep.subr.mxu0 0.0
    %8544 = vmatpush1.msra.mxu0 0.0
    %8545 = vmatprep.subr.mxu0 0.0
    %8546 = vmatpush1.msra.mxu0 0.0
    %8547 = vmatprep.subr.mxu0 0.0
    %8548 = vmatpush1.msra.mxu0 0.0
    %8549 = vmatprep.subr.mxu0 0.0
    %8550 = vmatpush1.msra.mxu0 0.0
    %8551 = vmatprep.subr.mxu0 0.0
    %8552 = vmatpush1.msra.mxu0 0.0
    %v8553 = vand.u32 %v7749, 4294901760
    %8554 = vmatprep.mubr.f32.mxu0 %v8553
    %v8555 = vand.u32 %v7179, 4294901760
    %8556 = vmatmul.mubr.f32.gmra.mrb[0].mxu0 %v8555
    %v8557 = vpop.f32.mrb[0].mxu0
    %v8558 = vadd.f32 %v8377, %v8557
    %v8559 = vpop.f32.mrb[0].mxu0
    %v8560 = vadd.f32 %v8379, %v8559
    %8561 = vdwg.mxu0
    %v8562 = vand.u32 %v7676, 4294901760
    %8563 = vmatprep.subr.mxu0 %v8562
    %v8564 = vand.u32 %v7675, 4294901760
    %8565 = vmatpush1.msra.mxu0 %v8564
    %v8566 = vand.u32 %v7680, 4294901760
    %8567 = vmatprep.subr.mxu0 %v8566
    %v8568 = vand.u32 %v7679, 4294901760
    %8569 = vmatpush1.msra.mxu0 %v8568
    %v8570 = vand.u32 %v7684, 4294901760
    %8571 = vmatprep.subr.mxu0 %v8570
    %v8572 = vand.u32 %v7683, 4294901760
    %8573 = vmatpush1.msra.mxu0 %v8572
    %v8574 = vand.u32 %v7688, 4294901760
    %8575 = vmatprep.subr.mxu0 %v8574
    %v8576 = vand.u32 %v7687, 4294901760
    %8577 = vmatpush1.msra.mxu0 %v8576
    %v8578 = vand.u32 %v7692, 4294901760
    %8579 = vmatprep.subr.mxu0 %v8578
    %v8580 = vand.u32 %v7691, 4294901760
    %8581 = vmatpush1.msra.mxu0 %v8580
    %v8582 = vand.u32 %v7696, 4294901760
    %8583 = vmatprep.subr.mxu0 %v8582
    %v8584 = vand.u32 %v7695, 4294901760
    %8585 = vmatpush1.msra.mxu0 %v8584
    %v8586 = vand.u32 %v7700, 4294901760
    %8587 = vmatprep.subr.mxu0 %v8586
    %v8588 = vand.u32 %v7699, 4294901760
    %8589 = vmatpush1.msra.mxu0 %v8588
    %v8590 = vand.u32 %v7704, 4294901760
    %8591 = vmatprep.subr.mxu0 %v8590
    %v8592 = vand.u32 %v7703, 4294901760
    %8593 = vmatpush1.msra.mxu0 %v8592
    %v8594 = vand.u32 %v7708, 4294901760
    %8595 = vmatprep.subr.mxu0 %v8594
    %v8596 = vand.u32 %v7707, 4294901760
    %8597 = vmatpush1.msra.mxu0 %v8596
    %v8598 = vand.u32 %v7712, 4294901760
    %8599 = vmatprep.subr.mxu0 %v8598
    %v8600 = vand.u32 %v7711, 4294901760
    %8601 = vmatpush1.msra.mxu0 %v8600
    %v8602 = vand.u32 %v7716, 4294901760
    %8603 = vmatprep.subr.mxu0 %v8602
    %v8604 = vand.u32 %v7715, 4294901760
    %8605 = vmatpush1.msra.mxu0 %v8604
    %v8606 = vand.u32 %v7720, 4294901760
    %8607 = vmatprep.subr.mxu0 %v8606
    %v8608 = vand.u32 %v7719, 4294901760
    %8609 = vmatpush1.msra.mxu0 %v8608
    %v8610 = vand.u32 %v7724, 4294901760
    %8611 = vmatprep.subr.mxu0 %v8610
    %v8612 = vand.u32 %v7723, 4294901760
    %8613 = vmatpush1.msra.mxu0 %v8612
    %v8614 = vand.u32 %v7728, 4294901760
    %8615 = vmatprep.subr.mxu0 %v8614
    %v8616 = vand.u32 %v7727, 4294901760
    %8617 = vmatpush1.msra.mxu0 %v8616
    %v8618 = vand.u32 %v7732, 4294901760
    %8619 = vmatprep.subr.mxu0 %v8618
    %v8620 = vand.u32 %v7731, 4294901760
    %8621 = vmatpush1.msra.mxu0 %v8620
    %v8622 = vand.u32 %v7736, 4294901760
    %8623 = vmatprep.subr.mxu0 %v8622
    %v8624 = vand.u32 %v7735, 4294901760
    %8625 = vmatpush1.msra.mxu0 %v8624
    %v8626 = vand.u32 %v7740, 4294901760
    %8627 = vmatprep.subr.mxu0 %v8626
    %v8628 = vand.u32 %v7739, 4294901760
    %8629 = vmatpush1.msra.mxu0 %v8628
    %v8630 = vand.u32 %v7744, 4294901760
    %8631 = vmatprep.subr.mxu0 %v8630
    %v8632 = vand.u32 %v7743, 4294901760
    %8633 = vmatpush1.msra.mxu0 %v8632
    %8634 = vmatprep.subr.mxu0 0.0
    %8635 = vmatpush1.msra.mxu0 0.0
    %8636 = vmatprep.subr.mxu0 0.0
    %8637 = vmatpush1.msra.mxu0 0.0
    %8638 = vmatprep.subr.mxu0 0.0
    %8639 = vmatpush1.msra.mxu0 0.0
    %8640 = vmatprep.subr.mxu0 0.0
    %8641 = vmatpush1.msra.mxu0 0.0
    %8642 = vmatprep.subr.mxu0 0.0
    %8643 = vmatpush1.msra.mxu0 0.0
    %8644 = vmatprep.subr.mxu0 0.0
    %8645 = vmatpush1.msra.mxu0 0.0
    %8646 = vmatprep.subr.mxu0 0.0
    %8647 = vmatpush1.msra.mxu0 0.0
    %8648 = vmatprep.subr.mxu0 0.0
    %8649 = vmatpush1.msra.mxu0 0.0
    %8650 = vmatprep.subr.mxu0 0.0
    %8651 = vmatpush1.msra.mxu0 0.0
    %8652 = vmatprep.subr.mxu0 0.0
    %8653 = vmatpush1.msra.mxu0 0.0
    %8654 = vmatprep.subr.mxu0 0.0
    %8655 = vmatpush1.msra.mxu0 0.0
    %8656 = vmatprep.subr.mxu0 0.0
    %8657 = vmatpush1.msra.mxu0 0.0
    %8658 = vmatprep.subr.mxu0 0.0
    %8659 = vmatpush1.msra.mxu0 0.0
    %8660 = vmatprep.subr.mxu0 0.0
    %8661 = vmatpush1.msra.mxu0 0.0
    %v8662 = vand.u32 %v7749, 4294901760
    %8663 = vmatprep.mubr.f32.mxu0 %v8662
    %v8664 = vand.u32 %v7179, 4294901760
    %8665 = vmatmul.mubr.f32.gmra.mrb[0].mxu0 %v8664
    %v8666 = vpop.f32.mrb[0].mxu0
    %v8667 = vadd.f32 %v8558, %v8666
    %v8668 = vpop.f32.mrb[0].mxu0
    %v8669 = vadd.f32 %v8560, %v8668
    %8670 = vdwg.mxu0
    %v8671 = vand.u32 %v7678, 4294901760
    %8672 = vmatprep.subr.mxu0 %v8671
    %v8673 = vand.u32 %v7677, 4294901760
    %8674 = vmatpush1.msra.mxu0 %v8673
    %v8675 = vand.u32 %v7682, 4294901760
    %8676 = vmatprep.subr.mxu0 %v8675
    %v8677 = vand.u32 %v7681, 4294901760
    %8678 = vmatpush1.msra.mxu0 %v8677
    %v8679 = vand.u32 %v7686, 4294901760
    %8680 = vmatprep.subr.mxu0 %v8679
    %v8681 = vand.u32 %v7685, 4294901760
    %8682 = vmatpush1.msra.mxu0 %v8681
    %v8683 = vand.u32 %v7690, 4294901760
    %8684 = vmatprep.subr.mxu0 %v8683
    %v8685 = vand.u32 %v7689, 4294901760
    %8686 = vmatpush1.msra.mxu0 %v8685
    %v8687 = vand.u32 %v7694, 4294901760
    %8688 = vmatprep.subr.mxu0 %v8687
    %v8689 = vand.u32 %v7693, 4294901760
    %8690 = vmatpush1.msra.mxu0 %v8689
    %v8691 = vand.u32 %v7698, 4294901760
    %8692 = vmatprep.subr.mxu0 %v8691
    %v8693 = vand.u32 %v7697, 4294901760
    %8694 = vmatpush1.msra.mxu0 %v8693
    %v8695 = vand.u32 %v7702, 4294901760
    %8696 = vmatprep.subr.mxu0 %v8695
    %v8697 = vand.u32 %v7701, 4294901760
    %8698 = vmatpush1.msra.mxu0 %v8697
    %v8699 = vand.u32 %v7706, 4294901760
    %8700 = vmatprep.subr.mxu0 %v8699
    %v8701 = vand.u32 %v7705, 4294901760
    %8702 = vmatpush1.msra.mxu0 %v8701
    %v8703 = vand.u32 %v7710, 4294901760
    %8704 = vmatprep.subr.mxu0 %v8703
    %v8705 = vand.u32 %v7709, 4294901760
    %8706 = vmatpush1.msra.mxu0 %v8705
    %v8707 = vand.u32 %v7714, 4294901760
    %8708 = vmatprep.subr.mxu0 %v8707
    %v8709 = vand.u32 %v7713, 4294901760
    %8710 = vmatpush1.msra.mxu0 %v8709
    %v8711 = vand.u32 %v7718, 4294901760
    %8712 = vmatprep.subr.mxu0 %v8711
    %v8713 = vand.u32 %v7717, 4294901760
    %8714 = vmatpush1.msra.mxu0 %v8713
    %v8715 = vand.u32 %v7722, 4294901760
    %8716 = vmatprep.subr.mxu0 %v8715
    %v8717 = vand.u32 %v7721, 4294901760
    %8718 = vmatpush1.msra.mxu0 %v8717
    %v8719 = vand.u32 %v7726, 4294901760
    %8720 = vmatprep.subr.mxu0 %v8719
    %v8721 = vand.u32 %v7725, 4294901760
    %8722 = vmatpush1.msra.mxu0 %v8721
    %v8723 = vand.u32 %v7730, 4294901760
    %8724 = vmatprep.subr.mxu0 %v8723
    %v8725 = vand.u32 %v7729, 4294901760
    %8726 = vmatpush1.msra.mxu0 %v8725
    %v8727 = vand.u32 %v7734, 4294901760
    %8728 = vmatprep.subr.mxu0 %v8727
    %v8729 = vand.u32 %v7733, 4294901760
    %8730 = vmatpush1.msra.mxu0 %v8729
    %v8731 = vand.u32 %v7738, 4294901760
    %8732 = vmatprep.subr.mxu0 %v8731
    %v8733 = vand.u32 %v7737, 4294901760
    %8734 = vmatpush1.msra.mxu0 %v8733
    %v8735 = vand.u32 %v7742, 4294901760
    %8736 = vmatprep.subr.mxu0 %v8735
    %v8737 = vand.u32 %v7741, 4294901760
    %8738 = vmatpush1.msra.mxu0 %v8737
    %v8739 = vand.u32 %v7746, 4294901760
    %8740 = vmatprep.subr.mxu0 %v8739
    %v8741 = vand.u32 %v7745, 4294901760
    %8742 = vmatpush1.msra.mxu0 %v8741
    %8743 = vmatprep.subr.mxu0 0.0
    %8744 = vmatpush1.msra.mxu0 0.0
    %8745 = vmatprep.subr.mxu0 0.0
    %8746 = vmatpush1.msra.mxu0 0.0
    %8747 = vmatprep.subr.mxu0 0.0
    %8748 = vmatpush1.msra.mxu0 0.0
    %8749 = vmatprep.subr.mxu0 0.0
    %8750 = vmatpush1.msra.mxu0 0.0
    %8751 = vmatprep.subr.mxu0 0.0
    %8752 = vmatpush1.msra.mxu0 0.0
    %8753 = vmatprep.subr.mxu0 0.0
    %8754 = vmatpush1.msra.mxu0 0.0
    %8755 = vmatprep.subr.mxu0 0.0
    %8756 = vmatpush1.msra.mxu0 0.0
    %8757 = vmatprep.subr.mxu0 0.0
    %8758 = vmatpush1.msra.mxu0 0.0
    %8759 = vmatprep.subr.mxu0 0.0
    %8760 = vmatpush1.msra.mxu0 0.0
    %8761 = vmatprep.subr.mxu0 0.0
    %8762 = vmatpush1.msra.mxu0 0.0
    %8763 = vmatprep.subr.mxu0 0.0
    %8764 = vmatpush1.msra.mxu0 0.0
    %8765 = vmatprep.subr.mxu0 0.0
    %8766 = vmatpush1.msra.mxu0 0.0
    %8767 = vmatprep.subr.mxu0 0.0
    %8768 = vmatpush1.msra.mxu0 0.0
    %8769 = vmatprep.subr.mxu0 0.0
    %8770 = vmatpush1.msra.mxu0 0.0
    %v8771 = vand.u32 %v7749, 4294901760
    %v8772 = vsub.f32 %v7749, %v8771
    %v8773 = vand.u32 %v8772, 4294901760
    %v8774 = vsub.f32 %v8772, %v8773
    %v8775 = vand.u32 %v8774, 4294901760
    %8776 = vmatprep.mubr.f32.mxu0 %v8775
    %v8777 = vand.u32 %v7179, 4294901760
    %v8778 = vsub.f32 %v7179, %v8777
    %v8779 = vand.u32 %v8778, 4294901760
    %v8780 = vsub.f32 %v8778, %v8779
    %v8781 = vand.u32 %v8780, 4294901760
    %8782 = vmatmul.mubr.f32.gmra.mrb[0].mxu0 %v8781
    %v8783 = vpop.f32.mrb[0].mxu0
    %v8784 = vadd.f32 %v7183, %v8783
    %v8785 = vpop.f32.mrb[0].mxu0
    %v8786 = vadd.f32 %v7184, %v8785
    %8787 = vdwg.mxu0
    %v8788 = vand.u32 %v7678, 4294901760
    %v8789 = vsub.f32 %v7678, %v8788
    %v8790 = vand.u32 %v8789, 4294901760
    %v8791 = vsub.f32 %v8789, %v8790
    %v8792 = vand.u32 %v8791, 4294901760
    %8793 = vmatprep.subr.mxu0 %v8792
    %v8794 = vand.u32 %v7677, 4294901760
    %v8795 = vsub.f32 %v7677, %v8794
    %v8796 = vand.u32 %v8795, 4294901760
    %v8797 = vsub.f32 %v8795, %v8796
    %v8798 = vand.u32 %v8797, 4294901760
    %8799 = vmatpush1.msra.mxu0 %v8798
    %v8800 = vand.u32 %v7682, 4294901760
    %v8801 = vsub.f32 %v7682, %v8800
    %v8802 = vand.u32 %v8801, 4294901760
    %v8803 = vsub.f32 %v8801, %v8802
    %v8804 = vand.u32 %v8803, 4294901760
    %8805 = vmatprep.subr.mxu0 %v8804
    %v8806 = vand.u32 %v7681, 4294901760
    %v8807 = vsub.f32 %v7681, %v8806
    %v8808 = vand.u32 %v8807, 4294901760
    %v8809 = vsub.f32 %v8807, %v8808
    %v8810 = vand.u32 %v8809, 4294901760
    %8811 = vmatpush1.msra.mxu0 %v8810
    %v8812 = vand.u32 %v7686, 4294901760
    %v8813 = vsub.f32 %v7686, %v8812
    %v8814 = vand.u32 %v8813, 4294901760
    %v8815 = vsub.f32 %v8813, %v8814
    %v8816 = vand.u32 %v8815, 4294901760
    %8817 = vmatprep.subr.mxu0 %v8816
    %v8818 = vand.u32 %v7685, 4294901760
    %v8819 = vsub.f32 %v7685, %v8818
    %v8820 = vand.u32 %v8819, 4294901760
    %v8821 = vsub.f32 %v8819, %v8820
    %v8822 = vand.u32 %v8821, 4294901760
    %8823 = vmatpush1.msra.mxu0 %v8822
    %v8824 = vand.u32 %v7690, 4294901760
    %v8825 = vsub.f32 %v7690, %v8824
    %v8826 = vand.u32 %v8825, 4294901760
    %v8827 = vsub.f32 %v8825, %v8826
    %v8828 = vand.u32 %v8827, 4294901760
    %8829 = vmatprep.subr.mxu0 %v8828
    %v8830 = vand.u32 %v7689, 4294901760
    %v8831 = vsub.f32 %v7689, %v8830
    %v8832 = vand.u32 %v8831, 4294901760
    %v8833 = vsub.f32 %v8831, %v8832
    %v8834 = vand.u32 %v8833, 4294901760
    %8835 = vmatpush1.msra.mxu0 %v8834
    %v8836 = vand.u32 %v7694, 4294901760
    %v8837 = vsub.f32 %v7694, %v8836
    %v8838 = vand.u32 %v8837, 4294901760
    %v8839 = vsub.f32 %v8837, %v8838
    %v8840 = vand.u32 %v8839, 4294901760
    %8841 = vmatprep.subr.mxu0 %v8840
    %v8842 = vand.u32 %v7693, 4294901760
    %v8843 = vsub.f32 %v7693, %v8842
    %v8844 = vand.u32 %v8843, 4294901760
    %v8845 = vsub.f32 %v8843, %v8844
    %v8846 = vand.u32 %v8845, 4294901760
    %8847 = vmatpush1.msra.mxu0 %v8846
    %v8848 = vand.u32 %v7698, 4294901760
    %v8849 = vsub.f32 %v7698, %v8848
    %v8850 = vand.u32 %v8849, 4294901760
    %v8851 = vsub.f32 %v8849, %v8850
    %v8852 = vand.u32 %v8851, 4294901760
    %8853 = vmatprep.subr.mxu0 %v8852
    %v8854 = vand.u32 %v7697, 4294901760
    %v8855 = vsub.f32 %v7697, %v8854
    %v8856 = vand.u32 %v8855, 4294901760
    %v8857 = vsub.f32 %v8855, %v8856
    %v8858 = vand.u32 %v8857, 4294901760
    %8859 = vmatpush1.msra.mxu0 %v8858
    %v8860 = vand.u32 %v7702, 4294901760
    %v8861 = vsub.f32 %v7702, %v8860
    %v8862 = vand.u32 %v8861, 4294901760
    %v8863 = vsub.f32 %v8861, %v8862
    %v8864 = vand.u32 %v8863, 4294901760
    %8865 = vmatprep.subr.mxu0 %v8864
    %v8866 = vand.u32 %v7701, 4294901760
    %v8867 = vsub.f32 %v7701, %v8866
    %v8868 = vand.u32 %v8867, 4294901760
    %v8869 = vsub.f32 %v8867, %v8868
    %v8870 = vand.u32 %v8869, 4294901760
    %8871 = vmatpush1.msra.mxu0 %v8870
    %v8872 = vand.u32 %v7706, 4294901760
    %v8873 = vsub.f32 %v7706, %v8872
    %v8874 = vand.u32 %v8873, 4294901760
    %v8875 = vsub.f32 %v8873, %v8874
    %v8876 = vand.u32 %v8875, 4294901760
    %8877 = vmatprep.subr.mxu0 %v8876
    %v8878 = vand.u32 %v7705, 4294901760
    %v8879 = vsub.f32 %v7705, %v8878
    %v8880 = vand.u32 %v8879, 4294901760
    %v8881 = vsub.f32 %v8879, %v8880
    %v8882 = vand.u32 %v8881, 4294901760
    %8883 = vmatpush1.msra.mxu0 %v8882
    %v8884 = vand.u32 %v7710, 4294901760
    %v8885 = vsub.f32 %v7710, %v8884
    %v8886 = vand.u32 %v8885, 4294901760
    %v8887 = vsub.f32 %v8885, %v8886
    %v8888 = vand.u32 %v8887, 4294901760
    %8889 = vmatprep.subr.mxu0 %v8888
    %v8890 = vand.u32 %v7709, 4294901760
    %v8891 = vsub.f32 %v7709, %v8890
    %v8892 = vand.u32 %v8891, 4294901760
    %v8893 = vsub.f32 %v8891, %v8892
    %v8894 = vand.u32 %v8893, 4294901760
    %8895 = vmatpush1.msra.mxu0 %v8894
    %v8896 = vand.u32 %v7714, 4294901760
    %v8897 = vsub.f32 %v7714, %v8896
    %v8898 = vand.u32 %v8897, 4294901760
    %v8899 = vsub.f32 %v8897, %v8898
    %v8900 = vand.u32 %v8899, 4294901760
    %8901 = vmatprep.subr.mxu0 %v8900
    %v8902 = vand.u32 %v7713, 4294901760
    %v8903 = vsub.f32 %v7713, %v8902
    %v8904 = vand.u32 %v8903, 4294901760
    %v8905 = vsub.f32 %v8903, %v8904
    %v8906 = vand.u32 %v8905, 4294901760
    %8907 = vmatpush1.msra.mxu0 %v8906
    %v8908 = vand.u32 %v7718, 4294901760
    %v8909 = vsub.f32 %v7718, %v8908
    %v8910 = vand.u32 %v8909, 4294901760
    %v8911 = vsub.f32 %v8909, %v8910
    %v8912 = vand.u32 %v8911, 4294901760
    %8913 = vmatprep.subr.mxu0 %v8912
    %v8914 = vand.u32 %v7717, 4294901760
    %v8915 = vsub.f32 %v7717, %v8914
    %v8916 = vand.u32 %v8915, 4294901760
    %v8917 = vsub.f32 %v8915, %v8916
    %v8918 = vand.u32 %v8917, 4294901760
    %8919 = vmatpush1.msra.mxu0 %v8918
    %v8920 = vand.u32 %v7722, 4294901760
    %v8921 = vsub.f32 %v7722, %v8920
    %v8922 = vand.u32 %v8921, 4294901760
    %v8923 = vsub.f32 %v8921, %v8922
    %v8924 = vand.u32 %v8923, 4294901760
    %8925 = vmatprep.subr.mxu0 %v8924
    %v8926 = vand.u32 %v7721, 4294901760
    %v8927 = vsub.f32 %v7721, %v8926
    %v8928 = vand.u32 %v8927, 4294901760
    %v8929 = vsub.f32 %v8927, %v8928
    %v8930 = vand.u32 %v8929, 4294901760
    %8931 = vmatpush1.msra.mxu0 %v8930
    %v8932 = vand.u32 %v7726, 4294901760
    %v8933 = vsub.f32 %v7726, %v8932
    %v8934 = vand.u32 %v8933, 4294901760
    %v8935 = vsub.f32 %v8933, %v8934
    %v8936 = vand.u32 %v8935, 4294901760
    %8937 = vmatprep.subr.mxu0 %v8936
    %v8938 = vand.u32 %v7725, 4294901760
    %v8939 = vsub.f32 %v7725, %v8938
    %v8940 = vand.u32 %v8939, 4294901760
    %v8941 = vsub.f32 %v8939, %v8940
    %v8942 = vand.u32 %v8941, 4294901760
    %8943 = vmatpush1.msra.mxu0 %v8942
    %v8944 = vand.u32 %v7730, 4294901760
    %v8945 = vsub.f32 %v7730, %v8944
    %v8946 = vand.u32 %v8945, 4294901760
    %v8947 = vsub.f32 %v8945, %v8946
    %v8948 = vand.u32 %v8947, 4294901760
    %8949 = vmatprep.subr.mxu0 %v8948
    %v8950 = vand.u32 %v7729, 4294901760
    %v8951 = vsub.f32 %v7729, %v8950
    %v8952 = vand.u32 %v8951, 4294901760
    %v8953 = vsub.f32 %v8951, %v8952
    %v8954 = vand.u32 %v8953, 4294901760
    %8955 = vmatpush1.msra.mxu0 %v8954
    %v8956 = vand.u32 %v7734, 4294901760
    %v8957 = vsub.f32 %v7734, %v8956
    %v8958 = vand.u32 %v8957, 4294901760
    %v8959 = vsub.f32 %v8957, %v8958
    %v8960 = vand.u32 %v8959, 4294901760
    %8961 = vmatprep.subr.mxu0 %v8960
    %v8962 = vand.u32 %v7733, 4294901760
    %v8963 = vsub.f32 %v7733, %v8962
    %v8964 = vand.u32 %v8963, 4294901760
    %v8965 = vsub.f32 %v8963, %v8964
    %v8966 = vand.u32 %v8965, 4294901760
    %8967 = vmatpush1.msra.mxu0 %v8966
    %v8968 = vand.u32 %v7738, 4294901760
    %v8969 = vsub.f32 %v7738, %v8968
    %v8970 = vand.u32 %v8969, 4294901760
    %v8971 = vsub.f32 %v8969, %v8970
    %v8972 = vand.u32 %v8971, 4294901760
    %8973 = vmatprep.subr.mxu0 %v8972
    %v8974 = vand.u32 %v7737, 4294901760
    %v8975 = vsub.f32 %v7737, %v8974
    %v8976 = vand.u32 %v8975, 4294901760
    %v8977 = vsub.f32 %v8975, %v8976
    %v8978 = vand.u32 %v8977, 4294901760
    %8979 = vmatpush1.msra.mxu0 %v8978
    %v8980 = vand.u32 %v7742, 4294901760
    %v8981 = vsub.f32 %v7742, %v8980
    %v8982 = vand.u32 %v8981, 4294901760
    %v8983 = vsub.f32 %v8981, %v8982
    %v8984 = vand.u32 %v8983, 4294901760
    %8985 = vmatprep.subr.mxu0 %v8984
    %v8986 = vand.u32 %v7741, 4294901760
    %v8987 = vsub.f32 %v7741, %v8986
    %v8988 = vand.u32 %v8987, 4294901760
    %v8989 = vsub.f32 %v8987, %v8988
    %v8990 = vand.u32 %v8989, 4294901760
    %8991 = vmatpush1.msra.mxu0 %v8990
    %v8992 = vand.u32 %v7746, 4294901760
    %v8993 = vsub.f32 %v7746, %v8992
    %v8994 = vand.u32 %v8993, 4294901760
    %v8995 = vsub.f32 %v8993, %v8994
    %v8996 = vand.u32 %v8995, 4294901760
    %8997 = vmatprep.subr.mxu0 %v8996
    %v8998 = vand.u32 %v7745, 4294901760
    %v8999 = vsub.f32 %v7745, %v8998
    %v9000 = vand.u32 %v8999, 4294901760
    %v9001 = vsub.f32 %v8999, %v9000
    %v9002 = vand.u32 %v9001, 4294901760
    %9003 = vmatpush1.msra.mxu0 %v9002
    %9004 = vmatprep.subr.mxu0 0.0
    %9005 = vmatpush1.msra.mxu0 0.0
    %9006 = vmatprep.subr.mxu0 0.0
    %9007 = vmatpush1.msra.mxu0 0.0
    %9008 = vmatprep.subr.mxu0 0.0
    %9009 = vmatpush1.msra.mxu0 0.0
    %9010 = vmatprep.subr.mxu0 0.0
    %9011 = vmatpush1.msra.mxu0 0.0
    %9012 = vmatprep.subr.mxu0 0.0
    %9013 = vmatpush1.msra.mxu0 0.0
    %9014 = vmatprep.subr.mxu0 0.0
    %9015 = vmatpush1.msra.mxu0 0.0
    %9016 = vmatprep.subr.mxu0 0.0
    %9017 = vmatpush1.msra.mxu0 0.0
    %9018 = vmatprep.subr.mxu0 0.0
    %9019 = vmatpush1.msra.mxu0 0.0
    %9020 = vmatprep.subr.mxu0 0.0
    %9021 = vmatpush1.msra.mxu0 0.0
    %9022 = vmatprep.subr.mxu0 0.0
    %9023 = vmatpush1.msra.mxu0 0.0
    %9024 = vmatprep.subr.mxu0 0.0
    %9025 = vmatpush1.msra.mxu0 0.0
    %9026 = vmatprep.subr.mxu0 0.0
    %9027 = vmatpush1.msra.mxu0 0.0
    %9028 = vmatprep.subr.mxu0 0.0
    %9029 = vmatpush1.msra.mxu0 0.0
    %9030 = vmatprep.subr.mxu0 0.0
    %9031 = vmatpush1.msra.mxu0 0.0
    %v9032 = vand.u32 %v7749, 4294901760
    %9033 = vmatprep.mubr.f32.mxu0 %v9032
    %v9034 = vand.u32 %v7179, 4294901760
    %9035 = vmatmul.mubr.f32.gmra.mrb[0].mxu0 %v9034
    %v9036 = vpop.f32.mrb[0].mxu0
    %v9037 = vadd.f32 %v8784, %v9036
    %v9038 = vpop.f32.mrb[0].mxu0
    %v9039 = vadd.f32 %v8786, %v9038
    %9040 = vdwg.mxu0
    %v9041 = vand.u32 %v7678, 4294901760
    %v9042 = vsub.f32 %v7678, %v9041
    %9043 = vmatprep.subr.mxu0 %v9042
    %v9044 = vand.u32 %v7677, 4294901760
    %v9045 = vsub.f32 %v7677, %v9044
    %9046 = vmatpush1.msra.mxu0 %v9045
    %v9047 = vand.u32 %v7682, 4294901760
    %v9048 = vsub.f32 %v7682, %v9047
    %9049 = vmatprep.subr.mxu0 %v9048
    %v9050 = vand.u32 %v7681, 4294901760
    %v9051 = vsub.f32 %v7681, %v9050
    %9052 = vmatpush1.msra.mxu0 %v9051
    %v9053 = vand.u32 %v7686, 4294901760
    %v9054 = vsub.f32 %v7686, %v9053
    %9055 = vmatprep.subr.mxu0 %v9054
    %v9056 = vand.u32 %v7685, 4294901760
    %v9057 = vsub.f32 %v7685, %v9056
    %9058 = vmatpush1.msra.mxu0 %v9057
    %v9059 = vand.u32 %v7690, 4294901760
    %v9060 = vsub.f32 %v7690, %v9059
    %9061 = vmatprep.subr.mxu0 %v9060
    %v9062 = vand.u32 %v7689, 4294901760
    %v9063 = vsub.f32 %v7689, %v9062
    %9064 = vmatpush1.msra.mxu0 %v9063
    %v9065 = vand.u32 %v7694, 4294901760
    %v9066 = vsub.f32 %v7694, %v9065
    %9067 = vmatprep.subr.mxu0 %v9066
    %v9068 = vand.u32 %v7693, 4294901760
    %v9069 = vsub.f32 %v7693, %v9068
    %9070 = vmatpush1.msra.mxu0 %v9069
    %v9071 = vand.u32 %v7698, 4294901760
    %v9072 = vsub.f32 %v7698, %v9071
    %9073 = vmatprep.subr.mxu0 %v9072
    %v9074 = vand.u32 %v7697, 4294901760
    %v9075 = vsub.f32 %v7697, %v9074
    %9076 = vmatpush1.msra.mxu0 %v9075
    %v9077 = vand.u32 %v7702, 4294901760
    %v9078 = vsub.f32 %v7702, %v9077
    %9079 = vmatprep.subr.mxu0 %v9078
    %v9080 = vand.u32 %v7701, 4294901760
    %v9081 = vsub.f32 %v7701, %v9080
    %9082 = vmatpush1.msra.mxu0 %v9081
    %v9083 = vand.u32 %v7706, 4294901760
    %v9084 = vsub.f32 %v7706, %v9083
    %9085 = vmatprep.subr.mxu0 %v9084
    %v9086 = vand.u32 %v7705, 4294901760
    %v9087 = vsub.f32 %v7705, %v9086
    %9088 = vmatpush1.msra.mxu0 %v9087
    %v9089 = vand.u32 %v7710, 4294901760
    %v9090 = vsub.f32 %v7710, %v9089
    %9091 = vmatprep.subr.mxu0 %v9090
    %v9092 = vand.u32 %v7709, 4294901760
    %v9093 = vsub.f32 %v7709, %v9092
    %9094 = vmatpush1.msra.mxu0 %v9093
    %v9095 = vand.u32 %v7714, 4294901760
    %v9096 = vsub.f32 %v7714, %v9095
    %9097 = vmatprep.subr.mxu0 %v9096
    %v9098 = vand.u32 %v7713, 4294901760
    %v9099 = vsub.f32 %v7713, %v9098
    %9100 = vmatpush1.msra.mxu0 %v9099
    %v9101 = vand.u32 %v7718, 4294901760
    %v9102 = vsub.f32 %v7718, %v9101
    %9103 = vmatprep.subr.mxu0 %v9102
    %v9104 = vand.u32 %v7717, 4294901760
    %v9105 = vsub.f32 %v7717, %v9104
    %9106 = vmatpush1.msra.mxu0 %v9105
    %v9107 = vand.u32 %v7722, 4294901760
    %v9108 = vsub.f32 %v7722, %v9107
    %9109 = vmatprep.subr.mxu0 %v9108
    %v9110 = vand.u32 %v7721, 4294901760
    %v9111 = vsub.f32 %v7721, %v9110
    %9112 = vmatpush1.msra.mxu0 %v9111
    %v9113 = vand.u32 %v7726, 4294901760
    %v9114 = vsub.f32 %v7726, %v9113
    %9115 = vmatprep.subr.mxu0 %v9114
    %v9116 = vand.u32 %v7725, 4294901760
    %v9117 = vsub.f32 %v7725, %v9116
    %9118 = vmatpush1.msra.mxu0 %v9117
    %v9119 = vand.u32 %v7730, 4294901760
    %v9120 = vsub.f32 %v7730, %v9119
    %9121 = vmatprep.subr.mxu0 %v9120
    %v9122 = vand.u32 %v7729, 4294901760
    %v9123 = vsub.f32 %v7729, %v9122
    %9124 = vmatpush1.msra.mxu0 %v9123
    %v9125 = vand.u32 %v7734, 4294901760
    %v9126 = vsub.f32 %v7734, %v9125
    %9127 = vmatprep.subr.mxu0 %v9126
    %v9128 = vand.u32 %v7733, 4294901760
    %v9129 = vsub.f32 %v7733, %v9128
    %9130 = vmatpush1.msra.mxu0 %v9129
    %v9131 = vand.u32 %v7738, 4294901760
    %v9132 = vsub.f32 %v7738, %v9131
    %9133 = vmatprep.subr.mxu0 %v9132
    %v9134 = vand.u32 %v7737, 4294901760
    %v9135 = vsub.f32 %v7737, %v9134
    %9136 = vmatpush1.msra.mxu0 %v9135
    %v9137 = vand.u32 %v7742, 4294901760
    %v9138 = vsub.f32 %v7742, %v9137
    %9139 = vmatprep.subr.mxu0 %v9138
    %v9140 = vand.u32 %v7741, 4294901760
    %v9141 = vsub.f32 %v7741, %v9140
    %9142 = vmatpush1.msra.mxu0 %v9141
    %v9143 = vand.u32 %v7746, 4294901760
    %v9144 = vsub.f32 %v7746, %v9143
    %9145 = vmatprep.subr.mxu0 %v9144
    %v9146 = vand.u32 %v7745, 4294901760
    %v9147 = vsub.f32 %v7745, %v9146
    %9148 = vmatpush1.msra.mxu0 %v9147
    %9149 = vmatprep.subr.mxu0 0.0
    %9150 = vmatpush1.msra.mxu0 0.0
    %9151 = vmatprep.subr.mxu0 0.0
    %9152 = vmatpush1.msra.mxu0 0.0
    %9153 = vmatprep.subr.mxu0 0.0
    %9154 = vmatpush1.msra.mxu0 0.0
    %9155 = vmatprep.subr.mxu0 0.0
    %9156 = vmatpush1.msra.mxu0 0.0
    %9157 = vmatprep.subr.mxu0 0.0
    %9158 = vmatpush1.msra.mxu0 0.0
    %9159 = vmatprep.subr.mxu0 0.0
    %9160 = vmatpush1.msra.mxu0 0.0
    %9161 = vmatprep.subr.mxu0 0.0
    %9162 = vmatpush1.msra.mxu0 0.0
    %9163 = vmatprep.subr.mxu0 0.0
    %9164 = vmatpush1.msra.mxu0 0.0
    %9165 = vmatprep.subr.mxu0 0.0
    %9166 = vmatpush1.msra.mxu0 0.0
    %9167 = vmatprep.subr.mxu0 0.0
    %9168 = vmatpush1.msra.mxu0 0.0
    %9169 = vmatprep.subr.mxu0 0.0
    %9170 = vmatpush1.msra.mxu0 0.0
    %9171 = vmatprep.subr.mxu0 0.0
    %9172 = vmatpush1.msra.mxu0 0.0
    %9173 = vmatprep.subr.mxu0 0.0
    %9174 = vmatpush1.msra.mxu0 0.0
    %9175 = vmatprep.subr.mxu0 0.0
    %9176 = vmatpush1.msra.mxu0 0.0
    %v9177 = vand.u32 %v7749, 4294901760
    %v9178 = vsub.f32 %v7749, %v9177
    %9179 = vmatprep.mubr.f32.mxu0 %v9178
    %v9180 = vand.u32 %v7179, 4294901760
    %v9181 = vsub.f32 %v7179, %v9180
    %9182 = vmatmul.mubr.f32.gmra.mrb[0].mxu0 %v9181
    %v9183 = vpop.f32.mrb[0].mxu0
    %v9184 = vadd.f32 %v9037, %v9183
    %v9185 = vpop.f32.mrb[0].mxu0
    %v9186 = vadd.f32 %v9039, %v9185
    %9187 = vdwg.mxu0
    %v9188 = vand.u32 %v7678, 4294901760
    %9189 = vmatprep.subr.mxu0 %v9188
    %v9190 = vand.u32 %v7677, 4294901760
    %9191 = vmatpush1.msra.mxu0 %v9190
    %v9192 = vand.u32 %v7682, 4294901760
    %9193 = vmatprep.subr.mxu0 %v9192
    %v9194 = vand.u32 %v7681, 4294901760
    %9195 = vmatpush1.msra.mxu0 %v9194
    %v9196 = vand.u32 %v7686, 4294901760
    %9197 = vmatprep.subr.mxu0 %v9196
    %v9198 = vand.u32 %v7685, 4294901760
    %9199 = vmatpush1.msra.mxu0 %v9198
    %v9200 = vand.u32 %v7690, 4294901760
    %9201 = vmatprep.subr.mxu0 %v9200
    %v9202 = vand.u32 %v7689, 4294901760
    %9203 = vmatpush1.msra.mxu0 %v9202
    %v9204 = vand.u32 %v7694, 4294901760
    %9205 = vmatprep.subr.mxu0 %v9204
    %v9206 = vand.u32 %v7693, 4294901760
    %9207 = vmatpush1.msra.mxu0 %v9206
    %v9208 = vand.u32 %v7698, 4294901760
    %9209 = vmatprep.subr.mxu0 %v9208
    %v9210 = vand.u32 %v7697, 4294901760
    %9211 = vmatpush1.msra.mxu0 %v9210
    %v9212 = vand.u32 %v7702, 4294901760
    %9213 = vmatprep.subr.mxu0 %v9212
    %v9214 = vand.u32 %v7701, 4294901760
    %9215 = vmatpush1.msra.mxu0 %v9214
    %v9216 = vand.u32 %v7706, 4294901760
    %9217 = vmatprep.subr.mxu0 %v9216
    %v9218 = vand.u32 %v7705, 4294901760
    %9219 = vmatpush1.msra.mxu0 %v9218
    %v9220 = vand.u32 %v7710, 4294901760
    %9221 = vmatprep.subr.mxu0 %v9220
    %v9222 = vand.u32 %v7709, 4294901760
    %9223 = vmatpush1.msra.mxu0 %v9222
    %v9224 = vand.u32 %v7714, 4294901760
    %9225 = vmatprep.subr.mxu0 %v9224
    %v9226 = vand.u32 %v7713, 4294901760
    %9227 = vmatpush1.msra.mxu0 %v9226
    %v9228 = vand.u32 %v7718, 4294901760
    %9229 = vmatprep.subr.mxu0 %v9228
    %v9230 = vand.u32 %v7717, 4294901760
    %9231 = vmatpush1.msra.mxu0 %v9230
    %v9232 = vand.u32 %v7722, 4294901760
    %9233 = vmatprep.subr.mxu0 %v9232
    %v9234 = vand.u32 %v7721, 4294901760
    %9235 = vmatpush1.msra.mxu0 %v9234
    %v9236 = vand.u32 %v7726, 4294901760
    %9237 = vmatprep.subr.mxu0 %v9236
    %v9238 = vand.u32 %v7725, 4294901760
    %9239 = vmatpush1.msra.mxu0 %v9238
    %v9240 = vand.u32 %v7730, 4294901760
    %9241 = vmatprep.subr.mxu0 %v9240
    %v9242 = vand.u32 %v7729, 4294901760
    %9243 = vmatpush1.msra.mxu0 %v9242
    %v9244 = vand.u32 %v7734, 4294901760
    %9245 = vmatprep.subr.mxu0 %v9244
    %v9246 = vand.u32 %v7733, 4294901760
    %9247 = vmatpush1.msra.mxu0 %v9246
    %v9248 = vand.u32 %v7738, 4294901760
    %9249 = vmatprep.subr.mxu0 %v9248
    %v9250 = vand.u32 %v7737, 4294901760
    %9251 = vmatpush1.msra.mxu0 %v9250
    %v9252 = vand.u32 %v7742, 4294901760
    %9253 = vmatprep.subr.mxu0 %v9252
    %v9254 = vand.u32 %v7741, 4294901760
    %9255 = vmatpush1.msra.mxu0 %v9254
    %v9256 = vand.u32 %v7746, 4294901760
    %9257 = vmatprep.subr.mxu0 %v9256
    %v9258 = vand.u32 %v7745, 4294901760
    %9259 = vmatpush1.msra.mxu0 %v9258
    %9260 = vmatprep.subr.mxu0 0.0
    %9261 = vmatpush1.msra.mxu0 0.0
    %9262 = vmatprep.subr.mxu0 0.0
    %9263 = vmatpush1.msra.mxu0 0.0
    %9264 = vmatprep.subr.mxu0 0.0
    %9265 = vmatpush1.msra.mxu0 0.0
    %9266 = vmatprep.subr.mxu0 0.0
    %9267 = vmatpush1.msra.mxu0 0.0
    %9268 = vmatprep.subr.mxu0 0.0
    %9269 = vmatpush1.msra.mxu0 0.0
    %9270 = vmatprep.subr.mxu0 0.0
    %9271 = vmatpush1.msra.mxu0 0.0
    %9272 = vmatprep.subr.mxu0 0.0
    %9273 = vmatpush1.msra.mxu0 0.0
    %9274 = vmatprep.subr.mxu0 0.0
    %9275 = vmatpush1.msra.mxu0 0.0
    %9276 = vmatprep.subr.mxu0 0.0
    %9277 = vmatpush1.msra.mxu0 0.0
    %9278 = vmatprep.subr.mxu0 0.0
    %9279 = vmatpush1.msra.mxu0 0.0
    %9280 = vmatprep.subr.mxu0 0.0
    %9281 = vmatpush1.msra.mxu0 0.0
    %9282 = vmatprep.subr.mxu0 0.0
    %9283 = vmatpush1.msra.mxu0 0.0
    %9284 = vmatprep.subr.mxu0 0.0
    %9285 = vmatpush1.msra.mxu0 0.0
    %9286 = vmatprep.subr.mxu0 0.0
    %9287 = vmatpush1.msra.mxu0 0.0
    %v9288 = vand.u32 %v7749, 4294901760
    %v9289 = vsub.f32 %v7749, %v9288
    %v9290 = vand.u32 %v9289, 4294901760
    %9291 = vmatprep.mubr.f32.mxu0 %v9290
    %v9292 = vand.u32 %v7179, 4294901760
    %v9293 = vsub.f32 %v7179, %v9292
    %v9294 = vand.u32 %v9293, 4294901760
    %9295 = vmatmul.mubr.f32.gmra.mrb[0].mxu0 %v9294
    %v9296 = vpop.f32.mrb[0].mxu0
    %v9297 = vadd.f32 %v9184, %v9296
    %v9298 = vpop.f32.mrb[0].mxu0
    %v9299 = vadd.f32 %v9186, %v9298
    %9300 = vdwg.mxu0
    %v9301 = vand.u32 %v7678, 4294901760
    %v9302 = vsub.f32 %v7678, %v9301
    %v9303 = vand.u32 %v9302, 4294901760
    %9304 = vmatprep.subr.mxu0 %v9303
    %v9305 = vand.u32 %v7677, 4294901760
    %v9306 = vsub.f32 %v7677, %v9305
    %v9307 = vand.u32 %v9306, 4294901760
    %9308 = vmatpush1.msra.mxu0 %v9307
    %v9309 = vand.u32 %v7682, 4294901760
    %v9310 = vsub.f32 %v7682, %v9309
    %v9311 = vand.u32 %v9310, 4294901760
    %9312 = vmatprep.subr.mxu0 %v9311
    %v9313 = vand.u32 %v7681, 4294901760
    %v9314 = vsub.f32 %v7681, %v9313
    %v9315 = vand.u32 %v9314, 4294901760
    %9316 = vmatpush1.msra.mxu0 %v9315
    %v9317 = vand.u32 %v7686, 4294901760
    %v9318 = vsub.f32 %v7686, %v9317
    %v9319 = vand.u32 %v9318, 4294901760
    %9320 = vmatprep.subr.mxu0 %v9319
    %v9321 = vand.u32 %v7685, 4294901760
    %v9322 = vsub.f32 %v7685, %v9321
    %v9323 = vand.u32 %v9322, 4294901760
    %9324 = vmatpush1.msra.mxu0 %v9323
    %v9325 = vand.u32 %v7690, 4294901760
    %v9326 = vsub.f32 %v7690, %v9325
    %v9327 = vand.u32 %v9326, 4294901760
    %9328 = vmatprep.subr.mxu0 %v9327
    %v9329 = vand.u32 %v7689, 4294901760
    %v9330 = vsub.f32 %v7689, %v9329
    %v9331 = vand.u32 %v9330, 4294901760
    %9332 = vmatpush1.msra.mxu0 %v9331
    %v9333 = vand.u32 %v7694, 4294901760
    %v9334 = vsub.f32 %v7694, %v9333
    %v9335 = vand.u32 %v9334, 4294901760
    %9336 = vmatprep.subr.mxu0 %v9335
    %v9337 = vand.u32 %v7693, 4294901760
    %v9338 = vsub.f32 %v7693, %v9337
    %v9339 = vand.u32 %v9338, 4294901760
    %9340 = vmatpush1.msra.mxu0 %v9339
    %v9341 = vand.u32 %v7698, 4294901760
    %v9342 = vsub.f32 %v7698, %v9341
    %v9343 = vand.u32 %v9342, 4294901760
    %9344 = vmatprep.subr.mxu0 %v9343
    %v9345 = vand.u32 %v7697, 4294901760
    %v9346 = vsub.f32 %v7697, %v9345
    %v9347 = vand.u32 %v9346, 4294901760
    %9348 = vmatpush1.msra.mxu0 %v9347
    %v9349 = vand.u32 %v7702, 4294901760
    %v9350 = vsub.f32 %v7702, %v9349
    %v9351 = vand.u32 %v9350, 4294901760
    %9352 = vmatprep.subr.mxu0 %v9351
    %v9353 = vand.u32 %v7701, 4294901760
    %v9354 = vsub.f32 %v7701, %v9353
    %v9355 = vand.u32 %v9354, 4294901760
    %9356 = vmatpush1.msra.mxu0 %v9355
    %v9357 = vand.u32 %v7706, 4294901760
    %v9358 = vsub.f32 %v7706, %v9357
    %v9359 = vand.u32 %v9358, 4294901760
    %9360 = vmatprep.subr.mxu0 %v9359
    %v9361 = vand.u32 %v7705, 4294901760
    %v9362 = vsub.f32 %v7705, %v9361
    %v9363 = vand.u32 %v9362, 4294901760
    %9364 = vmatpush1.msra.mxu0 %v9363
    %v9365 = vand.u32 %v7710, 4294901760
    %v9366 = vsub.f32 %v7710, %v9365
    %v9367 = vand.u32 %v9366, 4294901760
    %9368 = vmatprep.subr.mxu0 %v9367
    %v9369 = vand.u32 %v7709, 4294901760
    %v9370 = vsub.f32 %v7709, %v9369
    %v9371 = vand.u32 %v9370, 4294901760
    %9372 = vmatpush1.msra.mxu0 %v9371
    %v9373 = vand.u32 %v7714, 4294901760
    %v9374 = vsub.f32 %v7714, %v9373
    %v9375 = vand.u32 %v9374, 4294901760
    %9376 = vmatprep.subr.mxu0 %v9375
    %v9377 = vand.u32 %v7713, 4294901760
    %v9378 = vsub.f32 %v7713, %v9377
    %v9379 = vand.u32 %v9378, 4294901760
    %9380 = vmatpush1.msra.mxu0 %v9379
    %v9381 = vand.u32 %v7718, 4294901760
    %v9382 = vsub.f32 %v7718, %v9381
    %v9383 = vand.u32 %v9382, 4294901760
    %9384 = vmatprep.subr.mxu0 %v9383
    %v9385 = vand.u32 %v7717, 4294901760
    %v9386 = vsub.f32 %v7717, %v9385
    %v9387 = vand.u32 %v9386, 4294901760
    %9388 = vmatpush1.msra.mxu0 %v9387
    %v9389 = vand.u32 %v7722, 4294901760
    %v9390 = vsub.f32 %v7722, %v9389
    %v9391 = vand.u32 %v9390, 4294901760
    %9392 = vmatprep.subr.mxu0 %v9391
    %v9393 = vand.u32 %v7721, 4294901760
    %v9394 = vsub.f32 %v7721, %v9393
    %v9395 = vand.u32 %v9394, 4294901760
    %9396 = vmatpush1.msra.mxu0 %v9395
    %v9397 = vand.u32 %v7726, 4294901760
    %v9398 = vsub.f32 %v7726, %v9397
    %v9399 = vand.u32 %v9398, 4294901760
    %9400 = vmatprep.subr.mxu0 %v9399
    %v9401 = vand.u32 %v7725, 4294901760
    %v9402 = vsub.f32 %v7725, %v9401
    %v9403 = vand.u32 %v9402, 4294901760
    %9404 = vmatpush1.msra.mxu0 %v9403
    %v9405 = vand.u32 %v7730, 4294901760
    %v9406 = vsub.f32 %v7730, %v9405
    %v9407 = vand.u32 %v9406, 4294901760
    %9408 = vmatprep.subr.mxu0 %v9407
    %v9409 = vand.u32 %v7729, 4294901760
    %v9410 = vsub.f32 %v7729, %v9409
    %v9411 = vand.u32 %v9410, 4294901760
    %9412 = vmatpush1.msra.mxu0 %v9411
    %v9413 = vand.u32 %v7734, 4294901760
    %v9414 = vsub.f32 %v7734, %v9413
    %v9415 = vand.u32 %v9414, 4294901760
    %9416 = vmatprep.subr.mxu0 %v9415
    %v9417 = vand.u32 %v7733, 4294901760
    %v9418 = vsub.f32 %v7733, %v9417
    %v9419 = vand.u32 %v9418, 4294901760
    %9420 = vmatpush1.msra.mxu0 %v9419
    %v9421 = vand.u32 %v7738, 4294901760
    %v9422 = vsub.f32 %v7738, %v9421
    %v9423 = vand.u32 %v9422, 4294901760
    %9424 = vmatprep.subr.mxu0 %v9423
    %v9425 = vand.u32 %v7737, 4294901760
    %v9426 = vsub.f32 %v7737, %v9425
    %v9427 = vand.u32 %v9426, 4294901760
    %9428 = vmatpush1.msra.mxu0 %v9427
    %v9429 = vand.u32 %v7742, 4294901760
    %v9430 = vsub.f32 %v7742, %v9429
    %v9431 = vand.u32 %v9430, 4294901760
    %9432 = vmatprep.subr.mxu0 %v9431
    %v9433 = vand.u32 %v7741, 4294901760
    %v9434 = vsub.f32 %v7741, %v9433
    %v9435 = vand.u32 %v9434, 4294901760
    %9436 = vmatpush1.msra.mxu0 %v9435
    %v9437 = vand.u32 %v7746, 4294901760
    %v9438 = vsub.f32 %v7746, %v9437
    %v9439 = vand.u32 %v9438, 4294901760
    %9440 = vmatprep.subr.mxu0 %v9439
    %v9441 = vand.u32 %v7745, 4294901760
    %v9442 = vsub.f32 %v7745, %v9441
    %v9443 = vand.u32 %v9442, 4294901760
    %9444 = vmatpush1.msra.mxu0 %v9443
    %9445 = vmatprep.subr.mxu0 0.0
    %9446 = vmatpush1.msra.mxu0 0.0
    %9447 = vmatprep.subr.mxu0 0.0
    %9448 = vmatpush1.msra.mxu0 0.0
    %9449 = vmatprep.subr.mxu0 0.0
    %9450 = vmatpush1.msra.mxu0 0.0
    %9451 = vmatprep.subr.mxu0 0.0
    %9452 = vmatpush1.msra.mxu0 0.0
    %9453 = vmatprep.subr.mxu0 0.0
    %9454 = vmatpush1.msra.mxu0 0.0
    %9455 = vmatprep.subr.mxu0 0.0
    %9456 = vmatpush1.msra.mxu0 0.0
    %9457 = vmatprep.subr.mxu0 0.0
    %9458 = vmatpush1.msra.mxu0 0.0
    %9459 = vmatprep.subr.mxu0 0.0
    %9460 = vmatpush1.msra.mxu0 0.0
    %9461 = vmatprep.subr.mxu0 0.0
    %9462 = vmatpush1.msra.mxu0 0.0
    %9463 = vmatprep.subr.mxu0 0.0
    %9464 = vmatpush1.msra.mxu0 0.0
    %9465 = vmatprep.subr.mxu0 0.0
    %9466 = vmatpush1.msra.mxu0 0.0
    %9467 = vmatprep.subr.mxu0 0.0
    %9468 = vmatpush1.msra.mxu0 0.0
    %9469 = vmatprep.subr.mxu0 0.0
    %9470 = vmatpush1.msra.mxu0 0.0
    %9471 = vmatprep.subr.mxu0 0.0
    %9472 = vmatpush1.msra.mxu0 0.0
    %v9473 = vand.u32 %v7749, 4294901760
    %9474 = vmatprep.mubr.f32.mxu0 %v9473
    %v9475 = vand.u32 %v7179, 4294901760
    %9476 = vmatmul.mubr.f32.gmra.mrb[0].mxu0 %v9475
    %v9477 = vpop.f32.mrb[0].mxu0
    %v9478 = vadd.f32 %v9297, %v9477
    %v9479 = vpop.f32.mrb[0].mxu0
    %v9480 = vadd.f32 %v9299, %v9479
    %9481 = vdwg.mxu0
    %v9482 = vand.u32 %v7678, 4294901760
    %9483 = vmatprep.subr.mxu0 %v9482
    %v9484 = vand.u32 %v7677, 4294901760
    %9485 = vmatpush1.msra.mxu0 %v9484
    %v9486 = vand.u32 %v7682, 4294901760
    %9487 = vmatprep.subr.mxu0 %v9486
    %v9488 = vand.u32 %v7681, 4294901760
    %9489 = vmatpush1.msra.mxu0 %v9488
    %v9490 = vand.u32 %v7686, 4294901760
    %9491 = vmatprep.subr.mxu0 %v9490
    %v9492 = vand.u32 %v7685, 4294901760
    %9493 = vmatpush1.msra.mxu0 %v9492
    %v9494 = vand.u32 %v7690, 4294901760
    %9495 = vmatprep.subr.mxu0 %v9494
    %v9496 = vand.u32 %v7689, 4294901760
    %9497 = vmatpush1.msra.mxu0 %v9496
    %v9498 = vand.u32 %v7694, 4294901760
    %9499 = vmatprep.subr.mxu0 %v9498
    %v9500 = vand.u32 %v7693, 4294901760
    %9501 = vmatpush1.msra.mxu0 %v9500
    %v9502 = vand.u32 %v7698, 4294901760
    %9503 = vmatprep.subr.mxu0 %v9502
    %v9504 = vand.u32 %v7697, 4294901760
    %9505 = vmatpush1.msra.mxu0 %v9504
    %v9506 = vand.u32 %v7702, 4294901760
    %9507 = vmatprep.subr.mxu0 %v9506
    %v9508 = vand.u32 %v7701, 4294901760
    %9509 = vmatpush1.msra.mxu0 %v9508
    %v9510 = vand.u32 %v7706, 4294901760
    %9511 = vmatprep.subr.mxu0 %v9510
    %v9512 = vand.u32 %v7705, 4294901760
    %9513 = vmatpush1.msra.mxu0 %v9512
    %v9514 = vand.u32 %v7710, 4294901760
    %9515 = vmatprep.subr.mxu0 %v9514
    %v9516 = vand.u32 %v7709, 4294901760
    %9517 = vmatpush1.msra.mxu0 %v9516
    %v9518 = vand.u32 %v7714, 4294901760
    %9519 = vmatprep.subr.mxu0 %v9518
    %v9520 = vand.u32 %v7713, 4294901760
    %9521 = vmatpush1.msra.mxu0 %v9520
    %v9522 = vand.u32 %v7718, 4294901760
    %9523 = vmatprep.subr.mxu0 %v9522
    %v9524 = vand.u32 %v7717, 4294901760
    %9525 = vmatpush1.msra.mxu0 %v9524
    %v9526 = vand.u32 %v7722, 4294901760
    %9527 = vmatprep.subr.mxu0 %v9526
    %v9528 = vand.u32 %v7721, 4294901760
    %9529 = vmatpush1.msra.mxu0 %v9528
    %v9530 = vand.u32 %v7726, 4294901760
    %9531 = vmatprep.subr.mxu0 %v9530
    %v9532 = vand.u32 %v7725, 4294901760
    %9533 = vmatpush1.msra.mxu0 %v9532
    %v9534 = vand.u32 %v7730, 4294901760
    %9535 = vmatprep.subr.mxu0 %v9534
    %v9536 = vand.u32 %v7729, 4294901760
    %9537 = vmatpush1.msra.mxu0 %v9536
    %v9538 = vand.u32 %v7734, 4294901760
    %9539 = vmatprep.subr.mxu0 %v9538
    %v9540 = vand.u32 %v7733, 4294901760
    %9541 = vmatpush1.msra.mxu0 %v9540
    %v9542 = vand.u32 %v7738, 4294901760
    %9543 = vmatprep.subr.mxu0 %v9542
    %v9544 = vand.u32 %v7737, 4294901760
    %9545 = vmatpush1.msra.mxu0 %v9544
    %v9546 = vand.u32 %v7742, 4294901760
    %9547 = vmatprep.subr.mxu0 %v9546
    %v9548 = vand.u32 %v7741, 4294901760
    %9549 = vmatpush1.msra.mxu0 %v9548
    %v9550 = vand.u32 %v7746, 4294901760
    %9551 = vmatprep.subr.mxu0 %v9550
    %v9552 = vand.u32 %v7745, 4294901760
    %9553 = vmatpush1.msra.mxu0 %v9552
    %9554 = vmatprep.subr.mxu0 0.0
    %9555 = vmatpush1.msra.mxu0 0.0
    %9556 = vmatprep.subr.mxu0 0.0
    %9557 = vmatpush1.msra.mxu0 0.0
    %9558 = vmatprep.subr.mxu0 0.0
    %9559 = vmatpush1.msra.mxu0 0.0
    %9560 = vmatprep.subr.mxu0 0.0
    %9561 = vmatpush1.msra.mxu0 0.0
    %9562 = vmatprep.subr.mxu0 0.0
    %9563 = vmatpush1.msra.mxu0 0.0
    %9564 = vmatprep.subr.mxu0 0.0
    %9565 = vmatpush1.msra.mxu0 0.0
    %9566 = vmatprep.subr.mxu0 0.0
    %9567 = vmatpush1.msra.mxu0 0.0
    %9568 = vmatprep.subr.mxu0 0.0
    %9569 = vmatpush1.msra.mxu0 0.0
    %9570 = vmatprep.subr.mxu0 0.0
    %9571 = vmatpush1.msra.mxu0 0.0
    %9572 = vmatprep.subr.mxu0 0.0
    %9573 = vmatpush1.msra.mxu0 0.0
    %9574 = vmatprep.subr.mxu0 0.0
    %9575 = vmatpush1.msra.mxu0 0.0
    %9576 = vmatprep.subr.mxu0 0.0
    %9577 = vmatpush1.msra.mxu0 0.0
    %9578 = vmatprep.subr.mxu0 0.0
    %9579 = vmatpush1.msra.mxu0 0.0
    %9580 = vmatprep.subr.mxu0 0.0
    %9581 = vmatpush1.msra.mxu0 0.0
    %v9582 = vand.u32 %v7749, 4294901760
    %9583 = vmatprep.mubr.f32.mxu0 %v9582
    %v9584 = vand.u32 %v7179, 4294901760
    %9585 = vmatmul.mubr.f32.gmra.mrb[0].mxu0 %v9584
    %v9586 = vpop.f32.mrb[0].mxu0
    %v9587 = vadd.f32 %v9478, %v9586
    %v9588 = vpop.f32.mrb[0].mxu0
    %v9589 = vadd.f32 %v9480, %v9588
    %9590 = vdwg.mxu0
    %v9591 = vmax.f32 %v8667, 0.0
    %v9592 = vmax.f32 %v8669, 0.0
    %v9593 = vmax.f32 %v9587, 0.0
    %v9594 = vmax.f32 %v9589, 0.0
    %v9595 = vld [vmem:[%s12] sm:$0xff]
    %v9596 = vld [vmem:[%s13] sm:$0xff]
    %v9597 = vld [vmem:[%s13 + $0x8] sm:$0xff]
    %v9598 = vld [vmem:[%s13 + $0x10] sm:$0xff]
    %v9599 = vld [vmem:[%s13 + $0x18] sm:$0xff]
    %9600 = vrot.lane.b32.xlu0 %v9591, 17
    %v9601 = vpop.permute.xlu0 %9600
    %9602 = vrot.lane.b32.xlu0 %v9592, 17
    %v9603 = vpop.permute.xlu0 %9602
    %9604 = vrot.lane.b32.xlu0 %v9593, 17
    %v9605 = vpop.permute.xlu0 %9604
    %9606 = vrot.lane.b32.xlu0 %v9594, 17
    %v9607 = vpop.permute.xlu0 %9606
    %v9608 = vsel %vm7203, %v9605, %v9607
    %v9609 = vsel %vm7203, %v9603, %v9605
    %v9610 = vsel %vm7203, %v9601, %v9603
    %v9611 = vsel %vm7203, %v9607, %v9601
    %v9612 = vmul.f32 %v9611, %v7215
    %v9613 = vmul.f32 %v9610, %v7219
    %v9614 = vmul.f32 %v9609, %v7223
    %v9615 = vmul.f32 %v9608, %v7227
    %9616 = vst [vmem:[#allocation3] sm:$0xff] %v9612
    %9617 = vst [vmem:[#allocation3 + $0x8] sm:$0xff] %v9613
    %9618 = vst [vmem:[#allocation3 + $0x10] sm:$0xff] %v9614
    %9619 = vst [vmem:[#allocation3 + $0x18] sm:$0xff] %v9615
    %9620 = vrot.lane.b32.xlu0 %v9591, 16
    %v9621 = vpop.permute.xlu0 %9620
    %9622 = vrot.lane.b32.xlu0 %v9592, 16
    %v9623 = vpop.permute.xlu0 %9622
    %9624 = vrot.lane.b32.xlu0 %v9593, 16
    %v9625 = vpop.permute.xlu0 %9624
    %9626 = vrot.lane.b32.xlu0 %v9594, 16
    %v9627 = vpop.permute.xlu0 %9626
    %v9628 = vsel %vm7260, %v9625, %v9627
    %v9629 = vsel %vm7260, %v9623, %v9625
    %v9630 = vsel %vm7260, %v9621, %v9623
    %v9631 = vsel %vm7260, %v9627, %v9621
    %v9632 = vmul.f32 %v9631, %v7272
    %v9633 = vmul.f32 %v9630, %v7276
    %v9634 = vmul.f32 %v9629, %v7280
    %v9635 = vmul.f32 %v9628, %v7284
    %9636 = vst [vmem:[#allocation3 + $0x20] sm:$0xff] %v9632
    %9637 = vst [vmem:[#allocation3 + $0x28] sm:$0xff] %v9633
    %9638 = vst [vmem:[#allocation3 + $0x30] sm:$0xff] %v9634
    %9639 = vst [vmem:[#allocation3 + $0x38] sm:$0xff] %v9635
    %9640 = vrot.lane.b32.xlu0 %v9591, 15
    %v9641 = vpop.permute.xlu0 %9640
    %9642 = vrot.lane.b32.xlu0 %v9592, 15
    %v9643 = vpop.permute.xlu0 %9642
    %9644 = vrot.lane.b32.xlu0 %v9593, 15
    %v9645 = vpop.permute.xlu0 %9644
    %9646 = vrot.lane.b32.xlu0 %v9594, 15
    %v9647 = vpop.permute.xlu0 %9646
    %v9648 = vsel %vm7317, %v9645, %v9647
    %v9649 = vsel %vm7317, %v9643, %v9645
    %v9650 = vsel %vm7317, %v9641, %v9643
    %v9651 = vsel %vm7317, %v9647, %v9641
    %v9652 = vmul.f32 %v9651, %v7329
    %v9653 = vmul.f32 %v9650, %v7333
    %v9654 = vmul.f32 %v9649, %v7337
    %v9655 = vmul.f32 %v9648, %v7341
    %9656 = vst [vmem:[#allocation3 + $0x40] sm:$0xff] %v9652
    %9657 = vst [vmem:[#allocation3 + $0x48] sm:$0xff] %v9653
    %9658 = vst [vmem:[#allocation3 + $0x50] sm:$0xff] %v9654
    %9659 = vst [vmem:[#allocation3 + $0x58] sm:$0xff] %v9655
    %9660 = vrot.lane.b32.xlu0 %v9591, 1
    %v9661 = vpop.permute.xlu0 %9660
    %9662 = vrot.lane.b32.xlu0 %v9592, 1
    %v9663 = vpop.permute.xlu0 %9662
    %9664 = vrot.lane.b32.xlu0 %v9593, 1
    %v9665 = vpop.permute.xlu0 %9664
    %9666 = vrot.lane.b32.xlu0 %v9594, 1
    %v9667 = vpop.permute.xlu0 %9666
    %v9668 = vsel %vm7374, %v9665, %v9667
    %v9669 = vsel %vm7374, %v9663, %v9665
    %v9670 = vsel %vm7374, %v9661, %v9663
    %v9671 = vsel %vm7374, %v9667, %v9661
    %v9672 = vmul.f32 %v9671, %v7386
    %v9673 = vmul.f32 %v9670, %v7390
    %v9674 = vmul.f32 %v9669, %v7394
    %v9675 = vmul.f32 %v9668, %v7398
    %9676 = vst [vmem:[#allocation3 + $0x60] sm:$0xff] %v9672
    %9677 = vst [vmem:[#allocation3 + $0x68] sm:$0xff] %v9673
    %9678 = vst [vmem:[#allocation3 + $0x70] sm:$0xff] %v9674
    %9679 = vst [vmem:[#allocation3 + $0x78] sm:$0xff] %v9675
    %v9680 = vmul.f32 %v9591, %v7418
    %v9681 = vmul.f32 %v9592, %v7422
    %v9682 = vmul.f32 %v9593, %v7426
    %v9683 = vmul.f32 %v9594, %v7430
    %9684 = vst [vmem:[#allocation3 + $0x80] sm:$0xff] %v9680
    %9685 = vst [vmem:[#allocation3 + $0x88] sm:$0xff] %v9681
    %9686 = vst [vmem:[#allocation3 + $0x90] sm:$0xff] %v9682
    %9687 = vst [vmem:[#allocation3 + $0x98] sm:$0xff] %v9683
    %9688 = vrot.lane.b32.xlu0 %v9591, 127
    %v9689 = vpop.permute.xlu0 %9688
    %9690 = vrot.lane.b32.xlu0 %v9592, 127
    %v9691 = vpop.permute.xlu0 %9690
    %9692 = vrot.lane.b32.xlu0 %v9593, 127
    %v9693 = vpop.permute.xlu0 %9692
    %9694 = vrot.lane.b32.xlu0 %v9594, 127
    %v9695 = vpop.permute.xlu0 %9694
    %v9696 = vsel %vm7463, %v9693, %v9695
    %v9697 = vsel %vm7463, %v9691, %v9693
    %v9698 = vsel %vm7463, %v9689, %v9691
    %v9699 = vsel %vm7463, %v9695, %v9689
    %v9700 = vmul.f32 %v9698, %v7475
    %v9701 = vmul.f32 %v9697, %v7479
    %v9702 = vmul.f32 %v9696, %v7483
    %v9703 = vmul.f32 %v9699, %v7487
    %9704 = vst [vmem:[#allocation3 + $0xa0] sm:$0xff] %v9700
    %9705 = vst [vmem:[#allocation3 + $0xa8] sm:$0xff] %v9701
    %9706 = vst [vmem:[#allocation3 + $0xb0] sm:$0xff] %v9702
    %9707 = vst [vmem:[#allocation3 + $0xb8] sm:$0xff] %v9703
    %9708 = vrot.lane.b32.xlu0 %v9591, 113
    %v9709 = vpop.permute.xlu0 %9708
    %9710 = vrot.lane.b32.xlu0 %v9592, 113
    %v9711 = vpop.permute.xlu0 %9710
    %9712 = vrot.lane.b32.xlu0 %v9593, 113
    %v9713 = vpop.permute.xlu0 %9712
    %9714 = vrot.lane.b32.xlu0 %v9594, 113
    %v9715 = vpop.permute.xlu0 %9714
    %v9716 = vsel %vm7520, %v9713, %v9715
    %v9717 = vsel %vm7520, %v9711, %v9713
    %v9718 = vsel %vm7520, %v9709, %v9711
    %v9719 = vsel %vm7520, %v9715, %v9709
    %v9720 = vmul.f32 %v9718, %v7532
    %v9721 = vmul.f32 %v9717, %v7536
    %v9722 = vmul.f32 %v9716, %v7540
    %v9723 = vmul.f32 %v9719, %v7544
    %9724 = vst [vmem:[#allocation3 + $0xc0] sm:$0xff] %v9720
    %9725 = vst [vmem:[#allocation3 + $0xc8] sm:$0xff] %v9721
    %9726 = vst [vmem:[#allocation3 + $0xd0] sm:$0xff] %v9722
    %9727 = vst [vmem:[#allocation3 + $0xd8] sm:$0xff] %v9723
    %9728 = vrot.lane.b32.xlu0 %v9591, 112
    %v9729 = vpop.permute.xlu0 %9728
    %9730 = vrot.lane.b32.xlu0 %v9592, 112
    %v9731 = vpop.permute.xlu0 %9730
    %9732 = vrot.lane.b32.xlu0 %v9593, 112
    %v9733 = vpop.permute.xlu0 %9732
    %9734 = vrot.lane.b32.xlu0 %v9594, 112
    %v9735 = vpop.permute.xlu0 %9734
    %v9736 = vsel %vm7577, %v9733, %v9735
    %v9737 = vsel %vm7577, %v9731, %v9733
    %v9738 = vsel %vm7577, %v9729, %v9731
    %v9739 = vsel %vm7577, %v9735, %v9729
    %v9740 = vmul.f32 %v9738, %v7589
    %v9741 = vmul.f32 %v9737, %v7593
    %v9742 = vmul.f32 %v9736, %v7597
    %v9743 = vmul.f32 %v9739, %v7601
    %9744 = vst [vmem:[#allocation3 + $0xe0] sm:$0xff] %v9740
    %9745 = vst [vmem:[#allocation3 + $0xe8] sm:$0xff] %v9741
    %9746 = vst [vmem:[#allocation3 + $0xf0] sm:$0xff] %v9742
    %9747 = vst [vmem:[#allocation3 + $0xf8] sm:$0xff] %v9743
    %9748 = vrot.lane.b32.xlu0 %v9591, 111
    %v9749 = vpop.permute.xlu0 %9748
    %9750 = vrot.lane.b32.xlu0 %v9592, 111
    %v9751 = vpop.permute.xlu0 %9750
    %9752 = vrot.lane.b32.xlu0 %v9593, 111
    %v9753 = vpop.permute.xlu0 %9752
    %9754 = vrot.lane.b32.xlu0 %v9594, 111
    %v9755 = vpop.permute.xlu0 %9754
    %v9756 = vsel %vm7634, %v9753, %v9755
    %v9757 = vsel %vm7634, %v9751, %v9753
    %v9758 = vsel %vm7634, %v9749, %v9751
    %v9759 = vsel %vm7634, %v9755, %v9749
    %v9760 = vmul.f32 %v9758, %v7646
    %v9761 = vmul.f32 %v9757, %v7650
    %v9762 = vmul.f32 %v9756, %v7654
    %v9763 = vmul.f32 %v9759, %v7658
    %9764 = vst [vmem:[#allocation3 + $0x100] sm:$0xff] %v9760
    %9765 = vst [vmem:[#allocation3 + $0x108] sm:$0xff] %v9761
    %9766 = vst [vmem:[#allocation3 + $0x110] sm:$0xff] %v9762
    %9767 = vst [vmem:[#allocation3 + $0x118] sm:$0xff] %v9763
    %v9768 = vld [vmem:[#allocation3] sm:$0xff]
    %v9769 = vld [vmem:[#allocation3 + $0x8] sm:$0xff]
    %v9770 = vld [vmem:[#allocation3 + $0x10] sm:$0xff]
    %v9771 = vld [vmem:[#allocation3 + $0x18] sm:$0xff]
    %v9772 = vld [vmem:[#allocation3 + $0x20] sm:$0xff]
    %v9773 = vld [vmem:[#allocation3 + $0x28] sm:$0xff]
    %v9774 = vld [vmem:[#allocation3 + $0x30] sm:$0xff]
    %v9775 = vld [vmem:[#allocation3 + $0x38] sm:$0xff]
    %v9776 = vld [vmem:[#allocation3 + $0x40] sm:$0xff]
    %v9777 = vld [vmem:[#allocation3 + $0x48] sm:$0xff]
    %v9778 = vld [vmem:[#allocation3 + $0x50] sm:$0xff]
    %v9779 = vld [vmem:[#allocation3 + $0x58] sm:$0xff]
    %v9780 = vld [vmem:[#allocation3 + $0x60] sm:$0xff]
    %v9781 = vld [vmem:[#allocation3 + $0x68] sm:$0xff]
    %v9782 = vld [vmem:[#allocation3 + $0x70] sm:$0xff]
    %v9783 = vld [vmem:[#allocation3 + $0x78] sm:$0xff]
    %v9784 = vld [vmem:[#allocation3 + $0x80] sm:$0xff]
    %v9785 = vld [vmem:[#allocation3 + $0x88] sm:$0xff]
    %v9786 = vld [vmem:[#allocation3 + $0x90] sm:$0xff]
    %v9787 = vld [vmem:[#allocation3 + $0x98] sm:$0xff]
    %v9788 = vld [vmem:[#allocation3 + $0xa0] sm:$0xff]
    %v9789 = vld [vmem:[#allocation3 + $0xa8] sm:$0xff]
    %v9790 = vld [vmem:[#allocation3 + $0xb0] sm:$0xff]
    %v9791 = vld [vmem:[#allocation3 + $0xb8] sm:$0xff]
    %v9792 = vld [vmem:[#allocation3 + $0xc0] sm:$0xff]
    %v9793 = vld [vmem:[#allocation3 + $0xc8] sm:$0xff]
    %v9794 = vld [vmem:[#allocation3 + $0xd0] sm:$0xff]
    %v9795 = vld [vmem:[#allocation3 + $0xd8] sm:$0xff]
    %v9796 = vld [vmem:[#allocation3 + $0xe0] sm:$0xff]
    %v9797 = vld [vmem:[#allocation3 + $0xe8] sm:$0xff]
    %v9798 = vld [vmem:[#allocation3 + $0xf0] sm:$0xff]
    %v9799 = vld [vmem:[#allocation3 + $0xf8] sm:$0xff]
    %v9800 = vld [vmem:[#allocation3 + $0x100] sm:$0xff]
    %v9801 = vld [vmem:[#allocation3 + $0x108] sm:$0xff]
    %v9802 = vld [vmem:[#allocation3 + $0x110] sm:$0xff]
    %v9803 = vld [vmem:[#allocation3 + $0x118] sm:$0xff]
    %vm9804 = vcmask 588800
    %v9806 = vsel %vm9804, %v9595, 0
    %v9808 = vand.u32 %v9769, 4294901760
    %9809 = vmatprep.subr.mxu0 %v9808
    %v9810 = vand.u32 %v9768, 4294901760
    %9811 = vmatpush1.msra.mxu0 %v9810
    %v9812 = vand.u32 %v9773, 4294901760
    %9813 = vmatprep.subr.mxu0 %v9812
    %v9814 = vand.u32 %v9772, 4294901760
    %9815 = vmatpush1.msra.mxu0 %v9814
    %v9816 = vand.u32 %v9777, 4294901760
    %9817 = vmatprep.subr.mxu0 %v9816
    %v9818 = vand.u32 %v9776, 4294901760
    %9819 = vmatpush1.msra.mxu0 %v9818
    %v9820 = vand.u32 %v9781, 4294901760
    %9821 = vmatprep.subr.mxu0 %v9820
    %v9822 = vand.u32 %v9780, 4294901760
    %9823 = vmatpush1.msra.mxu0 %v9822
    %v9824 = vand.u32 %v9785, 4294901760
    %9825 = vmatprep.subr.mxu0 %v9824
    %v9826 = vand.u32 %v9784, 4294901760
    %9827 = vmatpush1.msra.mxu0 %v9826
    %v9828 = vand.u32 %v9789, 4294901760
    %9829 = vmatprep.subr.mxu0 %v9828
    %v9830 = vand.u32 %v9788, 4294901760
    %9831 = vmatpush1.msra.mxu0 %v9830
    %v9832 = vand.u32 %v9793, 4294901760
    %9833 = vmatprep.subr.mxu0 %v9832
    %v9834 = vand.u32 %v9792, 4294901760
    %9835 = vmatpush1.msra.mxu0 %v9834
    %v9836 = vand.u32 %v9797, 4294901760
    %9837 = vmatprep.subr.mxu0 %v9836
    %v9838 = vand.u32 %v9796, 4294901760
    %9839 = vmatpush1.msra.mxu0 %v9838
    %v9840 = vand.u32 %v9801, 4294901760
    %9841 = vmatprep.subr.mxu0 %v9840
    %v9842 = vand.u32 %v9800, 4294901760
    %9843 = vmatpush1.msra.mxu0 %v9842
    %9844 = vmatprep.subr.mxu0 0.0
    %9845 = vmatpush1.msra.mxu0 0.0
    %9846 = vmatprep.subr.mxu0 0.0
    %9847 = vmatpush1.msra.mxu0 0.0
    %9848 = vmatprep.subr.mxu0 0.0
    %9849 = vmatpush1.msra.mxu0 0.0
    %9850 = vmatprep.subr.mxu0 0.0
    %9851 = vmatpush1.msra.mxu0 0.0
    %9852 = vmatprep.subr.mxu0 0.0
    %9853 = vmatpush1.msra.mxu0 0.0
    %9854 = vmatprep.subr.mxu0 0.0
    %9855 = vmatpush1.msra.mxu0 0.0
    %9856 = vmatprep.subr.mxu0 0.0
    %9857 = vmatpush1.msra.mxu0 0.0
    %9858 = vmatprep.subr.mxu0 0.0
    %9859 = vmatpush1.msra.mxu0 0.0
    %9860 = vmatprep.subr.mxu0 0.0
    %9861 = vmatpush1.msra.mxu0 0.0
    %9862 = vmatprep.subr.mxu0 0.0
    %9863 = vmatpush1.msra.mxu0 0.0
    %9864 = vmatprep.subr.mxu0 0.0
    %9865 = vmatpush1.msra.mxu0 0.0
    %9866 = vmatprep.subr.mxu0 0.0
    %9867 = vmatpush1.msra.mxu0 0.0
    %9868 = vmatprep.subr.mxu0 0.0
    %9869 = vmatpush1.msra.mxu0 0.0
    %9870 = vmatprep.subr.mxu0 0.0
    %9871 = vmatpush1.msra.mxu0 0.0
    %9872 = vmatprep.subr.mxu0 0.0
    %9873 = vmatpush1.msra.mxu0 0.0
    %9874 = vmatprep.subr.mxu0 0.0
    %9875 = vmatpush1.msra.mxu0 0.0
    %9876 = vmatprep.subr.mxu0 0.0
    %9877 = vmatpush1.msra.mxu0 0.0
    %9878 = vmatprep.subr.mxu0 0.0
    %9879 = vmatpush1.msra.mxu0 0.0
    %9880 = vmatprep.subr.mxu0 0.0
    %9881 = vmatpush1.msra.mxu0 0.0
    %9882 = vmatprep.subr.mxu0 0.0
    %9883 = vmatpush1.msra.mxu0 0.0
    %9884 = vmatprep.subr.mxu0 0.0
    %9885 = vmatpush1.msra.mxu0 0.0
    %9886 = vmatprep.subr.mxu0 0.0
    %9887 = vmatpush1.msra.mxu0 0.0
    %9888 = vmatprep.subr.mxu0 0.0
    %9889 = vmatpush1.msra.mxu0 0.0
    %9890 = vmatprep.mubr.f32.mxu0 0.0
    %v9891 = vand.u32 %v9806, 4294901760
    %v9892 = vsub.f32 %v9806, %v9891
    %v9893 = vand.u32 %v9892, 4294901760
    %v9894 = vsub.f32 %v9892, %v9893
    %v9895 = vand.u32 %v9894, 4294901760
    %9896 = vmatmul.mubr.f32.gmra.mrb[0].mxu0 %v9895
    %v9897 = vpop.f32.mrb[0].mxu0
    %v9898 = vadd.f32 %v9596, %v9897
    %v9899 = vpop.f32.mrb[0].mxu0
    %v9900 = vadd.f32 %v9597, %v9899
    %9901 = vdwg.mxu0
    %v9902 = vand.u32 %v9769, 4294901760
    %v9903 = vsub.f32 %v9769, %v9902
    %v9904 = vand.u32 %v9903, 4294901760
    %v9905 = vsub.f32 %v9903, %v9904
    %v9906 = vand.u32 %v9905, 4294901760
    %9907 = vmatprep.subr.mxu0 %v9906
    %v9908 = vand.u32 %v9768, 4294901760
    %v9909 = vsub.f32 %v9768, %v9908
    %v9910 = vand.u32 %v9909, 4294901760
    %v9911 = vsub.f32 %v9909, %v9910
    %v9912 = vand.u32 %v9911, 4294901760
    %9913 = vmatpush1.msra.mxu0 %v9912
    %v9914 = vand.u32 %v9773, 4294901760
    %v9915 = vsub.f32 %v9773, %v9914
    %v9916 = vand.u32 %v9915, 4294901760
    %v9917 = vsub.f32 %v9915, %v9916
    %v9918 = vand.u32 %v9917, 4294901760
    %9919 = vmatprep.subr.mxu0 %v9918
    %v9920 = vand.u32 %v9772, 4294901760
    %v9921 = vsub.f32 %v9772, %v9920
    %v9922 = vand.u32 %v9921, 4294901760
    %v9923 = vsub.f32 %v9921, %v9922
    %v9924 = vand.u32 %v9923, 4294901760
    %9925 = vmatpush1.msra.mxu0 %v9924
    %v9926 = vand.u32 %v9777, 4294901760
    %v9927 = vsub.f32 %v9777, %v9926
    %v9928 = vand.u32 %v9927, 4294901760
    %v9929 = vsub.f32 %v9927, %v9928
    %v9930 = vand.u32 %v9929, 4294901760
    %9931 = vmatprep.subr.mxu0 %v9930
    %v9932 = vand.u32 %v9776, 4294901760
    %v9933 = vsub.f32 %v9776, %v9932
    %v9934 = vand.u32 %v9933, 4294901760
    %v9935 = vsub.f32 %v9933, %v9934
    %v9936 = vand.u32 %v9935, 4294901760
    %9937 = vmatpush1.msra.mxu0 %v9936
    %v9938 = vand.u32 %v9781, 4294901760
    %v9939 = vsub.f32 %v9781, %v9938
    %v9940 = vand.u32 %v9939, 4294901760
    %v9941 = vsub.f32 %v9939, %v9940
    %v9942 = vand.u32 %v9941, 4294901760
    %9943 = vmatprep.subr.mxu0 %v9942
    %v9944 = vand.u32 %v9780, 4294901760
    %v9945 = vsub.f32 %v9780, %v9944
    %v9946 = vand.u32 %v9945, 4294901760
    %v9947 = vsub.f32 %v9945, %v9946
    %v9948 = vand.u32 %v9947, 4294901760
    %9949 = vmatpush1.msra.mxu0 %v9948
    %v9950 = vand.u32 %v9785, 4294901760
    %v9951 = vsub.f32 %v9785, %v9950
    %v9952 = vand.u32 %v9951, 4294901760
    %v9953 = vsub.f32 %v9951, %v9952
    %v9954 = vand.u32 %v9953, 4294901760
    %9955 = vmatprep.subr.mxu0 %v9954
    %v9956 = vand.u32 %v9784, 4294901760
    %v9957 = vsub.f32 %v9784, %v9956
    %v9958 = vand.u32 %v9957, 4294901760
    %v9959 = vsub.f32 %v9957, %v9958
    %v9960 = vand.u32 %v9959, 4294901760
    %9961 = vmatpush1.msra.mxu0 %v9960
    %v9962 = vand.u32 %v9789, 4294901760
    %v9963 = vsub.f32 %v9789, %v9962
    %v9964 = vand.u32 %v9963, 4294901760
    %v9965 = vsub.f32 %v9963, %v9964
    %v9966 = vand.u32 %v9965, 4294901760
    %9967 = vmatprep.subr.mxu0 %v9966
    %v9968 = vand.u32 %v9788, 4294901760
    %v9969 = vsub.f32 %v9788, %v9968
    %v9970 = vand.u32 %v9969, 4294901760
    %v9971 = vsub.f32 %v9969, %v9970
    %v9972 = vand.u32 %v9971, 4294901760
    %9973 = vmatpush1.msra.mxu0 %v9972
    %v9974 = vand.u32 %v9793, 4294901760
    %v9975 = vsub.f32 %v9793, %v9974
    %v9976 = vand.u32 %v9975, 4294901760
    %v9977 = vsub.f32 %v9975, %v9976
    %v9978 = vand.u32 %v9977, 4294901760
    %9979 = vmatprep.subr.mxu0 %v9978
    %v9980 = vand.u32 %v9792, 4294901760
    %v9981 = vsub.f32 %v9792, %v9980
    %v9982 = vand.u32 %v9981, 4294901760
    %v9983 = vsub.f32 %v9981, %v9982
    %v9984 = vand.u32 %v9983, 4294901760
    %9985 = vmatpush1.msra.mxu0 %v9984
    %v9986 = vand.u32 %v9797, 4294901760
    %v9987 = vsub.f32 %v9797, %v9986
    %v9988 = vand.u32 %v9987, 4294901760
    %v9989 = vsub.f32 %v9987, %v9988
    %v9990 = vand.u32 %v9989, 4294901760
    %9991 = vmatprep.subr.mxu0 %v9990
    %v9992 = vand.u32 %v9796, 4294901760
    %v9993 = vsub.f32 %v9796, %v9992
    %v9994 = vand.u32 %v9993, 4294901760
    %v9995 = vsub.f32 %v9993, %v9994
    %v9996 = vand.u32 %v9995, 4294901760
    %9997 = vmatpush1.msra.mxu0 %v9996
    %v9998 = vand.u32 %v9801, 4294901760
    %v9999 = vsub.f32 %v9801, %v9998
    %v10000 = vand.u32 %v9999, 4294901760
    %v10001 = vsub.f32 %v9999, %v10000
    %v10002 = vand.u32 %v10001, 4294901760
    %10003 = vmatprep.subr.mxu0 %v10002
    %v10004 = vand.u32 %v9800, 4294901760
    %v10005 = vsub.f32 %v9800, %v10004
    %v10006 = vand.u32 %v10005, 4294901760
    %v10007 = vsub.f32 %v10005, %v10006
    %v10008 = vand.u32 %v10007, 4294901760
    %10009 = vmatpush1.msra.mxu0 %v10008
    %10010 = vmatprep.subr.mxu0 0.0
    %10011 = vmatpush1.msra.mxu0 0.0
    %10012 = vmatprep.subr.mxu0 0.0
    %10013 = vmatpush1.msra.mxu0 0.0
    %10014 = vmatprep.subr.mxu0 0.0
    %10015 = vmatpush1.msra.mxu0 0.0
    %10016 = vmatprep.subr.mxu0 0.0
    %10017 = vmatpush1.msra.mxu0 0.0
    %10018 = vmatprep.subr.mxu0 0.0
    %10019 = vmatpush1.msra.mxu0 0.0
    %10020 = vmatprep.subr.mxu0 0.0
    %10021 = vmatpush1.msra.mxu0 0.0
    %10022 = vmatprep.subr.mxu0 0.0
    %10023 = vmatpush1.msra.mxu0 0.0
    %10024 = vmatprep.subr.mxu0 0.0
    %10025 = vmatpush1.msra.mxu0 0.0
    %10026 = vmatprep.subr.mxu0 0.0
    %10027 = vmatpush1.msra.mxu0 0.0
    %10028 = vmatprep.subr.mxu0 0.0
    %10029 = vmatpush1.msra.mxu0 0.0
    %10030 = vmatprep.subr.mxu0 0.0
    %10031 = vmatpush1.msra.mxu0 0.0
    %10032 = vmatprep.subr.mxu0 0.0
    %10033 = vmatpush1.msra.mxu0 0.0
    %10034 = vmatprep.subr.mxu0 0.0
    %10035 = vmatpush1.msra.mxu0 0.0
    %10036 = vmatprep.subr.mxu0 0.0
    %10037 = vmatpush1.msra.mxu0 0.0
    %10038 = vmatprep.subr.mxu0 0.0
    %10039 = vmatpush1.msra.mxu0 0.0
    %10040 = vmatprep.subr.mxu0 0.0
    %10041 = vmatpush1.msra.mxu0 0.0
    %10042 = vmatprep.subr.mxu0 0.0
    %10043 = vmatpush1.msra.mxu0 0.0
    %10044 = vmatprep.subr.mxu0 0.0
    %10045 = vmatpush1.msra.mxu0 0.0
    %10046 = vmatprep.subr.mxu0 0.0
    %10047 = vmatpush1.msra.mxu0 0.0
    %10048 = vmatprep.subr.mxu0 0.0
    %10049 = vmatpush1.msra.mxu0 0.0
    %10050 = vmatprep.subr.mxu0 0.0
    %10051 = vmatpush1.msra.mxu0 0.0
    %10052 = vmatprep.subr.mxu0 0.0
    %10053 = vmatpush1.msra.mxu0 0.0
    %10054 = vmatprep.subr.mxu0 0.0
    %10055 = vmatpush1.msra.mxu0 0.0
    %10056 = vmatprep.mubr.f32.mxu0 0.0
    %v10057 = vand.u32 %v9806, 4294901760
    %10058 = vmatmul.mubr.f32.gmra.mrb[0].mxu0 %v10057
    %v10059 = vpop.f32.mrb[0].mxu0
    %v10060 = vadd.f32 %v9898, %v10059
    %v10061 = vpop.f32.mrb[0].mxu0
    %v10062 = vadd.f32 %v9900, %v10061
    %10063 = vdwg.mxu0
    %v10064 = vand.u32 %v9769, 4294901760
    %v10065 = vsub.f32 %v9769, %v10064
    %10066 = vmatprep.subr.mxu0 %v10065
    %v10067 = vand.u32 %v9768, 4294901760
    %v10068 = vsub.f32 %v9768, %v10067
    %10069 = vmatpush1.msra.mxu0 %v10068
    %v10070 = vand.u32 %v9773, 4294901760
    %v10071 = vsub.f32 %v9773, %v10070
    %10072 = vmatprep.subr.mxu0 %v10071
    %v10073 = vand.u32 %v9772, 4294901760
    %v10074 = vsub.f32 %v9772, %v10073
    %10075 = vmatpush1.msra.mxu0 %v10074
    %v10076 = vand.u32 %v9777, 4294901760
    %v10077 = vsub.f32 %v9777, %v10076
    %10078 = vmatprep.subr.mxu0 %v10077
    %v10079 = vand.u32 %v9776, 4294901760
    %v10080 = vsub.f32 %v9776, %v10079
    %10081 = vmatpush1.msra.mxu0 %v10080
    %v10082 = vand.u32 %v9781, 4294901760
    %v10083 = vsub.f32 %v9781, %v10082
    %10084 = vmatprep.subr.mxu0 %v10083
    %v10085 = vand.u32 %v9780, 4294901760
    %v10086 = vsub.f32 %v9780, %v10085
    %10087 = vmatpush1.msra.mxu0 %v10086
    %v10088 = vand.u32 %v9785, 4294901760
    %v10089 = vsub.f32 %v9785, %v10088
    %10090 = vmatprep.subr.mxu0 %v10089
    %v10091 = vand.u32 %v9784, 4294901760
    %v10092 = vsub.f32 %v9784, %v10091
    %10093 = vmatpush1.msra.mxu0 %v10092
    %v10094 = vand.u32 %v9789, 4294901760
    %v10095 = vsub.f32 %v9789, %v10094
    %10096 = vmatprep.subr.mxu0 %v10095
    %v10097 = vand.u32 %v9788, 4294901760
    %v10098 = vsub.f32 %v9788, %v10097
    %10099 = vmatpush1.msra.mxu0 %v10098
    %v10100 = vand.u32 %v9793, 4294901760
    %v10101 = vsub.f32 %v9793, %v10100
    %10102 = vmatprep.subr.mxu0 %v10101
    %v10103 = vand.u32 %v9792, 4294901760
    %v10104 = vsub.f32 %v9792, %v10103
    %10105 = vmatpush1.msra.mxu0 %v10104
    %v10106 = vand.u32 %v9797, 4294901760
    %v10107 = vsub.f32 %v9797, %v10106
    %10108 = vmatprep.subr.mxu0 %v10107
    %v10109 = vand.u32 %v9796, 4294901760
    %v10110 = vsub.f32 %v9796, %v10109
    %10111 = vmatpush1.msra.mxu0 %v10110
    %v10112 = vand.u32 %v9801, 4294901760
    %v10113 = vsub.f32 %v9801, %v10112
    %10114 = vmatprep.subr.mxu0 %v10113
    %v10115 = vand.u32 %v9800, 4294901760
    %v10116 = vsub.f32 %v9800, %v10115
    %10117 = vmatpush1.msra.mxu0 %v10116
    %10118 = vmatprep.subr.mxu0 0.0
    %10119 = vmatpush1.msra.mxu0 0.0
    %10120 = vmatprep.subr.mxu0 0.0
    %10121 = vmatpush1.msra.mxu0 0.0
    %10122 = vmatprep.subr.mxu0 0.0
    %10123 = vmatpush1.msra.mxu0 0.0
    %10124 = vmatprep.subr.mxu0 0.0
    %10125 = vmatpush1.msra.mxu0 0.0
    %10126 = vmatprep.subr.mxu0 0.0
    %10127 = vmatpush1.msra.mxu0 0.0
    %10128 = vmatprep.subr.mxu0 0.0
    %10129 = vmatpush1.msra.mxu0 0.0
    %10130 = vmatprep.subr.mxu0 0.0
    %10131 = vmatpush1.msra.mxu0 0.0
    %10132 = vmatprep.subr.mxu0 0.0
    %10133 = vmatpush1.msra.mxu0 0.0
    %10134 = vmatprep.subr.mxu0 0.0
    %10135 = vmatpush1.msra.mxu0 0.0
    %10136 = vmatprep.subr.mxu0 0.0
    %10137 = vmatpush1.msra.mxu0 0.0
    %10138 = vmatprep.subr.mxu0 0.0
    %10139 = vmatpush1.msra.mxu0 0.0
    %10140 = vmatprep.subr.mxu0 0.0
    %10141 = vmatpush1.msra.mxu0 0.0
    %10142 = vmatprep.subr.mxu0 0.0
    %10143 = vmatpush1.msra.mxu0 0.0
    %10144 = vmatprep.subr.mxu0 0.0
    %10145 = vmatpush1.msra.mxu0 0.0
    %10146 = vmatprep.subr.mxu0 0.0
    %10147 = vmatpush1.msra.mxu0 0.0
    %10148 = vmatprep.subr.mxu0 0.0
    %10149 = vmatpush1.msra.mxu0 0.0
    %10150 = vmatprep.subr.mxu0 0.0
    %10151 = vmatpush1.msra.mxu0 0.0
    %10152 = vmatprep.subr.mxu0 0.0
    %10153 = vmatpush1.msra.mxu0 0.0
    %10154 = vmatprep.subr.mxu0 0.0
    %10155 = vmatpush1.msra.mxu0 0.0
    %10156 = vmatprep.subr.mxu0 0.0
    %10157 = vmatpush1.msra.mxu0 0.0
    %10158 = vmatprep.subr.mxu0 0.0
    %10159 = vmatpush1.msra.mxu0 0.0
    %10160 = vmatprep.subr.mxu0 0.0
    %10161 = vmatpush1.msra.mxu0 0.0
    %10162 = vmatprep.subr.mxu0 0.0
    %10163 = vmatpush1.msra.mxu0 0.0
    %10164 = vmatprep.mubr.f32.mxu0 0.0
    %v10165 = vand.u32 %v9806, 4294901760
    %v10166 = vsub.f32 %v9806, %v10165
    %10167 = vmatmul.mubr.f32.gmra.mrb[0].mxu0 %v10166
    %v10168 = vpop.f32.mrb[0].mxu0
    %v10169 = vadd.f32 %v10060, %v10168
    %v10170 = vpop.f32.mrb[0].mxu0
    %v10171 = vadd.f32 %v10062, %v10170
    %10172 = vdwg.mxu0
    %v10173 = vand.u32 %v9769, 4294901760
    %10174 = vmatprep.subr.mxu0 %v10173
    %v10175 = vand.u32 %v9768, 4294901760
    %10176 = vmatpush1.msra.mxu0 %v10175
    %v10177 = vand.u32 %v9773, 4294901760
    %10178 = vmatprep.subr.mxu0 %v10177
    %v10179 = vand.u32 %v9772, 4294901760
    %10180 = vmatpush1.msra.mxu0 %v10179
    %v10181 = vand.u32 %v9777, 4294901760
    %10182 = vmatprep.subr.mxu0 %v10181
    %v10183 = vand.u32 %v9776, 4294901760
    %10184 = vmatpush1.msra.mxu0 %v10183
    %v10185 = vand.u32 %v9781, 4294901760
    %10186 = vmatprep.subr.mxu0 %v10185
    %v10187 = vand.u32 %v9780, 4294901760
    %10188 = vmatpush1.msra.mxu0 %v10187
    %v10189 = vand.u32 %v9785, 4294901760
    %10190 = vmatprep.subr.mxu0 %v10189
    %v10191 = vand.u32 %v9784, 4294901760
    %10192 = vmatpush1.msra.mxu0 %v10191
    %v10193 = vand.u32 %v9789, 4294901760
    %10194 = vmatprep.subr.mxu0 %v10193
    %v10195 = vand.u32 %v9788, 4294901760
    %10196 = vmatpush1.msra.mxu0 %v10195
    %v10197 = vand.u32 %v9793, 4294901760
    %10198 = vmatprep.subr.mxu0 %v10197
    %v10199 = vand.u32 %v9792, 4294901760
    %10200 = vmatpush1.msra.mxu0 %v10199
    %v10201 = vand.u32 %v9797, 4294901760
    %10202 = vmatprep.subr.mxu0 %v10201
    %v10203 = vand.u32 %v9796, 4294901760
    %10204 = vmatpush1.msra.mxu0 %v10203
    %v10205 = vand.u32 %v9801, 4294901760
    %10206 = vmatprep.subr.mxu0 %v10205
    %v10207 = vand.u32 %v9800, 4294901760
    %10208 = vmatpush1.msra.mxu0 %v10207
    %10209 = vmatprep.subr.mxu0 0.0
    %10210 = vmatpush1.msra.mxu0 0.0
    %10211 = vmatprep.subr.mxu0 0.0
    %10212 = vmatpush1.msra.mxu0 0.0
    %10213 = vmatprep.subr.mxu0 0.0
    %10214 = vmatpush1.msra.mxu0 0.0
    %10215 = vmatprep.subr.mxu0 0.0
    %10216 = vmatpush1.msra.mxu0 0.0
    %10217 = vmatprep.subr.mxu0 0.0
    %10218 = vmatpush1.msra.mxu0 0.0
    %10219 = vmatprep.subr.mxu0 0.0
    %10220 = vmatpush1.msra.mxu0 0.0
    %10221 = vmatprep.subr.mxu0 0.0
    %10222 = vmatpush1.msra.mxu0 0.0
    %10223 = vmatprep.subr.mxu0 0.0
    %10224 = vmatpush1.msra.mxu0 0.0
    %10225 = vmatprep.subr.mxu0 0.0
    %10226 = vmatpush1.msra.mxu0 0.0
    %10227 = vmatprep.subr.mxu0 0.0
    %10228 = vmatpush1.msra.mxu0 0.0
    %10229 = vmatprep.subr.mxu0 0.0
    %10230 = vmatpush1.msra.mxu0 0.0
    %10231 = vmatprep.subr.mxu0 0.0
    %10232 = vmatpush1.msra.mxu0 0.0
    %10233 = vmatprep.subr.mxu0 0.0
    %10234 = vmatpush1.msra.mxu0 0.0
    %10235 = vmatprep.subr.mxu0 0.0
    %10236 = vmatpush1.msra.mxu0 0.0
    %10237 = vmatprep.subr.mxu0 0.0
    %10238 = vmatpush1.msra.mxu0 0.0
    %10239 = vmatprep.subr.mxu0 0.0
    %10240 = vmatpush1.msra.mxu0 0.0
    %10241 = vmatprep.subr.mxu0 0.0
    %10242 = vmatpush1.msra.mxu0 0.0
    %10243 = vmatprep.subr.mxu0 0.0
    %10244 = vmatpush1.msra.mxu0 0.0
    %10245 = vmatprep.subr.mxu0 0.0
    %10246 = vmatpush1.msra.mxu0 0.0
    %10247 = vmatprep.subr.mxu0 0.0
    %10248 = vmatpush1.msra.mxu0 0.0
    %10249 = vmatprep.subr.mxu0 0.0
    %10250 = vmatpush1.msra.mxu0 0.0
    %10251 = vmatprep.subr.mxu0 0.0
    %10252 = vmatpush1.msra.mxu0 0.0
    %10253 = vmatprep.subr.mxu0 0.0
    %10254 = vmatpush1.msra.mxu0 0.0
    %10255 = vmatprep.mubr.f32.mxu0 0.0
    %v10256 = vand.u32 %v9806, 4294901760
    %v10257 = vsub.f32 %v9806, %v10256
    %v10258 = vand.u32 %v10257, 4294901760
    %10259 = vmatmul.mubr.f32.gmra.mrb[0].mxu0 %v10258
    %v10260 = vpop.f32.mrb[0].mxu0
    %v10261 = vadd.f32 %v10169, %v10260
    %v10262 = vpop.f32.mrb[0].mxu0
    %v10263 = vadd.f32 %v10171, %v10262
    %10264 = vdwg.mxu0
    %v10265 = vand.u32 %v9769, 4294901760
    %v10266 = vsub.f32 %v9769, %v10265
    %v10267 = vand.u32 %v10266, 4294901760
    %10268 = vmatprep.subr.mxu0 %v10267
    %v10269 = vand.u32 %v9768, 4294901760
    %v10270 = vsub.f32 %v9768, %v10269
    %v10271 = vand.u32 %v10270, 4294901760
    %10272 = vmatpush1.msra.mxu0 %v10271
    %v10273 = vand.u32 %v9773, 4294901760
    %v10274 = vsub.f32 %v9773, %v10273
    %v10275 = vand.u32 %v10274, 4294901760
    %10276 = vmatprep.subr.mxu0 %v10275
    %v10277 = vand.u32 %v9772, 4294901760
    %v10278 = vsub.f32 %v9772, %v10277
    %v10279 = vand.u32 %v10278, 4294901760
    %10280 = vmatpush1.msra.mxu0 %v10279
    %v10281 = vand.u32 %v9777, 4294901760
    %v10282 = vsub.f32 %v9777, %v10281
    %v10283 = vand.u32 %v10282, 4294901760
    %10284 = vmatprep.subr.mxu0 %v10283
    %v10285 = vand.u32 %v9776, 4294901760
    %v10286 = vsub.f32 %v9776, %v10285
    %v10287 = vand.u32 %v10286, 4294901760
    %10288 = vmatpush1.msra.mxu0 %v10287
    %v10289 = vand.u32 %v9781, 4294901760
    %v10290 = vsub.f32 %v9781, %v10289
    %v10291 = vand.u32 %v10290, 4294901760
    %10292 = vmatprep.subr.mxu0 %v10291
    %v10293 = vand.u32 %v9780, 4294901760
    %v10294 = vsub.f32 %v9780, %v10293
    %v10295 = vand.u32 %v10294, 4294901760
    %10296 = vmatpush1.msra.mxu0 %v10295
    %v10297 = vand.u32 %v9785, 4294901760
    %v10298 = vsub.f32 %v9785, %v10297
    %v10299 = vand.u32 %v10298, 4294901760
    %10300 = vmatprep.subr.mxu0 %v10299
    %v10301 = vand.u32 %v9784, 4294901760
    %v10302 = vsub.f32 %v9784, %v10301
    %v10303 = vand.u32 %v10302, 4294901760
    %10304 = vmatpush1.msra.mxu0 %v10303
    %v10305 = vand.u32 %v9789, 4294901760
    %v10306 = vsub.f32 %v9789, %v10305
    %v10307 = vand.u32 %v10306, 4294901760
    %10308 = vmatprep.subr.mxu0 %v10307
    %v10309 = vand.u32 %v9788, 4294901760
    %v10310 = vsub.f32 %v9788, %v10309
    %v10311 = vand.u32 %v10310, 4294901760
    %10312 = vmatpush1.msra.mxu0 %v10311
    %v10313 = vand.u32 %v9793, 4294901760
    %v10314 = vsub.f32 %v9793, %v10313
    %v10315 = vand.u32 %v10314, 4294901760
    %10316 = vmatprep.subr.mxu0 %v10315
    %v10317 = vand.u32 %v9792, 4294901760
    %v10318 = vsub.f32 %v9792, %v10317
    %v10319 = vand.u32 %v10318, 4294901760
    %10320 = vmatpush1.msra.mxu0 %v10319
    %v10321 = vand.u32 %v9797, 4294901760
    %v10322 = vsub.f32 %v9797, %v10321
    %v10323 = vand.u32 %v10322, 4294901760
    %10324 = vmatprep.subr.mxu0 %v10323
    %v10325 = vand.u32 %v9796, 4294901760
    %v10326 = vsub.f32 %v9796, %v10325
    %v10327 = vand.u32 %v10326, 4294901760
    %10328 = vmatpush1.msra.mxu0 %v10327
    %v10329 = vand.u32 %v9801, 4294901760
    %v10330 = vsub.f32 %v9801, %v10329
    %v10331 = vand.u32 %v10330, 4294901760
    %10332 = vmatprep.subr.mxu0 %v10331
    %v10333 = vand.u32 %v9800, 4294901760
    %v10334 = vsub.f32 %v9800, %v10333
    %v10335 = vand.u32 %v10334, 4294901760
    %10336 = vmatpush1.msra.mxu0 %v10335
    %10337 = vmatprep.subr.mxu0 0.0
    %10338 = vmatpush1.msra.mxu0 0.0
    %10339 = vmatprep.subr.mxu0 0.0
    %10340 = vmatpush1.msra.mxu0 0.0
    %10341 = vmatprep.subr.mxu0 0.0
    %10342 = vmatpush1.msra.mxu0 0.0
    %10343 = vmatprep.subr.mxu0 0.0
    %10344 = vmatpush1.msra.mxu0 0.0
    %10345 = vmatprep.subr.mxu0 0.0
    %10346 = vmatpush1.msra.mxu0 0.0
    %10347 = vmatprep.subr.mxu0 0.0
    %10348 = vmatpush1.msra.mxu0 0.0
    %10349 = vmatprep.subr.mxu0 0.0
    %10350 = vmatpush1.msra.mxu0 0.0
    %10351 = vmatprep.subr.mxu0 0.0
    %10352 = vmatpush1.msra.mxu0 0.0
    %10353 = vmatprep.subr.mxu0 0.0
    %10354 = vmatpush1.msra.mxu0 0.0
    %10355 = vmatprep.subr.mxu0 0.0
    %10356 = vmatpush1.msra.mxu0 0.0
    %10357 = vmatprep.subr.mxu0 0.0
    %10358 = vmatpush1.msra.mxu0 0.0
    %10359 = vmatprep.subr.mxu0 0.0
    %10360 = vmatpush1.msra.mxu0 0.0
    %10361 = vmatprep.subr.mxu0 0.0
    %10362 = vmatpush1.msra.mxu0 0.0
    %10363 = vmatprep.subr.mxu0 0.0
    %10364 = vmatpush1.msra.mxu0 0.0
    %10365 = vmatprep.subr.mxu0 0.0
    %10366 = vmatpush1.msra.mxu0 0.0
    %10367 = vmatprep.subr.mxu0 0.0
    %10368 = vmatpush1.msra.mxu0 0.0
    %10369 = vmatprep.subr.mxu0 0.0
    %10370 = vmatpush1.msra.mxu0 0.0
    %10371 = vmatprep.subr.mxu0 0.0
    %10372 = vmatpush1.msra.mxu0 0.0
    %10373 = vmatprep.subr.mxu0 0.0
    %10374 = vmatpush1.msra.mxu0 0.0
    %10375 = vmatprep.subr.mxu0 0.0
    %10376 = vmatpush1.msra.mxu0 0.0
    %10377 = vmatprep.subr.mxu0 0.0
    %10378 = vmatpush1.msra.mxu0 0.0
    %10379 = vmatprep.subr.mxu0 0.0
    %10380 = vmatpush1.msra.mxu0 0.0
    %10381 = vmatprep.subr.mxu0 0.0
    %10382 = vmatpush1.msra.mxu0 0.0
    %10383 = vmatprep.mubr.f32.mxu0 0.0
    %v10384 = vand.u32 %v9806, 4294901760
    %10385 = vmatmul.mubr.f32.gmra.mrb[0].mxu0 %v10384
    %v10386 = vpop.f32.mrb[0].mxu0
    %v10387 = vadd.f32 %v10261, %v10386
    %v10388 = vpop.f32.mrb[0].mxu0
    %v10389 = vadd.f32 %v10263, %v10388
    %10390 = vdwg.mxu0
    %v10391 = vand.u32 %v9769, 4294901760
    %10392 = vmatprep.subr.mxu0 %v10391
    %v10393 = vand.u32 %v9768, 4294901760
    %10394 = vmatpush1.msra.mxu0 %v10393
    %v10395 = vand.u32 %v9773, 4294901760
    %10396 = vmatprep.subr.mxu0 %v10395
    %v10397 = vand.u32 %v9772, 4294901760
    %10398 = vmatpush1.msra.mxu0 %v10397
    %v10399 = vand.u32 %v9777, 4294901760
    %10400 = vmatprep.subr.mxu0 %v10399
    %v10401 = vand.u32 %v9776, 4294901760
    %10402 = vmatpush1.msra.mxu0 %v10401
    %v10403 = vand.u32 %v9781, 4294901760
    %10404 = vmatprep.subr.mxu0 %v10403
    %v10405 = vand.u32 %v9780, 4294901760
    %10406 = vmatpush1.msra.mxu0 %v10405
    %v10407 = vand.u32 %v9785, 4294901760
    %10408 = vmatprep.subr.mxu0 %v10407
    %v10409 = vand.u32 %v9784, 4294901760
    %10410 = vmatpush1.msra.mxu0 %v10409
    %v10411 = vand.u32 %v9789, 4294901760
    %10412 = vmatprep.subr.mxu0 %v10411
    %v10413 = vand.u32 %v9788, 4294901760
    %10414 = vmatpush1.msra.mxu0 %v10413
    %v10415 = vand.u32 %v9793, 4294901760
    %10416 = vmatprep.subr.mxu0 %v10415
    %v10417 = vand.u32 %v9792, 4294901760
    %10418 = vmatpush1.msra.mxu0 %v10417
    %v10419 = vand.u32 %v9797, 4294901760
    %10420 = vmatprep.subr.mxu0 %v10419
    %v10421 = vand.u32 %v9796, 4294901760
    %10422 = vmatpush1.msra.mxu0 %v10421
    %v10423 = vand.u32 %v9801, 4294901760
    %10424 = vmatprep.subr.mxu0 %v10423
    %v10425 = vand.u32 %v9800, 4294901760
    %10426 = vmatpush1.msra.mxu0 %v10425
    %10427 = vmatprep.subr.mxu0 0.0
    %10428 = vmatpush1.msra.mxu0 0.0
    %10429 = vmatprep.subr.mxu0 0.0
    %10430 = vmatpush1.msra.mxu0 0.0
    %10431 = vmatprep.subr.mxu0 0.0
    %10432 = vmatpush1.msra.mxu0 0.0
    %10433 = vmatprep.subr.mxu0 0.0
    %10434 = vmatpush1.msra.mxu0 0.0
    %10435 = vmatprep.subr.mxu0 0.0
    %10436 = vmatpush1.msra.mxu0 0.0
    %10437 = vmatprep.subr.mxu0 0.0
    %10438 = vmatpush1.msra.mxu0 0.0
    %10439 = vmatprep.subr.mxu0 0.0
    %10440 = vmatpush1.msra.mxu0 0.0
    %10441 = vmatprep.subr.mxu0 0.0
    %10442 = vmatpush1.msra.mxu0 0.0
    %10443 = vmatprep.subr.mxu0 0.0
    %10444 = vmatpush1.msra.mxu0 0.0
    %10445 = vmatprep.subr.mxu0 0.0
    %10446 = vmatpush1.msra.mxu0 0.0
    %10447 = vmatprep.subr.mxu0 0.0
    %10448 = vmatpush1.msra.mxu0 0.0
    %10449 = vmatprep.subr.mxu0 0.0
    %10450 = vmatpush1.msra.mxu0 0.0
    %10451 = vmatprep.subr.mxu0 0.0
    %10452 = vmatpush1.msra.mxu0 0.0
    %10453 = vmatprep.subr.mxu0 0.0
    %10454 = vmatpush1.msra.mxu0 0.0
    %10455 = vmatprep.subr.mxu0 0.0
    %10456 = vmatpush1.msra.mxu0 0.0
    %10457 = vmatprep.subr.mxu0 0.0
    %10458 = vmatpush1.msra.mxu0 0.0
    %10459 = vmatprep.subr.mxu0 0.0
    %10460 = vmatpush1.msra.mxu0 0.0
    %10461 = vmatprep.subr.mxu0 0.0
    %10462 = vmatpush1.msra.mxu0 0.0
    %10463 = vmatprep.subr.mxu0 0.0
    %10464 = vmatpush1.msra.mxu0 0.0
    %10465 = vmatprep.subr.mxu0 0.0
    %10466 = vmatpush1.msra.mxu0 0.0
    %10467 = vmatprep.subr.mxu0 0.0
    %10468 = vmatpush1.msra.mxu0 0.0
    %10469 = vmatprep.subr.mxu0 0.0
    %10470 = vmatpush1.msra.mxu0 0.0
    %10471 = vmatprep.subr.mxu0 0.0
    %10472 = vmatpush1.msra.mxu0 0.0
    %10473 = vmatprep.mubr.f32.mxu0 0.0
    %v10474 = vand.u32 %v9806, 4294901760
    %10475 = vmatmul.mubr.f32.gmra.mrb[0].mxu0 %v10474
    %v10476 = vpop.f32.mrb[0].mxu0
    %v10477 = vadd.f32 %v10387, %v10476
    %v10478 = vpop.f32.mrb[0].mxu0
    %v10479 = vadd.f32 %v10389, %v10478
    %10480 = vdwg.mxu0
    %v10481 = vand.u32 %v9771, 4294901760
    %10482 = vmatprep.subr.mxu0 %v10481
    %v10483 = vand.u32 %v9770, 4294901760
    %10484 = vmatpush1.msra.mxu0 %v10483
    %v10485 = vand.u32 %v9775, 4294901760
    %10486 = vmatprep.subr.mxu0 %v10485
    %v10487 = vand.u32 %v9774, 4294901760
    %10488 = vmatpush1.msra.mxu0 %v10487
    %v10489 = vand.u32 %v9779, 4294901760
    %10490 = vmatprep.subr.mxu0 %v10489
    %v10491 = vand.u32 %v9778, 4294901760
    %10492 = vmatpush1.msra.mxu0 %v10491
    %v10493 = vand.u32 %v9783, 4294901760
    %10494 = vmatprep.subr.mxu0 %v10493
    %v10495 = vand.u32 %v9782, 4294901760
    %10496 = vmatpush1.msra.mxu0 %v10495
    %v10497 = vand.u32 %v9787, 4294901760
    %10498 = vmatprep.subr.mxu0 %v10497
    %v10499 = vand.u32 %v9786, 4294901760
    %10500 = vmatpush1.msra.mxu0 %v10499
    %v10501 = vand.u32 %v9791, 4294901760
    %10502 = vmatprep.subr.mxu0 %v10501
    %v10503 = vand.u32 %v9790, 4294901760
    %10504 = vmatpush1.msra.mxu0 %v10503
    %v10505 = vand.u32 %v9795, 4294901760
    %10506 = vmatprep.subr.mxu0 %v10505
    %v10507 = vand.u32 %v9794, 4294901760
    %10508 = vmatpush1.msra.mxu0 %v10507
    %v10509 = vand.u32 %v9799, 4294901760
    %10510 = vmatprep.subr.mxu0 %v10509
    %v10511 = vand.u32 %v9798, 4294901760
    %10512 = vmatpush1.msra.mxu0 %v10511
    %v10513 = vand.u32 %v9803, 4294901760
    %10514 = vmatprep.subr.mxu0 %v10513
    %v10515 = vand.u32 %v9802, 4294901760
    %10516 = vmatpush1.msra.mxu0 %v10515
    %10517 = vmatprep.subr.mxu0 0.0
    %10518 = vmatpush1.msra.mxu0 0.0
    %10519 = vmatprep.subr.mxu0 0.0
    %10520 = vmatpush1.msra.mxu0 0.0
    %10521 = vmatprep.subr.mxu0 0.0
    %10522 = vmatpush1.msra.mxu0 0.0
    %10523 = vmatprep.subr.mxu0 0.0
    %10524 = vmatpush1.msra.mxu0 0.0
    %10525 = vmatprep.subr.mxu0 0.0
    %10526 = vmatpush1.msra.mxu0 0.0
    %10527 = vmatprep.subr.mxu0 0.0
    %10528 = vmatpush1.msra.mxu0 0.0
    %10529 = vmatprep.subr.mxu0 0.0
    %10530 = vmatpush1.msra.mxu0 0.0
    %10531 = vmatprep.subr.mxu0 0.0
    %10532 = vmatpush1.msra.mxu0 0.0
    %10533 = vmatprep.subr.mxu0 0.0
    %10534 = vmatpush1.msra.mxu0 0.0
    %10535 = vmatprep.subr.mxu0 0.0
    %10536 = vmatpush1.msra.mxu0 0.0
    %10537 = vmatprep.subr.mxu0 0.0
    %10538 = vmatpush1.msra.mxu0 0.0
    %10539 = vmatprep.subr.mxu0 0.0
    %10540 = vmatpush1.msra.mxu0 0.0
    %10541 = vmatprep.subr.mxu0 0.0
    %10542 = vmatpush1.msra.mxu0 0.0
    %10543 = vmatprep.subr.mxu0 0.0
    %10544 = vmatpush1.msra.mxu0 0.0
    %10545 = vmatprep.subr.mxu0 0.0
    %10546 = vmatpush1.msra.mxu0 0.0
    %10547 = vmatprep.subr.mxu0 0.0
    %10548 = vmatpush1.msra.mxu0 0.0
    %10549 = vmatprep.subr.mxu0 0.0
    %10550 = vmatpush1.msra.mxu0 0.0
    %10551 = vmatprep.subr.mxu0 0.0
    %10552 = vmatpush1.msra.mxu0 0.0
    %10553 = vmatprep.subr.mxu0 0.0
    %10554 = vmatpush1.msra.mxu0 0.0
    %10555 = vmatprep.subr.mxu0 0.0
    %10556 = vmatpush1.msra.mxu0 0.0
    %10557 = vmatprep.subr.mxu0 0.0
    %10558 = vmatpush1.msra.mxu0 0.0
    %10559 = vmatprep.subr.mxu0 0.0
    %10560 = vmatpush1.msra.mxu0 0.0
    %10561 = vmatprep.subr.mxu0 0.0
    %10562 = vmatpush1.msra.mxu0 0.0
    %10563 = vmatprep.mubr.f32.mxu0 0.0
    %v10564 = vand.u32 %v9806, 4294901760
    %v10565 = vsub.f32 %v9806, %v10564
    %v10566 = vand.u32 %v10565, 4294901760
    %v10567 = vsub.f32 %v10565, %v10566
    %v10568 = vand.u32 %v10567, 4294901760
    %10569 = vmatmul.mubr.f32.gmra.mrb[0].mxu0 %v10568
    %v10570 = vpop.f32.mrb[0].mxu0
    %v10571 = vadd.f32 %v9598, %v10570
    %v10572 = vpop.f32.mrb[0].mxu0
    %v10573 = vadd.f32 %v9599, %v10572
    %10574 = vdwg.mxu0
    %v10575 = vand.u32 %v9771, 4294901760
    %v10576 = vsub.f32 %v9771, %v10575
    %v10577 = vand.u32 %v10576, 4294901760
    %v10578 = vsub.f32 %v10576, %v10577
    %v10579 = vand.u32 %v10578, 4294901760
    %10580 = vmatprep.subr.mxu0 %v10579
    %v10581 = vand.u32 %v9770, 4294901760
    %v10582 = vsub.f32 %v9770, %v10581
    %v10583 = vand.u32 %v10582, 4294901760
    %v10584 = vsub.f32 %v10582, %v10583
    %v10585 = vand.u32 %v10584, 4294901760
    %10586 = vmatpush1.msra.mxu0 %v10585
    %v10587 = vand.u32 %v9775, 4294901760
    %v10588 = vsub.f32 %v9775, %v10587
    %v10589 = vand.u32 %v10588, 4294901760
    %v10590 = vsub.f32 %v10588, %v10589
    %v10591 = vand.u32 %v10590, 4294901760
    %10592 = vmatprep.subr.mxu0 %v10591
    %v10593 = vand.u32 %v9774, 4294901760
    %v10594 = vsub.f32 %v9774, %v10593
    %v10595 = vand.u32 %v10594, 4294901760
    %v10596 = vsub.f32 %v10594, %v10595
    %v10597 = vand.u32 %v10596, 4294901760
    %10598 = vmatpush1.msra.mxu0 %v10597
    %v10599 = vand.u32 %v9779, 4294901760
    %v10600 = vsub.f32 %v9779, %v10599
    %v10601 = vand.u32 %v10600, 4294901760
    %v10602 = vsub.f32 %v10600, %v10601
    %v10603 = vand.u32 %v10602, 4294901760
    %10604 = vmatprep.subr.mxu0 %v10603
    %v10605 = vand.u32 %v9778, 4294901760
    %v10606 = vsub.f32 %v9778, %v10605
    %v10607 = vand.u32 %v10606, 4294901760
    %v10608 = vsub.f32 %v10606, %v10607
    %v10609 = vand.u32 %v10608, 4294901760
    %10610 = vmatpush1.msra.mxu0 %v10609
    %v10611 = vand.u32 %v9783, 4294901760
    %v10612 = vsub.f32 %v9783, %v10611
    %v10613 = vand.u32 %v10612, 4294901760
    %v10614 = vsub.f32 %v10612, %v10613
    %v10615 = vand.u32 %v10614, 4294901760
    %10616 = vmatprep.subr.mxu0 %v10615
    %v10617 = vand.u32 %v9782, 4294901760
    %v10618 = vsub.f32 %v9782, %v10617
    %v10619 = vand.u32 %v10618, 4294901760
    %v10620 = vsub.f32 %v10618, %v10619
    %v10621 = vand.u32 %v10620, 4294901760
    %10622 = vmatpush1.msra.mxu0 %v10621
    %v10623 = vand.u32 %v9787, 4294901760
    %v10624 = vsub.f32 %v9787, %v10623
    %v10625 = vand.u32 %v10624, 4294901760
    %v10626 = vsub.f32 %v10624, %v10625
    %v10627 = vand.u32 %v10626, 4294901760
    %10628 = vmatprep.subr.mxu0 %v10627
    %v10629 = vand.u32 %v9786, 4294901760
    %v10630 = vsub.f32 %v9786, %v10629
    %v10631 = vand.u32 %v10630, 4294901760
    %v10632 = vsub.f32 %v10630, %v10631
    %v10633 = vand.u32 %v10632, 4294901760
    %10634 = vmatpush1.msra.mxu0 %v10633
    %v10635 = vand.u32 %v9791, 4294901760
    %v10636 = vsub.f32 %v9791, %v10635
    %v10637 = vand.u32 %v10636, 4294901760
    %v10638 = vsub.f32 %v10636, %v10637
    %v10639 = vand.u32 %v10638, 4294901760
    %10640 = vmatprep.subr.mxu0 %v10639
    %v10641 = vand.u32 %v9790, 4294901760
    %v10642 = vsub.f32 %v9790, %v10641
    %v10643 = vand.u32 %v10642, 4294901760
    %v10644 = vsub.f32 %v10642, %v10643
    %v10645 = vand.u32 %v10644, 4294901760
    %10646 = vmatpush1.msra.mxu0 %v10645
    %v10647 = vand.u32 %v9795, 4294901760
    %v10648 = vsub.f32 %v9795, %v10647
    %v10649 = vand.u32 %v10648, 4294901760
    %v10650 = vsub.f32 %v10648, %v10649
    %v10651 = vand.u32 %v10650, 4294901760
    %10652 = vmatprep.subr.mxu0 %v10651
    %v10653 = vand.u32 %v9794, 4294901760
    %v10654 = vsub.f32 %v9794, %v10653
    %v10655 = vand.u32 %v10654, 4294901760
    %v10656 = vsub.f32 %v10654, %v10655
    %v10657 = vand.u32 %v10656, 4294901760
    %10658 = vmatpush1.msra.mxu0 %v10657
    %v10659 = vand.u32 %v9799, 4294901760
    %v10660 = vsub.f32 %v9799, %v10659
    %v10661 = vand.u32 %v10660, 4294901760
    %v10662 = vsub.f32 %v10660, %v10661
    %v10663 = vand.u32 %v10662, 4294901760
    %10664 = vmatprep.subr.mxu0 %v10663
    %v10665 = vand.u32 %v9798, 4294901760
    %v10666 = vsub.f32 %v9798, %v10665
    %v10667 = vand.u32 %v10666, 4294901760
    %v10668 = vsub.f32 %v10666, %v10667
    %v10669 = vand.u32 %v10668, 4294901760
    %10670 = vmatpush1.msra.mxu0 %v10669
    %v10671 = vand.u32 %v9803, 4294901760
    %v10672 = vsub.f32 %v9803, %v10671
    %v10673 = vand.u32 %v10672, 4294901760
    %v10674 = vsub.f32 %v10672, %v10673
    %v10675 = vand.u32 %v10674, 4294901760
    %10676 = vmatprep.subr.mxu0 %v10675
    %v10677 = vand.u32 %v9802, 4294901760
    %v10678 = vsub.f32 %v9802, %v10677
    %v10679 = vand.u32 %v10678, 4294901760
    %v10680 = vsub.f32 %v10678, %v10679
    %v10681 = vand.u32 %v10680, 4294901760
    %10682 = vmatpush1.msra.mxu0 %v10681
    %10683 = vmatprep.subr.mxu0 0.0
    %10684 = vmatpush1.msra.mxu0 0.0
    %10685 = vmatprep.subr.mxu0 0.0
    %10686 = vmatpush1.msra.mxu0 0.0
    %10687 = vmatprep.subr.mxu0 0.0
    %10688 = vmatpush1.msra.mxu0 0.0
    %10689 = vmatprep.subr.mxu0 0.0
    %10690 = vmatpush1.msra.mxu0 0.0
    %10691 = vmatprep.subr.mxu0 0.0
    %10692 = vmatpush1.msra.mxu0 0.0
    %10693 = vmatprep.subr.mxu0 0.0
    %10694 = vmatpush1.msra.mxu0 0.0
    %10695 = vmatprep.subr.mxu0 0.0
    %10696 = vmatpush1.msra.mxu0 0.0
    %10697 = vmatprep.subr.mxu0 0.0
    %10698 = vmatpush1.msra.mxu0 0.0
    %10699 = vmatprep.subr.mxu0 0.0
    %10700 = vmatpush1.msra.mxu0 0.0
    %10701 = vmatprep.subr.mxu0 0.0
    %10702 = vmatpush1.msra.mxu0 0.0
    %10703 = vmatprep.subr.mxu0 0.0
    %10704 = vmatpush1.msra.mxu0 0.0
    %10705 = vmatprep.subr.mxu0 0.0
    %10706 = vmatpush1.msra.mxu0 0.0
    %10707 = vmatprep.subr.mxu0 0.0
    %10708 = vmatpush1.msra.mxu0 0.0
    %10709 = vmatprep.subr.mxu0 0.0
    %10710 = vmatpush1.msra.mxu0 0.0
    %10711 = vmatprep.subr.mxu0 0.0
    %10712 = vmatpush1.msra.mxu0 0.0
    %10713 = vmatprep.subr.mxu0 0.0
    %10714 = vmatpush1.msra.mxu0 0.0
    %10715 = vmatprep.subr.mxu0 0.0
    %10716 = vmatpush1.msra.mxu0 0.0
    %10717 = vmatprep.subr.mxu0 0.0
    %10718 = vmatpush1.msra.mxu0 0.0
    %10719 = vmatprep.subr.mxu0 0.0
    %10720 = vmatpush1.msra.mxu0 0.0
    %10721 = vmatprep.subr.mxu0 0.0
    %10722 = vmatpush1.msra.mxu0 0.0
    %10723 = vmatprep.subr.mxu0 0.0
    %10724 = vmatpush1.msra.mxu0 0.0
    %10725 = vmatprep.subr.mxu0 0.0
    %10726 = vmatpush1.msra.mxu0 0.0
    %10727 = vmatprep.subr.mxu0 0.0
    %10728 = vmatpush1.msra.mxu0 0.0
    %10729 = vmatprep.mubr.f32.mxu0 0.0
    %v10730 = vand.u32 %v9806, 4294901760
    %10731 = vmatmul.mubr.f32.gmra.mrb[0].mxu0 %v10730
    %v10732 = vpop.f32.mrb[0].mxu0
    %v10733 = vadd.f32 %v10571, %v10732
    %v10734 = vpop.f32.mrb[0].mxu0
    %v10735 = vadd.f32 %v10573, %v10734
    %10736 = vdwg.mxu0
    %v10737 = vand.u32 %v9771, 4294901760
    %v10738 = vsub.f32 %v9771, %v10737
    %10739 = vmatprep.subr.mxu0 %v10738
    %v10740 = vand.u32 %v9770, 4294901760
    %v10741 = vsub.f32 %v9770, %v10740
    %10742 = vmatpush1.msra.mxu0 %v10741
    %v10743 = vand.u32 %v9775, 4294901760
    %v10744 = vsub.f32 %v9775, %v10743
    %10745 = vmatprep.subr.mxu0 %v10744
    %v10746 = vand.u32 %v9774, 4294901760
    %v10747 = vsub.f32 %v9774, %v10746
    %10748 = vmatpush1.msra.mxu0 %v10747
    %v10749 = vand.u32 %v9779, 4294901760
    %v10750 = vsub.f32 %v9779, %v10749
    %10751 = vmatprep.subr.mxu0 %v10750
    %v10752 = vand.u32 %v9778, 4294901760
    %v10753 = vsub.f32 %v9778, %v10752
    %10754 = vmatpush1.msra.mxu0 %v10753
    %v10755 = vand.u32 %v9783, 4294901760
    %v10756 = vsub.f32 %v9783, %v10755
    %10757 = vmatprep.subr.mxu0 %v10756
    %v10758 = vand.u32 %v9782, 4294901760
    %v10759 = vsub.f32 %v9782, %v10758
    %10760 = vmatpush1.msra.mxu0 %v10759
    %v10761 = vand.u32 %v9787, 4294901760
    %v10762 = vsub.f32 %v9787, %v10761
    %10763 = vmatprep.subr.mxu0 %v10762
    %v10764 = vand.u32 %v9786, 4294901760
    %v10765 = vsub.f32 %v9786, %v10764
    %10766 = vmatpush1.msra.mxu0 %v10765
    %v10767 = vand.u32 %v9791, 4294901760
    %v10768 = vsub.f32 %v9791, %v10767
    %10769 = vmatprep.subr.mxu0 %v10768
    %v10770 = vand.u32 %v9790, 4294901760
    %v10771 = vsub.f32 %v9790, %v10770
    %10772 = vmatpush1.msra.mxu0 %v10771
    %v10773 = vand.u32 %v9795, 4294901760
    %v10774 = vsub.f32 %v9795, %v10773
    %10775 = vmatprep.subr.mxu0 %v10774
    %v10776 = vand.u32 %v9794, 4294901760
    %v10777 = vsub.f32 %v9794, %v10776
    %10778 = vmatpush1.msra.mxu0 %v10777
    %v10779 = vand.u32 %v9799, 4294901760
    %v10780 = vsub.f32 %v9799, %v10779
    %10781 = vmatprep.subr.mxu0 %v10780
    %v10782 = vand.u32 %v9798, 4294901760
    %v10783 = vsub.f32 %v9798, %v10782
    %10784 = vmatpush1.msra.mxu0 %v10783
    %v10785 = vand.u32 %v9803, 4294901760
    %v10786 = vsub.f32 %v9803, %v10785
    %10787 = vmatprep.subr.mxu0 %v10786
    %v10788 = vand.u32 %v9802, 4294901760
    %v10789 = vsub.f32 %v9802, %v10788
    %10790 = vmatpush1.msra.mxu0 %v10789
    %10791 = vmatprep.subr.mxu0 0.0
    %10792 = vmatpush1.msra.mxu0 0.0
    %10793 = vmatprep.subr.mxu0 0.0
    %10794 = vmatpush1.msra.mxu0 0.0
    %10795 = vmatprep.subr.mxu0 0.0
    %10796 = vmatpush1.msra.mxu0 0.0
    %10797 = vmatprep.subr.mxu0 0.0
    %10798 = vmatpush1.msra.mxu0 0.0
    %10799 = vmatprep.subr.mxu0 0.0
    %10800 = vmatpush1.msra.mxu0 0.0
    %10801 = vmatprep.subr.mxu0 0.0
    %10802 = vmatpush1.msra.mxu0 0.0
    %10803 = vmatprep.subr.mxu0 0.0
    %10804 = vmatpush1.msra.mxu0 0.0
    %10805 = vmatprep.subr.mxu0 0.0
    %10806 = vmatpush1.msra.mxu0 0.0
    %10807 = vmatprep.subr.mxu0 0.0
    %10808 = vmatpush1.msra.mxu0 0.0
    %10809 = vmatprep.subr.mxu0 0.0
    %10810 = vmatpush1.msra.mxu0 0.0
    %10811 = vmatprep.subr.mxu0 0.0
    %10812 = vmatpush1.msra.mxu0 0.0
    %10813 = vmatprep.subr.mxu0 0.0
    %10814 = vmatpush1.msra.mxu0 0.0
    %10815 = vmatprep.subr.mxu0 0.0
    %10816 = vmatpush1.msra.mxu0 0.0
    %10817 = vmatprep.subr.mxu0 0.0
    %10818 = vmatpush1.msra.mxu0 0.0
    %10819 = vmatprep.subr.mxu0 0.0
    %10820 = vmatpush1.msra.mxu0 0.0
    %10821 = vmatprep.subr.mxu0 0.0
    %10822 = vmatpush1.msra.mxu0 0.0
    %10823 = vmatprep.subr.mxu0 0.0
    %10824 = vmatpush1.msra.mxu0 0.0
    %10825 = vmatprep.subr.mxu0 0.0
    %10826 = vmatpush1.msra.mxu0 0.0
    %10827 = vmatprep.subr.mxu0 0.0
    %10828 = vmatpush1.msra.mxu0 0.0
    %10829 = vmatprep.subr.mxu0 0.0
    %10830 = vmatpush1.msra.mxu0 0.0
    %10831 = vmatprep.subr.mxu0 0.0
    %10832 = vmatpush1.msra.mxu0 0.0
    %10833 = vmatprep.subr.mxu0 0.0
    %10834 = vmatpush1.msra.mxu0 0.0
    %10835 = vmatprep.subr.mxu0 0.0
    %10836 = vmatpush1.msra.mxu0 0.0
    %10837 = vmatprep.mubr.f32.mxu0 0.0
    %v10838 = vand.u32 %v9806, 4294901760
    %v10839 = vsub.f32 %v9806, %v10838
    %10840 = vmatmul.mubr.f32.gmra.mrb[0].mxu0 %v10839
    %v10841 = vpop.f32.mrb[0].mxu0
    %v10842 = vadd.f32 %v10733, %v10841
    %v10843 = vpop.f32.mrb[0].mxu0
    %v10844 = vadd.f32 %v10735, %v10843
    %10845 = vdwg.mxu0
    %v10846 = vand.u32 %v9771, 4294901760
    %10847 = vmatprep.subr.mxu0 %v10846
    %v10848 = vand.u32 %v9770, 4294901760
    %10849 = vmatpush1.msra.mxu0 %v10848
    %v10850 = vand.u32 %v9775, 4294901760
    %10851 = vmatprep.subr.mxu0 %v10850
    %v10852 = vand.u32 %v9774, 4294901760
    %10853 = vmatpush1.msra.mxu0 %v10852
    %v10854 = vand.u32 %v9779, 4294901760
    %10855 = vmatprep.subr.mxu0 %v10854
    %v10856 = vand.u32 %v9778, 4294901760
    %10857 = vmatpush1.msra.mxu0 %v10856
    %v10858 = vand.u32 %v9783, 4294901760
    %10859 = vmatprep.subr.mxu0 %v10858
    %v10860 = vand.u32 %v9782, 4294901760
    %10861 = vmatpush1.msra.mxu0 %v10860
    %v10862 = vand.u32 %v9787, 4294901760
    %10863 = vmatprep.subr.mxu0 %v10862
    %v10864 = vand.u32 %v9786, 4294901760
    %10865 = vmatpush1.msra.mxu0 %v10864
    %v10866 = vand.u32 %v9791, 4294901760
    %10867 = vmatprep.subr.mxu0 %v10866
    %v10868 = vand.u32 %v9790, 4294901760
    %10869 = vmatpush1.msra.mxu0 %v10868
    %v10870 = vand.u32 %v9795, 4294901760
    %10871 = vmatprep.subr.mxu0 %v10870
    %v10872 = vand.u32 %v9794, 4294901760
    %10873 = vmatpush1.msra.mxu0 %v10872
    %v10874 = vand.u32 %v9799, 4294901760
    %10875 = vmatprep.subr.mxu0 %v10874
    %v10876 = vand.u32 %v9798, 4294901760
    %10877 = vmatpush1.msra.mxu0 %v10876
    %v10878 = vand.u32 %v9803, 4294901760
    %10879 = vmatprep.subr.mxu0 %v10878
    %v10880 = vand.u32 %v9802, 4294901760
    %10881 = vmatpush1.msra.mxu0 %v10880
    %10882 = vmatprep.subr.mxu0 0.0
    %10883 = vmatpush1.msra.mxu0 0.0
    %10884 = vmatprep.subr.mxu0 0.0
    %10885 = vmatpush1.msra.mxu0 0.0
    %10886 = vmatprep.subr.mxu0 0.0
    %10887 = vmatpush1.msra.mxu0 0.0
    %10888 = vmatprep.subr.mxu0 0.0
    %10889 = vmatpush1.msra.mxu0 0.0
    %10890 = vmatprep.subr.mxu0 0.0
    %10891 = vmatpush1.msra.mxu0 0.0
    %10892 = vmatprep.subr.mxu0 0.0
    %10893 = vmatpush1.msra.mxu0 0.0
    %10894 = vmatprep.subr.mxu0 0.0
    %10895 = vmatpush1.msra.mxu0 0.0
    %10896 = vmatprep.subr.mxu0 0.0
    %10897 = vmatpush1.msra.mxu0 0.0
    %10898 = vmatprep.subr.mxu0 0.0
    %10899 = vmatpush1.msra.mxu0 0.0
    %10900 = vmatprep.subr.mxu0 0.0
    %10901 = vmatpush1.msra.mxu0 0.0
    %10902 = vmatprep.subr.mxu0 0.0
    %10903 = vmatpush1.msra.mxu0 0.0
    %10904 = vmatprep.subr.mxu0 0.0
    %10905 = vmatpush1.msra.mxu0 0.0
    %10906 = vmatprep.subr.mxu0 0.0
    %10907 = vmatpush1.msra.mxu0 0.0
    %10908 = vmatprep.subr.mxu0 0.0
    %10909 = vmatpush1.msra.mxu0 0.0
    %10910 = vmatprep.subr.mxu0 0.0
    %10911 = vmatpush1.msra.mxu0 0.0
    %10912 = vmatprep.subr.mxu0 0.0
    %10913 = vmatpush1.msra.mxu0 0.0
    %10914 = vmatprep.subr.mxu0 0.0
    %10915 = vmatpush1.msra.mxu0 0.0
    %10916 = vmatprep.subr.mxu0 0.0
    %10917 = vmatpush1.msra.mxu0 0.0
    %10918 = vmatprep.subr.mxu0 0.0
    %10919 = vmatpush1.msra.mxu0 0.0
    %10920 = vmatprep.subr.mxu0 0.0
    %10921 = vmatpush1.msra.mxu0 0.0
    %10922 = vmatprep.subr.mxu0 0.0
    %10923 = vmatpush1.msra.mxu0 0.0
    %10924 = vmatprep.subr.mxu0 0.0
    %10925 = vmatpush1.msra.mxu0 0.0
    %10926 = vmatprep.subr.mxu0 0.0
    %10927 = vmatpush1.msra.mxu0 0.0
    %10928 = vmatprep.mubr.f32.mxu0 0.0
    %v10929 = vand.u32 %v9806, 4294901760
    %v10930 = vsub.f32 %v9806, %v10929
    %v10931 = vand.u32 %v10930, 4294901760
    %10932 = vmatmul.mubr.f32.gmra.mrb[0].mxu0 %v10931
    %v10933 = vpop.f32.mrb[0].mxu0
    %v10934 = vadd.f32 %v10842, %v10933
    %v10935 = vpop.f32.mrb[0].mxu0
    %v10936 = vadd.f32 %v10844, %v10935
    %10937 = vdwg.mxu0
    %v10938 = vand.u32 %v9771, 4294901760
    %v10939 = vsub.f32 %v9771, %v10938
    %v10940 = vand.u32 %v10939, 4294901760
    %10941 = vmatprep.subr.mxu0 %v10940
    %v10942 = vand.u32 %v9770, 4294901760
    %v10943 = vsub.f32 %v9770, %v10942
    %v10944 = vand.u32 %v10943, 4294901760
    %10945 = vmatpush1.msra.mxu0 %v10944
    %v10946 = vand.u32 %v9775, 4294901760
    %v10947 = vsub.f32 %v9775, %v10946
    %v10948 = vand.u32 %v10947, 4294901760
    %10949 = vmatprep.subr.mxu0 %v10948
    %v10950 = vand.u32 %v9774, 4294901760
    %v10951 = vsub.f32 %v9774, %v10950
    %v10952 = vand.u32 %v10951, 4294901760
    %10953 = vmatpush1.msra.mxu0 %v10952
    %v10954 = vand.u32 %v9779, 4294901760
    %v10955 = vsub.f32 %v9779, %v10954
    %v10956 = vand.u32 %v10955, 4294901760
    %10957 = vmatprep.subr.mxu0 %v10956
    %v10958 = vand.u32 %v9778, 4294901760
    %v10959 = vsub.f32 %v9778, %v10958
    %v10960 = vand.u32 %v10959, 4294901760
    %10961 = vmatpush1.msra.mxu0 %v10960
    %v10962 = vand.u32 %v9783, 4294901760
    %v10963 = vsub.f32 %v9783, %v10962
    %v10964 = vand.u32 %v10963, 4294901760
    %10965 = vmatprep.subr.mxu0 %v10964
    %v10966 = vand.u32 %v9782, 4294901760
    %v10967 = vsub.f32 %v9782, %v10966
    %v10968 = vand.u32 %v10967, 4294901760
    %10969 = vmatpush1.msra.mxu0 %v10968
    %v10970 = vand.u32 %v9787, 4294901760
    %v10971 = vsub.f32 %v9787, %v10970
    %v10972 = vand.u32 %v10971, 4294901760
    %10973 = vmatprep.subr.mxu0 %v10972
    %v10974 = vand.u32 %v9786, 4294901760
    %v10975 = vsub.f32 %v9786, %v10974
    %v10976 = vand.u32 %v10975, 4294901760
    %10977 = vmatpush1.msra.mxu0 %v10976
    %v10978 = vand.u32 %v9791, 4294901760
    %v10979 = vsub.f32 %v9791, %v10978
    %v10980 = vand.u32 %v10979, 4294901760
    %10981 = vmatprep.subr.mxu0 %v10980
    %v10982 = vand.u32 %v9790, 4294901760
    %v10983 = vsub.f32 %v9790, %v10982
    %v10984 = vand.u32 %v10983, 4294901760
    %10985 = vmatpush1.msra.mxu0 %v10984
    %v10986 = vand.u32 %v9795, 4294901760
    %v10987 = vsub.f32 %v9795, %v10986
    %v10988 = vand.u32 %v10987, 4294901760
    %10989 = vmatprep.subr.mxu0 %v10988
    %v10990 = vand.u32 %v9794, 4294901760
    %v10991 = vsub.f32 %v9794, %v10990
    %v10992 = vand.u32 %v10991, 4294901760
    %10993 = vmatpush1.msra.mxu0 %v10992
    %v10994 = vand.u32 %v9799, 4294901760
    %v10995 = vsub.f32 %v9799, %v10994
    %v10996 = vand.u32 %v10995, 4294901760
    %10997 = vmatprep.subr.mxu0 %v10996
    %v10998 = vand.u32 %v9798, 4294901760
    %v10999 = vsub.f32 %v9798, %v10998
    %v11000 = vand.u32 %v10999, 4294901760
    %11001 = vmatpush1.msra.mxu0 %v11000
    %v11002 = vand.u32 %v9803, 4294901760
    %v11003 = vsub.f32 %v9803, %v11002
    %v11004 = vand.u32 %v11003, 4294901760
    %11005 = vmatprep.subr.mxu0 %v11004
    %v11006 = vand.u32 %v9802, 4294901760
    %v11007 = vsub.f32 %v9802, %v11006
    %v11008 = vand.u32 %v11007, 4294901760
    %11009 = vmatpush1.msra.mxu0 %v11008
    %11010 = vmatprep.subr.mxu0 0.0
    %11011 = vmatpush1.msra.mxu0 0.0
    %11012 = vmatprep.subr.mxu0 0.0
    %11013 = vmatpush1.msra.mxu0 0.0
    %11014 = vmatprep.subr.mxu0 0.0
    %11015 = vmatpush1.msra.mxu0 0.0
    %11016 = vmatprep.subr.mxu0 0.0
    %11017 = vmatpush1.msra.mxu0 0.0
    %11018 = vmatprep.subr.mxu0 0.0
    %11019 = vmatpush1.msra.mxu0 0.0
    %11020 = vmatprep.subr.mxu0 0.0
    %11021 = vmatpush1.msra.mxu0 0.0
    %11022 = vmatprep.subr.mxu0 0.0
    %11023 = vmatpush1.msra.mxu0 0.0
    %11024 = vmatprep.subr.mxu0 0.0
    %11025 = vmatpush1.msra.mxu0 0.0
    %11026 = vmatprep.subr.mxu0 0.0
    %11027 = vmatpush1.msra.mxu0 0.0
    %11028 = vmatprep.subr.mxu0 0.0
    %11029 = vmatpush1.msra.mxu0 0.0
    %11030 = vmatprep.subr.mxu0 0.0
    %11031 = vmatpush1.msra.mxu0 0.0
    %11032 = vmatprep.subr.mxu0 0.0
    %11033 = vmatpush1.msra.mxu0 0.0
    %11034 = vmatprep.subr.mxu0 0.0
    %11035 = vmatpush1.msra.mxu0 0.0
    %11036 = vmatprep.subr.mxu0 0.0
    %11037 = vmatpush1.msra.mxu0 0.0
    %11038 = vmatprep.subr.mxu0 0.0
    %11039 = vmatpush1.msra.mxu0 0.0
    %11040 = vmatprep.subr.mxu0 0.0
    %11041 = vmatpush1.msra.mxu0 0.0
    %11042 = vmatprep.subr.mxu0 0.0
    %11043 = vmatpush1.msra.mxu0 0.0
    %11044 = vmatprep.subr.mxu0 0.0
    %11045 = vmatpush1.msra.mxu0 0.0
    %11046 = vmatprep.subr.mxu0 0.0
    %11047 = vmatpush1.msra.mxu0 0.0
    %11048 = vmatprep.subr.mxu0 0.0
    %11049 = vmatpush1.msra.mxu0 0.0
    %11050 = vmatprep.subr.mxu0 0.0
    %11051 = vmatpush1.msra.mxu0 0.0
    %11052 = vmatprep.subr.mxu0 0.0
    %11053 = vmatpush1.msra.mxu0 0.0
    %11054 = vmatprep.subr.mxu0 0.0
    %11055 = vmatpush1.msra.mxu0 0.0
    %11056 = vmatprep.mubr.f32.mxu0 0.0
    %v11057 = vand.u32 %v9806, 4294901760
    %11058 = vmatmul.mubr.f32.gmra.mrb[0].mxu0 %v11057
    %v11059 = vpop.f32.mrb[0].mxu0
    %v11060 = vadd.f32 %v10934, %v11059
    %v11061 = vpop.f32.mrb[0].mxu0
    %v11062 = vadd.f32 %v10936, %v11061
    %11063 = vdwg.mxu0
    %v11064 = vand.u32 %v9771, 4294901760
    %11065 = vmatprep.subr.mxu0 %v11064
    %v11066 = vand.u32 %v9770, 4294901760
    %11067 = vmatpush1.msra.mxu0 %v11066
    %v11068 = vand.u32 %v9775, 4294901760
    %11069 = vmatprep.subr.mxu0 %v11068
    %v11070 = vand.u32 %v9774, 4294901760
    %11071 = vmatpush1.msra.mxu0 %v11070
    %v11072 = vand.u32 %v9779, 4294901760
    %11073 = vmatprep.subr.mxu0 %v11072
    %v11074 = vand.u32 %v9778, 4294901760
    %11075 = vmatpush1.msra.mxu0 %v11074
    %v11076 = vand.u32 %v9783, 4294901760
    %11077 = vmatprep.subr.mxu0 %v11076
    %v11078 = vand.u32 %v9782, 4294901760
    %11079 = vmatpush1.msra.mxu0 %v11078
    %v11080 = vand.u32 %v9787, 4294901760
    %11081 = vmatprep.subr.mxu0 %v11080
    %v11082 = vand.u32 %v9786, 4294901760
    %11083 = vmatpush1.msra.mxu0 %v11082
    %v11084 = vand.u32 %v9791, 4294901760
    %11085 = vmatprep.subr.mxu0 %v11084
    %v11086 = vand.u32 %v9790, 4294901760
    %11087 = vmatpush1.msra.mxu0 %v11086
    %v11088 = vand.u32 %v9795, 4294901760
    %11089 = vmatprep.subr.mxu0 %v11088
    %v11090 = vand.u32 %v9794, 4294901760
    %11091 = vmatpush1.msra.mxu0 %v11090
    %v11092 = vand.u32 %v9799, 4294901760
    %11093 = vmatprep.subr.mxu0 %v11092
    %v11094 = vand.u32 %v9798, 4294901760
    %11095 = vmatpush1.msra.mxu0 %v11094
    %v11096 = vand.u32 %v9803, 4294901760
    %11097 = vmatprep.subr.mxu0 %v11096
    %v11098 = vand.u32 %v9802, 4294901760
    %11099 = vmatpush1.msra.mxu0 %v11098
    %11100 = vmatprep.subr.mxu0 0.0
    %11101 = vmatpush1.msra.mxu0 0.0
    %11102 = vmatprep.subr.mxu0 0.0
    %11103 = vmatpush1.msra.mxu0 0.0
    %11104 = vmatprep.subr.mxu0 0.0
    %11105 = vmatpush1.msra.mxu0 0.0
    %11106 = vmatprep.subr.mxu0 0.0
    %11107 = vmatpush1.msra.mxu0 0.0
    %11108 = vmatprep.subr.mxu0 0.0
    %11109 = vmatpush1.msra.mxu0 0.0
    %11110 = vmatprep.subr.mxu0 0.0
    %11111 = vmatpush1.msra.mxu0 0.0
    %11112 = vmatprep.subr.mxu0 0.0
    %11113 = vmatpush1.msra.mxu0 0.0
    %11114 = vmatprep.subr.mxu0 0.0
    %11115 = vmatpush1.msra.mxu0 0.0
    %11116 = vmatprep.subr.mxu0 0.0
    %11117 = vmatpush1.msra.mxu0 0.0
    %11118 = vmatprep.subr.mxu0 0.0
    %11119 = vmatpush1.msra.mxu0 0.0
    %11120 = vmatprep.subr.mxu0 0.0
    %11121 = vmatpush1.msra.mxu0 0.0
    %11122 = vmatprep.subr.mxu0 0.0
    %11123 = vmatpush1.msra.mxu0 0.0
    %11124 = vmatprep.subr.mxu0 0.0
    %11125 = vmatpush1.msra.mxu0 0.0
    %11126 = vmatprep.subr.mxu0 0.0
    %11127 = vmatpush1.msra.mxu0 0.0
    %11128 = vmatprep.subr.mxu0 0.0
    %11129 = vmatpush1.msra.mxu0 0.0
    %11130 = vmatprep.subr.mxu0 0.0
    %11131 = vmatpush1.msra.mxu0 0.0
    %11132 = vmatprep.subr.mxu0 0.0
    %11133 = vmatpush1.msra.mxu0 0.0
    %11134 = vmatprep.subr.mxu0 0.0
    %11135 = vmatpush1.msra.mxu0 0.0
    %11136 = vmatprep.subr.mxu0 0.0
    %11137 = vmatpush1.msra.mxu0 0.0
    %11138 = vmatprep.subr.mxu0 0.0
    %11139 = vmatpush1.msra.mxu0 0.0
    %11140 = vmatprep.subr.mxu0 0.0
    %11141 = vmatpush1.msra.mxu0 0.0
    %11142 = vmatprep.subr.mxu0 0.0
    %11143 = vmatpush1.msra.mxu0 0.0
    %11144 = vmatprep.subr.mxu0 0.0
    %11145 = vmatpush1.msra.mxu0 0.0
    %11146 = vmatprep.mubr.f32.mxu0 0.0
    %v11147 = vand.u32 %v9806, 4294901760
    %11148 = vmatmul.mubr.f32.gmra.mrb[0].mxu0 %v11147
    %v11149 = vpop.f32.mrb[0].mxu0
    %v11150 = vadd.f32 %v11060, %v11149
    %v11151 = vpop.f32.mrb[0].mxu0
    %v11152 = vadd.f32 %v11062, %v11151
    %11153 = vdwg.mxu0
    %v11154 = vmax.f32 %v10477, 0.0
    %v11155 = vmax.f32 %v10479, 0.0
    %v11156 = vmax.f32 %v11150, 0.0
    %v11157 = vmax.f32 %v11152, 0.0
    %11158 = vst [vmem:[#allocation4] sm:$0xff] %v11154
    %11159 = vst [vmem:[#allocation4 + $0x8] sm:$0xff] %v11155
    %11160 = vst [vmem:[#allocation4 + $0x10] sm:$0xff] %v11156
    %11161 = vst [vmem:[#allocation4 + $0x18] sm:$0xff] %v11157
    // Predicated region
    $region58: #{tpu_custom_call.1} parent=1 // pred_check
      _
    $region59: #{tpu_custom_call.1} parent=1 // pred_check_branch
      %11163 = sbr.rel (0) target = $region61
    $region60: #{tpu_custom_call.1} parent=1 // pred_region
      %s11165 = ssub.s32 512, 512
      %11166 = vsyncadd [#allocation5], %s11165
      %s11168 = sshll.u32 [#allocation4], 4
      %s11169 = int_to_ptr.vmem [resolvable:$true] %s11168
      %11171 = dma.vmem_to_hbm [thread:$0]  %s11169, 512, %s14, [#allocation5]
    $region61: #{tpu_custom_call.1} parent=1 // pred_fallthru
      _
    // Predicated region
    $region62: #{tpu_custom_call.1} parent=1 // pred_check
      _
    $region63: #{tpu_custom_call.1} parent=1 // pred_check_branch
      %11173 = sbr.rel (0) target = $region65
    $region64: #{tpu_custom_call.1} parent=1 // pred_region
      %11174 = dma.done [#allocation5], 512
    $region65: #{tpu_custom_call.1} parent=1 // pred_fallthru
      _
    %11175 = vsyncpa [#allocation5], 1

</llo_original>
